<compile_context>
chip_gen: v5e
topology: v5e:2x2
jax: 0.10.0
libtpu: 0.0.40
codegen_flags: <defaults>
</compile_context>

<pallas_src>
import functools
import math

import jax
import jax.numpy as jnp
from jax.experimental import pallas as pl
from jax.experimental.pallas import tpu as pltpu


# ---------------------------------------------------------------------------
# Pallas kernel: in-kernel im2col (9-shift accumulate) + fused complex matmul
# + bias + complex_relu, bf16 output
# ---------------------------------------------------------------------------

def _cup_kernel(xr_ref, xi_ref, wr_ref, wi_ref, b_ref, y_ref, *, H, W, relu):
    """One batch image per grid step.

    xr_ref/xi_ref: (1, H+2, W+2, Cin)  bf16  pad-1 input slab (real / imag)
    wr_ref:        (9, Cin, 8*Cout)    bf16  per-shift weights applied to Xr
    wi_ref:        (9, Cin, 8*Cout)    bf16  per-shift weights applied to Xi
    b_ref:         (1, 8*Cout)         f32   folded complex bias
    y_ref:         (1, H*W, 8*Cout)    bf16  [real phases | imag phases]
    """
    cin = xr_ref.shape[-1]
    co = y_ref.shape[-1]
    acc = jnp.zeros((H * W, co), jnp.float32)
    # 9 accumulated matmuls (in-kernel im2col): activations are read from HBM
    # exactly once; the 9 shifted windows are static VMEM slices.
    for di in range(3):
        for dj in range(3):
            s = di * 3 + dj
            xr_s = xr_ref[0, di:di + H, dj:dj + W, :].reshape(H * W, cin)
            xi_s = xi_ref[0, di:di + H, dj:dj + W, :].reshape(H * W, cin)
            acc = acc + jnp.dot(xr_s, wr_ref[s], preferred_element_type=jnp.float32)
            acc = acc + jnp.dot(xi_s, wi_ref[s], preferred_element_type=jnp.float32)
    acc = acc + b_ref[...]
    if relu:
        acc = jnp.maximum(acc, 0.0)           # complex_relu on both halves
    y_ref[0, :, :] = acc.astype(y_ref.dtype)  # bf16 store (halved writeback)


# ---------------------------------------------------------------------------
# Parameter packing (one-time): sub-pixel weight mapping + complex fusion
# ---------------------------------------------------------------------------

def _subpixel_weight_shifts(w):
    """torch ConvTranspose2d weight (Cin, Cout, 4, 4) -> (9, Cin, 4*Cout):
    per 3x3-shift matmul weights of the sub-pixel formulation.  Output column
    order is (phase a*2+b, cout); phase (a, b) lands at output pixel
    (2p+a, 2q+b), reading pad-1 input pixel (p+di, q+dj)."""
    c_in, c_out = w.shape[:2]
    W = jnp.zeros((9, c_in, 4 * c_out), jnp.float32)
    for a in (0, 1):
        for b in (0, 1):
            for di in (a, a + 1):
                for dj in (b, b + 1):
                    kh = 3 + a - 2 * di
                    kw = 3 + b - 2 * dj
                    col = (a * 2 + b) * c_out
                    W = W.at[di * 3 + dj, :, col:col + c_out].set(w[:, :, kh, kw])
    return W


def pack_cup_params(wr, wi, br, bi, weight_dtype=jnp.bfloat16):
    """(wr, wi): torch ConvTranspose2d weights (Cin, Cout, 4, 4);
    (br, bi): (Cout,) biases of conv_tran_r / conv_tran_i (apply_complex)."""
    Wr3 = _subpixel_weight_shifts(wr)                      # (9, Cin, 4*Cout)
    Wi3 = _subpixel_weight_shifts(wi)
    # [Yr | Yi] = Xr @ [Wr | Wi] + Xi @ [-Wi | Wr]
    w_for_real = jnp.concatenate([Wr3, Wi3], axis=-1).astype(weight_dtype)
    w_for_imag = jnp.concatenate([-Wi3, Wr3], axis=-1).astype(weight_dtype)
    # apply_complex bias folding: real gets (br - bi), imag gets (br + bi);
    # replicated per output-pixel phase.
    b_cat = jnp.concatenate([jnp.tile(br - bi, 4), jnp.tile(br + bi, 4)])
    b_cat = b_cat.reshape(1, -1).astype(jnp.float32)       # (1, 8*Cout)
    return dict(w_for_real=w_for_real, w_for_imag=w_for_imag, b_cat=b_cat)


# ---------------------------------------------------------------------------
# Forward
# ---------------------------------------------------------------------------

def cup_forward(params, xr, xi, *, c_out, relu=True, compute_dtype=jnp.bfloat16):
    """CUp forward: complex_relu(ComplexConvTranspose2d(k=4, s=2, p=1)(x)).
    xr/xi: (N, H, W, Cin) float32.  Returns (yr, yi): (N, 2H, 2W, Cout) f32."""
    N, H, W, C = xr.shape
    co = 8 * c_out   # [4 real phases | 4 imag phases] * Cout, unpadded

    # Pad-1 halo + bf16 cast (single small XLA copy, ~1.27x the raw input).
    pad = ((0, 0), (1, 1), (1, 1), (0, 0))
    xr_p = jnp.pad(xr.astype(compute_dtype), pad)
    xi_p = jnp.pad(xi.astype(compute_dtype), pad)

    y = pl.pallas_call(
        functools.partial(_cup_kernel, H=H, W=W, relu=relu),
        out_shape=jax.ShapeDtypeStruct((N, H * W, co), compute_dtype),
        grid=(N,),
        in_specs=[
            # activation slabs: one image (+halo) per grid step, double-buffered
            pl.BlockSpec((1, H + 2, W + 2, C), lambda n: (n, 0, 0, 0)),
            pl.BlockSpec((1, H + 2, W + 2, C), lambda n: (n, 0, 0, 0)),
            # weights / bias: resident (constant block index)
            pl.BlockSpec((9, C, co), lambda n: (0, 0, 0)),
            pl.BlockSpec((9, C, co), lambda n: (0, 0, 0)),
            pl.BlockSpec((1, co), lambda n: (0, 0)),
        ],
        out_specs=pl.BlockSpec((1, H * W, co), lambda n: (n, 0, 0)),
        compiler_params=pltpu.CompilerParams(
            dimension_semantics=("parallel",),   # N=2 -> both v7x TCs busy
            vmem_limit_bytes=32 * 1024 * 1024,   # safe on v5e/v6e/v7x
        ),
    )(xr_p, xi_p, params["w_for_real"], params["w_for_imag"], params["b_cat"])

    # Depth-to-space on small bf16 arrays (XLA glue).
    yr = y[..., : 4 * c_out].reshape(N, H, W, 2, 2, c_out)
    yi = y[..., 4 * c_out:].reshape(N, H, W, 2, 2, c_out)

    def depth_to_space(t):   # (N,H,W,a,b,Co) -> (N,2H,2W,Co)
        t = jnp.transpose(t, (0, 1, 3, 2, 4, 5)).reshape(N, 2 * H, 2 * W, c_out)
        return t.astype(jnp.float32)

    return depth_to_space(yr), depth_to_space(yi)


# ---------------------------------------------------------------------------
# Pure-JAX reference (for validation) — torch ConvTranspose2d semantics
# ---------------------------------------------------------------------------

def _conv_transpose_ref(x, w, b):
    """x: (N,H,W,Cin); w: torch ConvTranspose2d weight (Cin,Cout,4,4);
    stride=2, padding=1."""
    k = jnp.transpose(w[:, :, ::-1, ::-1], (2, 3, 0, 1))   # (kh, kw, Cin, Cout)
    y = jax.lax.conv_general_dilated(
        x, k, window_strides=(1, 1), padding=[(2, 2), (2, 2)],
        lhs_dilation=(2, 2), dimension_numbers=("NHWC", "HWIO", "NHWC"))
    return y + b


def cup_reference(wr, wi, br, bi, xr, xi):
    yr = _conv_transpose_ref(xr, wr, br) - _conv_transpose_ref(xi, wi, bi)
    yi = _conv_transpose_ref(xi, wr, br) + _conv_transpose_ref(xr, wi, bi)
    return jnp.maximum(yr, 0.0), jnp.maximum(yi, 0.0)       # complex_relu


# ---------------------------------------------------------------------------
# main
# ---------------------------------------------------------------------------

if __name__ == "__main__":
    key = jax.random.PRNGKey(0)
    kw1, kw2, kb1, kb2, kx1, kx2 = jax.random.split(key, 6)

    N, H, W = 2, 16, 16
    c_in, c_out = 16, 8

    bound = 1.0 / math.sqrt(c_in * 4 * 4)
    wr = jax.random.uniform(kw1, (c_in, c_out, 4, 4), jnp.float32, -bound, bound)
    wi = jax.random.uniform(kw2, (c_in, c_out, 4, 4), jnp.float32, -bound, bound)
    br = jax.random.uniform(kb1, (c_out,), jnp.float32, -bound, bound)
    bi = jax.random.uniform(kb2, (c_out,), jnp.float32, -bound, bound)

    xr = jax.random.normal(kx1, (N, H, W, c_in), jnp.float32)
    xi = jax.random.normal(kx2, (N, H, W, c_in), jnp.float32)

    params = pack_cup_params(wr, wi, br, bi)

    fwd = jax.jit(functools.partial(cup_forward, c_out=c_out))
    yr, yi = fwd(params, xr, xi)
    jax.block_until_ready((yr, yi))

    assert yr.shape == (N, 2 * H, 2 * W, c_out)
    assert yi.shape == (N, 2 * H, 2 * W, c_out)

    # Validate against the pure-JAX reference using bf16-rounded operands
    # (the same values the kernel sees); the remaining differences are f32
    # accumulation order and the bf16 rounding of the kernel output.
    q = lambda t: t.astype(jnp.bfloat16).astype(jnp.float32)
    rr, ri = cup_reference(q(wr), q(wi), br, bi, q(xr), q(xi))
    err = max(float(jnp.max(jnp.abs(yr - rr))), float(jnp.max(jnp.abs(yi - ri))))
    assert err < 3e-2, f"max abs err {err}"

    print("KERNEL_OK")
</pallas_src>

<mosaic_0001>
module attributes {stable_mosaic.version = 11 : i64} {
  func.func @_cup_kernel(%arg0: i32, %arg1: memref<1x18x18x16xbf16, #tpu.memory_space<vmem>>, %arg2: memref<1x18x18x16xbf16, #tpu.memory_space<vmem>>, %arg3: memref<9x16x64xbf16, #tpu.memory_space<vmem>>, %arg4: memref<9x16x64xbf16, #tpu.memory_space<vmem>>, %arg5: memref<1x64xf32, #tpu.memory_space<vmem>>, %arg6: memref<1x256x64xbf16, #tpu.memory_space<vmem>>) attributes {dimension_semantics = [#tpu.dimension_semantics<parallel>], iteration_bounds = array<i64: 2>, scalar_prefetch = 0 : i64, scratch_operands = 0 : i64, tpu.core_type = #tpu.core_type<tc>, window_params = [{transform_indices = @transform_0, window_bounds = array<i64: 1, 18, 18, 16>}, {transform_indices = @transform_1, window_bounds = array<i64: 1, 18, 18, 16>}, {pipeline_mode = #tpu.pipeline_mode<synchronous>, transform_indices = @transform_2, window_bounds = array<i64: 9, 16, 64>}, {pipeline_mode = #tpu.pipeline_mode<synchronous>, transform_indices = @transform_3, window_bounds = array<i64: 9, 16, 64>}, {pipeline_mode = #tpu.pipeline_mode<synchronous>, transform_indices = @transform_4, window_bounds = array<i64: 1, 64>}, {transform_indices = @transform_5, window_bounds = array<i64: 1, 256, 64>}]} {
    %cst = arith.constant 0.000000e+00 : f32
    %0 = vector.broadcast %cst : f32 to vector<256x64xf32>
    %c0 = arith.constant 0 : index
    %c0_0 = arith.constant 0 : index
    %c0_1 = arith.constant 0 : index
    %c0_2 = arith.constant 0 : index
    %1 = vector.load %arg1[%c0, %c0_0, %c0_1, %c0_2] : memref<1x18x18x16xbf16, #tpu.memory_space<vmem>>, vector<1x16x16x16xbf16>
    %2 = vector.shape_cast %1 : vector<1x16x16x16xbf16> to vector<16x16x16xbf16>
    %3 = vector.shape_cast %2 : vector<16x16x16xbf16> to vector<256x16xbf16>
    %c0_3 = arith.constant 0 : index
    %c0_4 = arith.constant 0 : index
    %c0_5 = arith.constant 0 : index
    %c0_6 = arith.constant 0 : index
    %4 = vector.load %arg2[%c0_3, %c0_4, %c0_5, %c0_6] : memref<1x18x18x16xbf16, #tpu.memory_space<vmem>>, vector<1x16x16x16xbf16>
    %5 = vector.shape_cast %4 : vector<1x16x16x16xbf16> to vector<16x16x16xbf16>
    %6 = vector.shape_cast %5 : vector<16x16x16xbf16> to vector<256x16xbf16>
    %c0_7 = arith.constant 0 : index
    %c0_8 = arith.constant 0 : index
    %c0_9 = arith.constant 0 : index
    %7 = vector.load %arg3[%c0_7, %c0_8, %c0_9] : memref<9x16x64xbf16, #tpu.memory_space<vmem>>, vector<1x16x64xbf16>
    %8 = vector.shape_cast %7 : vector<1x16x64xbf16> to vector<16x64xbf16>
    %cst_10 = arith.constant dense<0.000000e+00> : vector<256x64xf32>
    %9 = tpu.matmul %3, %8, %cst_10 {dimension_numbers = #tpu.dot_dimension_numbers<[1], [0], [0], [1], [0, 0, 1, 1], [], []>} : vector<256x16xbf16>, vector<16x64xbf16>, vector<256x64xf32> -> vector<256x64xf32>
    %10 = arith.addf %0, %9 : vector<256x64xf32>
    %c0_11 = arith.constant 0 : index
    %c0_12 = arith.constant 0 : index
    %c0_13 = arith.constant 0 : index
    %11 = vector.load %arg4[%c0_11, %c0_12, %c0_13] : memref<9x16x64xbf16, #tpu.memory_space<vmem>>, vector<1x16x64xbf16>
    %12 = vector.shape_cast %11 : vector<1x16x64xbf16> to vector<16x64xbf16>
    %cst_14 = arith.constant dense<0.000000e+00> : vector<256x64xf32>
    %13 = tpu.matmul %6, %12, %cst_14 {dimension_numbers = #tpu.dot_dimension_numbers<[1], [0], [0], [1], [0, 0, 1, 1], [], []>} : vector<256x16xbf16>, vector<16x64xbf16>, vector<256x64xf32> -> vector<256x64xf32>
    %14 = arith.addf %10, %13 : vector<256x64xf32>
    %c0_15 = arith.constant 0 : index
    %c0_16 = arith.constant 0 : index
    %c1 = arith.constant 1 : index
    %c0_17 = arith.constant 0 : index
    %15 = vector.load %arg1[%c0_15, %c0_16, %c1, %c0_17] : memref<1x18x18x16xbf16, #tpu.memory_space<vmem>>, vector<1x16x16x16xbf16>
    %16 = vector.shape_cast %15 : vector<1x16x16x16xbf16> to vector<16x16x16xbf16>
    %17 = vector.shape_cast %16 : vector<16x16x16xbf16> to vector<256x16xbf16>
    %c0_18 = arith.constant 0 : index
    %c0_19 = arith.constant 0 : index
    %c1_20 = arith.constant 1 : index
    %c0_21 = arith.constant 0 : index
    %18 = vector.load %arg2[%c0_18, %c0_19, %c1_20, %c0_21] : memref<1x18x18x16xbf16, #tpu.memory_space<vmem>>, vector<1x16x16x16xbf16>
    %19 = vector.shape_cast %18 : vector<1x16x16x16xbf16> to vector<16x16x16xbf16>
    %20 = vector.shape_cast %19 : vector<16x16x16xbf16> to vector<256x16xbf16>
    %c1_22 = arith.constant 1 : index
    %c0_23 = arith.constant 0 : index
    %c0_24 = arith.constant 0 : index
    %21 = vector.load %arg3[%c1_22, %c0_23, %c0_24] : memref<9x16x64xbf16, #tpu.memory_space<vmem>>, vector<1x16x64xbf16>
    %22 = vector.shape_cast %21 : vector<1x16x64xbf16> to vector<16x64xbf16>
    %cst_25 = arith.constant dense<0.000000e+00> : vector<256x64xf32>
    %23 = tpu.matmul %17, %22, %cst_25 {dimension_numbers = #tpu.dot_dimension_numbers<[1], [0], [0], [1], [0, 0, 1, 1], [], []>} : vector<256x16xbf16>, vector<16x64xbf16>, vector<256x64xf32> -> vector<256x64xf32>
    %24 = arith.addf %14, %23 : vector<256x64xf32>
    %c1_26 = arith.constant 1 : index
    %c0_27 = arith.constant 0 : index
    %c0_28 = arith.constant 0 : index
    %25 = vector.load %arg4[%c1_26, %c0_27, %c0_28] : memref<9x16x64xbf16, #tpu.memory_space<vmem>>, vector<1x16x64xbf16>
    %26 = vector.shape_cast %25 : vector<1x16x64xbf16> to vector<16x64xbf16>
    %cst_29 = arith.constant dense<0.000000e+00> : vector<256x64xf32>
    %27 = tpu.matmul %20, %26, %cst_29 {dimension_numbers = #tpu.dot_dimension_numbers<[1], [0], [0], [1], [0, 0, 1, 1], [], []>} : vector<256x16xbf16>, vector<16x64xbf16>, vector<256x64xf32> -> vector<256x64xf32>
    %28 = arith.addf %24, %27 : vector<256x64xf32>
    %c0_30 = arith.constant 0 : index
    %c0_31 = arith.constant 0 : index
    %c2 = arith.constant 2 : index
    %c0_32 = arith.constant 0 : index
    %29 = vector.load %arg1[%c0_30, %c0_31, %c2, %c0_32] : memref<1x18x18x16xbf16, #tpu.memory_space<vmem>>, vector<1x16x16x16xbf16>
    %30 = vector.shape_cast %29 : vector<1x16x16x16xbf16> to vector<16x16x16xbf16>
    %31 = vector.shape_cast %30 : vector<16x16x16xbf16> to vector<256x16xbf16>
    %c0_33 = arith.constant 0 : index
    %c0_34 = arith.constant 0 : index
    %c2_35 = arith.constant 2 : index
    %c0_36 = arith.constant 0 : index
    %32 = vector.load %arg2[%c0_33, %c0_34, %c2_35, %c0_36] : memref<1x18x18x16xbf16, #tpu.memory_space<vmem>>, vector<1x16x16x16xbf16>
    %33 = vector.shape_cast %32 : vector<1x16x16x16xbf16> to vector<16x16x16xbf16>
    %34 = vector.shape_cast %33 : vector<16x16x16xbf16> to vector<256x16xbf16>
    %c2_37 = arith.constant 2 : index
    %c0_38 = arith.constant 0 : index
    %c0_39 = arith.constant 0 : index
    %35 = vector.load %arg3[%c2_37, %c0_38, %c0_39] : memref<9x16x64xbf16, #tpu.memory_space<vmem>>, vector<1x16x64xbf16>
    %36 = vector.shape_cast %35 : vector<1x16x64xbf16> to vector<16x64xbf16>
    %cst_40 = arith.constant dense<0.000000e+00> : vector<256x64xf32>
    %37 = tpu.matmul %31, %36, %cst_40 {dimension_numbers = #tpu.dot_dimension_numbers<[1], [0], [0], [1], [0, 0, 1, 1], [], []>} : vector<256x16xbf16>, vector<16x64xbf16>, vector<256x64xf32> -> vector<256x64xf32>
    %38 = arith.addf %28, %37 : vector<256x64xf32>
    %c2_41 = arith.constant 2 : index
    %c0_42 = arith.constant 0 : index
    %c0_43 = arith.constant 0 : index
    %39 = vector.load %arg4[%c2_41, %c0_42, %c0_43] : memref<9x16x64xbf16, #tpu.memory_space<vmem>>, vector<1x16x64xbf16>
    %40 = vector.shape_cast %39 : vector<1x16x64xbf16> to vector<16x64xbf16>
    %cst_44 = arith.constant dense<0.000000e+00> : vector<256x64xf32>
    %41 = tpu.matmul %34, %40, %cst_44 {dimension_numbers = #tpu.dot_dimension_numbers<[1], [0], [0], [1], [0, 0, 1, 1], [], []>} : vector<256x16xbf16>, vector<16x64xbf16>, vector<256x64xf32> -> vector<256x64xf32>
    %42 = arith.addf %38, %41 : vector<256x64xf32>
    %c0_45 = arith.constant 0 : index
    %c1_46 = arith.constant 1 : index
    %c0_47 = arith.constant 0 : index
    %c0_48 = arith.constant 0 : index
    %43 = vector.load %arg1[%c0_45, %c1_46, %c0_47, %c0_48] : memref<1x18x18x16xbf16, #tpu.memory_space<vmem>>, vector<1x16x16x16xbf16>
    %44 = vector.shape_cast %43 : vector<1x16x16x16xbf16> to vector<16x16x16xbf16>
    %45 = vector.shape_cast %44 : vector<16x16x16xbf16> to vector<256x16xbf16>
    %c0_49 = arith.constant 0 : index
    %c1_50 = arith.constant 1 : index
    %c0_51 = arith.constant 0 : index
    %c0_52 = arith.constant 0 : index
    %46 = vector.load %arg2[%c0_49, %c1_50, %c0_51, %c0_52] : memref<1x18x18x16xbf16, #tpu.memory_space<vmem>>, vector<1x16x16x16xbf16>
    %47 = vector.shape_cast %46 : vector<1x16x16x16xbf16> to vector<16x16x16xbf16>
    %48 = vector.shape_cast %47 : vector<16x16x16xbf16> to vector<256x16xbf16>
    %c3 = arith.constant 3 : index
    %c0_53 = arith.constant 0 : index
    %c0_54 = arith.constant 0 : index
    %49 = vector.load %arg3[%c3, %c0_53, %c0_54] : memref<9x16x64xbf16, #tpu.memory_space<vmem>>, vector<1x16x64xbf16>
    %50 = vector.shape_cast %49 : vector<1x16x64xbf16> to vector<16x64xbf16>
    %cst_55 = arith.constant dense<0.000000e+00> : vector<256x64xf32>
    %51 = tpu.matmul %45, %50, %cst_55 {dimension_numbers = #tpu.dot_dimension_numbers<[1], [0], [0], [1], [0, 0, 1, 1], [], []>} : vector<256x16xbf16>, vector<16x64xbf16>, vector<256x64xf32> -> vector<256x64xf32>
    %52 = arith.addf %42, %51 : vector<256x64xf32>
    %c3_56 = arith.constant 3 : index
    %c0_57 = arith.constant 0 : index
    %c0_58 = arith.constant 0 : index
    %53 = vector.load %arg4[%c3_56, %c0_57, %c0_58] : memref<9x16x64xbf16, #tpu.memory_space<vmem>>, vector<1x16x64xbf16>
    %54 = vector.shape_cast %53 : vector<1x16x64xbf16> to vector<16x64xbf16>
    %cst_59 = arith.constant dense<0.000000e+00> : vector<256x64xf32>
    %55 = tpu.matmul %48, %54, %cst_59 {dimension_numbers = #tpu.dot_dimension_numbers<[1], [0], [0], [1], [0, 0, 1, 1], [], []>} : vector<256x16xbf16>, vector<16x64xbf16>, vector<256x64xf32> -> vector<256x64xf32>
    %56 = arith.addf %52, %55 : vector<256x64xf32>
    %c0_60 = arith.constant 0 : index
    %c1_61 = arith.constant 1 : index
    %c1_62 = arith.constant 1 : index
    %c0_63 = arith.constant 0 : index
    %57 = vector.load %arg1[%c0_60, %c1_61, %c1_62, %c0_63] : memref<1x18x18x16xbf16, #tpu.memory_space<vmem>>, vector<1x16x16x16xbf16>
    %58 = vector.shape_cast %57 : vector<1x16x16x16xbf16> to vector<16x16x16xbf16>
    %59 = vector.shape_cast %58 : vector<16x16x16xbf16> to vector<256x16xbf16>
    %c0_64 = arith.constant 0 : index
    %c1_65 = arith.constant 1 : index
    %c1_66 = arith.constant 1 : index
    %c0_67 = arith.constant 0 : index
    %60 = vector.load %arg2[%c0_64, %c1_65, %c1_66, %c0_67] : memref<1x18x18x16xbf16, #tpu.memory_space<vmem>>, vector<1x16x16x16xbf16>
    %61 = vector.shape_cast %60 : vector<1x16x16x16xbf16> to vector<16x16x16xbf16>
    %62 = vector.shape_cast %61 : vector<16x16x16xbf16> to vector<256x16xbf16>
    %c4 = arith.constant 4 : index
    %c0_68 = arith.constant 0 : index
    %c0_69 = arith.constant 0 : index
    %63 = vector.load %arg3[%c4, %c0_68, %c0_69] : memref<9x16x64xbf16, #tpu.memory_space<vmem>>, vector<1x16x64xbf16>
    %64 = vector.shape_cast %63 : vector<1x16x64xbf16> to vector<16x64xbf16>
    %cst_70 = arith.constant dense<0.000000e+00> : vector<256x64xf32>
    %65 = tpu.matmul %59, %64, %cst_70 {dimension_numbers = #tpu.dot_dimension_numbers<[1], [0], [0], [1], [0, 0, 1, 1], [], []>} : vector<256x16xbf16>, vector<16x64xbf16>, vector<256x64xf32> -> vector<256x64xf32>
    %66 = arith.addf %56, %65 : vector<256x64xf32>
    %c4_71 = arith.constant 4 : index
    %c0_72 = arith.constant 0 : index
    %c0_73 = arith.constant 0 : index
    %67 = vector.load %arg4[%c4_71, %c0_72, %c0_73] : memref<9x16x64xbf16, #tpu.memory_space<vmem>>, vector<1x16x64xbf16>
    %68 = vector.shape_cast %67 : vector<1x16x64xbf16> to vector<16x64xbf16>
    %cst_74 = arith.constant dense<0.000000e+00> : vector<256x64xf32>
    %69 = tpu.matmul %62, %68, %cst_74 {dimension_numbers = #tpu.dot_dimension_numbers<[1], [0], [0], [1], [0, 0, 1, 1], [], []>} : vector<256x16xbf16>, vector<16x64xbf16>, vector<256x64xf32> -> vector<256x64xf32>
    %70 = arith.addf %66, %69 : vector<256x64xf32>
    %c0_75 = arith.constant 0 : index
    %c1_76 = arith.constant 1 : index
    %c2_77 = arith.constant 2 : index
    %c0_78 = arith.constant 0 : index
    %71 = vector.load %arg1[%c0_75, %c1_76, %c2_77, %c0_78] : memref<1x18x18x16xbf16, #tpu.memory_space<vmem>>, vector<1x16x16x16xbf16>
    %72 = vector.shape_cast %71 : vector<1x16x16x16xbf16> to vector<16x16x16xbf16>
    %73 = vector.shape_cast %72 : vector<16x16x16xbf16> to vector<256x16xbf16>
    %c0_79 = arith.constant 0 : index
    %c1_80 = arith.constant 1 : index
    %c2_81 = arith.constant 2 : index
    %c0_82 = arith.constant 0 : index
    %74 = vector.load %arg2[%c0_79, %c1_80, %c2_81, %c0_82] : memref<1x18x18x16xbf16, #tpu.memory_space<vmem>>, vector<1x16x16x16xbf16>
    %75 = vector.shape_cast %74 : vector<1x16x16x16xbf16> to vector<16x16x16xbf16>
    %76 = vector.shape_cast %75 : vector<16x16x16xbf16> to vector<256x16xbf16>
    %c5 = arith.constant 5 : index
    %c0_83 = arith.constant 0 : index
    %c0_84 = arith.constant 0 : index
    %77 = vector.load %arg3[%c5, %c0_83, %c0_84] : memref<9x16x64xbf16, #tpu.memory_space<vmem>>, vector<1x16x64xbf16>
    %78 = vector.shape_cast %77 : vector<1x16x64xbf16> to vector<16x64xbf16>
    %cst_85 = arith.constant dense<0.000000e+00> : vector<256x64xf32>
    %79 = tpu.matmul %73, %78, %cst_85 {dimension_numbers = #tpu.dot_dimension_numbers<[1], [0], [0], [1], [0, 0, 1, 1], [], []>} : vector<256x16xbf16>, vector<16x64xbf16>, vector<256x64xf32> -> vector<256x64xf32>
    %80 = arith.addf %70, %79 : vector<256x64xf32>
    %c5_86 = arith.constant 5 : index
    %c0_87 = arith.constant 0 : index
    %c0_88 = arith.constant 0 : index
    %81 = vector.load %arg4[%c5_86, %c0_87, %c0_88] : memref<9x16x64xbf16, #tpu.memory_space<vmem>>, vector<1x16x64xbf16>
    %82 = vector.shape_cast %81 : vector<1x16x64xbf16> to vector<16x64xbf16>
    %cst_89 = arith.constant dense<0.000000e+00> : vector<256x64xf32>
    %83 = tpu.matmul %76, %82, %cst_89 {dimension_numbers = #tpu.dot_dimension_numbers<[1], [0], [0], [1], [0, 0, 1, 1], [], []>} : vector<256x16xbf16>, vector<16x64xbf16>, vector<256x64xf32> -> vector<256x64xf32>
    %84 = arith.addf %80, %83 : vector<256x64xf32>
    %c0_90 = arith.constant 0 : index
    %c2_91 = arith.constant 2 : index
    %c0_92 = arith.constant 0 : index
    %c0_93 = arith.constant 0 : index
    %85 = vector.load %arg1[%c0_90, %c2_91, %c0_92, %c0_93] : memref<1x18x18x16xbf16, #tpu.memory_space<vmem>>, vector<1x16x16x16xbf16>
    %86 = vector.shape_cast %85 : vector<1x16x16x16xbf16> to vector<16x16x16xbf16>
    %87 = vector.shape_cast %86 : vector<16x16x16xbf16> to vector<256x16xbf16>
    %c0_94 = arith.constant 0 : index
    %c2_95 = arith.constant 2 : index
    %c0_96 = arith.constant 0 : index
    %c0_97 = arith.constant 0 : index
    %88 = vector.load %arg2[%c0_94, %c2_95, %c0_96, %c0_97] : memref<1x18x18x16xbf16, #tpu.memory_space<vmem>>, vector<1x16x16x16xbf16>
    %89 = vector.shape_cast %88 : vector<1x16x16x16xbf16> to vector<16x16x16xbf16>
    %90 = vector.shape_cast %89 : vector<16x16x16xbf16> to vector<256x16xbf16>
    %c6 = arith.constant 6 : index
    %c0_98 = arith.constant 0 : index
    %c0_99 = arith.constant 0 : index
    %91 = vector.load %arg3[%c6, %c0_98, %c0_99] : memref<9x16x64xbf16, #tpu.memory_space<vmem>>, vector<1x16x64xbf16>
    %92 = vector.shape_cast %91 : vector<1x16x64xbf16> to vector<16x64xbf16>
    %cst_100 = arith.constant dense<0.000000e+00> : vector<256x64xf32>
    %93 = tpu.matmul %87, %92, %cst_100 {dimension_numbers = #tpu.dot_dimension_numbers<[1], [0], [0], [1], [0, 0, 1, 1], [], []>} : vector<256x16xbf16>, vector<16x64xbf16>, vector<256x64xf32> -> vector<256x64xf32>
    %94 = arith.addf %84, %93 : vector<256x64xf32>
    %c6_101 = arith.constant 6 : index
    %c0_102 = arith.constant 0 : index
    %c0_103 = arith.constant 0 : index
    %95 = vector.load %arg4[%c6_101, %c0_102, %c0_103] : memref<9x16x64xbf16, #tpu.memory_space<vmem>>, vector<1x16x64xbf16>
    %96 = vector.shape_cast %95 : vector<1x16x64xbf16> to vector<16x64xbf16>
    %cst_104 = arith.constant dense<0.000000e+00> : vector<256x64xf32>
    %97 = tpu.matmul %90, %96, %cst_104 {dimension_numbers = #tpu.dot_dimension_numbers<[1], [0], [0], [1], [0, 0, 1, 1], [], []>} : vector<256x16xbf16>, vector<16x64xbf16>, vector<256x64xf32> -> vector<256x64xf32>
    %98 = arith.addf %94, %97 : vector<256x64xf32>
    %c0_105 = arith.constant 0 : index
    %c2_106 = arith.constant 2 : index
    %c1_107 = arith.constant 1 : index
    %c0_108 = arith.constant 0 : index
    %99 = vector.load %arg1[%c0_105, %c2_106, %c1_107, %c0_108] : memref<1x18x18x16xbf16, #tpu.memory_space<vmem>>, vector<1x16x16x16xbf16>
    %100 = vector.shape_cast %99 : vector<1x16x16x16xbf16> to vector<16x16x16xbf16>
    %101 = vector.shape_cast %100 : vector<16x16x16xbf16> to vector<256x16xbf16>
    %c0_109 = arith.constant 0 : index
    %c2_110 = arith.constant 2 : index
    %c1_111 = arith.constant 1 : index
    %c0_112 = arith.constant 0 : index
    %102 = vector.load %arg2[%c0_109, %c2_110, %c1_111, %c0_112] : memref<1x18x18x16xbf16, #tpu.memory_space<vmem>>, vector<1x16x16x16xbf16>
    %103 = vector.shape_cast %102 : vector<1x16x16x16xbf16> to vector<16x16x16xbf16>
    %104 = vector.shape_cast %103 : vector<16x16x16xbf16> to vector<256x16xbf16>
    %c7 = arith.constant 7 : index
    %c0_113 = arith.constant 0 : index
    %c0_114 = arith.constant 0 : index
    %105 = vector.load %arg3[%c7, %c0_113, %c0_114] : memref<9x16x64xbf16, #tpu.memory_space<vmem>>, vector<1x16x64xbf16>
    %106 = vector.shape_cast %105 : vector<1x16x64xbf16> to vector<16x64xbf16>
    %cst_115 = arith.constant dense<0.000000e+00> : vector<256x64xf32>
    %107 = tpu.matmul %101, %106, %cst_115 {dimension_numbers = #tpu.dot_dimension_numbers<[1], [0], [0], [1], [0, 0, 1, 1], [], []>} : vector<256x16xbf16>, vector<16x64xbf16>, vector<256x64xf32> -> vector<256x64xf32>
    %108 = arith.addf %98, %107 : vector<256x64xf32>
    %c7_116 = arith.constant 7 : index
    %c0_117 = arith.constant 0 : index
    %c0_118 = arith.constant 0 : index
    %109 = vector.load %arg4[%c7_116, %c0_117, %c0_118] : memref<9x16x64xbf16, #tpu.memory_space<vmem>>, vector<1x16x64xbf16>
    %110 = vector.shape_cast %109 : vector<1x16x64xbf16> to vector<16x64xbf16>
    %cst_119 = arith.constant dense<0.000000e+00> : vector<256x64xf32>
    %111 = tpu.matmul %104, %110, %cst_119 {dimension_numbers = #tpu.dot_dimension_numbers<[1], [0], [0], [1], [0, 0, 1, 1], [], []>} : vector<256x16xbf16>, vector<16x64xbf16>, vector<256x64xf32> -> vector<256x64xf32>
    %112 = arith.addf %108, %111 : vector<256x64xf32>
    %c0_120 = arith.constant 0 : index
    %c2_121 = arith.constant 2 : index
    %c2_122 = arith.constant 2 : index
    %c0_123 = arith.constant 0 : index
    %113 = vector.load %arg1[%c0_120, %c2_121, %c2_122, %c0_123] : memref<1x18x18x16xbf16, #tpu.memory_space<vmem>>, vector<1x16x16x16xbf16>
    %114 = vector.shape_cast %113 : vector<1x16x16x16xbf16> to vector<16x16x16xbf16>
    %115 = vector.shape_cast %114 : vector<16x16x16xbf16> to vector<256x16xbf16>
    %c0_124 = arith.constant 0 : index
    %c2_125 = arith.constant 2 : index
    %c2_126 = arith.constant 2 : index
    %c0_127 = arith.constant 0 : index
    %116 = vector.load %arg2[%c0_124, %c2_125, %c2_126, %c0_127] : memref<1x18x18x16xbf16, #tpu.memory_space<vmem>>, vector<1x16x16x16xbf16>
    %117 = vector.shape_cast %116 : vector<1x16x16x16xbf16> to vector<16x16x16xbf16>
    %118 = vector.shape_cast %117 : vector<16x16x16xbf16> to vector<256x16xbf16>
    %c8 = arith.constant 8 : index
    %c0_128 = arith.constant 0 : index
    %c0_129 = arith.constant 0 : index
    %119 = vector.load %arg3[%c8, %c0_128, %c0_129] : memref<9x16x64xbf16, #tpu.memory_space<vmem>>, vector<1x16x64xbf16>
    %120 = vector.shape_cast %119 : vector<1x16x64xbf16> to vector<16x64xbf16>
    %cst_130 = arith.constant dense<0.000000e+00> : vector<256x64xf32>
    %121 = tpu.matmul %115, %120, %cst_130 {dimension_numbers = #tpu.dot_dimension_numbers<[1], [0], [0], [1], [0, 0, 1, 1], [], []>} : vector<256x16xbf16>, vector<16x64xbf16>, vector<256x64xf32> -> vector<256x64xf32>
    %122 = arith.addf %112, %121 : vector<256x64xf32>
    %c8_131 = arith.constant 8 : index
    %c0_132 = arith.constant 0 : index
    %c0_133 = arith.constant 0 : index
    %123 = vector.load %arg4[%c8_131, %c0_132, %c0_133] : memref<9x16x64xbf16, #tpu.memory_space<vmem>>, vector<1x16x64xbf16>
    %124 = vector.shape_cast %123 : vector<1x16x64xbf16> to vector<16x64xbf16>
    %cst_134 = arith.constant dense<0.000000e+00> : vector<256x64xf32>
    %125 = tpu.matmul %118, %124, %cst_134 {dimension_numbers = #tpu.dot_dimension_numbers<[1], [0], [0], [1], [0, 0, 1, 1], [], []>} : vector<256x16xbf16>, vector<16x64xbf16>, vector<256x64xf32> -> vector<256x64xf32>
    %126 = arith.addf %122, %125 : vector<256x64xf32>
    %c0_135 = arith.constant 0 : index
    %c0_136 = arith.constant 0 : index
    %127 = vector.load %arg5[%c0_135, %c0_136] : memref<1x64xf32, #tpu.memory_space<vmem>>, vector<1x64xf32>
    %128 = vector.broadcast %127 : vector<1x64xf32> to vector<256x64xf32>
    %129 = arith.addf %126, %128 : vector<256x64xf32>
    %cst_137 = arith.constant 0.000000e+00 : f32
    %130 = vector.broadcast %cst_137 : f32 to vector<256x64xf32>
    %131 = arith.maximumf %129, %130 : vector<256x64xf32>
    %132 = arith.truncf %131 : vector<256x64xf32> to vector<256x64xbf16>
    %c0_138 = arith.constant 0 : index
    %c0_139 = arith.constant 0 : index
    %c0_140 = arith.constant 0 : index
    %133 = vector.load %arg6[%c0_138, %c0_139, %c0_140] : memref<1x256x64xbf16, #tpu.memory_space<vmem>>, vector<1x256x64xbf16>
    %134 = vector.shape_cast %133 : vector<1x256x64xbf16> to vector<256x64xbf16>
    %135 = vector.shape_cast %132 : vector<256x64xbf16> to vector<1x256x64xbf16>
    tpu.vector_store %arg6[%c0_138, %c0_139, %c0_140], %135 {strides = array<i32>} : memref<1x256x64xbf16, #tpu.memory_space<vmem>>, vector<1x256x64xbf16>,
    return
  }
  func.func @transform_0(%arg0: i32) -> (i32, i32, i32, i32) {
    %c0_i32 = arith.constant 0 : i32
    %c0_i32_0 = arith.constant 0 : i32
    %c0_i32_1 = arith.constant 0 : i32
    %c0_i32_2 = arith.constant 0 : i32
    return %arg0, %c0_i32, %c0_i32_0, %c0_i32_1 : i32, i32, i32, i32
  }
  func.func @transform_1(%arg0: i32) -> (i32, i32, i32, i32) {
    %c0_i32 = arith.constant 0 : i32
    %c0_i32_0 = arith.constant 0 : i32
    %c0_i32_1 = arith.constant 0 : i32
    %c0_i32_2 = arith.constant 0 : i32
    return %arg0, %c0_i32, %c0_i32_0, %c0_i32_1 : i32, i32, i32, i32
  }
  func.func @transform_2(%arg0: i32) -> (i32, i32, i32) {
    %c0_i32 = arith.constant 0 : i32
    %c0_i32_0 = arith.constant 0 : i32
    %c0_i32_1 = arith.constant 0 : i32
    %c0_i32_2 = arith.constant 0 : i32
    return %c0_i32, %c0_i32_0, %c0_i32_1 : i32, i32, i32
  }
  func.func @transform_3(%arg0: i32) -> (i32, i32, i32) {
    %c0_i32 = arith.constant 0 : i32
    %c0_i32_0 = arith.constant 0 : i32
    %c0_i32_1 = arith.constant 0 : i32
    %c0_i32_2 = arith.constant 0 : i32
    return %c0_i32, %c0_i32_0, %c0_i32_1 : i32, i32, i32
  }
  func.func @transform_4(%arg0: i32) -> (i32, i32) {
    %c0_i32 = arith.constant 0 : i32
    %c0_i32_0 = arith.constant 0 : i32
    %c0_i32_1 = arith.constant 0 : i32
    return %c0_i32, %c0_i32_0 : i32, i32
  }
  func.func @transform_5(%arg0: i32) -> (i32, i32, i32) {
    %c0_i32 = arith.constant 0 : i32
    %c0_i32_0 = arith.constant 0 : i32
    %c0_i32_1 = arith.constant 0 : i32
    return %arg0, %c0_i32, %c0_i32_0 : i32, i32, i32
  }
}

</mosaic_0001>

<llo_original>
// kernel: cup_forward.1
$region0: #{cup_forward.1}
  #allocation0 [shape = 'u32[]', space=smem, size = 0x4, offset = 0x4, fixed_abs, tag = 'smem constant byte address 0x4 - core index']
  #allocation1 [shape = 'u32[72,128]{1,0:T(1,128)}', space=vmem, size = 0x9000, scoped, tag = 'internal scratch']
  %s0 = inlined_call_operand.vmem [shape: bf16[2,18,18,16], index: 0, kind: input, shape index: {}]
  %s1 = inlined_call_operand.vmem [shape: bf16[2,18,18,16], index: 1, kind: input, shape index: {}]
  %s2 = inlined_call_operand.vmem [shape: bf16[9,16,64], index: 2, kind: input, shape index: {}]
  %s3 = inlined_call_operand.vmem [shape: bf16[9,16,64], index: 3, kind: input, shape index: {}]
  %s4 = inlined_call_operand.vmem [shape: f32[1,64], index: 4, kind: input, shape index: {}]
  %s5 = inlined_call_operand.vmem [shape: bf16[2,256,64], index: 5, kind: output, shape index: {}]
  %s6 = sld [smem:[#allocation0]]
  $region53: #{cup_forward.1} parent=0
    _
  %s8 = ssub.s32 1, %s6
  %s9 = scalar_select 0, %s8, %s6
  loop: start=0, step=1, limit=4
  $region2: #{cup_forward.1} parent=0 // loop_pre_header
    _
  $region3: #{cup_forward.1} parent=0 // loop_header
    %s11 = sphi 0, %s15
    %p12 = scmp.ge.s32.totalorder %s11, 4
    %s21 = sphi 0, %s23
    %s24 = sphi 0, %s21
    %s25 = sphi 0, %s24
    %s41 = sphi 0, %s25
    %s47 = sphi 0, %s49
    %s50 = sphi 0, %s47
    %s51 = sphi 0, %s50
    %s67 = sphi 0, %s51
    %s71 = sphi 0, %s71
    %s73 = sphi 0, %s71
    %s74 = sphi 0, %s73
    %s88 = sphi 0, %s74
    %s92 = sphi 0, %s92
    %s94 = sphi 0, %s92
    %s95 = sphi 0, %s94
    %s109 = sphi 0, %s95
    %s113 = sphi 0, %s113
    %s115 = sphi 0, %s113
    %s116 = sphi 0, %s115
    %s130 = sphi 0, %s116
    %s136 = sphi 0, %s138
    %s139 = sphi 0, %s136
    %s140 = sphi 0, %s139
    %s156 = sphi 0, %s140
  $region4: #{cup_forward.1} parent=0 // loop_header_branch
    %14 = sbr.rel (%p12) target = $region8
  $region5: #{cup_forward.1} parent=0 // loop_body
    %s16 = ssub.s32 %s11, 1
    %s17 = ssub.s32 %s11, 2
    %s18 = sadd.s32 %s11, 1
    %s19 = ssub.s32 %s11, %s18
    %p20 = scmp.eq.s32.totalorder %s19, 0
    %s22 = sadd.s32 %s21, 1
    %s23 = scalar_select %p20, %s21, %s22
    %p26 = pneg %p20
    %p27 = scmp.eq.s32.totalorder %s11, 1
    %p28 = por %p26, %p27
    %p29 = scmp.ne.s32.totalorder %s21, %s24
    %p30 = scmp.eq.s32.totalorder %s11, 0
    %p31 = por %p29, %p30
    %p32 = scmp.ne.s32.totalorder %s21, %s24
    %p33 = scmp.eq.s32.totalorder %s16, 1
    %p34 = por %p32, %p33
    %p35 = scmp.ne.s32.totalorder %s24, %s25
    %p36 = scmp.eq.s32.totalorder %s16, 0
    %p37 = por %p35, %p36
    %p38 = scmp.ne.s32.totalorder %s24, %s25
    %p39 = scmp.eq.s32.totalorder %s17, 1
    %p40 = por %p38, %p39
    %p42 = scmp.ne.s32.totalorder %s25, %s41
    %p43 = scmp.eq.s32.totalorder %s17, 0
    %p44 = por %p42, %p43
    %s45 = ssub.s32 %s11, %s18
    %p46 = scmp.eq.s32.totalorder %s45, 0
    %s48 = sadd.s32 %s47, 1
    %s49 = scalar_select %p46, %s47, %s48
    %p52 = pneg %p46
    %p53 = scmp.eq.s32.totalorder %s11, 1
    %p54 = por %p52, %p53
    %p55 = scmp.ne.s32.totalorder %s47, %s50
    %p56 = scmp.eq.s32.totalorder %s11, 0
    %p57 = por %p55, %p56
    %p58 = scmp.ne.s32.totalorder %s47, %s50
    %p59 = scmp.eq.s32.totalorder %s16, 1
    %p60 = por %p58, %p59
    %p61 = scmp.ne.s32.totalorder %s50, %s51
    %p62 = scmp.eq.s32.totalorder %s16, 0
    %p63 = por %p61, %p62
    %p64 = scmp.ne.s32.totalorder %s50, %s51
    %p65 = scmp.eq.s32.totalorder %s17, 1
    %p66 = por %p64, %p65
    %p68 = scmp.ne.s32.totalorder %s51, %s67
    %p69 = scmp.eq.s32.totalorder %s17, 0
    %p70 = por %p68, %p69
    %s72 = sadd.s32 %s71, 1
    %p75 = scmp.eq.s32.totalorder %s11, 1
    %p76 = scmp.ne.s32.totalorder %s71, %s73
    %p77 = scmp.eq.s32.totalorder %s11, 0
    %p78 = por %p76, %p77
    %p79 = scmp.ne.s32.totalorder %s71, %s73
    %p80 = scmp.eq.s32.totalorder %s16, 1
    %p81 = por %p79, %p80
    %p82 = scmp.ne.s32.totalorder %s73, %s74
    %p83 = scmp.eq.s32.totalorder %s16, 0
    %p84 = por %p82, %p83
    %p85 = scmp.ne.s32.totalorder %s73, %s74
    %p86 = scmp.eq.s32.totalorder %s17, 1
    %p87 = por %p85, %p86
    %p89 = scmp.ne.s32.totalorder %s74, %s88
    %p90 = scmp.eq.s32.totalorder %s17, 0
    %p91 = por %p89, %p90
    %s93 = sadd.s32 %s92, 1
    %p96 = scmp.eq.s32.totalorder %s11, 1
    %p97 = scmp.ne.s32.totalorder %s92, %s94
    %p98 = scmp.eq.s32.totalorder %s11, 0
    %p99 = por %p97, %p98
    %p100 = scmp.ne.s32.totalorder %s92, %s94
    %p101 = scmp.eq.s32.totalorder %s16, 1
    %p102 = por %p100, %p101
    %p103 = scmp.ne.s32.totalorder %s94, %s95
    %p104 = scmp.eq.s32.totalorder %s16, 0
    %p105 = por %p103, %p104
    %p106 = scmp.ne.s32.totalorder %s94, %s95
    %p107 = scmp.eq.s32.totalorder %s17, 1
    %p108 = por %p106, %p107
    %p110 = scmp.ne.s32.totalorder %s95, %s109
    %p111 = scmp.eq.s32.totalorder %s17, 0
    %p112 = por %p110, %p111
    %s114 = sadd.s32 %s113, 1
    %p117 = scmp.eq.s32.totalorder %s11, 1
    %p118 = scmp.ne.s32.totalorder %s113, %s115
    %p119 = scmp.eq.s32.totalorder %s11, 0
    %p120 = por %p118, %p119
    %p121 = scmp.ne.s32.totalorder %s113, %s115
    %p122 = scmp.eq.s32.totalorder %s16, 1
    %p123 = por %p121, %p122
    %p124 = scmp.ne.s32.totalorder %s115, %s116
    %p125 = scmp.eq.s32.totalorder %s16, 0
    %p126 = por %p124, %p125
    %p127 = scmp.ne.s32.totalorder %s115, %s116
    %p128 = scmp.eq.s32.totalorder %s17, 1
    %p129 = por %p127, %p128
    %p131 = scmp.ne.s32.totalorder %s116, %s130
    %p132 = scmp.eq.s32.totalorder %s17, 0
    %p133 = por %p131, %p132
    %s134 = ssub.s32 %s11, %s18
    %p135 = scmp.eq.s32.totalorder %s134, 0
    %s137 = sadd.s32 %s136, 1
    %s138 = scalar_select %p135, %s136, %s137
    %p141 = pneg %p135
    %p142 = scmp.eq.s32.totalorder %s11, 1
    %p143 = por %p141, %p142
    %p144 = scmp.ne.s32.totalorder %s136, %s139
    %p145 = scmp.eq.s32.totalorder %s11, 0
    %p146 = por %p144, %p145
    %p147 = scmp.ne.s32.totalorder %s136, %s139
    %p148 = scmp.eq.s32.totalorder %s16, 1
    %p149 = por %p147, %p148
    %p150 = scmp.ne.s32.totalorder %s139, %s140
    %p151 = scmp.eq.s32.totalorder %s16, 0
    %p152 = por %p150, %p151
    %p153 = scmp.ne.s32.totalorder %s139, %s140
    %p154 = scmp.eq.s32.totalorder %s17, 1
    %p155 = por %p153, %p154
    %p157 = scmp.ne.s32.totalorder %s140, %s156
    %p158 = scmp.eq.s32.totalorder %s17, 0
    %p159 = por %p157, %p158
    %p160 = scmp.le.s32.totalorder 1, %s11
    %p161 = scmp.lt.s32.totalorder %s11, 3
    %p162 = pnand %p160, %p161
    %p163 = pneg %p162
    // Predicated region
    $region9: #{cup_forward.1} parent=5 // pred_check
      _
    $region10: #{cup_forward.1} parent=5 // pred_check_branch
      %165 = sbr.rel (%p162) target = $region12
    $region11: #{cup_forward.1} parent=5 // pred_region
      %s166 = ssub.s32 %s11, 1
      // Predicated region
      $region13: #{cup_forward.1} parent=11 // pred_check
        %p167 = pneg %p84
      $region14: #{cup_forward.1} parent=11 // pred_check_branch
        %169 = sbr.rel (%p167) target = $region16
      $region15: #{cup_forward.1} parent=11 // pred_region
        _
      $region16: #{cup_forward.1} parent=11 // pred_fallthru
        _
      // Predicated region
      $region17: #{cup_forward.1} parent=11 // pred_check
        %p170 = pneg %p105
      $region18: #{cup_forward.1} parent=11 // pred_check_branch
        %172 = sbr.rel (%p170) target = $region20
      $region19: #{cup_forward.1} parent=11 // pred_region
        _
      $region20: #{cup_forward.1} parent=11 // pred_fallthru
        _
      // Predicated region
      $region21: #{cup_forward.1} parent=11 // pred_check
        %p173 = pneg %p126
      $region22: #{cup_forward.1} parent=11 // pred_check_branch
        %175 = sbr.rel (%p173) target = $region24
      $region23: #{cup_forward.1} parent=11 // pred_region
        _
      $region24: #{cup_forward.1} parent=11 // pred_fallthru
        _
    $region12: #{cup_forward.1} parent=5 // pred_fallthru
      _
    %p176 = scmp.lt.s32.totalorder %s11, 2
    // Predicated region
    $region25: #{cup_forward.1} parent=5 // pred_check
      %p177 = pneg %p176
    $region26: #{cup_forward.1} parent=5 // pred_check_branch
      %179 = sbr.rel (%p177) target = $region28
    $region27: #{cup_forward.1} parent=5 // pred_region
      // Predicated region
      $region29: #{cup_forward.1} parent=27 // pred_check
        %p180 = pneg %p31
      $region30: #{cup_forward.1} parent=27 // pred_check_branch
        %182 = sbr.rel (%p180) target = $region32
      $region31: #{cup_forward.1} parent=27 // pred_region
        %p183 = scmp.lt.s32.totalorder %s11, 1
        %s184 = scalar_select %p183, %s11, 1
        %s185 = smul.addr %s184, 54
        %s186 = smul.addr %s185, 4
        %s187 = scalar_lea.vmem %s0, %s186
      $region32: #{cup_forward.1} parent=27 // pred_fallthru
        _
      // Predicated region
      $region33: #{cup_forward.1} parent=27 // pred_check
        %p188 = pneg %p57
      $region34: #{cup_forward.1} parent=27 // pred_check_branch
        %190 = sbr.rel (%p188) target = $region36
      $region35: #{cup_forward.1} parent=27 // pred_region
        %p191 = scmp.lt.s32.totalorder %s11, 1
        %s192 = scalar_select %p191, %s11, 1
        %s193 = smul.addr %s192, 54
        %s194 = smul.addr %s193, 4
        %s195 = scalar_lea.vmem %s1, %s194
      $region36: #{cup_forward.1} parent=27 // pred_fallthru
        _
    $region28: #{cup_forward.1} parent=5 // pred_fallthru
      _
    %p196 = scmp.le.s32.totalorder 1, %s11
    %p197 = scmp.lt.s32.totalorder %s11, 3
    %p198 = pnand %p196, %p197
    %p199 = pneg %p198
    // Predicated region
    $region37: #{cup_forward.1} parent=5 // pred_check
      _
    $region38: #{cup_forward.1} parent=5 // pred_check_branch
      %201 = sbr.rel (%p198) target = $region40
    $region39: #{cup_forward.1} parent=5 // pred_region
      %s202 = ssub.s32 %s11, 1
      %p203 = scmp.lt.s32.totalorder %s16, 1
      %s204 = scalar_select %p203, %s16, 1
      %s205 = smul.addr %s204, 54
      %s206 = smul.addr %s205, 4
      %s207 = scalar_lea.vmem %s0, %s206
      %p208 = pneg %p37
      %p209 = pneg %p34
      %p210 = scmp.lt.s32.totalorder %s16, 1
      %s211 = scalar_select %p210, %s16, 1
      %s212 = smul.addr %s211, 54
      %s213 = smul.addr %s212, 4
      %s214 = scalar_lea.vmem %s1, %s213
      %p215 = pneg %p63
      %p216 = pneg %p60
      %p217 = pneg %p84
      %p218 = pneg %p81
      %p219 = pneg %p105
      %p220 = pneg %p102
      %p221 = pneg %p126
      %p222 = pneg %p123
      %p223 = pneg %p152
      %p224 = pneg %p149
      %p225 = scmp.lt.s32.totalorder %s16, 1
      %s226 = scalar_select %p225, %s16, 1
      %s227 = smul.addr %s226, 32
      %s228 = smul.addr %s227, 4
      %s229 = scalar_lea.vmem %s5, %s228
      %p230 = scmp.lt.s32.totalorder %s16, 1
      %s231 = scalar_select %p230, %s16, 1
      %s232 = smul.addr %s231, 54
      %s233 = smul.addr %s232, 4
      %s234 = scalar_lea.vmem %s0, %s233
      %p235 = scmp.lt.s32.totalorder %s16, 1
      %s236 = scalar_select %p235, %s16, 1
      %s237 = smul.addr %s236, 54
      %s238 = smul.addr %s237, 4
      %s239 = scalar_lea.vmem %s1, %s238
      %p240 = scmp.lt.s32.totalorder %s16, 1
      %s241 = scalar_select %p240, %s16, 1
      %s242 = smul.addr %s241, 32
      %s243 = smul.addr %s242, 4
      %s244 = scalar_lea.vmem %s5, %s243
      %v246 = vld [vmem:[%s234] sm:$0xf]
      %v247 = vld [vmem:[%s234 + $0x4] sm:$0xf]
      %v248 = vld [vmem:[%s234 + $0xc] sm:$0xf]
      %v249 = vld [vmem:[%s234 + $0x10] sm:$0xf]
      %v250 = vld [vmem:[%s234 + $0x18] sm:$0xf]
      %v251 = vld [vmem:[%s234 + $0x1c] sm:$0xf]
      %v252 = vld [vmem:[%s234 + $0x24] sm:$0xf]
      %v253 = vld [vmem:[%s234 + $0x28] sm:$0xf]
      %v254 = vld [vmem:[%s234 + $0x30] sm:$0xf]
      %v255 = vld [vmem:[%s234 + $0x34] sm:$0xf]
      %v256 = vld [vmem:[%s234 + $0x3c] sm:$0xf]
      %v257 = vld [vmem:[%s234 + $0x40] sm:$0xf]
      %v258 = vld [vmem:[%s234 + $0x48] sm:$0xf]
      %v259 = vld [vmem:[%s234 + $0x4c] sm:$0xf]
      %v260 = vld [vmem:[%s234 + $0x54] sm:$0xf]
      %v261 = vld [vmem:[%s234 + $0x58] sm:$0xf]
      %v262 = vld [vmem:[%s234 + $0x60] sm:$0xf]
      %v263 = vld [vmem:[%s234 + $0x64] sm:$0xf]
      %v264 = vld [vmem:[%s234 + $0x6c] sm:$0xf]
      %v265 = vld [vmem:[%s234 + $0x70] sm:$0xf]
      %v266 = vld [vmem:[%s234 + $0x78] sm:$0xf]
      %v267 = vld [vmem:[%s234 + $0x7c] sm:$0xf]
      %v268 = vld [vmem:[%s234 + $0x84] sm:$0xf]
      %v269 = vld [vmem:[%s234 + $0x88] sm:$0xf]
      %v270 = vld [vmem:[%s234 + $0x90] sm:$0xf]
      %v271 = vld [vmem:[%s234 + $0x94] sm:$0xf]
      %v272 = vld [vmem:[%s234 + $0x9c] sm:$0xf]
      %v273 = vld [vmem:[%s234 + $0xa0] sm:$0xf]
      %v274 = vld [vmem:[%s234 + $0xa8] sm:$0xf]
      %v275 = vld [vmem:[%s234 + $0xac] sm:$0xf]
      %v276 = vld [vmem:[%s234 + $0xb4] sm:$0xf]
      %v277 = vld [vmem:[%s234 + $0xb8] sm:$0xf]
      %v278 = vld [vmem:[%s239] sm:$0xf]
      %v279 = vld [vmem:[%s239 + $0x4] sm:$0xf]
      %v280 = vld [vmem:[%s239 + $0xc] sm:$0xf]
      %v281 = vld [vmem:[%s239 + $0x10] sm:$0xf]
      %v282 = vld [vmem:[%s239 + $0x18] sm:$0xf]
      %v283 = vld [vmem:[%s239 + $0x1c] sm:$0xf]
      %v284 = vld [vmem:[%s239 + $0x24] sm:$0xf]
      %v285 = vld [vmem:[%s239 + $0x28] sm:$0xf]
      %v286 = vld [vmem:[%s239 + $0x30] sm:$0xf]
      %v287 = vld [vmem:[%s239 + $0x34] sm:$0xf]
      %v288 = vld [vmem:[%s239 + $0x3c] sm:$0xf]
      %v289 = vld [vmem:[%s239 + $0x40] sm:$0xf]
      %v290 = vld [vmem:[%s239 + $0x48] sm:$0xf]
      %v291 = vld [vmem:[%s239 + $0x4c] sm:$0xf]
      %v292 = vld [vmem:[%s239 + $0x54] sm:$0xf]
      %v293 = vld [vmem:[%s239 + $0x58] sm:$0xf]
      %v294 = vld [vmem:[%s239 + $0x60] sm:$0xf]
      %v295 = vld [vmem:[%s239 + $0x64] sm:$0xf]
      %v296 = vld [vmem:[%s239 + $0x6c] sm:$0xf]
      %v297 = vld [vmem:[%s239 + $0x70] sm:$0xf]
      %v298 = vld [vmem:[%s239 + $0x78] sm:$0xf]
      %v299 = vld [vmem:[%s239 + $0x7c] sm:$0xf]
      %v300 = vld [vmem:[%s239 + $0x84] sm:$0xf]
      %v301 = vld [vmem:[%s239 + $0x88] sm:$0xf]
      %v302 = vld [vmem:[%s239 + $0x90] sm:$0xf]
      %v303 = vld [vmem:[%s239 + $0x94] sm:$0xf]
      %v304 = vld [vmem:[%s239 + $0x9c] sm:$0xf]
      %v305 = vld [vmem:[%s239 + $0xa0] sm:$0xf]
      %v306 = vld [vmem:[%s239 + $0xa8] sm:$0xf]
      %v307 = vld [vmem:[%s239 + $0xac] sm:$0xf]
      %v308 = vld [vmem:[%s239 + $0xb4] sm:$0xf]
      %v309 = vld [vmem:[%s239 + $0xb8] sm:$0xf]
      %v310 = vld [vmem:[%s2] sm:$0xf]
      %v311 = vld [vmem:[%s2 + $0x4] sm:$0xf]
      %v312 = vld [vmem:[%s3] sm:$0xf]
      %v313 = vld [vmem:[%s3 + $0x4] sm:$0xf]
      %v346 = vunpack.c.l.b16 %v278
      %v347 = vunpack.c.l.b16 %v279
      %v348 = vunpack.c.l.b16 %v280
      %v349 = vunpack.c.l.b16 %v281
      %v350 = vunpack.c.l.b16 %v282
      %v351 = vunpack.c.l.b16 %v283
      %v352 = vunpack.c.l.b16 %v284
      %v353 = vunpack.c.l.b16 %v285
      %v354 = vunpack.c.l.b16 %v286
      %v355 = vunpack.c.l.b16 %v287
      %v356 = vunpack.c.l.b16 %v288
      %v357 = vunpack.c.l.b16 %v289
      %v358 = vunpack.c.l.b16 %v290
      %v359 = vunpack.c.l.b16 %v291
      %v360 = vunpack.c.l.b16 %v292
      %v361 = vunpack.c.l.b16 %v293
      %v362 = vunpack.c.l.b16 %v294
      %v363 = vunpack.c.l.b16 %v295
      %v364 = vunpack.c.l.b16 %v296
      %v365 = vunpack.c.l.b16 %v297
      %v366 = vunpack.c.l.b16 %v298
      %v367 = vunpack.c.l.b16 %v299
      %v368 = vunpack.c.l.b16 %v300
      %v369 = vunpack.c.l.b16 %v301
      %v370 = vunpack.c.l.b16 %v302
      %v371 = vunpack.c.l.b16 %v303
      %v372 = vunpack.c.l.b16 %v304
      %v373 = vunpack.c.l.b16 %v305
      %v374 = vunpack.c.l.b16 %v306
      %v375 = vunpack.c.l.b16 %v307
      %v376 = vunpack.c.l.b16 %v308
      %v377 = vunpack.c.l.b16 %v309
      %v378 = vpack.c.b16 %v347, %v346
      %v379 = vpack.c.b16 %v349, %v348
      %v380 = vpack.c.b16 %v351, %v350
      %v381 = vpack.c.b16 %v353, %v352
      %v382 = vpack.c.b16 %v355, %v354
      %v383 = vpack.c.b16 %v357, %v356
      %v384 = vpack.c.b16 %v359, %v358
      %v385 = vpack.c.b16 %v361, %v360
      %v386 = vpack.c.b16 %v363, %v362
      %v387 = vpack.c.b16 %v365, %v364
      %v388 = vpack.c.b16 %v367, %v366
      %v389 = vpack.c.b16 %v369, %v368
      %v390 = vpack.c.b16 %v371, %v370
      %v391 = vpack.c.b16 %v373, %v372
      %v392 = vpack.c.b16 %v375, %v374
      %v393 = vpack.c.b16 %v377, %v376
      %v396 = vunpack.c.l.b16 %v312
      %v397 = vunpack.c.l.b16 %v313
      %v398 = vpack.c.b16 %v397, %v396
      %vm400 = vcmask 130048
      %v402 = vsel %vm400, %v378, 0
      %v405 = vsel %vm400, %v379, 0
      %v408 = vsel %vm400, %v380, 0
      %v411 = vsel %vm400, %v381, 0
      %v414 = vsel %vm400, %v382, 0
      %v417 = vsel %vm400, %v383, 0
      %v420 = vsel %vm400, %v384, 0
      %v423 = vsel %vm400, %v385, 0
      %v426 = vsel %vm400, %v386, 0
      %v429 = vsel %vm400, %v387, 0
      %v432 = vsel %vm400, %v388, 0
      %v435 = vsel %vm400, %v389, 0
      %v438 = vsel %vm400, %v390, 0
      %v441 = vsel %vm400, %v391, 0
      %v444 = vsel %vm400, %v392, 0
      %v447 = vsel %vm400, %v393, 0
      %449 = vmatpush.bf16.msra.mxu0 0
      %450 = vmatpush.bf16.msra.mxu0 0
      %451 = vmatpush.bf16.msra.mxu0 0
      %452 = vmatpush.bf16.msra.mxu0 0
      %453 = vmatpush.bf16.msra.mxu0 0
      %454 = vmatpush.bf16.msra.mxu0 0
      %455 = vmatpush.bf16.msra.mxu0 0
      %456 = vmatpush.bf16.msra.mxu0 %v398
      %457 = vmatmul.bf16.gmra.mxu0 %v402
      %v458 = vpop.f32.mrf.mxu0
      %v459 = vadd.f32 0.0, %v458
      %v460 = vpop.f32.mrf.mxu0
      %v461 = vadd.f32 0.0, %v460
      %462 = vmatmul.bf16.gmra.mxu0 %v405
      %v463 = vpop.f32.mrf.mxu0
      %v464 = vadd.f32 0.0, %v463
      %v465 = vpop.f32.mrf.mxu0
      %v466 = vadd.f32 0.0, %v465
      %467 = vmatmul.bf16.gmra.mxu0 %v408
      %v468 = vpop.f32.mrf.mxu0
      %v469 = vadd.f32 0.0, %v468
      %v470 = vpop.f32.mrf.mxu0
      %v471 = vadd.f32 0.0, %v470
      %472 = vmatmul.bf16.gmra.mxu0 %v411
      %v473 = vpop.f32.mrf.mxu0
      %v474 = vadd.f32 0.0, %v473
      %v475 = vpop.f32.mrf.mxu0
      %v476 = vadd.f32 0.0, %v475
      %477 = vmatmul.bf16.gmra.mxu0 %v414
      %v478 = vpop.f32.mrf.mxu0
      %v479 = vadd.f32 0.0, %v478
      %v480 = vpop.f32.mrf.mxu0
      %v481 = vadd.f32 0.0, %v480
      %482 = vmatmul.bf16.gmra.mxu0 %v417
      %v483 = vpop.f32.mrf.mxu0
      %v484 = vadd.f32 0.0, %v483
      %v485 = vpop.f32.mrf.mxu0
      %v486 = vadd.f32 0.0, %v485
      %487 = vmatmul.bf16.gmra.mxu0 %v420
      %v488 = vpop.f32.mrf.mxu0
      %v489 = vadd.f32 0.0, %v488
      %v490 = vpop.f32.mrf.mxu0
      %v491 = vadd.f32 0.0, %v490
      %492 = vmatmul.bf16.gmra.mxu0 %v423
      %v493 = vpop.f32.mrf.mxu0
      %v494 = vadd.f32 0.0, %v493
      %v495 = vpop.f32.mrf.mxu0
      %v496 = vadd.f32 0.0, %v495
      %497 = vmatmul.bf16.gmra.mxu0 %v426
      %v498 = vpop.f32.mrf.mxu0
      %v499 = vadd.f32 0.0, %v498
      %v500 = vpop.f32.mrf.mxu0
      %v501 = vadd.f32 0.0, %v500
      %502 = vmatmul.bf16.gmra.mxu0 %v429
      %v503 = vpop.f32.mrf.mxu0
      %v504 = vadd.f32 0.0, %v503
      %v505 = vpop.f32.mrf.mxu0
      %v506 = vadd.f32 0.0, %v505
      %507 = vmatmul.bf16.gmra.mxu0 %v432
      %v508 = vpop.f32.mrf.mxu0
      %v509 = vadd.f32 0.0, %v508
      %v510 = vpop.f32.mrf.mxu0
      %v511 = vadd.f32 0.0, %v510
      %512 = vmatmul.bf16.gmra.mxu0 %v435
      %v513 = vpop.f32.mrf.mxu0
      %v514 = vadd.f32 0.0, %v513
      %v515 = vpop.f32.mrf.mxu0
      %v516 = vadd.f32 0.0, %v515
      %517 = vmatmul.bf16.gmra.mxu0 %v438
      %v518 = vpop.f32.mrf.mxu0
      %v519 = vadd.f32 0.0, %v518
      %v520 = vpop.f32.mrf.mxu0
      %v521 = vadd.f32 0.0, %v520
      %522 = vmatmul.bf16.gmra.mxu0 %v441
      %v523 = vpop.f32.mrf.mxu0
      %v524 = vadd.f32 0.0, %v523
      %v525 = vpop.f32.mrf.mxu0
      %v526 = vadd.f32 0.0, %v525
      %527 = vmatmul.bf16.gmra.mxu0 %v444
      %v528 = vpop.f32.mrf.mxu0
      %v529 = vadd.f32 0.0, %v528
      %v530 = vpop.f32.mrf.mxu0
      %v531 = vadd.f32 0.0, %v530
      %532 = vmatmul.bf16.gmra.mxu0 %v447
      %v533 = vpop.f32.mrf.mxu0
      %v534 = vadd.f32 0.0, %v533
      %v535 = vpop.f32.mrf.mxu0
      %v536 = vadd.f32 0.0, %v535
      %537 = vdwg.mxu0
      %v570 = vunpack.c.l.b16 %v246
      %v571 = vunpack.c.l.b16 %v247
      %v572 = vunpack.c.l.b16 %v248
      %v573 = vunpack.c.l.b16 %v249
      %v574 = vunpack.c.l.b16 %v250
      %v575 = vunpack.c.l.b16 %v251
      %v576 = vunpack.c.l.b16 %v252
      %v577 = vunpack.c.l.b16 %v253
      %v578 = vunpack.c.l.b16 %v254
      %v579 = vunpack.c.l.b16 %v255
      %v580 = vunpack.c.l.b16 %v256
      %v581 = vunpack.c.l.b16 %v257
      %v582 = vunpack.c.l.b16 %v258
      %v583 = vunpack.c.l.b16 %v259
      %v584 = vunpack.c.l.b16 %v260
      %v585 = vunpack.c.l.b16 %v261
      %v586 = vunpack.c.l.b16 %v262
      %v587 = vunpack.c.l.b16 %v263
      %v588 = vunpack.c.l.b16 %v264
      %v589 = vunpack.c.l.b16 %v265
      %v590 = vunpack.c.l.b16 %v266
      %v591 = vunpack.c.l.b16 %v267
      %v592 = vunpack.c.l.b16 %v268
      %v593 = vunpack.c.l.b16 %v269
      %v594 = vunpack.c.l.b16 %v270
      %v595 = vunpack.c.l.b16 %v271
      %v596 = vunpack.c.l.b16 %v272
      %v597 = vunpack.c.l.b16 %v273
      %v598 = vunpack.c.l.b16 %v274
      %v599 = vunpack.c.l.b16 %v275
      %v600 = vunpack.c.l.b16 %v276
      %v601 = vunpack.c.l.b16 %v277
      %v602 = vpack.c.b16 %v571, %v570
      %v603 = vpack.c.b16 %v573, %v572
      %v604 = vpack.c.b16 %v575, %v574
      %v605 = vpack.c.b16 %v577, %v576
      %v606 = vpack.c.b16 %v579, %v578
      %v607 = vpack.c.b16 %v581, %v580
      %v608 = vpack.c.b16 %v583, %v582
      %v609 = vpack.c.b16 %v585, %v584
      %v610 = vpack.c.b16 %v587, %v586
      %v611 = vpack.c.b16 %v589, %v588
      %v612 = vpack.c.b16 %v591, %v590
      %v613 = vpack.c.b16 %v593, %v592
      %v614 = vpack.c.b16 %v595, %v594
      %v615 = vpack.c.b16 %v597, %v596
      %v616 = vpack.c.b16 %v599, %v598
      %v617 = vpack.c.b16 %v601, %v600
      %v620 = vunpack.c.l.b16 %v310
      %v621 = vunpack.c.l.b16 %v311
      %v622 = vpack.c.b16 %v621, %v620
      %v625 = vsel %vm400, %v602, 0
      %v628 = vsel %vm400, %v603, 0
      %v631 = vsel %vm400, %v604, 0
      %v634 = vsel %vm400, %v605, 0
      %v637 = vsel %vm400, %v606, 0
      %v640 = vsel %vm400, %v607, 0
      %v643 = vsel %vm400, %v608, 0
      %v646 = vsel %vm400, %v609, 0
      %v649 = vsel %vm400, %v610, 0
      %v652 = vsel %vm400, %v611, 0
      %v655 = vsel %vm400, %v612, 0
      %v658 = vsel %vm400, %v613, 0
      %v661 = vsel %vm400, %v614, 0
      %v664 = vsel %vm400, %v615, 0
      %v667 = vsel %vm400, %v616, 0
      %v670 = vsel %vm400, %v617, 0
      %672 = vmatpush.bf16.msra.mxu0 0
      %673 = vmatpush.bf16.msra.mxu0 0
      %674 = vmatpush.bf16.msra.mxu0 0
      %675 = vmatpush.bf16.msra.mxu0 0
      %676 = vmatpush.bf16.msra.mxu0 0
      %677 = vmatpush.bf16.msra.mxu0 0
      %678 = vmatpush.bf16.msra.mxu0 0
      %679 = vmatpush.bf16.msra.mxu0 %v622
      %680 = vmatmul.bf16.gmra.mxu0 %v625
      %v681 = vpop.f32.mrf.mxu0
      %v682 = vadd.f32 %v459, %v681
      %v683 = vpop.f32.mrf.mxu0
      %v684 = vadd.f32 %v461, %v683
      %685 = vmatmul.bf16.gmra.mxu0 %v628
      %v686 = vpop.f32.mrf.mxu0
      %v687 = vadd.f32 %v464, %v686
      %v688 = vpop.f32.mrf.mxu0
      %v689 = vadd.f32 %v466, %v688
      %690 = vmatmul.bf16.gmra.mxu0 %v631
      %v691 = vpop.f32.mrf.mxu0
      %v692 = vadd.f32 %v469, %v691
      %v693 = vpop.f32.mrf.mxu0
      %v694 = vadd.f32 %v471, %v693
      %695 = vmatmul.bf16.gmra.mxu0 %v634
      %v696 = vpop.f32.mrf.mxu0
      %v697 = vadd.f32 %v474, %v696
      %v698 = vpop.f32.mrf.mxu0
      %v699 = vadd.f32 %v476, %v698
      %700 = vmatmul.bf16.gmra.mxu0 %v637
      %v701 = vpop.f32.mrf.mxu0
      %v702 = vadd.f32 %v479, %v701
      %v703 = vpop.f32.mrf.mxu0
      %v704 = vadd.f32 %v481, %v703
      %705 = vmatmul.bf16.gmra.mxu0 %v640
      %v706 = vpop.f32.mrf.mxu0
      %v707 = vadd.f32 %v484, %v706
      %v708 = vpop.f32.mrf.mxu0
      %v709 = vadd.f32 %v486, %v708
      %710 = vmatmul.bf16.gmra.mxu0 %v643
      %v711 = vpop.f32.mrf.mxu0
      %v712 = vadd.f32 %v489, %v711
      %v713 = vpop.f32.mrf.mxu0
      %v714 = vadd.f32 %v491, %v713
      %715 = vmatmul.bf16.gmra.mxu0 %v646
      %v716 = vpop.f32.mrf.mxu0
      %v717 = vadd.f32 %v494, %v716
      %v718 = vpop.f32.mrf.mxu0
      %v719 = vadd.f32 %v496, %v718
      %720 = vmatmul.bf16.gmra.mxu0 %v649
      %v721 = vpop.f32.mrf.mxu0
      %v722 = vadd.f32 %v499, %v721
      %v723 = vpop.f32.mrf.mxu0
      %v724 = vadd.f32 %v501, %v723
      %725 = vmatmul.bf16.gmra.mxu0 %v652
      %v726 = vpop.f32.mrf.mxu0
      %v727 = vadd.f32 %v504, %v726
      %v728 = vpop.f32.mrf.mxu0
      %v729 = vadd.f32 %v506, %v728
      %730 = vmatmul.bf16.gmra.mxu0 %v655
      %v731 = vpop.f32.mrf.mxu0
      %v732 = vadd.f32 %v509, %v731
      %v733 = vpop.f32.mrf.mxu0
      %v734 = vadd.f32 %v511, %v733
      %735 = vmatmul.bf16.gmra.mxu0 %v658
      %v736 = vpop.f32.mrf.mxu0
      %v737 = vadd.f32 %v514, %v736
      %v738 = vpop.f32.mrf.mxu0
      %v739 = vadd.f32 %v516, %v738
      %740 = vmatmul.bf16.gmra.mxu0 %v661
      %v741 = vpop.f32.mrf.mxu0
      %v742 = vadd.f32 %v519, %v741
      %v743 = vpop.f32.mrf.mxu0
      %v744 = vadd.f32 %v521, %v743
      %745 = vmatmul.bf16.gmra.mxu0 %v664
      %v746 = vpop.f32.mrf.mxu0
      %v747 = vadd.f32 %v524, %v746
      %v748 = vpop.f32.mrf.mxu0
      %v749 = vadd.f32 %v526, %v748
      %750 = vmatmul.bf16.gmra.mxu0 %v667
      %v751 = vpop.f32.mrf.mxu0
      %v752 = vadd.f32 %v529, %v751
      %v753 = vpop.f32.mrf.mxu0
      %v754 = vadd.f32 %v531, %v753
      %755 = vmatmul.bf16.gmra.mxu0 %v670
      %v756 = vpop.f32.mrf.mxu0
      %v757 = vadd.f32 %v534, %v756
      %v758 = vpop.f32.mrf.mxu0
      %v759 = vadd.f32 %v536, %v758
      %760 = vdwg.mxu0
      %v761 = vld [vmem:[%s234] sm:$0xf]
      %v762 = vld [vmem:[%s234 + $0x4] sm:$0xf]
      %v763 = vld [vmem:[%s234 + $0x8] sm:$0x1]
      %v764 = vld [vmem:[%s234 + $0xc] sm:$0xf]
      %v765 = vld [vmem:[%s234 + $0x10] sm:$0xf]
      %v766 = vld [vmem:[%s234 + $0x14] sm:$0x1]
      %v767 = vld [vmem:[%s234 + $0x18] sm:$0xf]
      %v768 = vld [vmem:[%s234 + $0x1c] sm:$0xf]
      %v769 = vld [vmem:[%s234 + $0x20] sm:$0x1]
      %v770 = vld [vmem:[%s234 + $0x24] sm:$0xf]
      %v771 = vld [vmem:[%s234 + $0x28] sm:$0xf]
      %v772 = vld [vmem:[%s234 + $0x2c] sm:$0x1]
      %v773 = vld [vmem:[%s234 + $0x30] sm:$0xf]
      %v774 = vld [vmem:[%s234 + $0x34] sm:$0xf]
      %v775 = vld [vmem:[%s234 + $0x38] sm:$0x1]
      %v776 = vld [vmem:[%s234 + $0x3c] sm:$0xf]
      %v777 = vld [vmem:[%s234 + $0x40] sm:$0xf]
      %v778 = vld [vmem:[%s234 + $0x44] sm:$0x1]
      %v779 = vld [vmem:[%s234 + $0x48] sm:$0xf]
      %v780 = vld [vmem:[%s234 + $0x4c] sm:$0xf]
      %v781 = vld [vmem:[%s234 + $0x50] sm:$0x1]
      %v782 = vld [vmem:[%s234 + $0x54] sm:$0xf]
      %v783 = vld [vmem:[%s234 + $0x58] sm:$0xf]
      %v784 = vld [vmem:[%s234 + $0x5c] sm:$0x1]
      %v785 = vld [vmem:[%s234 + $0x60] sm:$0xf]
      %v786 = vld [vmem:[%s234 + $0x64] sm:$0xf]
      %v787 = vld [vmem:[%s234 + $0x68] sm:$0x1]
      %v788 = vld [vmem:[%s234 + $0x6c] sm:$0xf]
      %v789 = vld [vmem:[%s234 + $0x70] sm:$0xf]
      %v790 = vld [vmem:[%s234 + $0x74] sm:$0x1]
      %v791 = vld [vmem:[%s234 + $0x78] sm:$0xf]
      %v792 = vld [vmem:[%s234 + $0x7c] sm:$0xf]
      %v793 = vld [vmem:[%s234 + $0x80] sm:$0x1]
      %v794 = vld [vmem:[%s234 + $0x84] sm:$0xf]
      %v795 = vld [vmem:[%s234 + $0x88] sm:$0xf]
      %v796 = vld [vmem:[%s234 + $0x8c] sm:$0x1]
      %v797 = vld [vmem:[%s234 + $0x90] sm:$0xf]
      %v798 = vld [vmem:[%s234 + $0x94] sm:$0xf]
      %v799 = vld [vmem:[%s234 + $0x98] sm:$0x1]
      %v800 = vld [vmem:[%s234 + $0x9c] sm:$0xf]
      %v801 = vld [vmem:[%s234 + $0xa0] sm:$0xf]
      %v802 = vld [vmem:[%s234 + $0xa4] sm:$0x1]
      %v803 = vld [vmem:[%s234 + $0xa8] sm:$0xf]
      %v804 = vld [vmem:[%s234 + $0xac] sm:$0xf]
      %v805 = vld [vmem:[%s234 + $0xb0] sm:$0x1]
      %v806 = vld [vmem:[%s234 + $0xb4] sm:$0xf]
      %v807 = vld [vmem:[%s234 + $0xb8] sm:$0xf]
      %v808 = vld [vmem:[%s234 + $0xbc] sm:$0x1]
      %vm809 = vsmask.f32 3328
      %vm810 = vsmask.f32 7440
      %vm811 = vmor %vm809, %vm810
      %v813 = vshrl.u32 %v761, 16
      %v815 = vrot.slane %v813, 4
      %v816 = vshll.u32 %v761, 16
      %v818 = vrot.slane %v816, 5
      %v819 = vor.u32 %v815, %v818
      %v820 = vrot.slane %v819, 4
      %v822 = vshll.u32 %v762, 16
      %v824 = vrot.slane %v822, 5
      %v825 = vsel %vm811, %v820, %v824
      %v826 = vshrl.u32 %v762, 16
      %v828 = vrot.slane %v826, 4
      %v829 = vor.u32 %v828, %v824
      %v830 = vrot.slane %v829, 4
      %v832 = vshll.u32 %v763, 16
      %v834 = vrot.slane %v832, 5
      %v835 = vsel %vm811, %v830, %v834
      %v837 = vshrl.u32 %v764, 16
      %v839 = vrot.slane %v837, 4
      %v840 = vshll.u32 %v764, 16
      %v842 = vrot.slane %v840, 5
      %v843 = vor.u32 %v839, %v842
      %v844 = vrot.slane %v843, 4
      %v846 = vshll.u32 %v765, 16
      %v848 = vrot.slane %v846, 5
      %v849 = vsel %vm811, %v844, %v848
      %v850 = vshrl.u32 %v765, 16
      %v852 = vrot.slane %v850, 4
      %v853 = vor.u32 %v852, %v848
      %v854 = vrot.slane %v853, 4
      %v856 = vshll.u32 %v766, 16
      %v858 = vrot.slane %v856, 5
      %v859 = vsel %vm811, %v854, %v858
      %v861 = vshrl.u32 %v767, 16
      %v863 = vrot.slane %v861, 4
      %v864 = vshll.u32 %v767, 16
      %v866 = vrot.slane %v864, 5
      %v867 = vor.u32 %v863, %v866
      %v868 = vrot.slane %v867, 4
      %v870 = vshll.u32 %v768, 16
      %v872 = vrot.slane %v870, 5
      %v873 = vsel %vm811, %v868, %v872
      %v874 = vshrl.u32 %v768, 16
      %v876 = vrot.slane %v874, 4
      %v877 = vor.u32 %v876, %v872
      %v878 = vrot.slane %v877, 4
      %v880 = vshll.u32 %v769, 16
      %v882 = vrot.slane %v880, 5
      %v883 = vsel %vm811, %v878, %v882
      %v885 = vshrl.u32 %v770, 16
      %v887 = vrot.slane %v885, 4
      %v888 = vshll.u32 %v770, 16
      %v890 = vrot.slane %v888, 5
      %v891 = vor.u32 %v887, %v890
      %v892 = vrot.slane %v891, 4
      %v894 = vshll.u32 %v771, 16
      %v896 = vrot.slane %v894, 5
      %v897 = vsel %vm811, %v892, %v896
      %v898 = vshrl.u32 %v771, 16
      %v900 = vrot.slane %v898, 4
      %v901 = vor.u32 %v900, %v896
      %v902 = vrot.slane %v901, 4
      %v904 = vshll.u32 %v772, 16
      %v906 = vrot.slane %v904, 5
      %v907 = vsel %vm811, %v902, %v906
      %v909 = vshrl.u32 %v773, 16
      %v911 = vrot.slane %v909, 4
      %v912 = vshll.u32 %v773, 16
      %v914 = vrot.slane %v912, 5
      %v915 = vor.u32 %v911, %v914
      %v916 = vrot.slane %v915, 4
      %v918 = vshll.u32 %v774, 16
      %v920 = vrot.slane %v918, 5
      %v921 = vsel %vm811, %v916, %v920
      %v922 = vshrl.u32 %v774, 16
      %v924 = vrot.slane %v922, 4
      %v925 = vor.u32 %v924, %v920
      %v926 = vrot.slane %v925, 4
      %v928 = vshll.u32 %v775, 16
      %v930 = vrot.slane %v928, 5
      %v931 = vsel %vm811, %v926, %v930
      %v933 = vshrl.u32 %v776, 16
      %v935 = vrot.slane %v933, 4
      %v936 = vshll.u32 %v776, 16
      %v938 = vrot.slane %v936, 5
      %v939 = vor.u32 %v935, %v938
      %v940 = vrot.slane %v939, 4
      %v942 = vshll.u32 %v777, 16
      %v944 = vrot.slane %v942, 5
      %v945 = vsel %vm811, %v940, %v944
      %v946 = vshrl.u32 %v777, 16
      %v948 = vrot.slane %v946, 4
      %v949 = vor.u32 %v948, %v944
      %v950 = vrot.slane %v949, 4
      %v952 = vshll.u32 %v778, 16
      %v954 = vrot.slane %v952, 5
      %v955 = vsel %vm811, %v950, %v954
      %v957 = vshrl.u32 %v779, 16
      %v959 = vrot.slane %v957, 4
      %v960 = vshll.u32 %v779, 16
      %v962 = vrot.slane %v960, 5
      %v963 = vor.u32 %v959, %v962
      %v964 = vrot.slane %v963, 4
      %v966 = vshll.u32 %v780, 16
      %v968 = vrot.slane %v966, 5
      %v969 = vsel %vm811, %v964, %v968
      %v970 = vshrl.u32 %v780, 16
      %v972 = vrot.slane %v970, 4
      %v973 = vor.u32 %v972, %v968
      %v974 = vrot.slane %v973, 4
      %v976 = vshll.u32 %v781, 16
      %v978 = vrot.slane %v976, 5
      %v979 = vsel %vm811, %v974, %v978
      %v981 = vshrl.u32 %v782, 16
      %v983 = vrot.slane %v981, 4
      %v984 = vshll.u32 %v782, 16
      %v986 = vrot.slane %v984, 5
      %v987 = vor.u32 %v983, %v986
      %v988 = vrot.slane %v987, 4
      %v990 = vshll.u32 %v783, 16
      %v992 = vrot.slane %v990, 5
      %v993 = vsel %vm811, %v988, %v992
      %v994 = vshrl.u32 %v783, 16
      %v996 = vrot.slane %v994, 4
      %v997 = vor.u32 %v996, %v992
      %v998 = vrot.slane %v997, 4
      %v1000 = vshll.u32 %v784, 16
      %v1002 = vrot.slane %v1000, 5
      %v1003 = vsel %vm811, %v998, %v1002
      %v1005 = vshrl.u32 %v785, 16
      %v1007 = vrot.slane %v1005, 4
      %v1008 = vshll.u32 %v785, 16
      %v1010 = vrot.slane %v1008, 5
      %v1011 = vor.u32 %v1007, %v1010
      %v1012 = vrot.slane %v1011, 4
      %v1014 = vshll.u32 %v786, 16
      %v1016 = vrot.slane %v1014, 5
      %v1017 = vsel %vm811, %v1012, %v1016
      %v1018 = vshrl.u32 %v786, 16
      %v1020 = vrot.slane %v1018, 4
      %v1021 = vor.u32 %v1020, %v1016
      %v1022 = vrot.slane %v1021, 4
      %v1024 = vshll.u32 %v787, 16
      %v1026 = vrot.slane %v1024, 5
      %v1027 = vsel %vm811, %v1022, %v1026
      %v1029 = vshrl.u32 %v788, 16
      %v1031 = vrot.slane %v1029, 4
      %v1032 = vshll.u32 %v788, 16
      %v1034 = vrot.slane %v1032, 5
      %v1035 = vor.u32 %v1031, %v1034
      %v1036 = vrot.slane %v1035, 4
      %v1038 = vshll.u32 %v789, 16
      %v1040 = vrot.slane %v1038, 5
      %v1041 = vsel %vm811, %v1036, %v1040
      %v1042 = vshrl.u32 %v789, 16
      %v1044 = vrot.slane %v1042, 4
      %v1045 = vor.u32 %v1044, %v1040
      %v1046 = vrot.slane %v1045, 4
      %v1048 = vshll.u32 %v790, 16
      %v1050 = vrot.slane %v1048, 5
      %v1051 = vsel %vm811, %v1046, %v1050
      %v1053 = vshrl.u32 %v791, 16
      %v1055 = vrot.slane %v1053, 4
      %v1056 = vshll.u32 %v791, 16
      %v1058 = vrot.slane %v1056, 5
      %v1059 = vor.u32 %v1055, %v1058
      %v1060 = vrot.slane %v1059, 4
      %v1062 = vshll.u32 %v792, 16
      %v1064 = vrot.slane %v1062, 5
      %v1065 = vsel %vm811, %v1060, %v1064
      %v1066 = vshrl.u32 %v792, 16
      %v1068 = vrot.slane %v1066, 4
      %v1069 = vor.u32 %v1068, %v1064
      %v1070 = vrot.slane %v1069, 4
      %v1072 = vshll.u32 %v793, 16
      %v1074 = vrot.slane %v1072, 5
      %v1075 = vsel %vm811, %v1070, %v1074
      %v1077 = vshrl.u32 %v794, 16
      %v1079 = vrot.slane %v1077, 4
      %v1080 = vshll.u32 %v794, 16
      %v1082 = vrot.slane %v1080, 5
      %v1083 = vor.u32 %v1079, %v1082
      %v1084 = vrot.slane %v1083, 4
      %v1086 = vshll.u32 %v795, 16
      %v1088 = vrot.slane %v1086, 5
      %v1089 = vsel %vm811, %v1084, %v1088
      %v1090 = vshrl.u32 %v795, 16
      %v1092 = vrot.slane %v1090, 4
      %v1093 = vor.u32 %v1092, %v1088
      %v1094 = vrot.slane %v1093, 4
      %v1096 = vshll.u32 %v796, 16
      %v1098 = vrot.slane %v1096, 5
      %v1099 = vsel %vm811, %v1094, %v1098
      %v1101 = vshrl.u32 %v797, 16
      %v1103 = vrot.slane %v1101, 4
      %v1104 = vshll.u32 %v797, 16
      %v1106 = vrot.slane %v1104, 5
      %v1107 = vor.u32 %v1103, %v1106
      %v1108 = vrot.slane %v1107, 4
      %v1110 = vshll.u32 %v798, 16
      %v1112 = vrot.slane %v1110, 5
      %v1113 = vsel %vm811, %v1108, %v1112
      %v1114 = vshrl.u32 %v798, 16
      %v1116 = vrot.slane %v1114, 4
      %v1117 = vor.u32 %v1116, %v1112
      %v1118 = vrot.slane %v1117, 4
      %v1120 = vshll.u32 %v799, 16
      %v1122 = vrot.slane %v1120, 5
      %v1123 = vsel %vm811, %v1118, %v1122
      %v1125 = vshrl.u32 %v800, 16
      %v1127 = vrot.slane %v1125, 4
      %v1128 = vshll.u32 %v800, 16
      %v1130 = vrot.slane %v1128, 5
      %v1131 = vor.u32 %v1127, %v1130
      %v1132 = vrot.slane %v1131, 4
      %v1134 = vshll.u32 %v801, 16
      %v1136 = vrot.slane %v1134, 5
      %v1137 = vsel %vm811, %v1132, %v1136
      %v1138 = vshrl.u32 %v801, 16
      %v1140 = vrot.slane %v1138, 4
      %v1141 = vor.u32 %v1140, %v1136
      %v1142 = vrot.slane %v1141, 4
      %v1144 = vshll.u32 %v802, 16
      %v1146 = vrot.slane %v1144, 5
      %v1147 = vsel %vm811, %v1142, %v1146
      %v1149 = vshrl.u32 %v803, 16
      %v1151 = vrot.slane %v1149, 4
      %v1152 = vshll.u32 %v803, 16
      %v1154 = vrot.slane %v1152, 5
      %v1155 = vor.u32 %v1151, %v1154
      %v1156 = vrot.slane %v1155, 4
      %v1158 = vshll.u32 %v804, 16
      %v1160 = vrot.slane %v1158, 5
      %v1161 = vsel %vm811, %v1156, %v1160
      %v1162 = vshrl.u32 %v804, 16
      %v1164 = vrot.slane %v1162, 4
      %v1165 = vor.u32 %v1164, %v1160
      %v1166 = vrot.slane %v1165, 4
      %v1168 = vshll.u32 %v805, 16
      %v1170 = vrot.slane %v1168, 5
      %v1171 = vsel %vm811, %v1166, %v1170
      %v1173 = vshrl.u32 %v806, 16
      %v1175 = vrot.slane %v1173, 4
      %v1176 = vshll.u32 %v806, 16
      %v1178 = vrot.slane %v1176, 5
      %v1179 = vor.u32 %v1175, %v1178
      %v1180 = vrot.slane %v1179, 4
      %v1182 = vshll.u32 %v807, 16
      %v1184 = vrot.slane %v1182, 5
      %v1185 = vsel %vm811, %v1180, %v1184
      %v1186 = vshrl.u32 %v807, 16
      %v1188 = vrot.slane %v1186, 4
      %v1189 = vor.u32 %v1188, %v1184
      %v1190 = vrot.slane %v1189, 4
      %v1192 = vshll.u32 %v808, 16
      %v1194 = vrot.slane %v1192, 5
      %v1195 = vsel %vm811, %v1190, %v1194
      %v1196 = vld [vmem:[%s239] sm:$0xf]
      %v1197 = vld [vmem:[%s239 + $0x4] sm:$0xf]
      %v1198 = vld [vmem:[%s239 + $0x8] sm:$0x1]
      %v1199 = vld [vmem:[%s239 + $0xc] sm:$0xf]
      %v1200 = vld [vmem:[%s239 + $0x10] sm:$0xf]
      %v1201 = vld [vmem:[%s239 + $0x14] sm:$0x1]
      %v1202 = vld [vmem:[%s239 + $0x18] sm:$0xf]
      %v1203 = vld [vmem:[%s239 + $0x1c] sm:$0xf]
      %v1204 = vld [vmem:[%s239 + $0x20] sm:$0x1]
      %v1205 = vld [vmem:[%s239 + $0x24] sm:$0xf]
      %v1206 = vld [vmem:[%s239 + $0x28] sm:$0xf]
      %v1207 = vld [vmem:[%s239 + $0x2c] sm:$0x1]
      %v1208 = vld [vmem:[%s239 + $0x30] sm:$0xf]
      %v1209 = vld [vmem:[%s239 + $0x34] sm:$0xf]
      %v1210 = vld [vmem:[%s239 + $0x38] sm:$0x1]
      %v1211 = vld [vmem:[%s239 + $0x3c] sm:$0xf]
      %v1212 = vld [vmem:[%s239 + $0x40] sm:$0xf]
      %v1213 = vld [vmem:[%s239 + $0x44] sm:$0x1]
      %v1214 = vld [vmem:[%s239 + $0x48] sm:$0xf]
      %v1215 = vld [vmem:[%s239 + $0x4c] sm:$0xf]
      %v1216 = vld [vmem:[%s239 + $0x50] sm:$0x1]
      %v1217 = vld [vmem:[%s239 + $0x54] sm:$0xf]
      %v1218 = vld [vmem:[%s239 + $0x58] sm:$0xf]
      %v1219 = vld [vmem:[%s239 + $0x5c] sm:$0x1]
      %v1220 = vld [vmem:[%s239 + $0x60] sm:$0xf]
      %v1221 = vld [vmem:[%s239 + $0x64] sm:$0xf]
      %v1222 = vld [vmem:[%s239 + $0x68] sm:$0x1]
      %v1223 = vld [vmem:[%s239 + $0x6c] sm:$0xf]
      %v1224 = vld [vmem:[%s239 + $0x70] sm:$0xf]
      %v1225 = vld [vmem:[%s239 + $0x74] sm:$0x1]
      %v1226 = vld [vmem:[%s239 + $0x78] sm:$0xf]
      %v1227 = vld [vmem:[%s239 + $0x7c] sm:$0xf]
      %v1228 = vld [vmem:[%s239 + $0x80] sm:$0x1]
      %v1229 = vld [vmem:[%s239 + $0x84] sm:$0xf]
      %v1230 = vld [vmem:[%s239 + $0x88] sm:$0xf]
      %v1231 = vld [vmem:[%s239 + $0x8c] sm:$0x1]
      %v1232 = vld [vmem:[%s239 + $0x90] sm:$0xf]
      %v1233 = vld [vmem:[%s239 + $0x94] sm:$0xf]
      %v1234 = vld [vmem:[%s239 + $0x98] sm:$0x1]
      %v1235 = vld [vmem:[%s239 + $0x9c] sm:$0xf]
      %v1236 = vld [vmem:[%s239 + $0xa0] sm:$0xf]
      %v1237 = vld [vmem:[%s239 + $0xa4] sm:$0x1]
      %v1238 = vld [vmem:[%s239 + $0xa8] sm:$0xf]
      %v1239 = vld [vmem:[%s239 + $0xac] sm:$0xf]
      %v1240 = vld [vmem:[%s239 + $0xb0] sm:$0x1]
      %v1241 = vld [vmem:[%s239 + $0xb4] sm:$0xf]
      %v1242 = vld [vmem:[%s239 + $0xb8] sm:$0xf]
      %v1243 = vld [vmem:[%s239 + $0xbc] sm:$0x1]
      %v1245 = vshrl.u32 %v1196, 16
      %v1247 = vrot.slane %v1245, 4
      %v1248 = vshll.u32 %v1196, 16
      %v1250 = vrot.slane %v1248, 5
      %v1251 = vor.u32 %v1247, %v1250
      %v1252 = vrot.slane %v1251, 4
      %v1254 = vshll.u32 %v1197, 16
      %v1256 = vrot.slane %v1254, 5
      %v1257 = vsel %vm811, %v1252, %v1256
      %v1258 = vshrl.u32 %v1197, 16
      %v1260 = vrot.slane %v1258, 4
      %v1261 = vor.u32 %v1260, %v1256
      %v1262 = vrot.slane %v1261, 4
      %v1264 = vshll.u32 %v1198, 16
      %v1266 = vrot.slane %v1264, 5
      %v1267 = vsel %vm811, %v1262, %v1266
      %v1269 = vshrl.u32 %v1199, 16
      %v1271 = vrot.slane %v1269, 4
      %v1272 = vshll.u32 %v1199, 16
      %v1274 = vrot.slane %v1272, 5
      %v1275 = vor.u32 %v1271, %v1274
      %v1276 = vrot.slane %v1275, 4
      %v1278 = vshll.u32 %v1200, 16
      %v1280 = vrot.slane %v1278, 5
      %v1281 = vsel %vm811, %v1276, %v1280
      %v1282 = vshrl.u32 %v1200, 16
      %v1284 = vrot.slane %v1282, 4
      %v1285 = vor.u32 %v1284, %v1280
      %v1286 = vrot.slane %v1285, 4
      %v1288 = vshll.u32 %v1201, 16
      %v1290 = vrot.slane %v1288, 5
      %v1291 = vsel %vm811, %v1286, %v1290
      %v1293 = vshrl.u32 %v1202, 16
      %v1295 = vrot.slane %v1293, 4
      %v1296 = vshll.u32 %v1202, 16
      %v1298 = vrot.slane %v1296, 5
      %v1299 = vor.u32 %v1295, %v1298
      %v1300 = vrot.slane %v1299, 4
      %v1302 = vshll.u32 %v1203, 16
      %v1304 = vrot.slane %v1302, 5
      %v1305 = vsel %vm811, %v1300, %v1304
      %v1306 = vshrl.u32 %v1203, 16
      %v1308 = vrot.slane %v1306, 4
      %v1309 = vor.u32 %v1308, %v1304
      %v1310 = vrot.slane %v1309, 4
      %v1312 = vshll.u32 %v1204, 16
      %v1314 = vrot.slane %v1312, 5
      %v1315 = vsel %vm811, %v1310, %v1314
      %v1317 = vshrl.u32 %v1205, 16
      %v1319 = vrot.slane %v1317, 4
      %v1320 = vshll.u32 %v1205, 16
      %v1322 = vrot.slane %v1320, 5
      %v1323 = vor.u32 %v1319, %v1322
      %v1324 = vrot.slane %v1323, 4
      %v1326 = vshll.u32 %v1206, 16
      %v1328 = vrot.slane %v1326, 5
      %v1329 = vsel %vm811, %v1324, %v1328
      %v1330 = vshrl.u32 %v1206, 16
      %v1332 = vrot.slane %v1330, 4
      %v1333 = vor.u32 %v1332, %v1328
      %v1334 = vrot.slane %v1333, 4
      %v1336 = vshll.u32 %v1207, 16
      %v1338 = vrot.slane %v1336, 5
      %v1339 = vsel %vm811, %v1334, %v1338
      %v1341 = vshrl.u32 %v1208, 16
      %v1343 = vrot.slane %v1341, 4
      %v1344 = vshll.u32 %v1208, 16
      %v1346 = vrot.slane %v1344, 5
      %v1347 = vor.u32 %v1343, %v1346
      %v1348 = vrot.slane %v1347, 4
      %v1350 = vshll.u32 %v1209, 16
      %v1352 = vrot.slane %v1350, 5
      %v1353 = vsel %vm811, %v1348, %v1352
      %v1354 = vshrl.u32 %v1209, 16
      %v1356 = vrot.slane %v1354, 4
      %v1357 = vor.u32 %v1356, %v1352
      %v1358 = vrot.slane %v1357, 4
      %v1360 = vshll.u32 %v1210, 16
      %v1362 = vrot.slane %v1360, 5
      %v1363 = vsel %vm811, %v1358, %v1362
      %v1365 = vshrl.u32 %v1211, 16
      %v1367 = vrot.slane %v1365, 4
      %v1368 = vshll.u32 %v1211, 16
      %v1370 = vrot.slane %v1368, 5
      %v1371 = vor.u32 %v1367, %v1370
      %v1372 = vrot.slane %v1371, 4
      %v1374 = vshll.u32 %v1212, 16
      %v1376 = vrot.slane %v1374, 5
      %v1377 = vsel %vm811, %v1372, %v1376
      %v1378 = vshrl.u32 %v1212, 16
      %v1380 = vrot.slane %v1378, 4
      %v1381 = vor.u32 %v1380, %v1376
      %v1382 = vrot.slane %v1381, 4
      %v1384 = vshll.u32 %v1213, 16
      %v1386 = vrot.slane %v1384, 5
      %v1387 = vsel %vm811, %v1382, %v1386
      %v1389 = vshrl.u32 %v1214, 16
      %v1391 = vrot.slane %v1389, 4
      %v1392 = vshll.u32 %v1214, 16
      %v1394 = vrot.slane %v1392, 5
      %v1395 = vor.u32 %v1391, %v1394
      %v1396 = vrot.slane %v1395, 4
      %v1398 = vshll.u32 %v1215, 16
      %v1400 = vrot.slane %v1398, 5
      %v1401 = vsel %vm811, %v1396, %v1400
      %v1402 = vshrl.u32 %v1215, 16
      %v1404 = vrot.slane %v1402, 4
      %v1405 = vor.u32 %v1404, %v1400
      %v1406 = vrot.slane %v1405, 4
      %v1408 = vshll.u32 %v1216, 16
      %v1410 = vrot.slane %v1408, 5
      %v1411 = vsel %vm811, %v1406, %v1410
      %v1413 = vshrl.u32 %v1217, 16
      %v1415 = vrot.slane %v1413, 4
      %v1416 = vshll.u32 %v1217, 16
      %v1418 = vrot.slane %v1416, 5
      %v1419 = vor.u32 %v1415, %v1418
      %v1420 = vrot.slane %v1419, 4
      %v1422 = vshll.u32 %v1218, 16
      %v1424 = vrot.slane %v1422, 5
      %v1425 = vsel %vm811, %v1420, %v1424
      %v1426 = vshrl.u32 %v1218, 16
      %v1428 = vrot.slane %v1426, 4
      %v1429 = vor.u32 %v1428, %v1424
      %v1430 = vrot.slane %v1429, 4
      %v1432 = vshll.u32 %v1219, 16
      %v1434 = vrot.slane %v1432, 5
      %v1435 = vsel %vm811, %v1430, %v1434
      %v1437 = vshrl.u32 %v1220, 16
      %v1439 = vrot.slane %v1437, 4
      %v1440 = vshll.u32 %v1220, 16
      %v1442 = vrot.slane %v1440, 5
      %v1443 = vor.u32 %v1439, %v1442
      %v1444 = vrot.slane %v1443, 4
      %v1446 = vshll.u32 %v1221, 16
      %v1448 = vrot.slane %v1446, 5
      %v1449 = vsel %vm811, %v1444, %v1448
      %v1450 = vshrl.u32 %v1221, 16
      %v1452 = vrot.slane %v1450, 4
      %v1453 = vor.u32 %v1452, %v1448
      %v1454 = vrot.slane %v1453, 4
      %v1456 = vshll.u32 %v1222, 16
      %v1458 = vrot.slane %v1456, 5
      %v1459 = vsel %vm811, %v1454, %v1458
      %v1461 = vshrl.u32 %v1223, 16
      %v1463 = vrot.slane %v1461, 4
      %v1464 = vshll.u32 %v1223, 16
      %v1466 = vrot.slane %v1464, 5
      %v1467 = vor.u32 %v1463, %v1466
      %v1468 = vrot.slane %v1467, 4
      %v1470 = vshll.u32 %v1224, 16
      %v1472 = vrot.slane %v1470, 5
      %v1473 = vsel %vm811, %v1468, %v1472
      %v1474 = vshrl.u32 %v1224, 16
      %v1476 = vrot.slane %v1474, 4
      %v1477 = vor.u32 %v1476, %v1472
      %v1478 = vrot.slane %v1477, 4
      %v1480 = vshll.u32 %v1225, 16
      %v1482 = vrot.slane %v1480, 5
      %v1483 = vsel %vm811, %v1478, %v1482
      %v1485 = vshrl.u32 %v1226, 16
      %v1487 = vrot.slane %v1485, 4
      %v1488 = vshll.u32 %v1226, 16
      %v1490 = vrot.slane %v1488, 5
      %v1491 = vor.u32 %v1487, %v1490
      %v1492 = vrot.slane %v1491, 4
      %v1494 = vshll.u32 %v1227, 16
      %v1496 = vrot.slane %v1494, 5
      %v1497 = vsel %vm811, %v1492, %v1496
      %v1498 = vshrl.u32 %v1227, 16
      %v1500 = vrot.slane %v1498, 4
      %v1501 = vor.u32 %v1500, %v1496
      %v1502 = vrot.slane %v1501, 4
      %v1504 = vshll.u32 %v1228, 16
      %v1506 = vrot.slane %v1504, 5
      %v1507 = vsel %vm811, %v1502, %v1506
      %v1509 = vshrl.u32 %v1229, 16
      %v1511 = vrot.slane %v1509, 4
      %v1512 = vshll.u32 %v1229, 16
      %v1514 = vrot.slane %v1512, 5
      %v1515 = vor.u32 %v1511, %v1514
      %v1516 = vrot.slane %v1515, 4
      %v1518 = vshll.u32 %v1230, 16
      %v1520 = vrot.slane %v1518, 5
      %v1521 = vsel %vm811, %v1516, %v1520
      %v1522 = vshrl.u32 %v1230, 16
      %v1524 = vrot.slane %v1522, 4
      %v1525 = vor.u32 %v1524, %v1520
      %v1526 = vrot.slane %v1525, 4
      %v1528 = vshll.u32 %v1231, 16
      %v1530 = vrot.slane %v1528, 5
      %v1531 = vsel %vm811, %v1526, %v1530
      %v1533 = vshrl.u32 %v1232, 16
      %v1535 = vrot.slane %v1533, 4
      %v1536 = vshll.u32 %v1232, 16
      %v1538 = vrot.slane %v1536, 5
      %v1539 = vor.u32 %v1535, %v1538
      %v1540 = vrot.slane %v1539, 4
      %v1542 = vshll.u32 %v1233, 16
      %v1544 = vrot.slane %v1542, 5
      %v1545 = vsel %vm811, %v1540, %v1544
      %v1546 = vshrl.u32 %v1233, 16
      %v1548 = vrot.slane %v1546, 4
      %v1549 = vor.u32 %v1548, %v1544
      %v1550 = vrot.slane %v1549, 4
      %v1552 = vshll.u32 %v1234, 16
      %v1554 = vrot.slane %v1552, 5
      %v1555 = vsel %vm811, %v1550, %v1554
      %v1557 = vshrl.u32 %v1235, 16
      %v1559 = vrot.slane %v1557, 4
      %v1560 = vshll.u32 %v1235, 16
      %v1562 = vrot.slane %v1560, 5
      %v1563 = vor.u32 %v1559, %v1562
      %v1564 = vrot.slane %v1563, 4
      %v1566 = vshll.u32 %v1236, 16
      %v1568 = vrot.slane %v1566, 5
      %v1569 = vsel %vm811, %v1564, %v1568
      %v1570 = vshrl.u32 %v1236, 16
      %v1572 = vrot.slane %v1570, 4
      %v1573 = vor.u32 %v1572, %v1568
      %v1574 = vrot.slane %v1573, 4
      %v1576 = vshll.u32 %v1237, 16
      %v1578 = vrot.slane %v1576, 5
      %v1579 = vsel %vm811, %v1574, %v1578
      %v1581 = vshrl.u32 %v1238, 16
      %v1583 = vrot.slane %v1581, 4
      %v1584 = vshll.u32 %v1238, 16
      %v1586 = vrot.slane %v1584, 5
      %v1587 = vor.u32 %v1583, %v1586
      %v1588 = vrot.slane %v1587, 4
      %v1590 = vshll.u32 %v1239, 16
      %v1592 = vrot.slane %v1590, 5
      %v1593 = vsel %vm811, %v1588, %v1592
      %v1594 = vshrl.u32 %v1239, 16
      %v1596 = vrot.slane %v1594, 4
      %v1597 = vor.u32 %v1596, %v1592
      %v1598 = vrot.slane %v1597, 4
      %v1600 = vshll.u32 %v1240, 16
      %v1602 = vrot.slane %v1600, 5
      %v1603 = vsel %vm811, %v1598, %v1602
      %v1605 = vshrl.u32 %v1241, 16
      %v1607 = vrot.slane %v1605, 4
      %v1608 = vshll.u32 %v1241, 16
      %v1610 = vrot.slane %v1608, 5
      %v1611 = vor.u32 %v1607, %v1610
      %v1612 = vrot.slane %v1611, 4
      %v1614 = vshll.u32 %v1242, 16
      %v1616 = vrot.slane %v1614, 5
      %v1617 = vsel %vm811, %v1612, %v1616
      %v1618 = vshrl.u32 %v1242, 16
      %v1620 = vrot.slane %v1618, 4
      %v1621 = vor.u32 %v1620, %v1616
      %v1622 = vrot.slane %v1621, 4
      %v1624 = vshll.u32 %v1243, 16
      %v1626 = vrot.slane %v1624, 5
      %v1627 = vsel %vm811, %v1622, %v1626
      %s1628 = scalar_lea.vmem %s2, 8
      %v1629 = vld [vmem:[%s1628] sm:$0xf]
      %v1630 = vld [vmem:[%s1628 + $0x4] sm:$0xf]
      %v1631 = vunpack.c.l.b16 %v825
      %v1632 = vunpack.c.l.b16 %v835
      %v1633 = vunpack.c.l.b16 %v849
      %v1634 = vunpack.c.l.b16 %v859
      %v1635 = vunpack.c.l.b16 %v873
      %v1636 = vunpack.c.l.b16 %v883
      %v1637 = vunpack.c.l.b16 %v897
      %v1638 = vunpack.c.l.b16 %v907
      %v1639 = vunpack.c.l.b16 %v921
      %v1640 = vunpack.c.l.b16 %v931
      %v1641 = vunpack.c.l.b16 %v945
      %v1642 = vunpack.c.l.b16 %v955
      %v1643 = vunpack.c.l.b16 %v969
      %v1644 = vunpack.c.l.b16 %v979
      %v1645 = vunpack.c.l.b16 %v993
      %v1646 = vunpack.c.l.b16 %v1003
      %v1647 = vunpack.c.l.b16 %v1017
      %v1648 = vunpack.c.l.b16 %v1027
      %v1649 = vunpack.c.l.b16 %v1041
      %v1650 = vunpack.c.l.b16 %v1051
      %v1651 = vunpack.c.l.b16 %v1065
      %v1652 = vunpack.c.l.b16 %v1075
      %v1653 = vunpack.c.l.b16 %v1089
      %v1654 = vunpack.c.l.b16 %v1099
      %v1655 = vunpack.c.l.b16 %v1113
      %v1656 = vunpack.c.l.b16 %v1123
      %v1657 = vunpack.c.l.b16 %v1137
      %v1658 = vunpack.c.l.b16 %v1147
      %v1659 = vunpack.c.l.b16 %v1161
      %v1660 = vunpack.c.l.b16 %v1171
      %v1661 = vunpack.c.l.b16 %v1185
      %v1662 = vunpack.c.l.b16 %v1195
      %v1663 = vpack.c.b16 %v1632, %v1631
      %v1664 = vpack.c.b16 %v1634, %v1633
      %v1665 = vpack.c.b16 %v1636, %v1635
      %v1666 = vpack.c.b16 %v1638, %v1637
      %v1667 = vpack.c.b16 %v1640, %v1639
      %v1668 = vpack.c.b16 %v1642, %v1641
      %v1669 = vpack.c.b16 %v1644, %v1643
      %v1670 = vpack.c.b16 %v1646, %v1645
      %v1671 = vpack.c.b16 %v1648, %v1647
      %v1672 = vpack.c.b16 %v1650, %v1649
      %v1673 = vpack.c.b16 %v1652, %v1651
      %v1674 = vpack.c.b16 %v1654, %v1653
      %v1675 = vpack.c.b16 %v1656, %v1655
      %v1676 = vpack.c.b16 %v1658, %v1657
      %v1677 = vpack.c.b16 %v1660, %v1659
      %v1678 = vpack.c.b16 %v1662, %v1661
      %v1681 = vunpack.c.l.b16 %v1629
      %v1682 = vunpack.c.l.b16 %v1630
      %v1683 = vpack.c.b16 %v1682, %v1681
      %v1686 = vsel %vm400, %v1663, 0
      %v1689 = vsel %vm400, %v1664, 0
      %v1692 = vsel %vm400, %v1665, 0
      %v1695 = vsel %vm400, %v1666, 0
      %v1698 = vsel %vm400, %v1667, 0
      %v1701 = vsel %vm400, %v1668, 0
      %v1704 = vsel %vm400, %v1669, 0
      %v1707 = vsel %vm400, %v1670, 0
      %v1710 = vsel %vm400, %v1671, 0
      %v1713 = vsel %vm400, %v1672, 0
      %v1716 = vsel %vm400, %v1673, 0
      %v1719 = vsel %vm400, %v1674, 0
      %v1722 = vsel %vm400, %v1675, 0
      %v1725 = vsel %vm400, %v1676, 0
      %v1728 = vsel %vm400, %v1677, 0
      %v1731 = vsel %vm400, %v1678, 0
      %1733 = vmatpush.bf16.msra.mxu0 0
      %1734 = vmatpush.bf16.msra.mxu0 0
      %1735 = vmatpush.bf16.msra.mxu0 0
      %1736 = vmatpush.bf16.msra.mxu0 0
      %1737 = vmatpush.bf16.msra.mxu0 0
      %1738 = vmatpush.bf16.msra.mxu0 0
      %1739 = vmatpush.bf16.msra.mxu0 0
      %1740 = vmatpush.bf16.msra.mxu0 %v1683
      %1741 = vmatmul.bf16.gmra.mxu0 %v1686
      %v1742 = vpop.f32.mrf.mxu0
      %v1743 = vadd.f32 0.0, %v1742
      %v1744 = vpop.f32.mrf.mxu0
      %v1745 = vadd.f32 0.0, %v1744
      %1746 = vmatmul.bf16.gmra.mxu0 %v1689
      %v1747 = vpop.f32.mrf.mxu0
      %v1748 = vadd.f32 0.0, %v1747
      %v1749 = vpop.f32.mrf.mxu0
      %v1750 = vadd.f32 0.0, %v1749
      %1751 = vmatmul.bf16.gmra.mxu0 %v1692
      %v1752 = vpop.f32.mrf.mxu0
      %v1753 = vadd.f32 0.0, %v1752
      %v1754 = vpop.f32.mrf.mxu0
      %v1755 = vadd.f32 0.0, %v1754
      %1756 = vmatmul.bf16.gmra.mxu0 %v1695
      %v1757 = vpop.f32.mrf.mxu0
      %v1758 = vadd.f32 0.0, %v1757
      %v1759 = vpop.f32.mrf.mxu0
      %v1760 = vadd.f32 0.0, %v1759
      %1761 = vmatmul.bf16.gmra.mxu0 %v1698
      %v1762 = vpop.f32.mrf.mxu0
      %v1763 = vadd.f32 0.0, %v1762
      %v1764 = vpop.f32.mrf.mxu0
      %v1765 = vadd.f32 0.0, %v1764
      %1766 = vmatmul.bf16.gmra.mxu0 %v1701
      %v1767 = vpop.f32.mrf.mxu0
      %v1768 = vadd.f32 0.0, %v1767
      %v1769 = vpop.f32.mrf.mxu0
      %v1770 = vadd.f32 0.0, %v1769
      %1771 = vmatmul.bf16.gmra.mxu0 %v1704
      %v1772 = vpop.f32.mrf.mxu0
      %v1773 = vadd.f32 0.0, %v1772
      %v1774 = vpop.f32.mrf.mxu0
      %v1775 = vadd.f32 0.0, %v1774
      %1776 = vmatmul.bf16.gmra.mxu0 %v1707
      %v1777 = vpop.f32.mrf.mxu0
      %v1778 = vadd.f32 0.0, %v1777
      %v1779 = vpop.f32.mrf.mxu0
      %v1780 = vadd.f32 0.0, %v1779
      %1781 = vmatmul.bf16.gmra.mxu0 %v1710
      %v1782 = vpop.f32.mrf.mxu0
      %v1783 = vadd.f32 0.0, %v1782
      %v1784 = vpop.f32.mrf.mxu0
      %v1785 = vadd.f32 0.0, %v1784
      %1786 = vmatmul.bf16.gmra.mxu0 %v1713
      %v1787 = vpop.f32.mrf.mxu0
      %v1788 = vadd.f32 0.0, %v1787
      %v1789 = vpop.f32.mrf.mxu0
      %v1790 = vadd.f32 0.0, %v1789
      %1791 = vmatmul.bf16.gmra.mxu0 %v1716
      %v1792 = vpop.f32.mrf.mxu0
      %v1793 = vadd.f32 0.0, %v1792
      %v1794 = vpop.f32.mrf.mxu0
      %v1795 = vadd.f32 0.0, %v1794
      %1796 = vmatmul.bf16.gmra.mxu0 %v1719
      %v1797 = vpop.f32.mrf.mxu0
      %v1798 = vadd.f32 0.0, %v1797
      %v1799 = vpop.f32.mrf.mxu0
      %v1800 = vadd.f32 0.0, %v1799
      %1801 = vmatmul.bf16.gmra.mxu0 %v1722
      %v1802 = vpop.f32.mrf.mxu0
      %v1803 = vadd.f32 0.0, %v1802
      %v1804 = vpop.f32.mrf.mxu0
      %v1805 = vadd.f32 0.0, %v1804
      %1806 = vmatmul.bf16.gmra.mxu0 %v1725
      %v1807 = vpop.f32.mrf.mxu0
      %v1808 = vadd.f32 0.0, %v1807
      %v1809 = vpop.f32.mrf.mxu0
      %v1810 = vadd.f32 0.0, %v1809
      %1811 = vmatmul.bf16.gmra.mxu0 %v1728
      %v1812 = vpop.f32.mrf.mxu0
      %v1813 = vadd.f32 0.0, %v1812
      %v1814 = vpop.f32.mrf.mxu0
      %v1815 = vadd.f32 0.0, %v1814
      %1816 = vmatmul.bf16.gmra.mxu0 %v1731
      %v1817 = vpop.f32.mrf.mxu0
      %v1818 = vadd.f32 0.0, %v1817
      %v1819 = vpop.f32.mrf.mxu0
      %v1820 = vadd.f32 0.0, %v1819
      %1821 = vdwg.mxu0
      %v1822 = vadd.f32 %v682, %v1743
      %v1823 = vadd.f32 %v684, %v1745
      %v1824 = vadd.f32 %v687, %v1748
      %v1825 = vadd.f32 %v689, %v1750
      %v1826 = vadd.f32 %v692, %v1753
      %v1827 = vadd.f32 %v694, %v1755
      %v1828 = vadd.f32 %v697, %v1758
      %v1829 = vadd.f32 %v699, %v1760
      %v1830 = vadd.f32 %v702, %v1763
      %v1831 = vadd.f32 %v704, %v1765
      %v1832 = vadd.f32 %v707, %v1768
      %v1833 = vadd.f32 %v709, %v1770
      %v1834 = vadd.f32 %v712, %v1773
      %v1835 = vadd.f32 %v714, %v1775
      %v1836 = vadd.f32 %v717, %v1778
      %v1837 = vadd.f32 %v719, %v1780
      %v1838 = vadd.f32 %v722, %v1783
      %v1839 = vadd.f32 %v724, %v1785
      %v1840 = vadd.f32 %v727, %v1788
      %v1841 = vadd.f32 %v729, %v1790
      %v1842 = vadd.f32 %v732, %v1793
      %v1843 = vadd.f32 %v734, %v1795
      %v1844 = vadd.f32 %v737, %v1798
      %v1845 = vadd.f32 %v739, %v1800
      %v1846 = vadd.f32 %v742, %v1803
      %v1847 = vadd.f32 %v744, %v1805
      %v1848 = vadd.f32 %v747, %v1808
      %v1849 = vadd.f32 %v749, %v1810
      %v1850 = vadd.f32 %v752, %v1813
      %v1851 = vadd.f32 %v754, %v1815
      %v1852 = vadd.f32 %v757, %v1818
      %v1853 = vadd.f32 %v759, %v1820
      %s1854 = scalar_lea.vmem %s3, 8
      %v1855 = vld [vmem:[%s1854] sm:$0xf]
      %v1856 = vld [vmem:[%s1854 + $0x4] sm:$0xf]
      %v1857 = vunpack.c.l.b16 %v1257
      %v1858 = vunpack.c.l.b16 %v1267
      %v1859 = vunpack.c.l.b16 %v1281
      %v1860 = vunpack.c.l.b16 %v1291
      %v1861 = vunpack.c.l.b16 %v1305
      %v1862 = vunpack.c.l.b16 %v1315
      %v1863 = vunpack.c.l.b16 %v1329
      %v1864 = vunpack.c.l.b16 %v1339
      %v1865 = vunpack.c.l.b16 %v1353
      %v1866 = vunpack.c.l.b16 %v1363
      %v1867 = vunpack.c.l.b16 %v1377
      %v1868 = vunpack.c.l.b16 %v1387
      %v1869 = vunpack.c.l.b16 %v1401
      %v1870 = vunpack.c.l.b16 %v1411
      %v1871 = vunpack.c.l.b16 %v1425
      %v1872 = vunpack.c.l.b16 %v1435
      %v1873 = vunpack.c.l.b16 %v1449
      %v1874 = vunpack.c.l.b16 %v1459
      %v1875 = vunpack.c.l.b16 %v1473
      %v1876 = vunpack.c.l.b16 %v1483
      %v1877 = vunpack.c.l.b16 %v1497
      %v1878 = vunpack.c.l.b16 %v1507
      %v1879 = vunpack.c.l.b16 %v1521
      %v1880 = vunpack.c.l.b16 %v1531
      %v1881 = vunpack.c.l.b16 %v1545
      %v1882 = vunpack.c.l.b16 %v1555
      %v1883 = vunpack.c.l.b16 %v1569
      %v1884 = vunpack.c.l.b16 %v1579
      %v1885 = vunpack.c.l.b16 %v1593
      %v1886 = vunpack.c.l.b16 %v1603
      %v1887 = vunpack.c.l.b16 %v1617
      %v1888 = vunpack.c.l.b16 %v1627
      %v1889 = vpack.c.b16 %v1858, %v1857
      %v1890 = vpack.c.b16 %v1860, %v1859
      %v1891 = vpack.c.b16 %v1862, %v1861
      %v1892 = vpack.c.b16 %v1864, %v1863
      %v1893 = vpack.c.b16 %v1866, %v1865
      %v1894 = vpack.c.b16 %v1868, %v1867
      %v1895 = vpack.c.b16 %v1870, %v1869
      %v1896 = vpack.c.b16 %v1872, %v1871
      %v1897 = vpack.c.b16 %v1874, %v1873
      %v1898 = vpack.c.b16 %v1876, %v1875
      %v1899 = vpack.c.b16 %v1878, %v1877
      %v1900 = vpack.c.b16 %v1880, %v1879
      %v1901 = vpack.c.b16 %v1882, %v1881
      %v1902 = vpack.c.b16 %v1884, %v1883
      %v1903 = vpack.c.b16 %v1886, %v1885
      %v1904 = vpack.c.b16 %v1888, %v1887
      %v1907 = vunpack.c.l.b16 %v1855
      %v1908 = vunpack.c.l.b16 %v1856
      %v1909 = vpack.c.b16 %v1908, %v1907
      %v1912 = vsel %vm400, %v1889, 0
      %v1915 = vsel %vm400, %v1890, 0
      %v1918 = vsel %vm400, %v1891, 0
      %v1921 = vsel %vm400, %v1892, 0
      %v1924 = vsel %vm400, %v1893, 0
      %v1927 = vsel %vm400, %v1894, 0
      %v1930 = vsel %vm400, %v1895, 0
      %v1933 = vsel %vm400, %v1896, 0
      %v1936 = vsel %vm400, %v1897, 0
      %v1939 = vsel %vm400, %v1898, 0
      %v1942 = vsel %vm400, %v1899, 0
      %v1945 = vsel %vm400, %v1900, 0
      %v1948 = vsel %vm400, %v1901, 0
      %v1951 = vsel %vm400, %v1902, 0
      %v1954 = vsel %vm400, %v1903, 0
      %v1957 = vsel %vm400, %v1904, 0
      %1959 = vmatpush.bf16.msra.mxu0 0
      %1960 = vmatpush.bf16.msra.mxu0 0
      %1961 = vmatpush.bf16.msra.mxu0 0
      %1962 = vmatpush.bf16.msra.mxu0 0
      %1963 = vmatpush.bf16.msra.mxu0 0
      %1964 = vmatpush.bf16.msra.mxu0 0
      %1965 = vmatpush.bf16.msra.mxu0 0
      %1966 = vmatpush.bf16.msra.mxu0 %v1909
      %1967 = vmatmul.bf16.gmra.mxu0 %v1912
      %v1968 = vpop.f32.mrf.mxu0
      %v1969 = vadd.f32 0.0, %v1968
      %v1970 = vpop.f32.mrf.mxu0
      %v1971 = vadd.f32 0.0, %v1970
      %1972 = vmatmul.bf16.gmra.mxu0 %v1915
      %v1973 = vpop.f32.mrf.mxu0
      %v1974 = vadd.f32 0.0, %v1973
      %v1975 = vpop.f32.mrf.mxu0
      %v1976 = vadd.f32 0.0, %v1975
      %1977 = vmatmul.bf16.gmra.mxu0 %v1918
      %v1978 = vpop.f32.mrf.mxu0
      %v1979 = vadd.f32 0.0, %v1978
      %v1980 = vpop.f32.mrf.mxu0
      %v1981 = vadd.f32 0.0, %v1980
      %1982 = vmatmul.bf16.gmra.mxu0 %v1921
      %v1983 = vpop.f32.mrf.mxu0
      %v1984 = vadd.f32 0.0, %v1983
      %v1985 = vpop.f32.mrf.mxu0
      %v1986 = vadd.f32 0.0, %v1985
      %1987 = vmatmul.bf16.gmra.mxu0 %v1924
      %v1988 = vpop.f32.mrf.mxu0
      %v1989 = vadd.f32 0.0, %v1988
      %v1990 = vpop.f32.mrf.mxu0
      %v1991 = vadd.f32 0.0, %v1990
      %1992 = vmatmul.bf16.gmra.mxu0 %v1927
      %v1993 = vpop.f32.mrf.mxu0
      %v1994 = vadd.f32 0.0, %v1993
      %v1995 = vpop.f32.mrf.mxu0
      %v1996 = vadd.f32 0.0, %v1995
      %1997 = vmatmul.bf16.gmra.mxu0 %v1930
      %v1998 = vpop.f32.mrf.mxu0
      %v1999 = vadd.f32 0.0, %v1998
      %v2000 = vpop.f32.mrf.mxu0
      %v2001 = vadd.f32 0.0, %v2000
      %2002 = vmatmul.bf16.gmra.mxu0 %v1933
      %v2003 = vpop.f32.mrf.mxu0
      %v2004 = vadd.f32 0.0, %v2003
      %v2005 = vpop.f32.mrf.mxu0
      %v2006 = vadd.f32 0.0, %v2005
      %2007 = vmatmul.bf16.gmra.mxu0 %v1936
      %v2008 = vpop.f32.mrf.mxu0
      %v2009 = vadd.f32 0.0, %v2008
      %v2010 = vpop.f32.mrf.mxu0
      %v2011 = vadd.f32 0.0, %v2010
      %2012 = vmatmul.bf16.gmra.mxu0 %v1939
      %v2013 = vpop.f32.mrf.mxu0
      %v2014 = vadd.f32 0.0, %v2013
      %v2015 = vpop.f32.mrf.mxu0
      %v2016 = vadd.f32 0.0, %v2015
      %2017 = vmatmul.bf16.gmra.mxu0 %v1942
      %v2018 = vpop.f32.mrf.mxu0
      %v2019 = vadd.f32 0.0, %v2018
      %v2020 = vpop.f32.mrf.mxu0
      %v2021 = vadd.f32 0.0, %v2020
      %2022 = vmatmul.bf16.gmra.mxu0 %v1945
      %v2023 = vpop.f32.mrf.mxu0
      %v2024 = vadd.f32 0.0, %v2023
      %v2025 = vpop.f32.mrf.mxu0
      %v2026 = vadd.f32 0.0, %v2025
      %2027 = vmatmul.bf16.gmra.mxu0 %v1948
      %v2028 = vpop.f32.mrf.mxu0
      %v2029 = vadd.f32 0.0, %v2028
      %v2030 = vpop.f32.mrf.mxu0
      %v2031 = vadd.f32 0.0, %v2030
      %2032 = vmatmul.bf16.gmra.mxu0 %v1951
      %v2033 = vpop.f32.mrf.mxu0
      %v2034 = vadd.f32 0.0, %v2033
      %v2035 = vpop.f32.mrf.mxu0
      %v2036 = vadd.f32 0.0, %v2035
      %2037 = vmatmul.bf16.gmra.mxu0 %v1954
      %v2038 = vpop.f32.mrf.mxu0
      %v2039 = vadd.f32 0.0, %v2038
      %v2040 = vpop.f32.mrf.mxu0
      %v2041 = vadd.f32 0.0, %v2040
      %2042 = vmatmul.bf16.gmra.mxu0 %v1957
      %v2043 = vpop.f32.mrf.mxu0
      %v2044 = vadd.f32 0.0, %v2043
      %v2045 = vpop.f32.mrf.mxu0
      %v2046 = vadd.f32 0.0, %v2045
      %2047 = vdwg.mxu0
      %v2048 = vadd.f32 %v1822, %v1969
      %v2049 = vadd.f32 %v1823, %v1971
      %v2050 = vadd.f32 %v1824, %v1974
      %v2051 = vadd.f32 %v1825, %v1976
      %v2052 = vadd.f32 %v1826, %v1979
      %v2053 = vadd.f32 %v1827, %v1981
      %v2054 = vadd.f32 %v1828, %v1984
      %v2055 = vadd.f32 %v1829, %v1986
      %v2056 = vadd.f32 %v1830, %v1989
      %v2057 = vadd.f32 %v1831, %v1991
      %v2058 = vadd.f32 %v1832, %v1994
      %v2059 = vadd.f32 %v1833, %v1996
      %v2060 = vadd.f32 %v1834, %v1999
      %v2061 = vadd.f32 %v1835, %v2001
      %v2062 = vadd.f32 %v1836, %v2004
      %v2063 = vadd.f32 %v1837, %v2006
      %v2064 = vadd.f32 %v1838, %v2009
      %v2065 = vadd.f32 %v1839, %v2011
      %v2066 = vadd.f32 %v1840, %v2014
      %v2067 = vadd.f32 %v1841, %v2016
      %v2068 = vadd.f32 %v1842, %v2019
      %v2069 = vadd.f32 %v1843, %v2021
      %v2070 = vadd.f32 %v1844, %v2024
      %v2071 = vadd.f32 %v1845, %v2026
      %v2072 = vadd.f32 %v1846, %v2029
      %v2073 = vadd.f32 %v1847, %v2031
      %v2074 = vadd.f32 %v1848, %v2034
      %v2075 = vadd.f32 %v1849, %v2036
      %v2076 = vadd.f32 %v1850, %v2039
      %v2077 = vadd.f32 %v1851, %v2041
      %v2078 = vadd.f32 %v1852, %v2044
      %v2079 = vadd.f32 %v1853, %v2046
      %v2080 = vld [vmem:[%s234] sm:$0xe]
      %v2081 = vld [vmem:[%s234 + $0xc] sm:$0xe]
      %v2082 = vld [vmem:[%s234 + $0x18] sm:$0xe]
      %v2083 = vld [vmem:[%s234 + $0x24] sm:$0xe]
      %v2084 = vld [vmem:[%s234 + $0x30] sm:$0xe]
      %v2085 = vld [vmem:[%s234 + $0x3c] sm:$0xe]
      %v2086 = vld [vmem:[%s234 + $0x48] sm:$0xe]
      %v2087 = vld [vmem:[%s234 + $0x54] sm:$0xe]
      %v2088 = vld [vmem:[%s234 + $0x60] sm:$0xe]
      %v2089 = vld [vmem:[%s234 + $0x6c] sm:$0xe]
      %v2090 = vld [vmem:[%s234 + $0x78] sm:$0xe]
      %v2091 = vld [vmem:[%s234 + $0x84] sm:$0xe]
      %v2092 = vld [vmem:[%s234 + $0x90] sm:$0xe]
      %v2093 = vld [vmem:[%s234 + $0x9c] sm:$0xe]
      %v2094 = vld [vmem:[%s234 + $0xa8] sm:$0xe]
      %v2095 = vld [vmem:[%s234 + $0xb4] sm:$0xe]
      %vm2144 = vcmask 1042432
      %vm2145 = vcmask 1046532
      %vm2146 = vmor %vm2144, %vm2145
      %v2147 = vrot.slane %v2080, 5
      %v2148 = vrot.slane %v2147, 4
      %v2149 = vrot.slane %v762, 5
      %v2150 = vsel %vm2146, %v2148, %v2149
      %v2151 = vrot.slane %v2149, 4
      %v2152 = vrot.slane %v763, 5
      %v2153 = vsel %vm2146, %v2151, %v2152
      %v2154 = vrot.slane %v2081, 5
      %v2155 = vrot.slane %v2154, 4
      %v2156 = vrot.slane %v765, 5
      %v2157 = vsel %vm2146, %v2155, %v2156
      %v2158 = vrot.slane %v2156, 4
      %v2159 = vrot.slane %v766, 5
      %v2160 = vsel %vm2146, %v2158, %v2159
      %v2161 = vrot.slane %v2082, 5
      %v2162 = vrot.slane %v2161, 4
      %v2163 = vrot.slane %v768, 5
      %v2164 = vsel %vm2146, %v2162, %v2163
      %v2165 = vrot.slane %v2163, 4
      %v2166 = vrot.slane %v769, 5
      %v2167 = vsel %vm2146, %v2165, %v2166
      %v2168 = vrot.slane %v2083, 5
      %v2169 = vrot.slane %v2168, 4
      %v2170 = vrot.slane %v771, 5
      %v2171 = vsel %vm2146, %v2169, %v2170
      %v2172 = vrot.slane %v2170, 4
      %v2173 = vrot.slane %v772, 5
      %v2174 = vsel %vm2146, %v2172, %v2173
      %v2175 = vrot.slane %v2084, 5
      %v2176 = vrot.slane %v2175, 4
      %v2177 = vrot.slane %v774, 5
      %v2178 = vsel %vm2146, %v2176, %v2177
      %v2179 = vrot.slane %v2177, 4
      %v2180 = vrot.slane %v775, 5
      %v2181 = vsel %vm2146, %v2179, %v2180
      %v2182 = vrot.slane %v2085, 5
      %v2183 = vrot.slane %v2182, 4
      %v2184 = vrot.slane %v777, 5
      %v2185 = vsel %vm2146, %v2183, %v2184
      %v2186 = vrot.slane %v2184, 4
      %v2187 = vrot.slane %v778, 5
      %v2188 = vsel %vm2146, %v2186, %v2187
      %v2189 = vrot.slane %v2086, 5
      %v2190 = vrot.slane %v2189, 4
      %v2191 = vrot.slane %v780, 5
      %v2192 = vsel %vm2146, %v2190, %v2191
      %v2193 = vrot.slane %v2191, 4
      %v2194 = vrot.slane %v781, 5
      %v2195 = vsel %vm2146, %v2193, %v2194
      %v2196 = vrot.slane %v2087, 5
      %v2197 = vrot.slane %v2196, 4
      %v2198 = vrot.slane %v783, 5
      %v2199 = vsel %vm2146, %v2197, %v2198
      %v2200 = vrot.slane %v2198, 4
      %v2201 = vrot.slane %v784, 5
      %v2202 = vsel %vm2146, %v2200, %v2201
      %v2203 = vrot.slane %v2088, 5
      %v2204 = vrot.slane %v2203, 4
      %v2205 = vrot.slane %v786, 5
      %v2206 = vsel %vm2146, %v2204, %v2205
      %v2207 = vrot.slane %v2205, 4
      %v2208 = vrot.slane %v787, 5
      %v2209 = vsel %vm2146, %v2207, %v2208
      %v2210 = vrot.slane %v2089, 5
      %v2211 = vrot.slane %v2210, 4
      %v2212 = vrot.slane %v789, 5
      %v2213 = vsel %vm2146, %v2211, %v2212
      %v2214 = vrot.slane %v2212, 4
      %v2215 = vrot.slane %v790, 5
      %v2216 = vsel %vm2146, %v2214, %v2215
      %v2217 = vrot.slane %v2090, 5
      %v2218 = vrot.slane %v2217, 4
      %v2219 = vrot.slane %v792, 5
      %v2220 = vsel %vm2146, %v2218, %v2219
      %v2221 = vrot.slane %v2219, 4
      %v2222 = vrot.slane %v793, 5
      %v2223 = vsel %vm2146, %v2221, %v2222
      %v2224 = vrot.slane %v2091, 5
      %v2225 = vrot.slane %v2224, 4
      %v2226 = vrot.slane %v795, 5
      %v2227 = vsel %vm2146, %v2225, %v2226
      %v2228 = vrot.slane %v2226, 4
      %v2229 = vrot.slane %v796, 5
      %v2230 = vsel %vm2146, %v2228, %v2229
      %v2231 = vrot.slane %v2092, 5
      %v2232 = vrot.slane %v2231, 4
      %v2233 = vrot.slane %v798, 5
      %v2234 = vsel %vm2146, %v2232, %v2233
      %v2235 = vrot.slane %v2233, 4
      %v2236 = vrot.slane %v799, 5
      %v2237 = vsel %vm2146, %v2235, %v2236
      %v2238 = vrot.slane %v2093, 5
      %v2239 = vrot.slane %v2238, 4
      %v2240 = vrot.slane %v801, 5
      %v2241 = vsel %vm2146, %v2239, %v2240
      %v2242 = vrot.slane %v2240, 4
      %v2243 = vrot.slane %v802, 5
      %v2244 = vsel %vm2146, %v2242, %v2243
      %v2245 = vrot.slane %v2094, 5
      %v2246 = vrot.slane %v2245, 4
      %v2247 = vrot.slane %v804, 5
      %v2248 = vsel %vm2146, %v2246, %v2247
      %v2249 = vrot.slane %v2247, 4
      %v2250 = vrot.slane %v805, 5
      %v2251 = vsel %vm2146, %v2249, %v2250
      %v2252 = vrot.slane %v2095, 5
      %v2253 = vrot.slane %v2252, 4
      %v2254 = vrot.slane %v807, 5
      %v2255 = vsel %vm2146, %v2253, %v2254
      %v2256 = vrot.slane %v2254, 4
      %v2257 = vrot.slane %v808, 5
      %v2258 = vsel %vm2146, %v2256, %v2257
      %v2259 = vld [vmem:[%s239] sm:$0xe]
      %v2260 = vld [vmem:[%s239 + $0xc] sm:$0xe]
      %v2261 = vld [vmem:[%s239 + $0x18] sm:$0xe]
      %v2262 = vld [vmem:[%s239 + $0x24] sm:$0xe]
      %v2263 = vld [vmem:[%s239 + $0x30] sm:$0xe]
      %v2264 = vld [vmem:[%s239 + $0x3c] sm:$0xe]
      %v2265 = vld [vmem:[%s239 + $0x48] sm:$0xe]
      %v2266 = vld [vmem:[%s239 + $0x54] sm:$0xe]
      %v2267 = vld [vmem:[%s239 + $0x60] sm:$0xe]
      %v2268 = vld [vmem:[%s239 + $0x6c] sm:$0xe]
      %v2269 = vld [vmem:[%s239 + $0x78] sm:$0xe]
      %v2270 = vld [vmem:[%s239 + $0x84] sm:$0xe]
      %v2271 = vld [vmem:[%s239 + $0x90] sm:$0xe]
      %v2272 = vld [vmem:[%s239 + $0x9c] sm:$0xe]
      %v2273 = vld [vmem:[%s239 + $0xa8] sm:$0xe]
      %v2274 = vld [vmem:[%s239 + $0xb4] sm:$0xe]
      %v2323 = vrot.slane %v2259, 5
      %v2324 = vrot.slane %v2323, 4
      %v2325 = vrot.slane %v1197, 5
      %v2326 = vsel %vm2146, %v2324, %v2325
      %v2327 = vrot.slane %v2325, 4
      %v2328 = vrot.slane %v1198, 5
      %v2329 = vsel %vm2146, %v2327, %v2328
      %v2330 = vrot.slane %v2260, 5
      %v2331 = vrot.slane %v2330, 4
      %v2332 = vrot.slane %v1200, 5
      %v2333 = vsel %vm2146, %v2331, %v2332
      %v2334 = vrot.slane %v2332, 4
      %v2335 = vrot.slane %v1201, 5
      %v2336 = vsel %vm2146, %v2334, %v2335
      %v2337 = vrot.slane %v2261, 5
      %v2338 = vrot.slane %v2337, 4
      %v2339 = vrot.slane %v1203, 5
      %v2340 = vsel %vm2146, %v2338, %v2339
      %v2341 = vrot.slane %v2339, 4
      %v2342 = vrot.slane %v1204, 5
      %v2343 = vsel %vm2146, %v2341, %v2342
      %v2344 = vrot.slane %v2262, 5
      %v2345 = vrot.slane %v2344, 4
      %v2346 = vrot.slane %v1206, 5
      %v2347 = vsel %vm2146, %v2345, %v2346
      %v2348 = vrot.slane %v2346, 4
      %v2349 = vrot.slane %v1207, 5
      %v2350 = vsel %vm2146, %v2348, %v2349
      %v2351 = vrot.slane %v2263, 5
      %v2352 = vrot.slane %v2351, 4
      %v2353 = vrot.slane %v1209, 5
      %v2354 = vsel %vm2146, %v2352, %v2353
      %v2355 = vrot.slane %v2353, 4
      %v2356 = vrot.slane %v1210, 5
      %v2357 = vsel %vm2146, %v2355, %v2356
      %v2358 = vrot.slane %v2264, 5
      %v2359 = vrot.slane %v2358, 4
      %v2360 = vrot.slane %v1212, 5
      %v2361 = vsel %vm2146, %v2359, %v2360
      %v2362 = vrot.slane %v2360, 4
      %v2363 = vrot.slane %v1213, 5
      %v2364 = vsel %vm2146, %v2362, %v2363
      %v2365 = vrot.slane %v2265, 5
      %v2366 = vrot.slane %v2365, 4
      %v2367 = vrot.slane %v1215, 5
      %v2368 = vsel %vm2146, %v2366, %v2367
      %v2369 = vrot.slane %v2367, 4
      %v2370 = vrot.slane %v1216, 5
      %v2371 = vsel %vm2146, %v2369, %v2370
      %v2372 = vrot.slane %v2266, 5
      %v2373 = vrot.slane %v2372, 4
      %v2374 = vrot.slane %v1218, 5
      %v2375 = vsel %vm2146, %v2373, %v2374
      %v2376 = vrot.slane %v2374, 4
      %v2377 = vrot.slane %v1219, 5
      %v2378 = vsel %vm2146, %v2376, %v2377
      %v2379 = vrot.slane %v2267, 5
      %v2380 = vrot.slane %v2379, 4
      %v2381 = vrot.slane %v1221, 5
      %v2382 = vsel %vm2146, %v2380, %v2381
      %v2383 = vrot.slane %v2381, 4
      %v2384 = vrot.slane %v1222, 5
      %v2385 = vsel %vm2146, %v2383, %v2384
      %v2386 = vrot.slane %v2268, 5
      %v2387 = vrot.slane %v2386, 4
      %v2388 = vrot.slane %v1224, 5
      %v2389 = vsel %vm2146, %v2387, %v2388
      %v2390 = vrot.slane %v2388, 4
      %v2391 = vrot.slane %v1225, 5
      %v2392 = vsel %vm2146, %v2390, %v2391
      %v2393 = vrot.slane %v2269, 5
      %v2394 = vrot.slane %v2393, 4
      %v2395 = vrot.slane %v1227, 5
      %v2396 = vsel %vm2146, %v2394, %v2395
      %v2397 = vrot.slane %v2395, 4
      %v2398 = vrot.slane %v1228, 5
      %v2399 = vsel %vm2146, %v2397, %v2398
      %v2400 = vrot.slane %v2270, 5
      %v2401 = vrot.slane %v2400, 4
      %v2402 = vrot.slane %v1230, 5
      %v2403 = vsel %vm2146, %v2401, %v2402
      %v2404 = vrot.slane %v2402, 4
      %v2405 = vrot.slane %v1231, 5
      %v2406 = vsel %vm2146, %v2404, %v2405
      %v2407 = vrot.slane %v2271, 5
      %v2408 = vrot.slane %v2407, 4
      %v2409 = vrot.slane %v1233, 5
      %v2410 = vsel %vm2146, %v2408, %v2409
      %v2411 = vrot.slane %v2409, 4
      %v2412 = vrot.slane %v1234, 5
      %v2413 = vsel %vm2146, %v2411, %v2412
      %v2414 = vrot.slane %v2272, 5
      %v2415 = vrot.slane %v2414, 4
      %v2416 = vrot.slane %v1236, 5
      %v2417 = vsel %vm2146, %v2415, %v2416
      %v2418 = vrot.slane %v2416, 4
      %v2419 = vrot.slane %v1237, 5
      %v2420 = vsel %vm2146, %v2418, %v2419
      %v2421 = vrot.slane %v2273, 5
      %v2422 = vrot.slane %v2421, 4
      %v2423 = vrot.slane %v1239, 5
      %v2424 = vsel %vm2146, %v2422, %v2423
      %v2425 = vrot.slane %v2423, 4
      %v2426 = vrot.slane %v1240, 5
      %v2427 = vsel %vm2146, %v2425, %v2426
      %v2428 = vrot.slane %v2274, 5
      %v2429 = vrot.slane %v2428, 4
      %v2430 = vrot.slane %v1242, 5
      %v2431 = vsel %vm2146, %v2429, %v2430
      %v2432 = vrot.slane %v2430, 4
      %v2433 = vrot.slane %v1243, 5
      %v2434 = vsel %vm2146, %v2432, %v2433
      %s2435 = scalar_lea.vmem %s2, 16
      %v2436 = vld [vmem:[%s2435] sm:$0xf]
      %v2437 = vld [vmem:[%s2435 + $0x4] sm:$0xf]
      %v2438 = vunpack.c.l.b16 %v2150
      %v2439 = vunpack.c.l.b16 %v2153
      %v2440 = vunpack.c.l.b16 %v2157
      %v2441 = vunpack.c.l.b16 %v2160
      %v2442 = vunpack.c.l.b16 %v2164
      %v2443 = vunpack.c.l.b16 %v2167
      %v2444 = vunpack.c.l.b16 %v2171
      %v2445 = vunpack.c.l.b16 %v2174
      %v2446 = vunpack.c.l.b16 %v2178
      %v2447 = vunpack.c.l.b16 %v2181
      %v2448 = vunpack.c.l.b16 %v2185
      %v2449 = vunpack.c.l.b16 %v2188
      %v2450 = vunpack.c.l.b16 %v2192
      %v2451 = vunpack.c.l.b16 %v2195
      %v2452 = vunpack.c.l.b16 %v2199
      %v2453 = vunpack.c.l.b16 %v2202
      %v2454 = vunpack.c.l.b16 %v2206
      %v2455 = vunpack.c.l.b16 %v2209
      %v2456 = vunpack.c.l.b16 %v2213
      %v2457 = vunpack.c.l.b16 %v2216
      %v2458 = vunpack.c.l.b16 %v2220
      %v2459 = vunpack.c.l.b16 %v2223
      %v2460 = vunpack.c.l.b16 %v2227
      %v2461 = vunpack.c.l.b16 %v2230
      %v2462 = vunpack.c.l.b16 %v2234
      %v2463 = vunpack.c.l.b16 %v2237
      %v2464 = vunpack.c.l.b16 %v2241
      %v2465 = vunpack.c.l.b16 %v2244
      %v2466 = vunpack.c.l.b16 %v2248
      %v2467 = vunpack.c.l.b16 %v2251
      %v2468 = vunpack.c.l.b16 %v2255
      %v2469 = vunpack.c.l.b16 %v2258
      %v2470 = vpack.c.b16 %v2439, %v2438
      %v2471 = vpack.c.b16 %v2441, %v2440
      %v2472 = vpack.c.b16 %v2443, %v2442
      %v2473 = vpack.c.b16 %v2445, %v2444
      %v2474 = vpack.c.b16 %v2447, %v2446
      %v2475 = vpack.c.b16 %v2449, %v2448
      %v2476 = vpack.c.b16 %v2451, %v2450
      %v2477 = vpack.c.b16 %v2453, %v2452
      %v2478 = vpack.c.b16 %v2455, %v2454
      %v2479 = vpack.c.b16 %v2457, %v2456
      %v2480 = vpack.c.b16 %v2459, %v2458
      %v2481 = vpack.c.b16 %v2461, %v2460
      %v2482 = vpack.c.b16 %v2463, %v2462
      %v2483 = vpack.c.b16 %v2465, %v2464
      %v2484 = vpack.c.b16 %v2467, %v2466
      %v2485 = vpack.c.b16 %v2469, %v2468
      %v2488 = vunpack.c.l.b16 %v2436
      %v2489 = vunpack.c.l.b16 %v2437
      %v2490 = vpack.c.b16 %v2489, %v2488
      %v2493 = vsel %vm400, %v2470, 0
      %v2496 = vsel %vm400, %v2471, 0
      %v2499 = vsel %vm400, %v2472, 0
      %v2502 = vsel %vm400, %v2473, 0
      %v2505 = vsel %vm400, %v2474, 0
      %v2508 = vsel %vm400, %v2475, 0
      %v2511 = vsel %vm400, %v2476, 0
      %v2514 = vsel %vm400, %v2477, 0
      %v2517 = vsel %vm400, %v2478, 0
      %v2520 = vsel %vm400, %v2479, 0
      %v2523 = vsel %vm400, %v2480, 0
      %v2526 = vsel %vm400, %v2481, 0
      %v2529 = vsel %vm400, %v2482, 0
      %v2532 = vsel %vm400, %v2483, 0
      %v2535 = vsel %vm400, %v2484, 0
      %v2538 = vsel %vm400, %v2485, 0
      %2540 = vmatpush.bf16.msra.mxu0 0
      %2541 = vmatpush.bf16.msra.mxu0 0
      %2542 = vmatpush.bf16.msra.mxu0 0
      %2543 = vmatpush.bf16.msra.mxu0 0
      %2544 = vmatpush.bf16.msra.mxu0 0
      %2545 = vmatpush.bf16.msra.mxu0 0
      %2546 = vmatpush.bf16.msra.mxu0 0
      %2547 = vmatpush.bf16.msra.mxu0 %v2490
      %2548 = vmatmul.bf16.gmra.mxu0 %v2493
      %v2549 = vpop.f32.mrf.mxu0
      %v2550 = vadd.f32 0.0, %v2549
      %v2551 = vpop.f32.mrf.mxu0
      %v2552 = vadd.f32 0.0, %v2551
      %2553 = vmatmul.bf16.gmra.mxu0 %v2496
      %v2554 = vpop.f32.mrf.mxu0
      %v2555 = vadd.f32 0.0, %v2554
      %v2556 = vpop.f32.mrf.mxu0
      %v2557 = vadd.f32 0.0, %v2556
      %2558 = vmatmul.bf16.gmra.mxu0 %v2499
      %v2559 = vpop.f32.mrf.mxu0
      %v2560 = vadd.f32 0.0, %v2559
      %v2561 = vpop.f32.mrf.mxu0
      %v2562 = vadd.f32 0.0, %v2561
      %2563 = vmatmul.bf16.gmra.mxu0 %v2502
      %v2564 = vpop.f32.mrf.mxu0
      %v2565 = vadd.f32 0.0, %v2564
      %v2566 = vpop.f32.mrf.mxu0
      %v2567 = vadd.f32 0.0, %v2566
      %2568 = vmatmul.bf16.gmra.mxu0 %v2505
      %v2569 = vpop.f32.mrf.mxu0
      %v2570 = vadd.f32 0.0, %v2569
      %v2571 = vpop.f32.mrf.mxu0
      %v2572 = vadd.f32 0.0, %v2571
      %2573 = vmatmul.bf16.gmra.mxu0 %v2508
      %v2574 = vpop.f32.mrf.mxu0
      %v2575 = vadd.f32 0.0, %v2574
      %v2576 = vpop.f32.mrf.mxu0
      %v2577 = vadd.f32 0.0, %v2576
      %2578 = vmatmul.bf16.gmra.mxu0 %v2511
      %v2579 = vpop.f32.mrf.mxu0
      %v2580 = vadd.f32 0.0, %v2579
      %v2581 = vpop.f32.mrf.mxu0
      %v2582 = vadd.f32 0.0, %v2581
      %2583 = vmatmul.bf16.gmra.mxu0 %v2514
      %v2584 = vpop.f32.mrf.mxu0
      %v2585 = vadd.f32 0.0, %v2584
      %v2586 = vpop.f32.mrf.mxu0
      %v2587 = vadd.f32 0.0, %v2586
      %2588 = vmatmul.bf16.gmra.mxu0 %v2517
      %v2589 = vpop.f32.mrf.mxu0
      %v2590 = vadd.f32 0.0, %v2589
      %v2591 = vpop.f32.mrf.mxu0
      %v2592 = vadd.f32 0.0, %v2591
      %2593 = vmatmul.bf16.gmra.mxu0 %v2520
      %v2594 = vpop.f32.mrf.mxu0
      %v2595 = vadd.f32 0.0, %v2594
      %v2596 = vpop.f32.mrf.mxu0
      %v2597 = vadd.f32 0.0, %v2596
      %2598 = vmatmul.bf16.gmra.mxu0 %v2523
      %v2599 = vpop.f32.mrf.mxu0
      %v2600 = vadd.f32 0.0, %v2599
      %v2601 = vpop.f32.mrf.mxu0
      %v2602 = vadd.f32 0.0, %v2601
      %2603 = vmatmul.bf16.gmra.mxu0 %v2526
      %v2604 = vpop.f32.mrf.mxu0
      %v2605 = vadd.f32 0.0, %v2604
      %v2606 = vpop.f32.mrf.mxu0
      %v2607 = vadd.f32 0.0, %v2606
      %2608 = vmatmul.bf16.gmra.mxu0 %v2529
      %v2609 = vpop.f32.mrf.mxu0
      %v2610 = vadd.f32 0.0, %v2609
      %v2611 = vpop.f32.mrf.mxu0
      %v2612 = vadd.f32 0.0, %v2611
      %2613 = vmatmul.bf16.gmra.mxu0 %v2532
      %v2614 = vpop.f32.mrf.mxu0
      %v2615 = vadd.f32 0.0, %v2614
      %v2616 = vpop.f32.mrf.mxu0
      %v2617 = vadd.f32 0.0, %v2616
      %2618 = vmatmul.bf16.gmra.mxu0 %v2535
      %v2619 = vpop.f32.mrf.mxu0
      %v2620 = vadd.f32 0.0, %v2619
      %v2621 = vpop.f32.mrf.mxu0
      %v2622 = vadd.f32 0.0, %v2621
      %2623 = vmatmul.bf16.gmra.mxu0 %v2538
      %v2624 = vpop.f32.mrf.mxu0
      %v2625 = vadd.f32 0.0, %v2624
      %v2626 = vpop.f32.mrf.mxu0
      %v2627 = vadd.f32 0.0, %v2626
      %2628 = vdwg.mxu0
      %v2629 = vadd.f32 %v2048, %v2550
      %v2630 = vadd.f32 %v2049, %v2552
      %v2631 = vadd.f32 %v2050, %v2555
      %v2632 = vadd.f32 %v2051, %v2557
      %v2633 = vadd.f32 %v2052, %v2560
      %v2634 = vadd.f32 %v2053, %v2562
      %v2635 = vadd.f32 %v2054, %v2565
      %v2636 = vadd.f32 %v2055, %v2567
      %v2637 = vadd.f32 %v2056, %v2570
      %v2638 = vadd.f32 %v2057, %v2572
      %v2639 = vadd.f32 %v2058, %v2575
      %v2640 = vadd.f32 %v2059, %v2577
      %v2641 = vadd.f32 %v2060, %v2580
      %v2642 = vadd.f32 %v2061, %v2582
      %v2643 = vadd.f32 %v2062, %v2585
      %v2644 = vadd.f32 %v2063, %v2587
      %v2645 = vadd.f32 %v2064, %v2590
      %v2646 = vadd.f32 %v2065, %v2592
      %v2647 = vadd.f32 %v2066, %v2595
      %v2648 = vadd.f32 %v2067, %v2597
      %v2649 = vadd.f32 %v2068, %v2600
      %v2650 = vadd.f32 %v2069, %v2602
      %v2651 = vadd.f32 %v2070, %v2605
      %v2652 = vadd.f32 %v2071, %v2607
      %v2653 = vadd.f32 %v2072, %v2610
      %v2654 = vadd.f32 %v2073, %v2612
      %v2655 = vadd.f32 %v2074, %v2615
      %v2656 = vadd.f32 %v2075, %v2617
      %v2657 = vadd.f32 %v2076, %v2620
      %v2658 = vadd.f32 %v2077, %v2622
      %v2659 = vadd.f32 %v2078, %v2625
      %v2660 = vadd.f32 %v2079, %v2627
      %s2661 = scalar_lea.vmem %s3, 16
      %v2662 = vld [vmem:[%s2661] sm:$0xf]
      %v2663 = vld [vmem:[%s2661 + $0x4] sm:$0xf]
      %v2664 = vunpack.c.l.b16 %v2326
      %v2665 = vunpack.c.l.b16 %v2329
      %v2666 = vunpack.c.l.b16 %v2333
      %v2667 = vunpack.c.l.b16 %v2336
      %v2668 = vunpack.c.l.b16 %v2340
      %v2669 = vunpack.c.l.b16 %v2343
      %v2670 = vunpack.c.l.b16 %v2347
      %v2671 = vunpack.c.l.b16 %v2350
      %v2672 = vunpack.c.l.b16 %v2354
      %v2673 = vunpack.c.l.b16 %v2357
      %v2674 = vunpack.c.l.b16 %v2361
      %v2675 = vunpack.c.l.b16 %v2364
      %v2676 = vunpack.c.l.b16 %v2368
      %v2677 = vunpack.c.l.b16 %v2371
      %v2678 = vunpack.c.l.b16 %v2375
      %v2679 = vunpack.c.l.b16 %v2378
      %v2680 = vunpack.c.l.b16 %v2382
      %v2681 = vunpack.c.l.b16 %v2385
      %v2682 = vunpack.c.l.b16 %v2389
      %v2683 = vunpack.c.l.b16 %v2392
      %v2684 = vunpack.c.l.b16 %v2396
      %v2685 = vunpack.c.l.b16 %v2399
      %v2686 = vunpack.c.l.b16 %v2403
      %v2687 = vunpack.c.l.b16 %v2406
      %v2688 = vunpack.c.l.b16 %v2410
      %v2689 = vunpack.c.l.b16 %v2413
      %v2690 = vunpack.c.l.b16 %v2417
      %v2691 = vunpack.c.l.b16 %v2420
      %v2692 = vunpack.c.l.b16 %v2424
      %v2693 = vunpack.c.l.b16 %v2427
      %v2694 = vunpack.c.l.b16 %v2431
      %v2695 = vunpack.c.l.b16 %v2434
      %v2696 = vpack.c.b16 %v2665, %v2664
      %v2697 = vpack.c.b16 %v2667, %v2666
      %v2698 = vpack.c.b16 %v2669, %v2668
      %v2699 = vpack.c.b16 %v2671, %v2670
      %v2700 = vpack.c.b16 %v2673, %v2672
      %v2701 = vpack.c.b16 %v2675, %v2674
      %v2702 = vpack.c.b16 %v2677, %v2676
      %v2703 = vpack.c.b16 %v2679, %v2678
      %v2704 = vpack.c.b16 %v2681, %v2680
      %v2705 = vpack.c.b16 %v2683, %v2682
      %v2706 = vpack.c.b16 %v2685, %v2684
      %v2707 = vpack.c.b16 %v2687, %v2686
      %v2708 = vpack.c.b16 %v2689, %v2688
      %v2709 = vpack.c.b16 %v2691, %v2690
      %v2710 = vpack.c.b16 %v2693, %v2692
      %v2711 = vpack.c.b16 %v2695, %v2694
      %v2714 = vunpack.c.l.b16 %v2662
      %v2715 = vunpack.c.l.b16 %v2663
      %v2716 = vpack.c.b16 %v2715, %v2714
      %v2719 = vsel %vm400, %v2696, 0
      %v2722 = vsel %vm400, %v2697, 0
      %v2725 = vsel %vm400, %v2698, 0
      %v2728 = vsel %vm400, %v2699, 0
      %v2731 = vsel %vm400, %v2700, 0
      %v2734 = vsel %vm400, %v2701, 0
      %v2737 = vsel %vm400, %v2702, 0
      %v2740 = vsel %vm400, %v2703, 0
      %v2743 = vsel %vm400, %v2704, 0
      %v2746 = vsel %vm400, %v2705, 0
      %v2749 = vsel %vm400, %v2706, 0
      %v2752 = vsel %vm400, %v2707, 0
      %v2755 = vsel %vm400, %v2708, 0
      %v2758 = vsel %vm400, %v2709, 0
      %v2761 = vsel %vm400, %v2710, 0
      %v2764 = vsel %vm400, %v2711, 0
      %2766 = vmatpush.bf16.msra.mxu0 0
      %2767 = vmatpush.bf16.msra.mxu0 0
      %2768 = vmatpush.bf16.msra.mxu0 0
      %2769 = vmatpush.bf16.msra.mxu0 0
      %2770 = vmatpush.bf16.msra.mxu0 0
      %2771 = vmatpush.bf16.msra.mxu0 0
      %2772 = vmatpush.bf16.msra.mxu0 0
      %2773 = vmatpush.bf16.msra.mxu0 %v2716
      %2774 = vmatmul.bf16.gmra.mxu0 %v2719
      %v2775 = vpop.f32.mrf.mxu0
      %v2776 = vadd.f32 0.0, %v2775
      %v2777 = vpop.f32.mrf.mxu0
      %v2778 = vadd.f32 0.0, %v2777
      %2779 = vmatmul.bf16.gmra.mxu0 %v2722
      %v2780 = vpop.f32.mrf.mxu0
      %v2781 = vadd.f32 0.0, %v2780
      %v2782 = vpop.f32.mrf.mxu0
      %v2783 = vadd.f32 0.0, %v2782
      %2784 = vmatmul.bf16.gmra.mxu0 %v2725
      %v2785 = vpop.f32.mrf.mxu0
      %v2786 = vadd.f32 0.0, %v2785
      %v2787 = vpop.f32.mrf.mxu0
      %v2788 = vadd.f32 0.0, %v2787
      %2789 = vmatmul.bf16.gmra.mxu0 %v2728
      %v2790 = vpop.f32.mrf.mxu0
      %v2791 = vadd.f32 0.0, %v2790
      %v2792 = vpop.f32.mrf.mxu0
      %v2793 = vadd.f32 0.0, %v2792
      %2794 = vmatmul.bf16.gmra.mxu0 %v2731
      %v2795 = vpop.f32.mrf.mxu0
      %v2796 = vadd.f32 0.0, %v2795
      %v2797 = vpop.f32.mrf.mxu0
      %v2798 = vadd.f32 0.0, %v2797
      %2799 = vmatmul.bf16.gmra.mxu0 %v2734
      %v2800 = vpop.f32.mrf.mxu0
      %v2801 = vadd.f32 0.0, %v2800
      %v2802 = vpop.f32.mrf.mxu0
      %v2803 = vadd.f32 0.0, %v2802
      %2804 = vmatmul.bf16.gmra.mxu0 %v2737
      %v2805 = vpop.f32.mrf.mxu0
      %v2806 = vadd.f32 0.0, %v2805
      %v2807 = vpop.f32.mrf.mxu0
      %v2808 = vadd.f32 0.0, %v2807
      %2809 = vmatmul.bf16.gmra.mxu0 %v2740
      %v2810 = vpop.f32.mrf.mxu0
      %v2811 = vadd.f32 0.0, %v2810
      %v2812 = vpop.f32.mrf.mxu0
      %v2813 = vadd.f32 0.0, %v2812
      %2814 = vmatmul.bf16.gmra.mxu0 %v2743
      %v2815 = vpop.f32.mrf.mxu0
      %v2816 = vadd.f32 0.0, %v2815
      %v2817 = vpop.f32.mrf.mxu0
      %v2818 = vadd.f32 0.0, %v2817
      %2819 = vmatmul.bf16.gmra.mxu0 %v2746
      %v2820 = vpop.f32.mrf.mxu0
      %v2821 = vadd.f32 0.0, %v2820
      %v2822 = vpop.f32.mrf.mxu0
      %v2823 = vadd.f32 0.0, %v2822
      %2824 = vmatmul.bf16.gmra.mxu0 %v2749
      %v2825 = vpop.f32.mrf.mxu0
      %v2826 = vadd.f32 0.0, %v2825
      %v2827 = vpop.f32.mrf.mxu0
      %v2828 = vadd.f32 0.0, %v2827
      %2829 = vmatmul.bf16.gmra.mxu0 %v2752
      %v2830 = vpop.f32.mrf.mxu0
      %v2831 = vadd.f32 0.0, %v2830
      %v2832 = vpop.f32.mrf.mxu0
      %v2833 = vadd.f32 0.0, %v2832
      %2834 = vmatmul.bf16.gmra.mxu0 %v2755
      %v2835 = vpop.f32.mrf.mxu0
      %v2836 = vadd.f32 0.0, %v2835
      %v2837 = vpop.f32.mrf.mxu0
      %v2838 = vadd.f32 0.0, %v2837
      %2839 = vmatmul.bf16.gmra.mxu0 %v2758
      %v2840 = vpop.f32.mrf.mxu0
      %v2841 = vadd.f32 0.0, %v2840
      %v2842 = vpop.f32.mrf.mxu0
      %v2843 = vadd.f32 0.0, %v2842
      %2844 = vmatmul.bf16.gmra.mxu0 %v2761
      %v2845 = vpop.f32.mrf.mxu0
      %v2846 = vadd.f32 0.0, %v2845
      %v2847 = vpop.f32.mrf.mxu0
      %v2848 = vadd.f32 0.0, %v2847
      %2849 = vmatmul.bf16.gmra.mxu0 %v2764
      %v2850 = vpop.f32.mrf.mxu0
      %v2851 = vadd.f32 0.0, %v2850
      %v2852 = vpop.f32.mrf.mxu0
      %v2853 = vadd.f32 0.0, %v2852
      %2854 = vdwg.mxu0
      %v2855 = vadd.f32 %v2629, %v2776
      %v2856 = vadd.f32 %v2630, %v2778
      %v2857 = vadd.f32 %v2631, %v2781
      %v2858 = vadd.f32 %v2632, %v2783
      %v2859 = vadd.f32 %v2633, %v2786
      %v2860 = vadd.f32 %v2634, %v2788
      %v2861 = vadd.f32 %v2635, %v2791
      %v2862 = vadd.f32 %v2636, %v2793
      %v2863 = vadd.f32 %v2637, %v2796
      %v2864 = vadd.f32 %v2638, %v2798
      %v2865 = vadd.f32 %v2639, %v2801
      %v2866 = vadd.f32 %v2640, %v2803
      %v2867 = vadd.f32 %v2641, %v2806
      %v2868 = vadd.f32 %v2642, %v2808
      %v2869 = vadd.f32 %v2643, %v2811
      %v2870 = vadd.f32 %v2644, %v2813
      %v2871 = vadd.f32 %v2645, %v2816
      %v2872 = vadd.f32 %v2646, %v2818
      %v2873 = vadd.f32 %v2647, %v2821
      %v2874 = vadd.f32 %v2648, %v2823
      %v2875 = vadd.f32 %v2649, %v2826
      %v2876 = vadd.f32 %v2650, %v2828
      %v2877 = vadd.f32 %v2651, %v2831
      %v2878 = vadd.f32 %v2652, %v2833
      %v2879 = vadd.f32 %v2653, %v2836
      %v2880 = vadd.f32 %v2654, %v2838
      %v2881 = vadd.f32 %v2655, %v2841
      %v2882 = vadd.f32 %v2656, %v2843
      %v2883 = vadd.f32 %v2657, %v2846
      %v2884 = vadd.f32 %v2658, %v2848
      %v2885 = vadd.f32 %v2659, %v2851
      %v2886 = vadd.f32 %v2660, %v2853
      %s2887 = scalar_lea.vmem %s234, 12
      %v2888 = vld [vmem:[%s2887] sm:$0xf]
      %v2889 = vld [vmem:[%s2887 + $0x4] sm:$0xf]
      %v2890 = vld [vmem:[%s2887 + $0xc] sm:$0xf]
      %v2891 = vld [vmem:[%s2887 + $0x10] sm:$0xf]
      %v2892 = vld [vmem:[%s2887 + $0x18] sm:$0xf]
      %v2893 = vld [vmem:[%s2887 + $0x1c] sm:$0xf]
      %v2894 = vld [vmem:[%s2887 + $0x24] sm:$0xf]
      %v2895 = vld [vmem:[%s2887 + $0x28] sm:$0xf]
      %v2896 = vld [vmem:[%s2887 + $0x30] sm:$0xf]
      %v2897 = vld [vmem:[%s2887 + $0x34] sm:$0xf]
      %v2898 = vld [vmem:[%s2887 + $0x3c] sm:$0xf]
      %v2899 = vld [vmem:[%s2887 + $0x40] sm:$0xf]
      %v2900 = vld [vmem:[%s2887 + $0x48] sm:$0xf]
      %v2901 = vld [vmem:[%s2887 + $0x4c] sm:$0xf]
      %v2902 = vld [vmem:[%s2887 + $0x54] sm:$0xf]
      %v2903 = vld [vmem:[%s2887 + $0x58] sm:$0xf]
      %v2904 = vld [vmem:[%s2887 + $0x60] sm:$0xf]
      %v2905 = vld [vmem:[%s2887 + $0x64] sm:$0xf]
      %v2906 = vld [vmem:[%s2887 + $0x6c] sm:$0xf]
      %v2907 = vld [vmem:[%s2887 + $0x70] sm:$0xf]
      %v2908 = vld [vmem:[%s2887 + $0x78] sm:$0xf]
      %v2909 = vld [vmem:[%s2887 + $0x7c] sm:$0xf]
      %v2910 = vld [vmem:[%s2887 + $0x84] sm:$0xf]
      %v2911 = vld [vmem:[%s2887 + $0x88] sm:$0xf]
      %v2912 = vld [vmem:[%s2887 + $0x90] sm:$0xf]
      %v2913 = vld [vmem:[%s2887 + $0x94] sm:$0xf]
      %v2914 = vld [vmem:[%s2887 + $0x9c] sm:$0xf]
      %v2915 = vld [vmem:[%s2887 + $0xa0] sm:$0xf]
      %v2916 = vld [vmem:[%s2887 + $0xa8] sm:$0xf]
      %v2917 = vld [vmem:[%s2887 + $0xac] sm:$0xf]
      %v2918 = vld [vmem:[%s2887 + $0xb4] sm:$0xf]
      %v2919 = vld [vmem:[%s2887 + $0xb8] sm:$0xf]
      %s2920 = scalar_lea.vmem %s239, 12
      %v2921 = vld [vmem:[%s2920] sm:$0xf]
      %v2922 = vld [vmem:[%s2920 + $0x4] sm:$0xf]
      %v2923 = vld [vmem:[%s2920 + $0xc] sm:$0xf]
      %v2924 = vld [vmem:[%s2920 + $0x10] sm:$0xf]
      %v2925 = vld [vmem:[%s2920 + $0x18] sm:$0xf]
      %v2926 = vld [vmem:[%s2920 + $0x1c] sm:$0xf]
      %v2927 = vld [vmem:[%s2920 + $0x24] sm:$0xf]
      %v2928 = vld [vmem:[%s2920 + $0x28] sm:$0xf]
      %v2929 = vld [vmem:[%s2920 + $0x30] sm:$0xf]
      %v2930 = vld [vmem:[%s2920 + $0x34] sm:$0xf]
      %v2931 = vld [vmem:[%s2920 + $0x3c] sm:$0xf]
      %v2932 = vld [vmem:[%s2920 + $0x40] sm:$0xf]
      %v2933 = vld [vmem:[%s2920 + $0x48] sm:$0xf]
      %v2934 = vld [vmem:[%s2920 + $0x4c] sm:$0xf]
      %v2935 = vld [vmem:[%s2920 + $0x54] sm:$0xf]
      %v2936 = vld [vmem:[%s2920 + $0x58] sm:$0xf]
      %v2937 = vld [vmem:[%s2920 + $0x60] sm:$0xf]
      %v2938 = vld [vmem:[%s2920 + $0x64] sm:$0xf]
      %v2939 = vld [vmem:[%s2920 + $0x6c] sm:$0xf]
      %v2940 = vld [vmem:[%s2920 + $0x70] sm:$0xf]
      %v2941 = vld [vmem:[%s2920 + $0x78] sm:$0xf]
      %v2942 = vld [vmem:[%s2920 + $0x7c] sm:$0xf]
      %v2943 = vld [vmem:[%s2920 + $0x84] sm:$0xf]
      %v2944 = vld [vmem:[%s2920 + $0x88] sm:$0xf]
      %v2945 = vld [vmem:[%s2920 + $0x90] sm:$0xf]
      %v2946 = vld [vmem:[%s2920 + $0x94] sm:$0xf]
      %v2947 = vld [vmem:[%s2920 + $0x9c] sm:$0xf]
      %v2948 = vld [vmem:[%s2920 + $0xa0] sm:$0xf]
      %v2949 = vld [vmem:[%s2920 + $0xa8] sm:$0xf]
      %v2950 = vld [vmem:[%s2920 + $0xac] sm:$0xf]
      %v2951 = vld [vmem:[%s2920 + $0xb4] sm:$0xf]
      %v2952 = vld [vmem:[%s2920 + $0xb8] sm:$0xf]
      %s2953 = scalar_lea.vmem %s2, 24
      %v2954 = vld [vmem:[%s2953] sm:$0xf]
      %v2955 = vld [vmem:[%s2953 + $0x4] sm:$0xf]
      %v2988 = vunpack.c.l.b16 %v2888
      %v2989 = vunpack.c.l.b16 %v2889
      %v2990 = vunpack.c.l.b16 %v2890
      %v2991 = vunpack.c.l.b16 %v2891
      %v2992 = vunpack.c.l.b16 %v2892
      %v2993 = vunpack.c.l.b16 %v2893
      %v2994 = vunpack.c.l.b16 %v2894
      %v2995 = vunpack.c.l.b16 %v2895
      %v2996 = vunpack.c.l.b16 %v2896
      %v2997 = vunpack.c.l.b16 %v2897
      %v2998 = vunpack.c.l.b16 %v2898
      %v2999 = vunpack.c.l.b16 %v2899
      %v3000 = vunpack.c.l.b16 %v2900
      %v3001 = vunpack.c.l.b16 %v2901
      %v3002 = vunpack.c.l.b16 %v2902
      %v3003 = vunpack.c.l.b16 %v2903
      %v3004 = vunpack.c.l.b16 %v2904
      %v3005 = vunpack.c.l.b16 %v2905
      %v3006 = vunpack.c.l.b16 %v2906
      %v3007 = vunpack.c.l.b16 %v2907
      %v3008 = vunpack.c.l.b16 %v2908
      %v3009 = vunpack.c.l.b16 %v2909
      %v3010 = vunpack.c.l.b16 %v2910
      %v3011 = vunpack.c.l.b16 %v2911
      %v3012 = vunpack.c.l.b16 %v2912
      %v3013 = vunpack.c.l.b16 %v2913
      %v3014 = vunpack.c.l.b16 %v2914
      %v3015 = vunpack.c.l.b16 %v2915
      %v3016 = vunpack.c.l.b16 %v2916
      %v3017 = vunpack.c.l.b16 %v2917
      %v3018 = vunpack.c.l.b16 %v2918
      %v3019 = vunpack.c.l.b16 %v2919
      %v3020 = vpack.c.b16 %v2989, %v2988
      %v3021 = vpack.c.b16 %v2991, %v2990
      %v3022 = vpack.c.b16 %v2993, %v2992
      %v3023 = vpack.c.b16 %v2995, %v2994
      %v3024 = vpack.c.b16 %v2997, %v2996
      %v3025 = vpack.c.b16 %v2999, %v2998
      %v3026 = vpack.c.b16 %v3001, %v3000
      %v3027 = vpack.c.b16 %v3003, %v3002
      %v3028 = vpack.c.b16 %v3005, %v3004
      %v3029 = vpack.c.b16 %v3007, %v3006
      %v3030 = vpack.c.b16 %v3009, %v3008
      %v3031 = vpack.c.b16 %v3011, %v3010
      %v3032 = vpack.c.b16 %v3013, %v3012
      %v3033 = vpack.c.b16 %v3015, %v3014
      %v3034 = vpack.c.b16 %v3017, %v3016
      %v3035 = vpack.c.b16 %v3019, %v3018
      %v3038 = vunpack.c.l.b16 %v2954
      %v3039 = vunpack.c.l.b16 %v2955
      %v3040 = vpack.c.b16 %v3039, %v3038
      %v3043 = vsel %vm400, %v3020, 0
      %v3046 = vsel %vm400, %v3021, 0
      %v3049 = vsel %vm400, %v3022, 0
      %v3052 = vsel %vm400, %v3023, 0
      %v3055 = vsel %vm400, %v3024, 0
      %v3058 = vsel %vm400, %v3025, 0
      %v3061 = vsel %vm400, %v3026, 0
      %v3064 = vsel %vm400, %v3027, 0
      %v3067 = vsel %vm400, %v3028, 0
      %v3070 = vsel %vm400, %v3029, 0
      %v3073 = vsel %vm400, %v3030, 0
      %v3076 = vsel %vm400, %v3031, 0
      %v3079 = vsel %vm400, %v3032, 0
      %v3082 = vsel %vm400, %v3033, 0
      %v3085 = vsel %vm400, %v3034, 0
      %v3088 = vsel %vm400, %v3035, 0
      %3090 = vmatpush.bf16.msra.mxu0 0
      %3091 = vmatpush.bf16.msra.mxu0 0
      %3092 = vmatpush.bf16.msra.mxu0 0
      %3093 = vmatpush.bf16.msra.mxu0 0
      %3094 = vmatpush.bf16.msra.mxu0 0
      %3095 = vmatpush.bf16.msra.mxu0 0
      %3096 = vmatpush.bf16.msra.mxu0 0
      %3097 = vmatpush.bf16.msra.mxu0 %v3040
      %3098 = vmatmul.bf16.gmra.mxu0 %v3043
      %v3099 = vpop.f32.mrf.mxu0
      %v3100 = vadd.f32 0.0, %v3099
      %v3101 = vpop.f32.mrf.mxu0
      %v3102 = vadd.f32 0.0, %v3101
      %3103 = vmatmul.bf16.gmra.mxu0 %v3046
      %v3104 = vpop.f32.mrf.mxu0
      %v3105 = vadd.f32 0.0, %v3104
      %v3106 = vpop.f32.mrf.mxu0
      %v3107 = vadd.f32 0.0, %v3106
      %3108 = vmatmul.bf16.gmra.mxu0 %v3049
      %v3109 = vpop.f32.mrf.mxu0
      %v3110 = vadd.f32 0.0, %v3109
      %v3111 = vpop.f32.mrf.mxu0
      %v3112 = vadd.f32 0.0, %v3111
      %3113 = vmatmul.bf16.gmra.mxu0 %v3052
      %v3114 = vpop.f32.mrf.mxu0
      %v3115 = vadd.f32 0.0, %v3114
      %v3116 = vpop.f32.mrf.mxu0
      %v3117 = vadd.f32 0.0, %v3116
      %3118 = vmatmul.bf16.gmra.mxu0 %v3055
      %v3119 = vpop.f32.mrf.mxu0
      %v3120 = vadd.f32 0.0, %v3119
      %v3121 = vpop.f32.mrf.mxu0
      %v3122 = vadd.f32 0.0, %v3121
      %3123 = vmatmul.bf16.gmra.mxu0 %v3058
      %v3124 = vpop.f32.mrf.mxu0
      %v3125 = vadd.f32 0.0, %v3124
      %v3126 = vpop.f32.mrf.mxu0
      %v3127 = vadd.f32 0.0, %v3126
      %3128 = vmatmul.bf16.gmra.mxu0 %v3061
      %v3129 = vpop.f32.mrf.mxu0
      %v3130 = vadd.f32 0.0, %v3129
      %v3131 = vpop.f32.mrf.mxu0
      %v3132 = vadd.f32 0.0, %v3131
      %3133 = vmatmul.bf16.gmra.mxu0 %v3064
      %v3134 = vpop.f32.mrf.mxu0
      %v3135 = vadd.f32 0.0, %v3134
      %v3136 = vpop.f32.mrf.mxu0
      %v3137 = vadd.f32 0.0, %v3136
      %3138 = vmatmul.bf16.gmra.mxu0 %v3067
      %v3139 = vpop.f32.mrf.mxu0
      %v3140 = vadd.f32 0.0, %v3139
      %v3141 = vpop.f32.mrf.mxu0
      %v3142 = vadd.f32 0.0, %v3141
      %3143 = vmatmul.bf16.gmra.mxu0 %v3070
      %v3144 = vpop.f32.mrf.mxu0
      %v3145 = vadd.f32 0.0, %v3144
      %v3146 = vpop.f32.mrf.mxu0
      %v3147 = vadd.f32 0.0, %v3146
      %3148 = vmatmul.bf16.gmra.mxu0 %v3073
      %v3149 = vpop.f32.mrf.mxu0
      %v3150 = vadd.f32 0.0, %v3149
      %v3151 = vpop.f32.mrf.mxu0
      %v3152 = vadd.f32 0.0, %v3151
      %3153 = vmatmul.bf16.gmra.mxu0 %v3076
      %v3154 = vpop.f32.mrf.mxu0
      %v3155 = vadd.f32 0.0, %v3154
      %v3156 = vpop.f32.mrf.mxu0
      %v3157 = vadd.f32 0.0, %v3156
      %3158 = vmatmul.bf16.gmra.mxu0 %v3079
      %v3159 = vpop.f32.mrf.mxu0
      %v3160 = vadd.f32 0.0, %v3159
      %v3161 = vpop.f32.mrf.mxu0
      %v3162 = vadd.f32 0.0, %v3161
      %3163 = vmatmul.bf16.gmra.mxu0 %v3082
      %v3164 = vpop.f32.mrf.mxu0
      %v3165 = vadd.f32 0.0, %v3164
      %v3166 = vpop.f32.mrf.mxu0
      %v3167 = vadd.f32 0.0, %v3166
      %3168 = vmatmul.bf16.gmra.mxu0 %v3085
      %v3169 = vpop.f32.mrf.mxu0
      %v3170 = vadd.f32 0.0, %v3169
      %v3171 = vpop.f32.mrf.mxu0
      %v3172 = vadd.f32 0.0, %v3171
      %3173 = vmatmul.bf16.gmra.mxu0 %v3088
      %v3174 = vpop.f32.mrf.mxu0
      %v3175 = vadd.f32 0.0, %v3174
      %v3176 = vpop.f32.mrf.mxu0
      %v3177 = vadd.f32 0.0, %v3176
      %3178 = vdwg.mxu0
      %v3179 = vadd.f32 %v2855, %v3100
      %v3180 = vadd.f32 %v2856, %v3102
      %v3181 = vadd.f32 %v2857, %v3105
      %v3182 = vadd.f32 %v2858, %v3107
      %v3183 = vadd.f32 %v2859, %v3110
      %v3184 = vadd.f32 %v2860, %v3112
      %v3185 = vadd.f32 %v2861, %v3115
      %v3186 = vadd.f32 %v2862, %v3117
      %v3187 = vadd.f32 %v2863, %v3120
      %v3188 = vadd.f32 %v2864, %v3122
      %v3189 = vadd.f32 %v2865, %v3125
      %v3190 = vadd.f32 %v2866, %v3127
      %v3191 = vadd.f32 %v2867, %v3130
      %v3192 = vadd.f32 %v2868, %v3132
      %v3193 = vadd.f32 %v2869, %v3135
      %v3194 = vadd.f32 %v2870, %v3137
      %v3195 = vadd.f32 %v2871, %v3140
      %v3196 = vadd.f32 %v2872, %v3142
      %v3197 = vadd.f32 %v2873, %v3145
      %v3198 = vadd.f32 %v2874, %v3147
      %v3199 = vadd.f32 %v2875, %v3150
      %v3200 = vadd.f32 %v2876, %v3152
      %v3201 = vadd.f32 %v2877, %v3155
      %v3202 = vadd.f32 %v2878, %v3157
      %v3203 = vadd.f32 %v2879, %v3160
      %v3204 = vadd.f32 %v2880, %v3162
      %v3205 = vadd.f32 %v2881, %v3165
      %v3206 = vadd.f32 %v2882, %v3167
      %v3207 = vadd.f32 %v2883, %v3170
      %v3208 = vadd.f32 %v2884, %v3172
      %v3209 = vadd.f32 %v2885, %v3175
      %v3210 = vadd.f32 %v2886, %v3177
      %s3211 = scalar_lea.vmem %s3, 24
      %v3212 = vld [vmem:[%s3211] sm:$0xf]
      %v3213 = vld [vmem:[%s3211 + $0x4] sm:$0xf]
      %v3246 = vunpack.c.l.b16 %v2921
      %v3247 = vunpack.c.l.b16 %v2922
      %v3248 = vunpack.c.l.b16 %v2923
      %v3249 = vunpack.c.l.b16 %v2924
      %v3250 = vunpack.c.l.b16 %v2925
      %v3251 = vunpack.c.l.b16 %v2926
      %v3252 = vunpack.c.l.b16 %v2927
      %v3253 = vunpack.c.l.b16 %v2928
      %v3254 = vunpack.c.l.b16 %v2929
      %v3255 = vunpack.c.l.b16 %v2930
      %v3256 = vunpack.c.l.b16 %v2931
      %v3257 = vunpack.c.l.b16 %v2932
      %v3258 = vunpack.c.l.b16 %v2933
      %v3259 = vunpack.c.l.b16 %v2934
      %v3260 = vunpack.c.l.b16 %v2935
      %v3261 = vunpack.c.l.b16 %v2936
      %v3262 = vunpack.c.l.b16 %v2937
      %v3263 = vunpack.c.l.b16 %v2938
      %v3264 = vunpack.c.l.b16 %v2939
      %v3265 = vunpack.c.l.b16 %v2940
      %v3266 = vunpack.c.l.b16 %v2941
      %v3267 = vunpack.c.l.b16 %v2942
      %v3268 = vunpack.c.l.b16 %v2943
      %v3269 = vunpack.c.l.b16 %v2944
      %v3270 = vunpack.c.l.b16 %v2945
      %v3271 = vunpack.c.l.b16 %v2946
      %v3272 = vunpack.c.l.b16 %v2947
      %v3273 = vunpack.c.l.b16 %v2948
      %v3274 = vunpack.c.l.b16 %v2949
      %v3275 = vunpack.c.l.b16 %v2950
      %v3276 = vunpack.c.l.b16 %v2951
      %v3277 = vunpack.c.l.b16 %v2952
      %v3278 = vpack.c.b16 %v3247, %v3246
      %v3279 = vpack.c.b16 %v3249, %v3248
      %v3280 = vpack.c.b16 %v3251, %v3250
      %v3281 = vpack.c.b16 %v3253, %v3252
      %v3282 = vpack.c.b16 %v3255, %v3254
      %v3283 = vpack.c.b16 %v3257, %v3256
      %v3284 = vpack.c.b16 %v3259, %v3258
      %v3285 = vpack.c.b16 %v3261, %v3260
      %v3286 = vpack.c.b16 %v3263, %v3262
      %v3287 = vpack.c.b16 %v3265, %v3264
      %v3288 = vpack.c.b16 %v3267, %v3266
      %v3289 = vpack.c.b16 %v3269, %v3268
      %v3290 = vpack.c.b16 %v3271, %v3270
      %v3291 = vpack.c.b16 %v3273, %v3272
      %v3292 = vpack.c.b16 %v3275, %v3274
      %v3293 = vpack.c.b16 %v3277, %v3276
      %v3296 = vunpack.c.l.b16 %v3212
      %v3297 = vunpack.c.l.b16 %v3213
      %v3298 = vpack.c.b16 %v3297, %v3296
      %v3301 = vsel %vm400, %v3278, 0
      %v3304 = vsel %vm400, %v3279, 0
      %v3307 = vsel %vm400, %v3280, 0
      %v3310 = vsel %vm400, %v3281, 0
      %v3313 = vsel %vm400, %v3282, 0
      %v3316 = vsel %vm400, %v3283, 0
      %v3319 = vsel %vm400, %v3284, 0
      %v3322 = vsel %vm400, %v3285, 0
      %v3325 = vsel %vm400, %v3286, 0
      %v3328 = vsel %vm400, %v3287, 0
      %v3331 = vsel %vm400, %v3288, 0
      %v3334 = vsel %vm400, %v3289, 0
      %v3337 = vsel %vm400, %v3290, 0
      %v3340 = vsel %vm400, %v3291, 0
      %v3343 = vsel %vm400, %v3292, 0
      %v3346 = vsel %vm400, %v3293, 0
      %3348 = vmatpush.bf16.msra.mxu0 0
      %3349 = vmatpush.bf16.msra.mxu0 0
      %3350 = vmatpush.bf16.msra.mxu0 0
      %3351 = vmatpush.bf16.msra.mxu0 0
      %3352 = vmatpush.bf16.msra.mxu0 0
      %3353 = vmatpush.bf16.msra.mxu0 0
      %3354 = vmatpush.bf16.msra.mxu0 0
      %3355 = vmatpush.bf16.msra.mxu0 %v3298
      %3356 = vmatmul.bf16.gmra.mxu0 %v3301
      %v3357 = vpop.f32.mrf.mxu0
      %v3358 = vadd.f32 0.0, %v3357
      %v3359 = vpop.f32.mrf.mxu0
      %v3360 = vadd.f32 0.0, %v3359
      %3361 = vmatmul.bf16.gmra.mxu0 %v3304
      %v3362 = vpop.f32.mrf.mxu0
      %v3363 = vadd.f32 0.0, %v3362
      %v3364 = vpop.f32.mrf.mxu0
      %v3365 = vadd.f32 0.0, %v3364
      %3366 = vmatmul.bf16.gmra.mxu0 %v3307
      %v3367 = vpop.f32.mrf.mxu0
      %v3368 = vadd.f32 0.0, %v3367
      %v3369 = vpop.f32.mrf.mxu0
      %v3370 = vadd.f32 0.0, %v3369
      %3371 = vmatmul.bf16.gmra.mxu0 %v3310
      %v3372 = vpop.f32.mrf.mxu0
      %v3373 = vadd.f32 0.0, %v3372
      %v3374 = vpop.f32.mrf.mxu0
      %v3375 = vadd.f32 0.0, %v3374
      %3376 = vmatmul.bf16.gmra.mxu0 %v3313
      %v3377 = vpop.f32.mrf.mxu0
      %v3378 = vadd.f32 0.0, %v3377
      %v3379 = vpop.f32.mrf.mxu0
      %v3380 = vadd.f32 0.0, %v3379
      %3381 = vmatmul.bf16.gmra.mxu0 %v3316
      %v3382 = vpop.f32.mrf.mxu0
      %v3383 = vadd.f32 0.0, %v3382
      %v3384 = vpop.f32.mrf.mxu0
      %v3385 = vadd.f32 0.0, %v3384
      %3386 = vmatmul.bf16.gmra.mxu0 %v3319
      %v3387 = vpop.f32.mrf.mxu0
      %v3388 = vadd.f32 0.0, %v3387
      %v3389 = vpop.f32.mrf.mxu0
      %v3390 = vadd.f32 0.0, %v3389
      %3391 = vmatmul.bf16.gmra.mxu0 %v3322
      %v3392 = vpop.f32.mrf.mxu0
      %v3393 = vadd.f32 0.0, %v3392
      %v3394 = vpop.f32.mrf.mxu0
      %v3395 = vadd.f32 0.0, %v3394
      %3396 = vmatmul.bf16.gmra.mxu0 %v3325
      %v3397 = vpop.f32.mrf.mxu0
      %v3398 = vadd.f32 0.0, %v3397
      %v3399 = vpop.f32.mrf.mxu0
      %v3400 = vadd.f32 0.0, %v3399
      %3401 = vmatmul.bf16.gmra.mxu0 %v3328
      %v3402 = vpop.f32.mrf.mxu0
      %v3403 = vadd.f32 0.0, %v3402
      %v3404 = vpop.f32.mrf.mxu0
      %v3405 = vadd.f32 0.0, %v3404
      %3406 = vmatmul.bf16.gmra.mxu0 %v3331
      %v3407 = vpop.f32.mrf.mxu0
      %v3408 = vadd.f32 0.0, %v3407
      %v3409 = vpop.f32.mrf.mxu0
      %v3410 = vadd.f32 0.0, %v3409
      %3411 = vmatmul.bf16.gmra.mxu0 %v3334
      %v3412 = vpop.f32.mrf.mxu0
      %v3413 = vadd.f32 0.0, %v3412
      %v3414 = vpop.f32.mrf.mxu0
      %v3415 = vadd.f32 0.0, %v3414
      %3416 = vmatmul.bf16.gmra.mxu0 %v3337
      %v3417 = vpop.f32.mrf.mxu0
      %v3418 = vadd.f32 0.0, %v3417
      %v3419 = vpop.f32.mrf.mxu0
      %v3420 = vadd.f32 0.0, %v3419
      %3421 = vmatmul.bf16.gmra.mxu0 %v3340
      %v3422 = vpop.f32.mrf.mxu0
      %v3423 = vadd.f32 0.0, %v3422
      %v3424 = vpop.f32.mrf.mxu0
      %v3425 = vadd.f32 0.0, %v3424
      %3426 = vmatmul.bf16.gmra.mxu0 %v3343
      %v3427 = vpop.f32.mrf.mxu0
      %v3428 = vadd.f32 0.0, %v3427
      %v3429 = vpop.f32.mrf.mxu0
      %v3430 = vadd.f32 0.0, %v3429
      %3431 = vmatmul.bf16.gmra.mxu0 %v3346
      %v3432 = vpop.f32.mrf.mxu0
      %v3433 = vadd.f32 0.0, %v3432
      %v3434 = vpop.f32.mrf.mxu0
      %v3435 = vadd.f32 0.0, %v3434
      %3436 = vdwg.mxu0
      %v3437 = vadd.f32 %v3179, %v3358
      %v3438 = vadd.f32 %v3180, %v3360
      %v3439 = vadd.f32 %v3181, %v3363
      %v3440 = vadd.f32 %v3182, %v3365
      %v3441 = vadd.f32 %v3183, %v3368
      %v3442 = vadd.f32 %v3184, %v3370
      %v3443 = vadd.f32 %v3185, %v3373
      %v3444 = vadd.f32 %v3186, %v3375
      %v3445 = vadd.f32 %v3187, %v3378
      %v3446 = vadd.f32 %v3188, %v3380
      %v3447 = vadd.f32 %v3189, %v3383
      %v3448 = vadd.f32 %v3190, %v3385
      %v3449 = vadd.f32 %v3191, %v3388
      %v3450 = vadd.f32 %v3192, %v3390
      %v3451 = vadd.f32 %v3193, %v3393
      %v3452 = vadd.f32 %v3194, %v3395
      %v3453 = vadd.f32 %v3195, %v3398
      %v3454 = vadd.f32 %v3196, %v3400
      %v3455 = vadd.f32 %v3197, %v3403
      %v3456 = vadd.f32 %v3198, %v3405
      %v3457 = vadd.f32 %v3199, %v3408
      %v3458 = vadd.f32 %v3200, %v3410
      %v3459 = vadd.f32 %v3201, %v3413
      %v3460 = vadd.f32 %v3202, %v3415
      %v3461 = vadd.f32 %v3203, %v3418
      %v3462 = vadd.f32 %v3204, %v3420
      %v3463 = vadd.f32 %v3205, %v3423
      %v3464 = vadd.f32 %v3206, %v3425
      %v3465 = vadd.f32 %v3207, %v3428
      %v3466 = vadd.f32 %v3208, %v3430
      %v3467 = vadd.f32 %v3209, %v3433
      %v3468 = vadd.f32 %v3210, %v3435
      %v3469 = vld [vmem:[%s2887] sm:$0xf]
      %v3470 = vld [vmem:[%s2887 + $0x4] sm:$0xf]
      %v3471 = vld [vmem:[%s2887 + $0x8] sm:$0x1]
      %v3472 = vld [vmem:[%s2887 + $0xc] sm:$0xf]
      %v3473 = vld [vmem:[%s2887 + $0x10] sm:$0xf]
      %v3474 = vld [vmem:[%s2887 + $0x14] sm:$0x1]
      %v3475 = vld [vmem:[%s2887 + $0x18] sm:$0xf]
      %v3476 = vld [vmem:[%s2887 + $0x1c] sm:$0xf]
      %v3477 = vld [vmem:[%s2887 + $0x20] sm:$0x1]
      %v3478 = vld [vmem:[%s2887 + $0x24] sm:$0xf]
      %v3479 = vld [vmem:[%s2887 + $0x28] sm:$0xf]
      %v3480 = vld [vmem:[%s2887 + $0x2c] sm:$0x1]
      %v3481 = vld [vmem:[%s2887 + $0x30] sm:$0xf]
      %v3482 = vld [vmem:[%s2887 + $0x34] sm:$0xf]
      %v3483 = vld [vmem:[%s2887 + $0x38] sm:$0x1]
      %v3484 = vld [vmem:[%s2887 + $0x3c] sm:$0xf]
      %v3485 = vld [vmem:[%s2887 + $0x40] sm:$0xf]
      %v3486 = vld [vmem:[%s2887 + $0x44] sm:$0x1]
      %v3487 = vld [vmem:[%s2887 + $0x48] sm:$0xf]
      %v3488 = vld [vmem:[%s2887 + $0x4c] sm:$0xf]
      %v3489 = vld [vmem:[%s2887 + $0x50] sm:$0x1]
      %v3490 = vld [vmem:[%s2887 + $0x54] sm:$0xf]
      %v3491 = vld [vmem:[%s2887 + $0x58] sm:$0xf]
      %v3492 = vld [vmem:[%s2887 + $0x5c] sm:$0x1]
      %v3493 = vld [vmem:[%s2887 + $0x60] sm:$0xf]
      %v3494 = vld [vmem:[%s2887 + $0x64] sm:$0xf]
      %v3495 = vld [vmem:[%s2887 + $0x68] sm:$0x1]
      %v3496 = vld [vmem:[%s2887 + $0x6c] sm:$0xf]
      %v3497 = vld [vmem:[%s2887 + $0x70] sm:$0xf]
      %v3498 = vld [vmem:[%s2887 + $0x74] sm:$0x1]
      %v3499 = vld [vmem:[%s2887 + $0x78] sm:$0xf]
      %v3500 = vld [vmem:[%s2887 + $0x7c] sm:$0xf]
      %v3501 = vld [vmem:[%s2887 + $0x80] sm:$0x1]
      %v3502 = vld [vmem:[%s2887 + $0x84] sm:$0xf]
      %v3503 = vld [vmem:[%s2887 + $0x88] sm:$0xf]
      %v3504 = vld [vmem:[%s2887 + $0x8c] sm:$0x1]
      %v3505 = vld [vmem:[%s2887 + $0x90] sm:$0xf]
      %v3506 = vld [vmem:[%s2887 + $0x94] sm:$0xf]
      %v3507 = vld [vmem:[%s2887 + $0x98] sm:$0x1]
      %v3508 = vld [vmem:[%s2887 + $0x9c] sm:$0xf]
      %v3509 = vld [vmem:[%s2887 + $0xa0] sm:$0xf]
      %v3510 = vld [vmem:[%s2887 + $0xa4] sm:$0x1]
      %v3511 = vld [vmem:[%s2887 + $0xa8] sm:$0xf]
      %v3512 = vld [vmem:[%s2887 + $0xac] sm:$0xf]
      %v3513 = vld [vmem:[%s2887 + $0xb0] sm:$0x1]
      %v3514 = vld [vmem:[%s2887 + $0xb4] sm:$0xf]
      %v3515 = vld [vmem:[%s2887 + $0xb8] sm:$0xf]
      %v3516 = vld [vmem:[%s2887 + $0xbc] sm:$0x1]
      %v3518 = vshrl.u32 %v3469, 16
      %v3520 = vrot.slane %v3518, 4
      %v3521 = vshll.u32 %v3469, 16
      %v3523 = vrot.slane %v3521, 5
      %v3524 = vor.u32 %v3520, %v3523
      %v3525 = vrot.slane %v3524, 4
      %v3527 = vshll.u32 %v3470, 16
      %v3529 = vrot.slane %v3527, 5
      %v3530 = vsel %vm811, %v3525, %v3529
      %v3531 = vshrl.u32 %v3470, 16
      %v3533 = vrot.slane %v3531, 4
      %v3534 = vor.u32 %v3533, %v3529
      %v3535 = vrot.slane %v3534, 4
      %v3537 = vshll.u32 %v3471, 16
      %v3539 = vrot.slane %v3537, 5
      %v3540 = vsel %vm811, %v3535, %v3539
      %v3542 = vshrl.u32 %v3472, 16
      %v3544 = vrot.slane %v3542, 4
      %v3545 = vshll.u32 %v3472, 16
      %v3547 = vrot.slane %v3545, 5
      %v3548 = vor.u32 %v3544, %v3547
      %v3549 = vrot.slane %v3548, 4
      %v3551 = vshll.u32 %v3473, 16
      %v3553 = vrot.slane %v3551, 5
      %v3554 = vsel %vm811, %v3549, %v3553
      %v3555 = vshrl.u32 %v3473, 16
      %v3557 = vrot.slane %v3555, 4
      %v3558 = vor.u32 %v3557, %v3553
      %v3559 = vrot.slane %v3558, 4
      %v3561 = vshll.u32 %v3474, 16
      %v3563 = vrot.slane %v3561, 5
      %v3564 = vsel %vm811, %v3559, %v3563
      %v3566 = vshrl.u32 %v3475, 16
      %v3568 = vrot.slane %v3566, 4
      %v3569 = vshll.u32 %v3475, 16
      %v3571 = vrot.slane %v3569, 5
      %v3572 = vor.u32 %v3568, %v3571
      %v3573 = vrot.slane %v3572, 4
      %v3575 = vshll.u32 %v3476, 16
      %v3577 = vrot.slane %v3575, 5
      %v3578 = vsel %vm811, %v3573, %v3577
      %v3579 = vshrl.u32 %v3476, 16
      %v3581 = vrot.slane %v3579, 4
      %v3582 = vor.u32 %v3581, %v3577
      %v3583 = vrot.slane %v3582, 4
      %v3585 = vshll.u32 %v3477, 16
      %v3587 = vrot.slane %v3585, 5
      %v3588 = vsel %vm811, %v3583, %v3587
      %v3590 = vshrl.u32 %v3478, 16
      %v3592 = vrot.slane %v3590, 4
      %v3593 = vshll.u32 %v3478, 16
      %v3595 = vrot.slane %v3593, 5
      %v3596 = vor.u32 %v3592, %v3595
      %v3597 = vrot.slane %v3596, 4
      %v3599 = vshll.u32 %v3479, 16
      %v3601 = vrot.slane %v3599, 5
      %v3602 = vsel %vm811, %v3597, %v3601
      %v3603 = vshrl.u32 %v3479, 16
      %v3605 = vrot.slane %v3603, 4
      %v3606 = vor.u32 %v3605, %v3601
      %v3607 = vrot.slane %v3606, 4
      %v3609 = vshll.u32 %v3480, 16
      %v3611 = vrot.slane %v3609, 5
      %v3612 = vsel %vm811, %v3607, %v3611
      %v3614 = vshrl.u32 %v3481, 16
      %v3616 = vrot.slane %v3614, 4
      %v3617 = vshll.u32 %v3481, 16
      %v3619 = vrot.slane %v3617, 5
      %v3620 = vor.u32 %v3616, %v3619
      %v3621 = vrot.slane %v3620, 4
      %v3623 = vshll.u32 %v3482, 16
      %v3625 = vrot.slane %v3623, 5
      %v3626 = vsel %vm811, %v3621, %v3625
      %v3627 = vshrl.u32 %v3482, 16
      %v3629 = vrot.slane %v3627, 4
      %v3630 = vor.u32 %v3629, %v3625
      %v3631 = vrot.slane %v3630, 4
      %v3633 = vshll.u32 %v3483, 16
      %v3635 = vrot.slane %v3633, 5
      %v3636 = vsel %vm811, %v3631, %v3635
      %v3638 = vshrl.u32 %v3484, 16
      %v3640 = vrot.slane %v3638, 4
      %v3641 = vshll.u32 %v3484, 16
      %v3643 = vrot.slane %v3641, 5
      %v3644 = vor.u32 %v3640, %v3643
      %v3645 = vrot.slane %v3644, 4
      %v3647 = vshll.u32 %v3485, 16
      %v3649 = vrot.slane %v3647, 5
      %v3650 = vsel %vm811, %v3645, %v3649
      %v3651 = vshrl.u32 %v3485, 16
      %v3653 = vrot.slane %v3651, 4
      %v3654 = vor.u32 %v3653, %v3649
      %v3655 = vrot.slane %v3654, 4
      %v3657 = vshll.u32 %v3486, 16
      %v3659 = vrot.slane %v3657, 5
      %v3660 = vsel %vm811, %v3655, %v3659
      %v3662 = vshrl.u32 %v3487, 16
      %v3664 = vrot.slane %v3662, 4
      %v3665 = vshll.u32 %v3487, 16
      %v3667 = vrot.slane %v3665, 5
      %v3668 = vor.u32 %v3664, %v3667
      %v3669 = vrot.slane %v3668, 4
      %v3671 = vshll.u32 %v3488, 16
      %v3673 = vrot.slane %v3671, 5
      %v3674 = vsel %vm811, %v3669, %v3673
      %v3675 = vshrl.u32 %v3488, 16
      %v3677 = vrot.slane %v3675, 4
      %v3678 = vor.u32 %v3677, %v3673
      %v3679 = vrot.slane %v3678, 4
      %v3681 = vshll.u32 %v3489, 16
      %v3683 = vrot.slane %v3681, 5
      %v3684 = vsel %vm811, %v3679, %v3683
      %v3686 = vshrl.u32 %v3490, 16
      %v3688 = vrot.slane %v3686, 4
      %v3689 = vshll.u32 %v3490, 16
      %v3691 = vrot.slane %v3689, 5
      %v3692 = vor.u32 %v3688, %v3691
      %v3693 = vrot.slane %v3692, 4
      %v3695 = vshll.u32 %v3491, 16
      %v3697 = vrot.slane %v3695, 5
      %v3698 = vsel %vm811, %v3693, %v3697
      %v3699 = vshrl.u32 %v3491, 16
      %v3701 = vrot.slane %v3699, 4
      %v3702 = vor.u32 %v3701, %v3697
      %v3703 = vrot.slane %v3702, 4
      %v3705 = vshll.u32 %v3492, 16
      %v3707 = vrot.slane %v3705, 5
      %v3708 = vsel %vm811, %v3703, %v3707
      %v3710 = vshrl.u32 %v3493, 16
      %v3712 = vrot.slane %v3710, 4
      %v3713 = vshll.u32 %v3493, 16
      %v3715 = vrot.slane %v3713, 5
      %v3716 = vor.u32 %v3712, %v3715
      %v3717 = vrot.slane %v3716, 4
      %v3719 = vshll.u32 %v3494, 16
      %v3721 = vrot.slane %v3719, 5
      %v3722 = vsel %vm811, %v3717, %v3721
      %v3723 = vshrl.u32 %v3494, 16
      %v3725 = vrot.slane %v3723, 4
      %v3726 = vor.u32 %v3725, %v3721
      %v3727 = vrot.slane %v3726, 4
      %v3729 = vshll.u32 %v3495, 16
      %v3731 = vrot.slane %v3729, 5
      %v3732 = vsel %vm811, %v3727, %v3731
      %v3734 = vshrl.u32 %v3496, 16
      %v3736 = vrot.slane %v3734, 4
      %v3737 = vshll.u32 %v3496, 16
      %v3739 = vrot.slane %v3737, 5
      %v3740 = vor.u32 %v3736, %v3739
      %v3741 = vrot.slane %v3740, 4
      %v3743 = vshll.u32 %v3497, 16
      %v3745 = vrot.slane %v3743, 5
      %v3746 = vsel %vm811, %v3741, %v3745
      %v3747 = vshrl.u32 %v3497, 16
      %v3749 = vrot.slane %v3747, 4
      %v3750 = vor.u32 %v3749, %v3745
      %v3751 = vrot.slane %v3750, 4
      %v3753 = vshll.u32 %v3498, 16
      %v3755 = vrot.slane %v3753, 5
      %v3756 = vsel %vm811, %v3751, %v3755
      %v3758 = vshrl.u32 %v3499, 16
      %v3760 = vrot.slane %v3758, 4
      %v3761 = vshll.u32 %v3499, 16
      %v3763 = vrot.slane %v3761, 5
      %v3764 = vor.u32 %v3760, %v3763
      %v3765 = vrot.slane %v3764, 4
      %v3767 = vshll.u32 %v3500, 16
      %v3769 = vrot.slane %v3767, 5
      %v3770 = vsel %vm811, %v3765, %v3769
      %v3771 = vshrl.u32 %v3500, 16
      %v3773 = vrot.slane %v3771, 4
      %v3774 = vor.u32 %v3773, %v3769
      %v3775 = vrot.slane %v3774, 4
      %v3777 = vshll.u32 %v3501, 16
      %v3779 = vrot.slane %v3777, 5
      %v3780 = vsel %vm811, %v3775, %v3779
      %v3782 = vshrl.u32 %v3502, 16
      %v3784 = vrot.slane %v3782, 4
      %v3785 = vshll.u32 %v3502, 16
      %v3787 = vrot.slane %v3785, 5
      %v3788 = vor.u32 %v3784, %v3787
      %v3789 = vrot.slane %v3788, 4
      %v3791 = vshll.u32 %v3503, 16
      %v3793 = vrot.slane %v3791, 5
      %v3794 = vsel %vm811, %v3789, %v3793
      %v3795 = vshrl.u32 %v3503, 16
      %v3797 = vrot.slane %v3795, 4
      %v3798 = vor.u32 %v3797, %v3793
      %v3799 = vrot.slane %v3798, 4
      %v3801 = vshll.u32 %v3504, 16
      %v3803 = vrot.slane %v3801, 5
      %v3804 = vsel %vm811, %v3799, %v3803
      %v3806 = vshrl.u32 %v3505, 16
      %v3808 = vrot.slane %v3806, 4
      %v3809 = vshll.u32 %v3505, 16
      %v3811 = vrot.slane %v3809, 5
      %v3812 = vor.u32 %v3808, %v3811
      %v3813 = vrot.slane %v3812, 4
      %v3815 = vshll.u32 %v3506, 16
      %v3817 = vrot.slane %v3815, 5
      %v3818 = vsel %vm811, %v3813, %v3817
      %v3819 = vshrl.u32 %v3506, 16
      %v3821 = vrot.slane %v3819, 4
      %v3822 = vor.u32 %v3821, %v3817
      %v3823 = vrot.slane %v3822, 4
      %v3825 = vshll.u32 %v3507, 16
      %v3827 = vrot.slane %v3825, 5
      %v3828 = vsel %vm811, %v3823, %v3827
      %v3830 = vshrl.u32 %v3508, 16
      %v3832 = vrot.slane %v3830, 4
      %v3833 = vshll.u32 %v3508, 16
      %v3835 = vrot.slane %v3833, 5
      %v3836 = vor.u32 %v3832, %v3835
      %v3837 = vrot.slane %v3836, 4
      %v3839 = vshll.u32 %v3509, 16
      %v3841 = vrot.slane %v3839, 5
      %v3842 = vsel %vm811, %v3837, %v3841
      %v3843 = vshrl.u32 %v3509, 16
      %v3845 = vrot.slane %v3843, 4
      %v3846 = vor.u32 %v3845, %v3841
      %v3847 = vrot.slane %v3846, 4
      %v3849 = vshll.u32 %v3510, 16
      %v3851 = vrot.slane %v3849, 5
      %v3852 = vsel %vm811, %v3847, %v3851
      %v3854 = vshrl.u32 %v3511, 16
      %v3856 = vrot.slane %v3854, 4
      %v3857 = vshll.u32 %v3511, 16
      %v3859 = vrot.slane %v3857, 5
      %v3860 = vor.u32 %v3856, %v3859
      %v3861 = vrot.slane %v3860, 4
      %v3863 = vshll.u32 %v3512, 16
      %v3865 = vrot.slane %v3863, 5
      %v3866 = vsel %vm811, %v3861, %v3865
      %v3867 = vshrl.u32 %v3512, 16
      %v3869 = vrot.slane %v3867, 4
      %v3870 = vor.u32 %v3869, %v3865
      %v3871 = vrot.slane %v3870, 4
      %v3873 = vshll.u32 %v3513, 16
      %v3875 = vrot.slane %v3873, 5
      %v3876 = vsel %vm811, %v3871, %v3875
      %v3878 = vshrl.u32 %v3514, 16
      %v3880 = vrot.slane %v3878, 4
      %v3881 = vshll.u32 %v3514, 16
      %v3883 = vrot.slane %v3881, 5
      %v3884 = vor.u32 %v3880, %v3883
      %v3885 = vrot.slane %v3884, 4
      %v3887 = vshll.u32 %v3515, 16
      %v3889 = vrot.slane %v3887, 5
      %v3890 = vsel %vm811, %v3885, %v3889
      %v3891 = vshrl.u32 %v3515, 16
      %v3893 = vrot.slane %v3891, 4
      %v3894 = vor.u32 %v3893, %v3889
      %v3895 = vrot.slane %v3894, 4
      %v3897 = vshll.u32 %v3516, 16
      %v3899 = vrot.slane %v3897, 5
      %v3900 = vsel %vm811, %v3895, %v3899
      %v3901 = vld [vmem:[%s2920] sm:$0xf]
      %v3902 = vld [vmem:[%s2920 + $0x4] sm:$0xf]
      %v3903 = vld [vmem:[%s2920 + $0x8] sm:$0x1]
      %v3904 = vld [vmem:[%s2920 + $0xc] sm:$0xf]
      %v3905 = vld [vmem:[%s2920 + $0x10] sm:$0xf]
      %v3906 = vld [vmem:[%s2920 + $0x14] sm:$0x1]
      %v3907 = vld [vmem:[%s2920 + $0x18] sm:$0xf]
      %v3908 = vld [vmem:[%s2920 + $0x1c] sm:$0xf]
      %v3909 = vld [vmem:[%s2920 + $0x20] sm:$0x1]
      %v3910 = vld [vmem:[%s2920 + $0x24] sm:$0xf]
      %v3911 = vld [vmem:[%s2920 + $0x28] sm:$0xf]
      %v3912 = vld [vmem:[%s2920 + $0x2c] sm:$0x1]
      %v3913 = vld [vmem:[%s2920 + $0x30] sm:$0xf]
      %v3914 = vld [vmem:[%s2920 + $0x34] sm:$0xf]
      %v3915 = vld [vmem:[%s2920 + $0x38] sm:$0x1]
      %v3916 = vld [vmem:[%s2920 + $0x3c] sm:$0xf]
      %v3917 = vld [vmem:[%s2920 + $0x40] sm:$0xf]
      %v3918 = vld [vmem:[%s2920 + $0x44] sm:$0x1]
      %v3919 = vld [vmem:[%s2920 + $0x48] sm:$0xf]
      %v3920 = vld [vmem:[%s2920 + $0x4c] sm:$0xf]
      %v3921 = vld [vmem:[%s2920 + $0x50] sm:$0x1]
      %v3922 = vld [vmem:[%s2920 + $0x54] sm:$0xf]
      %v3923 = vld [vmem:[%s2920 + $0x58] sm:$0xf]
      %v3924 = vld [vmem:[%s2920 + $0x5c] sm:$0x1]
      %v3925 = vld [vmem:[%s2920 + $0x60] sm:$0xf]
      %v3926 = vld [vmem:[%s2920 + $0x64] sm:$0xf]
      %v3927 = vld [vmem:[%s2920 + $0x68] sm:$0x1]
      %v3928 = vld [vmem:[%s2920 + $0x6c] sm:$0xf]
      %v3929 = vld [vmem:[%s2920 + $0x70] sm:$0xf]
      %v3930 = vld [vmem:[%s2920 + $0x74] sm:$0x1]
      %v3931 = vld [vmem:[%s2920 + $0x78] sm:$0xf]
      %v3932 = vld [vmem:[%s2920 + $0x7c] sm:$0xf]
      %v3933 = vld [vmem:[%s2920 + $0x80] sm:$0x1]
      %v3934 = vld [vmem:[%s2920 + $0x84] sm:$0xf]
      %v3935 = vld [vmem:[%s2920 + $0x88] sm:$0xf]
      %v3936 = vld [vmem:[%s2920 + $0x8c] sm:$0x1]
      %v3937 = vld [vmem:[%s2920 + $0x90] sm:$0xf]
      %v3938 = vld [vmem:[%s2920 + $0x94] sm:$0xf]
      %v3939 = vld [vmem:[%s2920 + $0x98] sm:$0x1]
      %v3940 = vld [vmem:[%s2920 + $0x9c] sm:$0xf]
      %v3941 = vld [vmem:[%s2920 + $0xa0] sm:$0xf]
      %v3942 = vld [vmem:[%s2920 + $0xa4] sm:$0x1]
      %v3943 = vld [vmem:[%s2920 + $0xa8] sm:$0xf]
      %v3944 = vld [vmem:[%s2920 + $0xac] sm:$0xf]
      %v3945 = vld [vmem:[%s2920 + $0xb0] sm:$0x1]
      %v3946 = vld [vmem:[%s2920 + $0xb4] sm:$0xf]
      %v3947 = vld [vmem:[%s2920 + $0xb8] sm:$0xf]
      %v3948 = vld [vmem:[%s2920 + $0xbc] sm:$0x1]
      %v3950 = vshrl.u32 %v3901, 16
      %v3952 = vrot.slane %v3950, 4
      %v3953 = vshll.u32 %v3901, 16
      %v3955 = vrot.slane %v3953, 5
      %v3956 = vor.u32 %v3952, %v3955
      %v3957 = vrot.slane %v3956, 4
      %v3959 = vshll.u32 %v3902, 16
      %v3961 = vrot.slane %v3959, 5
      %v3962 = vsel %vm811, %v3957, %v3961
      %v3963 = vshrl.u32 %v3902, 16
      %v3965 = vrot.slane %v3963, 4
      %v3966 = vor.u32 %v3965, %v3961
      %v3967 = vrot.slane %v3966, 4
      %v3969 = vshll.u32 %v3903, 16
      %v3971 = vrot.slane %v3969, 5
      %v3972 = vsel %vm811, %v3967, %v3971
      %v3974 = vshrl.u32 %v3904, 16
      %v3976 = vrot.slane %v3974, 4
      %v3977 = vshll.u32 %v3904, 16
      %v3979 = vrot.slane %v3977, 5
      %v3980 = vor.u32 %v3976, %v3979
      %v3981 = vrot.slane %v3980, 4
      %v3983 = vshll.u32 %v3905, 16
      %v3985 = vrot.slane %v3983, 5
      %v3986 = vsel %vm811, %v3981, %v3985
      %v3987 = vshrl.u32 %v3905, 16
      %v3989 = vrot.slane %v3987, 4
      %v3990 = vor.u32 %v3989, %v3985
      %v3991 = vrot.slane %v3990, 4
      %v3993 = vshll.u32 %v3906, 16
      %v3995 = vrot.slane %v3993, 5
      %v3996 = vsel %vm811, %v3991, %v3995
      %v3998 = vshrl.u32 %v3907, 16
      %v4000 = vrot.slane %v3998, 4
      %v4001 = vshll.u32 %v3907, 16
      %v4003 = vrot.slane %v4001, 5
      %v4004 = vor.u32 %v4000, %v4003
      %v4005 = vrot.slane %v4004, 4
      %v4007 = vshll.u32 %v3908, 16
      %v4009 = vrot.slane %v4007, 5
      %v4010 = vsel %vm811, %v4005, %v4009
      %v4011 = vshrl.u32 %v3908, 16
      %v4013 = vrot.slane %v4011, 4
      %v4014 = vor.u32 %v4013, %v4009
      %v4015 = vrot.slane %v4014, 4
      %v4017 = vshll.u32 %v3909, 16
      %v4019 = vrot.slane %v4017, 5
      %v4020 = vsel %vm811, %v4015, %v4019
      %v4022 = vshrl.u32 %v3910, 16
      %v4024 = vrot.slane %v4022, 4
      %v4025 = vshll.u32 %v3910, 16
      %v4027 = vrot.slane %v4025, 5
      %v4028 = vor.u32 %v4024, %v4027
      %v4029 = vrot.slane %v4028, 4
      %v4031 = vshll.u32 %v3911, 16
      %v4033 = vrot.slane %v4031, 5
      %v4034 = vsel %vm811, %v4029, %v4033
      %v4035 = vshrl.u32 %v3911, 16
      %v4037 = vrot.slane %v4035, 4
      %v4038 = vor.u32 %v4037, %v4033
      %v4039 = vrot.slane %v4038, 4
      %v4041 = vshll.u32 %v3912, 16
      %v4043 = vrot.slane %v4041, 5
      %v4044 = vsel %vm811, %v4039, %v4043
      %v4046 = vshrl.u32 %v3913, 16
      %v4048 = vrot.slane %v4046, 4
      %v4049 = vshll.u32 %v3913, 16
      %v4051 = vrot.slane %v4049, 5
      %v4052 = vor.u32 %v4048, %v4051
      %v4053 = vrot.slane %v4052, 4
      %v4055 = vshll.u32 %v3914, 16
      %v4057 = vrot.slane %v4055, 5
      %v4058 = vsel %vm811, %v4053, %v4057
      %v4059 = vshrl.u32 %v3914, 16
      %v4061 = vrot.slane %v4059, 4
      %v4062 = vor.u32 %v4061, %v4057
      %v4063 = vrot.slane %v4062, 4
      %v4065 = vshll.u32 %v3915, 16
      %v4067 = vrot.slane %v4065, 5
      %v4068 = vsel %vm811, %v4063, %v4067
      %v4070 = vshrl.u32 %v3916, 16
      %v4072 = vrot.slane %v4070, 4
      %v4073 = vshll.u32 %v3916, 16
      %v4075 = vrot.slane %v4073, 5
      %v4076 = vor.u32 %v4072, %v4075
      %v4077 = vrot.slane %v4076, 4
      %v4079 = vshll.u32 %v3917, 16
      %v4081 = vrot.slane %v4079, 5
      %v4082 = vsel %vm811, %v4077, %v4081
      %v4083 = vshrl.u32 %v3917, 16
      %v4085 = vrot.slane %v4083, 4
      %v4086 = vor.u32 %v4085, %v4081
      %v4087 = vrot.slane %v4086, 4
      %v4089 = vshll.u32 %v3918, 16
      %v4091 = vrot.slane %v4089, 5
      %v4092 = vsel %vm811, %v4087, %v4091
      %v4094 = vshrl.u32 %v3919, 16
      %v4096 = vrot.slane %v4094, 4
      %v4097 = vshll.u32 %v3919, 16
      %v4099 = vrot.slane %v4097, 5
      %v4100 = vor.u32 %v4096, %v4099
      %v4101 = vrot.slane %v4100, 4
      %v4103 = vshll.u32 %v3920, 16
      %v4105 = vrot.slane %v4103, 5
      %v4106 = vsel %vm811, %v4101, %v4105
      %v4107 = vshrl.u32 %v3920, 16
      %v4109 = vrot.slane %v4107, 4
      %v4110 = vor.u32 %v4109, %v4105
      %v4111 = vrot.slane %v4110, 4
      %v4113 = vshll.u32 %v3921, 16
      %v4115 = vrot.slane %v4113, 5
      %v4116 = vsel %vm811, %v4111, %v4115
      %v4118 = vshrl.u32 %v3922, 16
      %v4120 = vrot.slane %v4118, 4
      %v4121 = vshll.u32 %v3922, 16
      %v4123 = vrot.slane %v4121, 5
      %v4124 = vor.u32 %v4120, %v4123
      %v4125 = vrot.slane %v4124, 4
      %v4127 = vshll.u32 %v3923, 16
      %v4129 = vrot.slane %v4127, 5
      %v4130 = vsel %vm811, %v4125, %v4129
      %v4131 = vshrl.u32 %v3923, 16
      %v4133 = vrot.slane %v4131, 4
      %v4134 = vor.u32 %v4133, %v4129
      %v4135 = vrot.slane %v4134, 4
      %v4137 = vshll.u32 %v3924, 16
      %v4139 = vrot.slane %v4137, 5
      %v4140 = vsel %vm811, %v4135, %v4139
      %v4142 = vshrl.u32 %v3925, 16
      %v4144 = vrot.slane %v4142, 4
      %v4145 = vshll.u32 %v3925, 16
      %v4147 = vrot.slane %v4145, 5
      %v4148 = vor.u32 %v4144, %v4147
      %v4149 = vrot.slane %v4148, 4
      %v4151 = vshll.u32 %v3926, 16
      %v4153 = vrot.slane %v4151, 5
      %v4154 = vsel %vm811, %v4149, %v4153
      %v4155 = vshrl.u32 %v3926, 16
      %v4157 = vrot.slane %v4155, 4
      %v4158 = vor.u32 %v4157, %v4153
      %v4159 = vrot.slane %v4158, 4
      %v4161 = vshll.u32 %v3927, 16
      %v4163 = vrot.slane %v4161, 5
      %v4164 = vsel %vm811, %v4159, %v4163
      %v4166 = vshrl.u32 %v3928, 16
      %v4168 = vrot.slane %v4166, 4
      %v4169 = vshll.u32 %v3928, 16
      %v4171 = vrot.slane %v4169, 5
      %v4172 = vor.u32 %v4168, %v4171
      %v4173 = vrot.slane %v4172, 4
      %v4175 = vshll.u32 %v3929, 16
      %v4177 = vrot.slane %v4175, 5
      %v4178 = vsel %vm811, %v4173, %v4177
      %v4179 = vshrl.u32 %v3929, 16
      %v4181 = vrot.slane %v4179, 4
      %v4182 = vor.u32 %v4181, %v4177
      %v4183 = vrot.slane %v4182, 4
      %v4185 = vshll.u32 %v3930, 16
      %v4187 = vrot.slane %v4185, 5
      %v4188 = vsel %vm811, %v4183, %v4187
      %v4190 = vshrl.u32 %v3931, 16
      %v4192 = vrot.slane %v4190, 4
      %v4193 = vshll.u32 %v3931, 16
      %v4195 = vrot.slane %v4193, 5
      %v4196 = vor.u32 %v4192, %v4195
      %v4197 = vrot.slane %v4196, 4
      %v4199 = vshll.u32 %v3932, 16
      %v4201 = vrot.slane %v4199, 5
      %v4202 = vsel %vm811, %v4197, %v4201
      %v4203 = vshrl.u32 %v3932, 16
      %v4205 = vrot.slane %v4203, 4
      %v4206 = vor.u32 %v4205, %v4201
      %v4207 = vrot.slane %v4206, 4
      %v4209 = vshll.u32 %v3933, 16
      %v4211 = vrot.slane %v4209, 5
      %v4212 = vsel %vm811, %v4207, %v4211
      %v4214 = vshrl.u32 %v3934, 16
      %v4216 = vrot.slane %v4214, 4
      %v4217 = vshll.u32 %v3934, 16
      %v4219 = vrot.slane %v4217, 5
      %v4220 = vor.u32 %v4216, %v4219
      %v4221 = vrot.slane %v4220, 4
      %v4223 = vshll.u32 %v3935, 16
      %v4225 = vrot.slane %v4223, 5
      %v4226 = vsel %vm811, %v4221, %v4225
      %v4227 = vshrl.u32 %v3935, 16
      %v4229 = vrot.slane %v4227, 4
      %v4230 = vor.u32 %v4229, %v4225
      %v4231 = vrot.slane %v4230, 4
      %v4233 = vshll.u32 %v3936, 16
      %v4235 = vrot.slane %v4233, 5
      %v4236 = vsel %vm811, %v4231, %v4235
      %v4238 = vshrl.u32 %v3937, 16
      %v4240 = vrot.slane %v4238, 4
      %v4241 = vshll.u32 %v3937, 16
      %v4243 = vrot.slane %v4241, 5
      %v4244 = vor.u32 %v4240, %v4243
      %v4245 = vrot.slane %v4244, 4
      %v4247 = vshll.u32 %v3938, 16
      %v4249 = vrot.slane %v4247, 5
      %v4250 = vsel %vm811, %v4245, %v4249
      %v4251 = vshrl.u32 %v3938, 16
      %v4253 = vrot.slane %v4251, 4
      %v4254 = vor.u32 %v4253, %v4249
      %v4255 = vrot.slane %v4254, 4
      %v4257 = vshll.u32 %v3939, 16
      %v4259 = vrot.slane %v4257, 5
      %v4260 = vsel %vm811, %v4255, %v4259
      %v4262 = vshrl.u32 %v3940, 16
      %v4264 = vrot.slane %v4262, 4
      %v4265 = vshll.u32 %v3940, 16
      %v4267 = vrot.slane %v4265, 5
      %v4268 = vor.u32 %v4264, %v4267
      %v4269 = vrot.slane %v4268, 4
      %v4271 = vshll.u32 %v3941, 16
      %v4273 = vrot.slane %v4271, 5
      %v4274 = vsel %vm811, %v4269, %v4273
      %v4275 = vshrl.u32 %v3941, 16
      %v4277 = vrot.slane %v4275, 4
      %v4278 = vor.u32 %v4277, %v4273
      %v4279 = vrot.slane %v4278, 4
      %v4281 = vshll.u32 %v3942, 16
      %v4283 = vrot.slane %v4281, 5
      %v4284 = vsel %vm811, %v4279, %v4283
      %v4286 = vshrl.u32 %v3943, 16
      %v4288 = vrot.slane %v4286, 4
      %v4289 = vshll.u32 %v3943, 16
      %v4291 = vrot.slane %v4289, 5
      %v4292 = vor.u32 %v4288, %v4291
      %v4293 = vrot.slane %v4292, 4
      %v4295 = vshll.u32 %v3944, 16
      %v4297 = vrot.slane %v4295, 5
      %v4298 = vsel %vm811, %v4293, %v4297
      %v4299 = vshrl.u32 %v3944, 16
      %v4301 = vrot.slane %v4299, 4
      %v4302 = vor.u32 %v4301, %v4297
      %v4303 = vrot.slane %v4302, 4
      %v4305 = vshll.u32 %v3945, 16
      %v4307 = vrot.slane %v4305, 5
      %v4308 = vsel %vm811, %v4303, %v4307
      %v4310 = vshrl.u32 %v3946, 16
      %v4312 = vrot.slane %v4310, 4
      %v4313 = vshll.u32 %v3946, 16
      %v4315 = vrot.slane %v4313, 5
      %v4316 = vor.u32 %v4312, %v4315
      %v4317 = vrot.slane %v4316, 4
      %v4319 = vshll.u32 %v3947, 16
      %v4321 = vrot.slane %v4319, 5
      %v4322 = vsel %vm811, %v4317, %v4321
      %v4323 = vshrl.u32 %v3947, 16
      %v4325 = vrot.slane %v4323, 4
      %v4326 = vor.u32 %v4325, %v4321
      %v4327 = vrot.slane %v4326, 4
      %v4329 = vshll.u32 %v3948, 16
      %v4331 = vrot.slane %v4329, 5
      %v4332 = vsel %vm811, %v4327, %v4331
      %s4333 = scalar_lea.vmem %s2, 32
      %v4334 = vld [vmem:[%s4333] sm:$0xf]
      %v4335 = vld [vmem:[%s4333 + $0x4] sm:$0xf]
      %v4336 = vunpack.c.l.b16 %v3530
      %v4337 = vunpack.c.l.b16 %v3540
      %v4338 = vunpack.c.l.b16 %v3554
      %v4339 = vunpack.c.l.b16 %v3564
      %v4340 = vunpack.c.l.b16 %v3578
      %v4341 = vunpack.c.l.b16 %v3588
      %v4342 = vunpack.c.l.b16 %v3602
      %v4343 = vunpack.c.l.b16 %v3612
      %v4344 = vunpack.c.l.b16 %v3626
      %v4345 = vunpack.c.l.b16 %v3636
      %v4346 = vunpack.c.l.b16 %v3650
      %v4347 = vunpack.c.l.b16 %v3660
      %v4348 = vunpack.c.l.b16 %v3674
      %v4349 = vunpack.c.l.b16 %v3684
      %v4350 = vunpack.c.l.b16 %v3698
      %v4351 = vunpack.c.l.b16 %v3708
      %v4352 = vunpack.c.l.b16 %v3722
      %v4353 = vunpack.c.l.b16 %v3732
      %v4354 = vunpack.c.l.b16 %v3746
      %v4355 = vunpack.c.l.b16 %v3756
      %v4356 = vunpack.c.l.b16 %v3770
      %v4357 = vunpack.c.l.b16 %v3780
      %v4358 = vunpack.c.l.b16 %v3794
      %v4359 = vunpack.c.l.b16 %v3804
      %v4360 = vunpack.c.l.b16 %v3818
      %v4361 = vunpack.c.l.b16 %v3828
      %v4362 = vunpack.c.l.b16 %v3842
      %v4363 = vunpack.c.l.b16 %v3852
      %v4364 = vunpack.c.l.b16 %v3866
      %v4365 = vunpack.c.l.b16 %v3876
      %v4366 = vunpack.c.l.b16 %v3890
      %v4367 = vunpack.c.l.b16 %v3900
      %v4368 = vpack.c.b16 %v4337, %v4336
      %v4369 = vpack.c.b16 %v4339, %v4338
      %v4370 = vpack.c.b16 %v4341, %v4340
      %v4371 = vpack.c.b16 %v4343, %v4342
      %v4372 = vpack.c.b16 %v4345, %v4344
      %v4373 = vpack.c.b16 %v4347, %v4346
      %v4374 = vpack.c.b16 %v4349, %v4348
      %v4375 = vpack.c.b16 %v4351, %v4350
      %v4376 = vpack.c.b16 %v4353, %v4352
      %v4377 = vpack.c.b16 %v4355, %v4354
      %v4378 = vpack.c.b16 %v4357, %v4356
      %v4379 = vpack.c.b16 %v4359, %v4358
      %v4380 = vpack.c.b16 %v4361, %v4360
      %v4381 = vpack.c.b16 %v4363, %v4362
      %v4382 = vpack.c.b16 %v4365, %v4364
      %v4383 = vpack.c.b16 %v4367, %v4366
      %v4386 = vunpack.c.l.b16 %v4334
      %v4387 = vunpack.c.l.b16 %v4335
      %v4388 = vpack.c.b16 %v4387, %v4386
      %v4391 = vsel %vm400, %v4368, 0
      %v4394 = vsel %vm400, %v4369, 0
      %v4397 = vsel %vm400, %v4370, 0
      %v4400 = vsel %vm400, %v4371, 0
      %v4403 = vsel %vm400, %v4372, 0
      %v4406 = vsel %vm400, %v4373, 0
      %v4409 = vsel %vm400, %v4374, 0
      %v4412 = vsel %vm400, %v4375, 0
      %v4415 = vsel %vm400, %v4376, 0
      %v4418 = vsel %vm400, %v4377, 0
      %v4421 = vsel %vm400, %v4378, 0
      %v4424 = vsel %vm400, %v4379, 0
      %v4427 = vsel %vm400, %v4380, 0
      %v4430 = vsel %vm400, %v4381, 0
      %v4433 = vsel %vm400, %v4382, 0
      %v4436 = vsel %vm400, %v4383, 0
      %4438 = vmatpush.bf16.msra.mxu0 0
      %4439 = vmatpush.bf16.msra.mxu0 0
      %4440 = vmatpush.bf16.msra.mxu0 0
      %4441 = vmatpush.bf16.msra.mxu0 0
      %4442 = vmatpush.bf16.msra.mxu0 0
      %4443 = vmatpush.bf16.msra.mxu0 0
      %4444 = vmatpush.bf16.msra.mxu0 0
      %4445 = vmatpush.bf16.msra.mxu0 %v4388
      %4446 = vmatmul.bf16.gmra.mxu0 %v4391
      %v4447 = vpop.f32.mrf.mxu0
      %v4448 = vadd.f32 0.0, %v4447
      %v4449 = vpop.f32.mrf.mxu0
      %v4450 = vadd.f32 0.0, %v4449
      %4451 = vmatmul.bf16.gmra.mxu0 %v4394
      %v4452 = vpop.f32.mrf.mxu0
      %v4453 = vadd.f32 0.0, %v4452
      %v4454 = vpop.f32.mrf.mxu0
      %v4455 = vadd.f32 0.0, %v4454
      %4456 = vmatmul.bf16.gmra.mxu0 %v4397
      %v4457 = vpop.f32.mrf.mxu0
      %v4458 = vadd.f32 0.0, %v4457
      %v4459 = vpop.f32.mrf.mxu0
      %v4460 = vadd.f32 0.0, %v4459
      %4461 = vmatmul.bf16.gmra.mxu0 %v4400
      %v4462 = vpop.f32.mrf.mxu0
      %v4463 = vadd.f32 0.0, %v4462
      %v4464 = vpop.f32.mrf.mxu0
      %v4465 = vadd.f32 0.0, %v4464
      %4466 = vmatmul.bf16.gmra.mxu0 %v4403
      %v4467 = vpop.f32.mrf.mxu0
      %v4468 = vadd.f32 0.0, %v4467
      %v4469 = vpop.f32.mrf.mxu0
      %v4470 = vadd.f32 0.0, %v4469
      %4471 = vmatmul.bf16.gmra.mxu0 %v4406
      %v4472 = vpop.f32.mrf.mxu0
      %v4473 = vadd.f32 0.0, %v4472
      %v4474 = vpop.f32.mrf.mxu0
      %v4475 = vadd.f32 0.0, %v4474
      %4476 = vmatmul.bf16.gmra.mxu0 %v4409
      %v4477 = vpop.f32.mrf.mxu0
      %v4478 = vadd.f32 0.0, %v4477
      %v4479 = vpop.f32.mrf.mxu0
      %v4480 = vadd.f32 0.0, %v4479
      %4481 = vmatmul.bf16.gmra.mxu0 %v4412
      %v4482 = vpop.f32.mrf.mxu0
      %v4483 = vadd.f32 0.0, %v4482
      %v4484 = vpop.f32.mrf.mxu0
      %v4485 = vadd.f32 0.0, %v4484
      %4486 = vmatmul.bf16.gmra.mxu0 %v4415
      %v4487 = vpop.f32.mrf.mxu0
      %v4488 = vadd.f32 0.0, %v4487
      %v4489 = vpop.f32.mrf.mxu0
      %v4490 = vadd.f32 0.0, %v4489
      %4491 = vmatmul.bf16.gmra.mxu0 %v4418
      %v4492 = vpop.f32.mrf.mxu0
      %v4493 = vadd.f32 0.0, %v4492
      %v4494 = vpop.f32.mrf.mxu0
      %v4495 = vadd.f32 0.0, %v4494
      %4496 = vmatmul.bf16.gmra.mxu0 %v4421
      %v4497 = vpop.f32.mrf.mxu0
      %v4498 = vadd.f32 0.0, %v4497
      %v4499 = vpop.f32.mrf.mxu0
      %v4500 = vadd.f32 0.0, %v4499
      %4501 = vmatmul.bf16.gmra.mxu0 %v4424
      %v4502 = vpop.f32.mrf.mxu0
      %v4503 = vadd.f32 0.0, %v4502
      %v4504 = vpop.f32.mrf.mxu0
      %v4505 = vadd.f32 0.0, %v4504
      %4506 = vmatmul.bf16.gmra.mxu0 %v4427
      %v4507 = vpop.f32.mrf.mxu0
      %v4508 = vadd.f32 0.0, %v4507
      %v4509 = vpop.f32.mrf.mxu0
      %v4510 = vadd.f32 0.0, %v4509
      %4511 = vmatmul.bf16.gmra.mxu0 %v4430
      %v4512 = vpop.f32.mrf.mxu0
      %v4513 = vadd.f32 0.0, %v4512
      %v4514 = vpop.f32.mrf.mxu0
      %v4515 = vadd.f32 0.0, %v4514
      %4516 = vmatmul.bf16.gmra.mxu0 %v4433
      %v4517 = vpop.f32.mrf.mxu0
      %v4518 = vadd.f32 0.0, %v4517
      %v4519 = vpop.f32.mrf.mxu0
      %v4520 = vadd.f32 0.0, %v4519
      %4521 = vmatmul.bf16.gmra.mxu0 %v4436
      %v4522 = vpop.f32.mrf.mxu0
      %v4523 = vadd.f32 0.0, %v4522
      %v4524 = vpop.f32.mrf.mxu0
      %v4525 = vadd.f32 0.0, %v4524
      %4526 = vdwg.mxu0
      %v4527 = vadd.f32 %v3437, %v4448
      %v4528 = vadd.f32 %v3438, %v4450
      %v4529 = vadd.f32 %v3439, %v4453
      %v4530 = vadd.f32 %v3440, %v4455
      %v4531 = vadd.f32 %v3441, %v4458
      %v4532 = vadd.f32 %v3442, %v4460
      %v4533 = vadd.f32 %v3443, %v4463
      %v4534 = vadd.f32 %v3444, %v4465
      %v4535 = vadd.f32 %v3445, %v4468
      %v4536 = vadd.f32 %v3446, %v4470
      %v4537 = vadd.f32 %v3447, %v4473
      %v4538 = vadd.f32 %v3448, %v4475
      %v4539 = vadd.f32 %v3449, %v4478
      %v4540 = vadd.f32 %v3450, %v4480
      %v4541 = vadd.f32 %v3451, %v4483
      %v4542 = vadd.f32 %v3452, %v4485
      %v4543 = vadd.f32 %v3453, %v4488
      %v4544 = vadd.f32 %v3454, %v4490
      %v4545 = vadd.f32 %v3455, %v4493
      %v4546 = vadd.f32 %v3456, %v4495
      %v4547 = vadd.f32 %v3457, %v4498
      %v4548 = vadd.f32 %v3458, %v4500
      %v4549 = vadd.f32 %v3459, %v4503
      %v4550 = vadd.f32 %v3460, %v4505
      %v4551 = vadd.f32 %v3461, %v4508
      %v4552 = vadd.f32 %v3462, %v4510
      %v4553 = vadd.f32 %v3463, %v4513
      %v4554 = vadd.f32 %v3464, %v4515
      %v4555 = vadd.f32 %v3465, %v4518
      %v4556 = vadd.f32 %v3466, %v4520
      %v4557 = vadd.f32 %v3467, %v4523
      %v4558 = vadd.f32 %v3468, %v4525
      %s4559 = scalar_lea.vmem %s3, 32
      %v4560 = vld [vmem:[%s4559] sm:$0xf]
      %v4561 = vld [vmem:[%s4559 + $0x4] sm:$0xf]
      %v4562 = vunpack.c.l.b16 %v3962
      %v4563 = vunpack.c.l.b16 %v3972
      %v4564 = vunpack.c.l.b16 %v3986
      %v4565 = vunpack.c.l.b16 %v3996
      %v4566 = vunpack.c.l.b16 %v4010
      %v4567 = vunpack.c.l.b16 %v4020
      %v4568 = vunpack.c.l.b16 %v4034
      %v4569 = vunpack.c.l.b16 %v4044
      %v4570 = vunpack.c.l.b16 %v4058
      %v4571 = vunpack.c.l.b16 %v4068
      %v4572 = vunpack.c.l.b16 %v4082
      %v4573 = vunpack.c.l.b16 %v4092
      %v4574 = vunpack.c.l.b16 %v4106
      %v4575 = vunpack.c.l.b16 %v4116
      %v4576 = vunpack.c.l.b16 %v4130
      %v4577 = vunpack.c.l.b16 %v4140
      %v4578 = vunpack.c.l.b16 %v4154
      %v4579 = vunpack.c.l.b16 %v4164
      %v4580 = vunpack.c.l.b16 %v4178
      %v4581 = vunpack.c.l.b16 %v4188
      %v4582 = vunpack.c.l.b16 %v4202
      %v4583 = vunpack.c.l.b16 %v4212
      %v4584 = vunpack.c.l.b16 %v4226
      %v4585 = vunpack.c.l.b16 %v4236
      %v4586 = vunpack.c.l.b16 %v4250
      %v4587 = vunpack.c.l.b16 %v4260
      %v4588 = vunpack.c.l.b16 %v4274
      %v4589 = vunpack.c.l.b16 %v4284
      %v4590 = vunpack.c.l.b16 %v4298
      %v4591 = vunpack.c.l.b16 %v4308
      %v4592 = vunpack.c.l.b16 %v4322
      %v4593 = vunpack.c.l.b16 %v4332
      %v4594 = vpack.c.b16 %v4563, %v4562
      %v4595 = vpack.c.b16 %v4565, %v4564
      %v4596 = vpack.c.b16 %v4567, %v4566
      %v4597 = vpack.c.b16 %v4569, %v4568
      %v4598 = vpack.c.b16 %v4571, %v4570
      %v4599 = vpack.c.b16 %v4573, %v4572
      %v4600 = vpack.c.b16 %v4575, %v4574
      %v4601 = vpack.c.b16 %v4577, %v4576
      %v4602 = vpack.c.b16 %v4579, %v4578
      %v4603 = vpack.c.b16 %v4581, %v4580
      %v4604 = vpack.c.b16 %v4583, %v4582
      %v4605 = vpack.c.b16 %v4585, %v4584
      %v4606 = vpack.c.b16 %v4587, %v4586
      %v4607 = vpack.c.b16 %v4589, %v4588
      %v4608 = vpack.c.b16 %v4591, %v4590
      %v4609 = vpack.c.b16 %v4593, %v4592
      %v4612 = vunpack.c.l.b16 %v4560
      %v4613 = vunpack.c.l.b16 %v4561
      %v4614 = vpack.c.b16 %v4613, %v4612
      %v4617 = vsel %vm400, %v4594, 0
      %v4620 = vsel %vm400, %v4595, 0
      %v4623 = vsel %vm400, %v4596, 0
      %v4626 = vsel %vm400, %v4597, 0
      %v4629 = vsel %vm400, %v4598, 0
      %v4632 = vsel %vm400, %v4599, 0
      %v4635 = vsel %vm400, %v4600, 0
      %v4638 = vsel %vm400, %v4601, 0
      %v4641 = vsel %vm400, %v4602, 0
      %v4644 = vsel %vm400, %v4603, 0
      %v4647 = vsel %vm400, %v4604, 0
      %v4650 = vsel %vm400, %v4605, 0
      %v4653 = vsel %vm400, %v4606, 0
      %v4656 = vsel %vm400, %v4607, 0
      %v4659 = vsel %vm400, %v4608, 0
      %v4662 = vsel %vm400, %v4609, 0
      %4664 = vmatpush.bf16.msra.mxu0 0
      %4665 = vmatpush.bf16.msra.mxu0 0
      %4666 = vmatpush.bf16.msra.mxu0 0
      %4667 = vmatpush.bf16.msra.mxu0 0
      %4668 = vmatpush.bf16.msra.mxu0 0
      %4669 = vmatpush.bf16.msra.mxu0 0
      %4670 = vmatpush.bf16.msra.mxu0 0
      %4671 = vmatpush.bf16.msra.mxu0 %v4614
      %4672 = vmatmul.bf16.gmra.mxu0 %v4617
      %v4673 = vpop.f32.mrf.mxu0
      %v4674 = vadd.f32 0.0, %v4673
      %v4675 = vpop.f32.mrf.mxu0
      %v4676 = vadd.f32 0.0, %v4675
      %4677 = vmatmul.bf16.gmra.mxu0 %v4620
      %v4678 = vpop.f32.mrf.mxu0
      %v4679 = vadd.f32 0.0, %v4678
      %v4680 = vpop.f32.mrf.mxu0
      %v4681 = vadd.f32 0.0, %v4680
      %4682 = vmatmul.bf16.gmra.mxu0 %v4623
      %v4683 = vpop.f32.mrf.mxu0
      %v4684 = vadd.f32 0.0, %v4683
      %v4685 = vpop.f32.mrf.mxu0
      %v4686 = vadd.f32 0.0, %v4685
      %4687 = vmatmul.bf16.gmra.mxu0 %v4626
      %v4688 = vpop.f32.mrf.mxu0
      %v4689 = vadd.f32 0.0, %v4688
      %v4690 = vpop.f32.mrf.mxu0
      %v4691 = vadd.f32 0.0, %v4690
      %4692 = vmatmul.bf16.gmra.mxu0 %v4629
      %v4693 = vpop.f32.mrf.mxu0
      %v4694 = vadd.f32 0.0, %v4693
      %v4695 = vpop.f32.mrf.mxu0
      %v4696 = vadd.f32 0.0, %v4695
      %4697 = vmatmul.bf16.gmra.mxu0 %v4632
      %v4698 = vpop.f32.mrf.mxu0
      %v4699 = vadd.f32 0.0, %v4698
      %v4700 = vpop.f32.mrf.mxu0
      %v4701 = vadd.f32 0.0, %v4700
      %4702 = vmatmul.bf16.gmra.mxu0 %v4635
      %v4703 = vpop.f32.mrf.mxu0
      %v4704 = vadd.f32 0.0, %v4703
      %v4705 = vpop.f32.mrf.mxu0
      %v4706 = vadd.f32 0.0, %v4705
      %4707 = vmatmul.bf16.gmra.mxu0 %v4638
      %v4708 = vpop.f32.mrf.mxu0
      %v4709 = vadd.f32 0.0, %v4708
      %v4710 = vpop.f32.mrf.mxu0
      %v4711 = vadd.f32 0.0, %v4710
      %4712 = vmatmul.bf16.gmra.mxu0 %v4641
      %v4713 = vpop.f32.mrf.mxu0
      %v4714 = vadd.f32 0.0, %v4713
      %v4715 = vpop.f32.mrf.mxu0
      %v4716 = vadd.f32 0.0, %v4715
      %4717 = vmatmul.bf16.gmra.mxu0 %v4644
      %v4718 = vpop.f32.mrf.mxu0
      %v4719 = vadd.f32 0.0, %v4718
      %v4720 = vpop.f32.mrf.mxu0
      %v4721 = vadd.f32 0.0, %v4720
      %4722 = vmatmul.bf16.gmra.mxu0 %v4647
      %v4723 = vpop.f32.mrf.mxu0
      %v4724 = vadd.f32 0.0, %v4723
      %v4725 = vpop.f32.mrf.mxu0
      %v4726 = vadd.f32 0.0, %v4725
      %4727 = vmatmul.bf16.gmra.mxu0 %v4650
      %v4728 = vpop.f32.mrf.mxu0
      %v4729 = vadd.f32 0.0, %v4728
      %v4730 = vpop.f32.mrf.mxu0
      %v4731 = vadd.f32 0.0, %v4730
      %4732 = vmatmul.bf16.gmra.mxu0 %v4653
      %v4733 = vpop.f32.mrf.mxu0
      %v4734 = vadd.f32 0.0, %v4733
      %v4735 = vpop.f32.mrf.mxu0
      %v4736 = vadd.f32 0.0, %v4735
      %4737 = vmatmul.bf16.gmra.mxu0 %v4656
      %v4738 = vpop.f32.mrf.mxu0
      %v4739 = vadd.f32 0.0, %v4738
      %v4740 = vpop.f32.mrf.mxu0
      %v4741 = vadd.f32 0.0, %v4740
      %4742 = vmatmul.bf16.gmra.mxu0 %v4659
      %v4743 = vpop.f32.mrf.mxu0
      %v4744 = vadd.f32 0.0, %v4743
      %v4745 = vpop.f32.mrf.mxu0
      %v4746 = vadd.f32 0.0, %v4745
      %4747 = vmatmul.bf16.gmra.mxu0 %v4662
      %v4748 = vpop.f32.mrf.mxu0
      %v4749 = vadd.f32 0.0, %v4748
      %v4750 = vpop.f32.mrf.mxu0
      %v4751 = vadd.f32 0.0, %v4750
      %4752 = vdwg.mxu0
      %v4753 = vadd.f32 %v4527, %v4674
      %v4754 = vadd.f32 %v4528, %v4676
      %v4755 = vadd.f32 %v4529, %v4679
      %v4756 = vadd.f32 %v4530, %v4681
      %v4757 = vadd.f32 %v4531, %v4684
      %v4758 = vadd.f32 %v4532, %v4686
      %v4759 = vadd.f32 %v4533, %v4689
      %v4760 = vadd.f32 %v4534, %v4691
      %v4761 = vadd.f32 %v4535, %v4694
      %v4762 = vadd.f32 %v4536, %v4696
      %v4763 = vadd.f32 %v4537, %v4699
      %v4764 = vadd.f32 %v4538, %v4701
      %v4765 = vadd.f32 %v4539, %v4704
      %v4766 = vadd.f32 %v4540, %v4706
      %v4767 = vadd.f32 %v4541, %v4709
      %v4768 = vadd.f32 %v4542, %v4711
      %v4769 = vadd.f32 %v4543, %v4714
      %v4770 = vadd.f32 %v4544, %v4716
      %v4771 = vadd.f32 %v4545, %v4719
      %v4772 = vadd.f32 %v4546, %v4721
      %v4773 = vadd.f32 %v4547, %v4724
      %v4774 = vadd.f32 %v4548, %v4726
      %v4775 = vadd.f32 %v4549, %v4729
      %v4776 = vadd.f32 %v4550, %v4731
      %v4777 = vadd.f32 %v4551, %v4734
      %v4778 = vadd.f32 %v4552, %v4736
      %v4779 = vadd.f32 %v4553, %v4739
      %v4780 = vadd.f32 %v4554, %v4741
      %v4781 = vadd.f32 %v4555, %v4744
      %v4782 = vadd.f32 %v4556, %v4746
      %v4783 = vadd.f32 %v4557, %v4749
      %v4784 = vadd.f32 %v4558, %v4751
      %v4785 = vld [vmem:[%s2887] sm:$0xe]
      %v4786 = vld [vmem:[%s2887 + $0xc] sm:$0xe]
      %v4787 = vld [vmem:[%s2887 + $0x18] sm:$0xe]
      %v4788 = vld [vmem:[%s2887 + $0x24] sm:$0xe]
      %v4789 = vld [vmem:[%s2887 + $0x30] sm:$0xe]
      %v4790 = vld [vmem:[%s2887 + $0x3c] sm:$0xe]
      %v4791 = vld [vmem:[%s2887 + $0x48] sm:$0xe]
      %v4792 = vld [vmem:[%s2887 + $0x54] sm:$0xe]
      %v4793 = vld [vmem:[%s2887 + $0x60] sm:$0xe]
      %v4794 = vld [vmem:[%s2887 + $0x6c] sm:$0xe]
      %v4795 = vld [vmem:[%s2887 + $0x78] sm:$0xe]
      %v4796 = vld [vmem:[%s2887 + $0x84] sm:$0xe]
      %v4797 = vld [vmem:[%s2887 + $0x90] sm:$0xe]
      %v4798 = vld [vmem:[%s2887 + $0x9c] sm:$0xe]
      %v4799 = vld [vmem:[%s2887 + $0xa8] sm:$0xe]
      %v4800 = vld [vmem:[%s2887 + $0xb4] sm:$0xe]
      %v4849 = vrot.slane %v4785, 5
      %v4850 = vrot.slane %v4849, 4
      %v4851 = vrot.slane %v3470, 5
      %v4852 = vsel %vm2146, %v4850, %v4851
      %v4853 = vrot.slane %v4851, 4
      %v4854 = vrot.slane %v3471, 5
      %v4855 = vsel %vm2146, %v4853, %v4854
      %v4856 = vrot.slane %v4786, 5
      %v4857 = vrot.slane %v4856, 4
      %v4858 = vrot.slane %v3473, 5
      %v4859 = vsel %vm2146, %v4857, %v4858
      %v4860 = vrot.slane %v4858, 4
      %v4861 = vrot.slane %v3474, 5
      %v4862 = vsel %vm2146, %v4860, %v4861
      %v4863 = vrot.slane %v4787, 5
      %v4864 = vrot.slane %v4863, 4
      %v4865 = vrot.slane %v3476, 5
      %v4866 = vsel %vm2146, %v4864, %v4865
      %v4867 = vrot.slane %v4865, 4
      %v4868 = vrot.slane %v3477, 5
      %v4869 = vsel %vm2146, %v4867, %v4868
      %v4870 = vrot.slane %v4788, 5
      %v4871 = vrot.slane %v4870, 4
      %v4872 = vrot.slane %v3479, 5
      %v4873 = vsel %vm2146, %v4871, %v4872
      %v4874 = vrot.slane %v4872, 4
      %v4875 = vrot.slane %v3480, 5
      %v4876 = vsel %vm2146, %v4874, %v4875
      %v4877 = vrot.slane %v4789, 5
      %v4878 = vrot.slane %v4877, 4
      %v4879 = vrot.slane %v3482, 5
      %v4880 = vsel %vm2146, %v4878, %v4879
      %v4881 = vrot.slane %v4879, 4
      %v4882 = vrot.slane %v3483, 5
      %v4883 = vsel %vm2146, %v4881, %v4882
      %v4884 = vrot.slane %v4790, 5
      %v4885 = vrot.slane %v4884, 4
      %v4886 = vrot.slane %v3485, 5
      %v4887 = vsel %vm2146, %v4885, %v4886
      %v4888 = vrot.slane %v4886, 4
      %v4889 = vrot.slane %v3486, 5
      %v4890 = vsel %vm2146, %v4888, %v4889
      %v4891 = vrot.slane %v4791, 5
      %v4892 = vrot.slane %v4891, 4
      %v4893 = vrot.slane %v3488, 5
      %v4894 = vsel %vm2146, %v4892, %v4893
      %v4895 = vrot.slane %v4893, 4
      %v4896 = vrot.slane %v3489, 5
      %v4897 = vsel %vm2146, %v4895, %v4896
      %v4898 = vrot.slane %v4792, 5
      %v4899 = vrot.slane %v4898, 4
      %v4900 = vrot.slane %v3491, 5
      %v4901 = vsel %vm2146, %v4899, %v4900
      %v4902 = vrot.slane %v4900, 4
      %v4903 = vrot.slane %v3492, 5
      %v4904 = vsel %vm2146, %v4902, %v4903
      %v4905 = vrot.slane %v4793, 5
      %v4906 = vrot.slane %v4905, 4
      %v4907 = vrot.slane %v3494, 5
      %v4908 = vsel %vm2146, %v4906, %v4907
      %v4909 = vrot.slane %v4907, 4
      %v4910 = vrot.slane %v3495, 5
      %v4911 = vsel %vm2146, %v4909, %v4910
      %v4912 = vrot.slane %v4794, 5
      %v4913 = vrot.slane %v4912, 4
      %v4914 = vrot.slane %v3497, 5
      %v4915 = vsel %vm2146, %v4913, %v4914
      %v4916 = vrot.slane %v4914, 4
      %v4917 = vrot.slane %v3498, 5
      %v4918 = vsel %vm2146, %v4916, %v4917
      %v4919 = vrot.slane %v4795, 5
      %v4920 = vrot.slane %v4919, 4
      %v4921 = vrot.slane %v3500, 5
      %v4922 = vsel %vm2146, %v4920, %v4921
      %v4923 = vrot.slane %v4921, 4
      %v4924 = vrot.slane %v3501, 5
      %v4925 = vsel %vm2146, %v4923, %v4924
      %v4926 = vrot.slane %v4796, 5
      %v4927 = vrot.slane %v4926, 4
      %v4928 = vrot.slane %v3503, 5
      %v4929 = vsel %vm2146, %v4927, %v4928
      %v4930 = vrot.slane %v4928, 4
      %v4931 = vrot.slane %v3504, 5
      %v4932 = vsel %vm2146, %v4930, %v4931
      %v4933 = vrot.slane %v4797, 5
      %v4934 = vrot.slane %v4933, 4
      %v4935 = vrot.slane %v3506, 5
      %v4936 = vsel %vm2146, %v4934, %v4935
      %v4937 = vrot.slane %v4935, 4
      %v4938 = vrot.slane %v3507, 5
      %v4939 = vsel %vm2146, %v4937, %v4938
      %v4940 = vrot.slane %v4798, 5
      %v4941 = vrot.slane %v4940, 4
      %v4942 = vrot.slane %v3509, 5
      %v4943 = vsel %vm2146, %v4941, %v4942
      %v4944 = vrot.slane %v4942, 4
      %v4945 = vrot.slane %v3510, 5
      %v4946 = vsel %vm2146, %v4944, %v4945
      %v4947 = vrot.slane %v4799, 5
      %v4948 = vrot.slane %v4947, 4
      %v4949 = vrot.slane %v3512, 5
      %v4950 = vsel %vm2146, %v4948, %v4949
      %v4951 = vrot.slane %v4949, 4
      %v4952 = vrot.slane %v3513, 5
      %v4953 = vsel %vm2146, %v4951, %v4952
      %v4954 = vrot.slane %v4800, 5
      %v4955 = vrot.slane %v4954, 4
      %v4956 = vrot.slane %v3515, 5
      %v4957 = vsel %vm2146, %v4955, %v4956
      %v4958 = vrot.slane %v4956, 4
      %v4959 = vrot.slane %v3516, 5
      %v4960 = vsel %vm2146, %v4958, %v4959
      %v4961 = vld [vmem:[%s2920] sm:$0xe]
      %v4962 = vld [vmem:[%s2920 + $0xc] sm:$0xe]
      %v4963 = vld [vmem:[%s2920 + $0x18] sm:$0xe]
      %v4964 = vld [vmem:[%s2920 + $0x24] sm:$0xe]
      %v4965 = vld [vmem:[%s2920 + $0x30] sm:$0xe]
      %v4966 = vld [vmem:[%s2920 + $0x3c] sm:$0xe]
      %v4967 = vld [vmem:[%s2920 + $0x48] sm:$0xe]
      %v4968 = vld [vmem:[%s2920 + $0x54] sm:$0xe]
      %v4969 = vld [vmem:[%s2920 + $0x60] sm:$0xe]
      %v4970 = vld [vmem:[%s2920 + $0x6c] sm:$0xe]
      %v4971 = vld [vmem:[%s2920 + $0x78] sm:$0xe]
      %v4972 = vld [vmem:[%s2920 + $0x84] sm:$0xe]
      %v4973 = vld [vmem:[%s2920 + $0x90] sm:$0xe]
      %v4974 = vld [vmem:[%s2920 + $0x9c] sm:$0xe]
      %v4975 = vld [vmem:[%s2920 + $0xa8] sm:$0xe]
      %v4976 = vld [vmem:[%s2920 + $0xb4] sm:$0xe]
      %v5025 = vrot.slane %v4961, 5
      %v5026 = vrot.slane %v5025, 4
      %v5027 = vrot.slane %v3902, 5
      %v5028 = vsel %vm2146, %v5026, %v5027
      %v5029 = vrot.slane %v5027, 4
      %v5030 = vrot.slane %v3903, 5
      %v5031 = vsel %vm2146, %v5029, %v5030
      %v5032 = vrot.slane %v4962, 5
      %v5033 = vrot.slane %v5032, 4
      %v5034 = vrot.slane %v3905, 5
      %v5035 = vsel %vm2146, %v5033, %v5034
      %v5036 = vrot.slane %v5034, 4
      %v5037 = vrot.slane %v3906, 5
      %v5038 = vsel %vm2146, %v5036, %v5037
      %v5039 = vrot.slane %v4963, 5
      %v5040 = vrot.slane %v5039, 4
      %v5041 = vrot.slane %v3908, 5
      %v5042 = vsel %vm2146, %v5040, %v5041
      %v5043 = vrot.slane %v5041, 4
      %v5044 = vrot.slane %v3909, 5
      %v5045 = vsel %vm2146, %v5043, %v5044
      %v5046 = vrot.slane %v4964, 5
      %v5047 = vrot.slane %v5046, 4
      %v5048 = vrot.slane %v3911, 5
      %v5049 = vsel %vm2146, %v5047, %v5048
      %v5050 = vrot.slane %v5048, 4
      %v5051 = vrot.slane %v3912, 5
      %v5052 = vsel %vm2146, %v5050, %v5051
      %v5053 = vrot.slane %v4965, 5
      %v5054 = vrot.slane %v5053, 4
      %v5055 = vrot.slane %v3914, 5
      %v5056 = vsel %vm2146, %v5054, %v5055
      %v5057 = vrot.slane %v5055, 4
      %v5058 = vrot.slane %v3915, 5
      %v5059 = vsel %vm2146, %v5057, %v5058
      %v5060 = vrot.slane %v4966, 5
      %v5061 = vrot.slane %v5060, 4
      %v5062 = vrot.slane %v3917, 5
      %v5063 = vsel %vm2146, %v5061, %v5062
      %v5064 = vrot.slane %v5062, 4
      %v5065 = vrot.slane %v3918, 5
      %v5066 = vsel %vm2146, %v5064, %v5065
      %v5067 = vrot.slane %v4967, 5
      %v5068 = vrot.slane %v5067, 4
      %v5069 = vrot.slane %v3920, 5
      %v5070 = vsel %vm2146, %v5068, %v5069
      %v5071 = vrot.slane %v5069, 4
      %v5072 = vrot.slane %v3921, 5
      %v5073 = vsel %vm2146, %v5071, %v5072
      %v5074 = vrot.slane %v4968, 5
      %v5075 = vrot.slane %v5074, 4
      %v5076 = vrot.slane %v3923, 5
      %v5077 = vsel %vm2146, %v5075, %v5076
      %v5078 = vrot.slane %v5076, 4
      %v5079 = vrot.slane %v3924, 5
      %v5080 = vsel %vm2146, %v5078, %v5079
      %v5081 = vrot.slane %v4969, 5
      %v5082 = vrot.slane %v5081, 4
      %v5083 = vrot.slane %v3926, 5
      %v5084 = vsel %vm2146, %v5082, %v5083
      %v5085 = vrot.slane %v5083, 4
      %v5086 = vrot.slane %v3927, 5
      %v5087 = vsel %vm2146, %v5085, %v5086
      %v5088 = vrot.slane %v4970, 5
      %v5089 = vrot.slane %v5088, 4
      %v5090 = vrot.slane %v3929, 5
      %v5091 = vsel %vm2146, %v5089, %v5090
      %v5092 = vrot.slane %v5090, 4
      %v5093 = vrot.slane %v3930, 5
      %v5094 = vsel %vm2146, %v5092, %v5093
      %v5095 = vrot.slane %v4971, 5
      %v5096 = vrot.slane %v5095, 4
      %v5097 = vrot.slane %v3932, 5
      %v5098 = vsel %vm2146, %v5096, %v5097
      %v5099 = vrot.slane %v5097, 4
      %v5100 = vrot.slane %v3933, 5
      %v5101 = vsel %vm2146, %v5099, %v5100
      %v5102 = vrot.slane %v4972, 5
      %v5103 = vrot.slane %v5102, 4
      %v5104 = vrot.slane %v3935, 5
      %v5105 = vsel %vm2146, %v5103, %v5104
      %v5106 = vrot.slane %v5104, 4
      %v5107 = vrot.slane %v3936, 5
      %v5108 = vsel %vm2146, %v5106, %v5107
      %v5109 = vrot.slane %v4973, 5
      %v5110 = vrot.slane %v5109, 4
      %v5111 = vrot.slane %v3938, 5
      %v5112 = vsel %vm2146, %v5110, %v5111
      %v5113 = vrot.slane %v5111, 4
      %v5114 = vrot.slane %v3939, 5
      %v5115 = vsel %vm2146, %v5113, %v5114
      %v5116 = vrot.slane %v4974, 5
      %v5117 = vrot.slane %v5116, 4
      %v5118 = vrot.slane %v3941, 5
      %v5119 = vsel %vm2146, %v5117, %v5118
      %v5120 = vrot.slane %v5118, 4
      %v5121 = vrot.slane %v3942, 5
      %v5122 = vsel %vm2146, %v5120, %v5121
      %v5123 = vrot.slane %v4975, 5
      %v5124 = vrot.slane %v5123, 4
      %v5125 = vrot.slane %v3944, 5
      %v5126 = vsel %vm2146, %v5124, %v5125
      %v5127 = vrot.slane %v5125, 4
      %v5128 = vrot.slane %v3945, 5
      %v5129 = vsel %vm2146, %v5127, %v5128
      %v5130 = vrot.slane %v4976, 5
      %v5131 = vrot.slane %v5130, 4
      %v5132 = vrot.slane %v3947, 5
      %v5133 = vsel %vm2146, %v5131, %v5132
      %v5134 = vrot.slane %v5132, 4
      %v5135 = vrot.slane %v3948, 5
      %v5136 = vsel %vm2146, %v5134, %v5135
      %s5137 = scalar_lea.vmem %s2, 40
      %v5138 = vld [vmem:[%s5137] sm:$0xf]
      %v5139 = vld [vmem:[%s5137 + $0x4] sm:$0xf]
      %v5140 = vunpack.c.l.b16 %v4852
      %v5141 = vunpack.c.l.b16 %v4855
      %v5142 = vunpack.c.l.b16 %v4859
      %v5143 = vunpack.c.l.b16 %v4862
      %v5144 = vunpack.c.l.b16 %v4866
      %v5145 = vunpack.c.l.b16 %v4869
      %v5146 = vunpack.c.l.b16 %v4873
      %v5147 = vunpack.c.l.b16 %v4876
      %v5148 = vunpack.c.l.b16 %v4880
      %v5149 = vunpack.c.l.b16 %v4883
      %v5150 = vunpack.c.l.b16 %v4887
      %v5151 = vunpack.c.l.b16 %v4890
      %v5152 = vunpack.c.l.b16 %v4894
      %v5153 = vunpack.c.l.b16 %v4897
      %v5154 = vunpack.c.l.b16 %v4901
      %v5155 = vunpack.c.l.b16 %v4904
      %v5156 = vunpack.c.l.b16 %v4908
      %v5157 = vunpack.c.l.b16 %v4911
      %v5158 = vunpack.c.l.b16 %v4915
      %v5159 = vunpack.c.l.b16 %v4918
      %v5160 = vunpack.c.l.b16 %v4922
      %v5161 = vunpack.c.l.b16 %v4925
      %v5162 = vunpack.c.l.b16 %v4929
      %v5163 = vunpack.c.l.b16 %v4932
      %v5164 = vunpack.c.l.b16 %v4936
      %v5165 = vunpack.c.l.b16 %v4939
      %v5166 = vunpack.c.l.b16 %v4943
      %v5167 = vunpack.c.l.b16 %v4946
      %v5168 = vunpack.c.l.b16 %v4950
      %v5169 = vunpack.c.l.b16 %v4953
      %v5170 = vunpack.c.l.b16 %v4957
      %v5171 = vunpack.c.l.b16 %v4960
      %v5172 = vpack.c.b16 %v5141, %v5140
      %v5173 = vpack.c.b16 %v5143, %v5142
      %v5174 = vpack.c.b16 %v5145, %v5144
      %v5175 = vpack.c.b16 %v5147, %v5146
      %v5176 = vpack.c.b16 %v5149, %v5148
      %v5177 = vpack.c.b16 %v5151, %v5150
      %v5178 = vpack.c.b16 %v5153, %v5152
      %v5179 = vpack.c.b16 %v5155, %v5154
      %v5180 = vpack.c.b16 %v5157, %v5156
      %v5181 = vpack.c.b16 %v5159, %v5158
      %v5182 = vpack.c.b16 %v5161, %v5160
      %v5183 = vpack.c.b16 %v5163, %v5162
      %v5184 = vpack.c.b16 %v5165, %v5164
      %v5185 = vpack.c.b16 %v5167, %v5166
      %v5186 = vpack.c.b16 %v5169, %v5168
      %v5187 = vpack.c.b16 %v5171, %v5170
      %v5190 = vunpack.c.l.b16 %v5138
      %v5191 = vunpack.c.l.b16 %v5139
      %v5192 = vpack.c.b16 %v5191, %v5190
      %v5195 = vsel %vm400, %v5172, 0
      %v5198 = vsel %vm400, %v5173, 0
      %v5201 = vsel %vm400, %v5174, 0
      %v5204 = vsel %vm400, %v5175, 0
      %v5207 = vsel %vm400, %v5176, 0
      %v5210 = vsel %vm400, %v5177, 0
      %v5213 = vsel %vm400, %v5178, 0
      %v5216 = vsel %vm400, %v5179, 0
      %v5219 = vsel %vm400, %v5180, 0
      %v5222 = vsel %vm400, %v5181, 0
      %v5225 = vsel %vm400, %v5182, 0
      %v5228 = vsel %vm400, %v5183, 0
      %v5231 = vsel %vm400, %v5184, 0
      %v5234 = vsel %vm400, %v5185, 0
      %v5237 = vsel %vm400, %v5186, 0
      %v5240 = vsel %vm400, %v5187, 0
      %5242 = vmatpush.bf16.msra.mxu0 0
      %5243 = vmatpush.bf16.msra.mxu0 0
      %5244 = vmatpush.bf16.msra.mxu0 0
      %5245 = vmatpush.bf16.msra.mxu0 0
      %5246 = vmatpush.bf16.msra.mxu0 0
      %5247 = vmatpush.bf16.msra.mxu0 0
      %5248 = vmatpush.bf16.msra.mxu0 0
      %5249 = vmatpush.bf16.msra.mxu0 %v5192
      %5250 = vmatmul.bf16.gmra.mxu0 %v5195
      %v5251 = vpop.f32.mrf.mxu0
      %v5252 = vadd.f32 0.0, %v5251
      %v5253 = vpop.f32.mrf.mxu0
      %v5254 = vadd.f32 0.0, %v5253
      %5255 = vmatmul.bf16.gmra.mxu0 %v5198
      %v5256 = vpop.f32.mrf.mxu0
      %v5257 = vadd.f32 0.0, %v5256
      %v5258 = vpop.f32.mrf.mxu0
      %v5259 = vadd.f32 0.0, %v5258
      %5260 = vmatmul.bf16.gmra.mxu0 %v5201
      %v5261 = vpop.f32.mrf.mxu0
      %v5262 = vadd.f32 0.0, %v5261
      %v5263 = vpop.f32.mrf.mxu0
      %v5264 = vadd.f32 0.0, %v5263
      %5265 = vmatmul.bf16.gmra.mxu0 %v5204
      %v5266 = vpop.f32.mrf.mxu0
      %v5267 = vadd.f32 0.0, %v5266
      %v5268 = vpop.f32.mrf.mxu0
      %v5269 = vadd.f32 0.0, %v5268
      %5270 = vmatmul.bf16.gmra.mxu0 %v5207
      %v5271 = vpop.f32.mrf.mxu0
      %v5272 = vadd.f32 0.0, %v5271
      %v5273 = vpop.f32.mrf.mxu0
      %v5274 = vadd.f32 0.0, %v5273
      %5275 = vmatmul.bf16.gmra.mxu0 %v5210
      %v5276 = vpop.f32.mrf.mxu0
      %v5277 = vadd.f32 0.0, %v5276
      %v5278 = vpop.f32.mrf.mxu0
      %v5279 = vadd.f32 0.0, %v5278
      %5280 = vmatmul.bf16.gmra.mxu0 %v5213
      %v5281 = vpop.f32.mrf.mxu0
      %v5282 = vadd.f32 0.0, %v5281
      %v5283 = vpop.f32.mrf.mxu0
      %v5284 = vadd.f32 0.0, %v5283
      %5285 = vmatmul.bf16.gmra.mxu0 %v5216
      %v5286 = vpop.f32.mrf.mxu0
      %v5287 = vadd.f32 0.0, %v5286
      %v5288 = vpop.f32.mrf.mxu0
      %v5289 = vadd.f32 0.0, %v5288
      %5290 = vmatmul.bf16.gmra.mxu0 %v5219
      %v5291 = vpop.f32.mrf.mxu0
      %v5292 = vadd.f32 0.0, %v5291
      %v5293 = vpop.f32.mrf.mxu0
      %v5294 = vadd.f32 0.0, %v5293
      %5295 = vmatmul.bf16.gmra.mxu0 %v5222
      %v5296 = vpop.f32.mrf.mxu0
      %v5297 = vadd.f32 0.0, %v5296
      %v5298 = vpop.f32.mrf.mxu0
      %v5299 = vadd.f32 0.0, %v5298
      %5300 = vmatmul.bf16.gmra.mxu0 %v5225
      %v5301 = vpop.f32.mrf.mxu0
      %v5302 = vadd.f32 0.0, %v5301
      %v5303 = vpop.f32.mrf.mxu0
      %v5304 = vadd.f32 0.0, %v5303
      %5305 = vmatmul.bf16.gmra.mxu0 %v5228
      %v5306 = vpop.f32.mrf.mxu0
      %v5307 = vadd.f32 0.0, %v5306
      %v5308 = vpop.f32.mrf.mxu0
      %v5309 = vadd.f32 0.0, %v5308
      %5310 = vmatmul.bf16.gmra.mxu0 %v5231
      %v5311 = vpop.f32.mrf.mxu0
      %v5312 = vadd.f32 0.0, %v5311
      %v5313 = vpop.f32.mrf.mxu0
      %v5314 = vadd.f32 0.0, %v5313
      %5315 = vmatmul.bf16.gmra.mxu0 %v5234
      %v5316 = vpop.f32.mrf.mxu0
      %v5317 = vadd.f32 0.0, %v5316
      %v5318 = vpop.f32.mrf.mxu0
      %v5319 = vadd.f32 0.0, %v5318
      %5320 = vmatmul.bf16.gmra.mxu0 %v5237
      %v5321 = vpop.f32.mrf.mxu0
      %v5322 = vadd.f32 0.0, %v5321
      %v5323 = vpop.f32.mrf.mxu0
      %v5324 = vadd.f32 0.0, %v5323
      %5325 = vmatmul.bf16.gmra.mxu0 %v5240
      %v5326 = vpop.f32.mrf.mxu0
      %v5327 = vadd.f32 0.0, %v5326
      %v5328 = vpop.f32.mrf.mxu0
      %v5329 = vadd.f32 0.0, %v5328
      %5330 = vdwg.mxu0
      %v5331 = vadd.f32 %v4753, %v5252
      %v5332 = vadd.f32 %v4754, %v5254
      %v5333 = vadd.f32 %v4755, %v5257
      %v5334 = vadd.f32 %v4756, %v5259
      %v5335 = vadd.f32 %v4757, %v5262
      %v5336 = vadd.f32 %v4758, %v5264
      %v5337 = vadd.f32 %v4759, %v5267
      %v5338 = vadd.f32 %v4760, %v5269
      %v5339 = vadd.f32 %v4761, %v5272
      %v5340 = vadd.f32 %v4762, %v5274
      %v5341 = vadd.f32 %v4763, %v5277
      %v5342 = vadd.f32 %v4764, %v5279
      %v5343 = vadd.f32 %v4765, %v5282
      %v5344 = vadd.f32 %v4766, %v5284
      %v5345 = vadd.f32 %v4767, %v5287
      %v5346 = vadd.f32 %v4768, %v5289
      %v5347 = vadd.f32 %v4769, %v5292
      %v5348 = vadd.f32 %v4770, %v5294
      %v5349 = vadd.f32 %v4771, %v5297
      %v5350 = vadd.f32 %v4772, %v5299
      %v5351 = vadd.f32 %v4773, %v5302
      %v5352 = vadd.f32 %v4774, %v5304
      %v5353 = vadd.f32 %v4775, %v5307
      %v5354 = vadd.f32 %v4776, %v5309
      %v5355 = vadd.f32 %v4777, %v5312
      %v5356 = vadd.f32 %v4778, %v5314
      %v5357 = vadd.f32 %v4779, %v5317
      %v5358 = vadd.f32 %v4780, %v5319
      %v5359 = vadd.f32 %v4781, %v5322
      %v5360 = vadd.f32 %v4782, %v5324
      %v5361 = vadd.f32 %v4783, %v5327
      %v5362 = vadd.f32 %v4784, %v5329
      %s5363 = scalar_lea.vmem %s3, 40
      %v5364 = vld [vmem:[%s5363] sm:$0xf]
      %v5365 = vld [vmem:[%s5363 + $0x4] sm:$0xf]
      %v5366 = vunpack.c.l.b16 %v5028
      %v5367 = vunpack.c.l.b16 %v5031
      %v5368 = vunpack.c.l.b16 %v5035
      %v5369 = vunpack.c.l.b16 %v5038
      %v5370 = vunpack.c.l.b16 %v5042
      %v5371 = vunpack.c.l.b16 %v5045
      %v5372 = vunpack.c.l.b16 %v5049
      %v5373 = vunpack.c.l.b16 %v5052
      %v5374 = vunpack.c.l.b16 %v5056
      %v5375 = vunpack.c.l.b16 %v5059
      %v5376 = vunpack.c.l.b16 %v5063
      %v5377 = vunpack.c.l.b16 %v5066
      %v5378 = vunpack.c.l.b16 %v5070
      %v5379 = vunpack.c.l.b16 %v5073
      %v5380 = vunpack.c.l.b16 %v5077
      %v5381 = vunpack.c.l.b16 %v5080
      %v5382 = vunpack.c.l.b16 %v5084
      %v5383 = vunpack.c.l.b16 %v5087
      %v5384 = vunpack.c.l.b16 %v5091
      %v5385 = vunpack.c.l.b16 %v5094
      %v5386 = vunpack.c.l.b16 %v5098
      %v5387 = vunpack.c.l.b16 %v5101
      %v5388 = vunpack.c.l.b16 %v5105
      %v5389 = vunpack.c.l.b16 %v5108
      %v5390 = vunpack.c.l.b16 %v5112
      %v5391 = vunpack.c.l.b16 %v5115
      %v5392 = vunpack.c.l.b16 %v5119
      %v5393 = vunpack.c.l.b16 %v5122
      %v5394 = vunpack.c.l.b16 %v5126
      %v5395 = vunpack.c.l.b16 %v5129
      %v5396 = vunpack.c.l.b16 %v5133
      %v5397 = vunpack.c.l.b16 %v5136
      %v5398 = vpack.c.b16 %v5367, %v5366
      %v5399 = vpack.c.b16 %v5369, %v5368
      %v5400 = vpack.c.b16 %v5371, %v5370
      %v5401 = vpack.c.b16 %v5373, %v5372
      %v5402 = vpack.c.b16 %v5375, %v5374
      %v5403 = vpack.c.b16 %v5377, %v5376
      %v5404 = vpack.c.b16 %v5379, %v5378
      %v5405 = vpack.c.b16 %v5381, %v5380
      %v5406 = vpack.c.b16 %v5383, %v5382
      %v5407 = vpack.c.b16 %v5385, %v5384
      %v5408 = vpack.c.b16 %v5387, %v5386
      %v5409 = vpack.c.b16 %v5389, %v5388
      %v5410 = vpack.c.b16 %v5391, %v5390
      %v5411 = vpack.c.b16 %v5393, %v5392
      %v5412 = vpack.c.b16 %v5395, %v5394
      %v5413 = vpack.c.b16 %v5397, %v5396
      %v5416 = vunpack.c.l.b16 %v5364
      %v5417 = vunpack.c.l.b16 %v5365
      %v5418 = vpack.c.b16 %v5417, %v5416
      %v5421 = vsel %vm400, %v5398, 0
      %v5424 = vsel %vm400, %v5399, 0
      %v5427 = vsel %vm400, %v5400, 0
      %v5430 = vsel %vm400, %v5401, 0
      %v5433 = vsel %vm400, %v5402, 0
      %v5436 = vsel %vm400, %v5403, 0
      %v5439 = vsel %vm400, %v5404, 0
      %v5442 = vsel %vm400, %v5405, 0
      %v5445 = vsel %vm400, %v5406, 0
      %v5448 = vsel %vm400, %v5407, 0
      %v5451 = vsel %vm400, %v5408, 0
      %v5454 = vsel %vm400, %v5409, 0
      %v5457 = vsel %vm400, %v5410, 0
      %v5460 = vsel %vm400, %v5411, 0
      %v5463 = vsel %vm400, %v5412, 0
      %v5466 = vsel %vm400, %v5413, 0
      %5468 = vmatpush.bf16.msra.mxu0 0
      %5469 = vmatpush.bf16.msra.mxu0 0
      %5470 = vmatpush.bf16.msra.mxu0 0
      %5471 = vmatpush.bf16.msra.mxu0 0
      %5472 = vmatpush.bf16.msra.mxu0 0
      %5473 = vmatpush.bf16.msra.mxu0 0
      %5474 = vmatpush.bf16.msra.mxu0 0
      %5475 = vmatpush.bf16.msra.mxu0 %v5418
      %5476 = vmatmul.bf16.gmra.mxu0 %v5421
      %v5477 = vpop.f32.mrf.mxu0
      %v5478 = vadd.f32 0.0, %v5477
      %v5479 = vpop.f32.mrf.mxu0
      %v5480 = vadd.f32 0.0, %v5479
      %5481 = vmatmul.bf16.gmra.mxu0 %v5424
      %v5482 = vpop.f32.mrf.mxu0
      %v5483 = vadd.f32 0.0, %v5482
      %v5484 = vpop.f32.mrf.mxu0
      %v5485 = vadd.f32 0.0, %v5484
      %5486 = vmatmul.bf16.gmra.mxu0 %v5427
      %v5487 = vpop.f32.mrf.mxu0
      %v5488 = vadd.f32 0.0, %v5487
      %v5489 = vpop.f32.mrf.mxu0
      %v5490 = vadd.f32 0.0, %v5489
      %5491 = vmatmul.bf16.gmra.mxu0 %v5430
      %v5492 = vpop.f32.mrf.mxu0
      %v5493 = vadd.f32 0.0, %v5492
      %v5494 = vpop.f32.mrf.mxu0
      %v5495 = vadd.f32 0.0, %v5494
      %5496 = vmatmul.bf16.gmra.mxu0 %v5433
      %v5497 = vpop.f32.mrf.mxu0
      %v5498 = vadd.f32 0.0, %v5497
      %v5499 = vpop.f32.mrf.mxu0
      %v5500 = vadd.f32 0.0, %v5499
      %5501 = vmatmul.bf16.gmra.mxu0 %v5436
      %v5502 = vpop.f32.mrf.mxu0
      %v5503 = vadd.f32 0.0, %v5502
      %v5504 = vpop.f32.mrf.mxu0
      %v5505 = vadd.f32 0.0, %v5504
      %5506 = vmatmul.bf16.gmra.mxu0 %v5439
      %v5507 = vpop.f32.mrf.mxu0
      %v5508 = vadd.f32 0.0, %v5507
      %v5509 = vpop.f32.mrf.mxu0
      %v5510 = vadd.f32 0.0, %v5509
      %5511 = vmatmul.bf16.gmra.mxu0 %v5442
      %v5512 = vpop.f32.mrf.mxu0
      %v5513 = vadd.f32 0.0, %v5512
      %v5514 = vpop.f32.mrf.mxu0
      %v5515 = vadd.f32 0.0, %v5514
      %5516 = vmatmul.bf16.gmra.mxu0 %v5445
      %v5517 = vpop.f32.mrf.mxu0
      %v5518 = vadd.f32 0.0, %v5517
      %v5519 = vpop.f32.mrf.mxu0
      %v5520 = vadd.f32 0.0, %v5519
      %5521 = vmatmul.bf16.gmra.mxu0 %v5448
      %v5522 = vpop.f32.mrf.mxu0
      %v5523 = vadd.f32 0.0, %v5522
      %v5524 = vpop.f32.mrf.mxu0
      %v5525 = vadd.f32 0.0, %v5524
      %5526 = vmatmul.bf16.gmra.mxu0 %v5451
      %v5527 = vpop.f32.mrf.mxu0
      %v5528 = vadd.f32 0.0, %v5527
      %v5529 = vpop.f32.mrf.mxu0
      %v5530 = vadd.f32 0.0, %v5529
      %5531 = vmatmul.bf16.gmra.mxu0 %v5454
      %v5532 = vpop.f32.mrf.mxu0
      %v5533 = vadd.f32 0.0, %v5532
      %v5534 = vpop.f32.mrf.mxu0
      %v5535 = vadd.f32 0.0, %v5534
      %5536 = vmatmul.bf16.gmra.mxu0 %v5457
      %v5537 = vpop.f32.mrf.mxu0
      %v5538 = vadd.f32 0.0, %v5537
      %v5539 = vpop.f32.mrf.mxu0
      %v5540 = vadd.f32 0.0, %v5539
      %5541 = vmatmul.bf16.gmra.mxu0 %v5460
      %v5542 = vpop.f32.mrf.mxu0
      %v5543 = vadd.f32 0.0, %v5542
      %v5544 = vpop.f32.mrf.mxu0
      %v5545 = vadd.f32 0.0, %v5544
      %5546 = vmatmul.bf16.gmra.mxu0 %v5463
      %v5547 = vpop.f32.mrf.mxu0
      %v5548 = vadd.f32 0.0, %v5547
      %v5549 = vpop.f32.mrf.mxu0
      %v5550 = vadd.f32 0.0, %v5549
      %5551 = vmatmul.bf16.gmra.mxu0 %v5466
      %v5552 = vpop.f32.mrf.mxu0
      %v5553 = vadd.f32 0.0, %v5552
      %v5554 = vpop.f32.mrf.mxu0
      %v5555 = vadd.f32 0.0, %v5554
      %5556 = vdwg.mxu0
      %v5557 = vadd.f32 %v5331, %v5478
      %v5558 = vadd.f32 %v5332, %v5480
      %v5559 = vadd.f32 %v5333, %v5483
      %v5560 = vadd.f32 %v5334, %v5485
      %v5561 = vadd.f32 %v5335, %v5488
      %v5562 = vadd.f32 %v5336, %v5490
      %v5563 = vadd.f32 %v5337, %v5493
      %v5564 = vadd.f32 %v5338, %v5495
      %v5565 = vadd.f32 %v5339, %v5498
      %v5566 = vadd.f32 %v5340, %v5500
      %v5567 = vadd.f32 %v5341, %v5503
      %v5568 = vadd.f32 %v5342, %v5505
      %v5569 = vadd.f32 %v5343, %v5508
      %v5570 = vadd.f32 %v5344, %v5510
      %v5571 = vadd.f32 %v5345, %v5513
      %v5572 = vadd.f32 %v5346, %v5515
      %v5573 = vadd.f32 %v5347, %v5518
      %v5574 = vadd.f32 %v5348, %v5520
      %v5575 = vadd.f32 %v5349, %v5523
      %v5576 = vadd.f32 %v5350, %v5525
      %v5577 = vadd.f32 %v5351, %v5528
      %v5578 = vadd.f32 %v5352, %v5530
      %v5579 = vadd.f32 %v5353, %v5533
      %v5580 = vadd.f32 %v5354, %v5535
      %v5581 = vadd.f32 %v5355, %v5538
      %v5582 = vadd.f32 %v5356, %v5540
      %v5583 = vadd.f32 %v5357, %v5543
      %v5584 = vadd.f32 %v5358, %v5545
      %v5585 = vadd.f32 %v5359, %v5548
      %v5586 = vadd.f32 %v5360, %v5550
      %v5587 = vadd.f32 %v5361, %v5553
      %v5588 = vadd.f32 %v5362, %v5555
      %s5589 = scalar_lea.vmem %s234, 24
      %v5590 = vld [vmem:[%s5589] sm:$0xf]
      %v5591 = vld [vmem:[%s5589 + $0x4] sm:$0xf]
      %v5592 = vld [vmem:[%s5589 + $0xc] sm:$0xf]
      %v5593 = vld [vmem:[%s5589 + $0x10] sm:$0xf]
      %v5594 = vld [vmem:[%s5589 + $0x18] sm:$0xf]
      %v5595 = vld [vmem:[%s5589 + $0x1c] sm:$0xf]
      %v5596 = vld [vmem:[%s5589 + $0x24] sm:$0xf]
      %v5597 = vld [vmem:[%s5589 + $0x28] sm:$0xf]
      %v5598 = vld [vmem:[%s5589 + $0x30] sm:$0xf]
      %v5599 = vld [vmem:[%s5589 + $0x34] sm:$0xf]
      %v5600 = vld [vmem:[%s5589 + $0x3c] sm:$0xf]
      %v5601 = vld [vmem:[%s5589 + $0x40] sm:$0xf]
      %v5602 = vld [vmem:[%s5589 + $0x48] sm:$0xf]
      %v5603 = vld [vmem:[%s5589 + $0x4c] sm:$0xf]
      %v5604 = vld [vmem:[%s5589 + $0x54] sm:$0xf]
      %v5605 = vld [vmem:[%s5589 + $0x58] sm:$0xf]
      %v5606 = vld [vmem:[%s5589 + $0x60] sm:$0xf]
      %v5607 = vld [vmem:[%s5589 + $0x64] sm:$0xf]
      %v5608 = vld [vmem:[%s5589 + $0x6c] sm:$0xf]
      %v5609 = vld [vmem:[%s5589 + $0x70] sm:$0xf]
      %v5610 = vld [vmem:[%s5589 + $0x78] sm:$0xf]
      %v5611 = vld [vmem:[%s5589 + $0x7c] sm:$0xf]
      %v5612 = vld [vmem:[%s5589 + $0x84] sm:$0xf]
      %v5613 = vld [vmem:[%s5589 + $0x88] sm:$0xf]
      %v5614 = vld [vmem:[%s5589 + $0x90] sm:$0xf]
      %v5615 = vld [vmem:[%s5589 + $0x94] sm:$0xf]
      %v5616 = vld [vmem:[%s5589 + $0x9c] sm:$0xf]
      %v5617 = vld [vmem:[%s5589 + $0xa0] sm:$0xf]
      %v5618 = vld [vmem:[%s5589 + $0xa8] sm:$0xf]
      %v5619 = vld [vmem:[%s5589 + $0xac] sm:$0xf]
      %v5620 = vld [vmem:[%s5589 + $0xb4] sm:$0xf]
      %v5621 = vld [vmem:[%s5589 + $0xb8] sm:$0xf]
      %s5622 = scalar_lea.vmem %s239, 24
      %v5623 = vld [vmem:[%s5622] sm:$0xf]
      %v5624 = vld [vmem:[%s5622 + $0x4] sm:$0xf]
      %v5625 = vld [vmem:[%s5622 + $0xc] sm:$0xf]
      %v5626 = vld [vmem:[%s5622 + $0x10] sm:$0xf]
      %v5627 = vld [vmem:[%s5622 + $0x18] sm:$0xf]
      %v5628 = vld [vmem:[%s5622 + $0x1c] sm:$0xf]
      %v5629 = vld [vmem:[%s5622 + $0x24] sm:$0xf]
      %v5630 = vld [vmem:[%s5622 + $0x28] sm:$0xf]
      %v5631 = vld [vmem:[%s5622 + $0x30] sm:$0xf]
      %v5632 = vld [vmem:[%s5622 + $0x34] sm:$0xf]
      %v5633 = vld [vmem:[%s5622 + $0x3c] sm:$0xf]
      %v5634 = vld [vmem:[%s5622 + $0x40] sm:$0xf]
      %v5635 = vld [vmem:[%s5622 + $0x48] sm:$0xf]
      %v5636 = vld [vmem:[%s5622 + $0x4c] sm:$0xf]
      %v5637 = vld [vmem:[%s5622 + $0x54] sm:$0xf]
      %v5638 = vld [vmem:[%s5622 + $0x58] sm:$0xf]
      %v5639 = vld [vmem:[%s5622 + $0x60] sm:$0xf]
      %v5640 = vld [vmem:[%s5622 + $0x64] sm:$0xf]
      %v5641 = vld [vmem:[%s5622 + $0x6c] sm:$0xf]
      %v5642 = vld [vmem:[%s5622 + $0x70] sm:$0xf]
      %v5643 = vld [vmem:[%s5622 + $0x78] sm:$0xf]
      %v5644 = vld [vmem:[%s5622 + $0x7c] sm:$0xf]
      %v5645 = vld [vmem:[%s5622 + $0x84] sm:$0xf]
      %v5646 = vld [vmem:[%s5622 + $0x88] sm:$0xf]
      %v5647 = vld [vmem:[%s5622 + $0x90] sm:$0xf]
      %v5648 = vld [vmem:[%s5622 + $0x94] sm:$0xf]
      %v5649 = vld [vmem:[%s5622 + $0x9c] sm:$0xf]
      %v5650 = vld [vmem:[%s5622 + $0xa0] sm:$0xf]
      %v5651 = vld [vmem:[%s5622 + $0xa8] sm:$0xf]
      %v5652 = vld [vmem:[%s5622 + $0xac] sm:$0xf]
      %v5653 = vld [vmem:[%s5622 + $0xb4] sm:$0xf]
      %v5654 = vld [vmem:[%s5622 + $0xb8] sm:$0xf]
      %s5655 = scalar_lea.vmem %s2, 48
      %v5656 = vld [vmem:[%s5655] sm:$0xf]
      %v5657 = vld [vmem:[%s5655 + $0x4] sm:$0xf]
      %v5690 = vunpack.c.l.b16 %v5590
      %v5691 = vunpack.c.l.b16 %v5591
      %v5692 = vunpack.c.l.b16 %v5592
      %v5693 = vunpack.c.l.b16 %v5593
      %v5694 = vunpack.c.l.b16 %v5594
      %v5695 = vunpack.c.l.b16 %v5595
      %v5696 = vunpack.c.l.b16 %v5596
      %v5697 = vunpack.c.l.b16 %v5597
      %v5698 = vunpack.c.l.b16 %v5598
      %v5699 = vunpack.c.l.b16 %v5599
      %v5700 = vunpack.c.l.b16 %v5600
      %v5701 = vunpack.c.l.b16 %v5601
      %v5702 = vunpack.c.l.b16 %v5602
      %v5703 = vunpack.c.l.b16 %v5603
      %v5704 = vunpack.c.l.b16 %v5604
      %v5705 = vunpack.c.l.b16 %v5605
      %v5706 = vunpack.c.l.b16 %v5606
      %v5707 = vunpack.c.l.b16 %v5607
      %v5708 = vunpack.c.l.b16 %v5608
      %v5709 = vunpack.c.l.b16 %v5609
      %v5710 = vunpack.c.l.b16 %v5610
      %v5711 = vunpack.c.l.b16 %v5611
      %v5712 = vunpack.c.l.b16 %v5612
      %v5713 = vunpack.c.l.b16 %v5613
      %v5714 = vunpack.c.l.b16 %v5614
      %v5715 = vunpack.c.l.b16 %v5615
      %v5716 = vunpack.c.l.b16 %v5616
      %v5717 = vunpack.c.l.b16 %v5617
      %v5718 = vunpack.c.l.b16 %v5618
      %v5719 = vunpack.c.l.b16 %v5619
      %v5720 = vunpack.c.l.b16 %v5620
      %v5721 = vunpack.c.l.b16 %v5621
      %v5722 = vpack.c.b16 %v5691, %v5690
      %v5723 = vpack.c.b16 %v5693, %v5692
      %v5724 = vpack.c.b16 %v5695, %v5694
      %v5725 = vpack.c.b16 %v5697, %v5696
      %v5726 = vpack.c.b16 %v5699, %v5698
      %v5727 = vpack.c.b16 %v5701, %v5700
      %v5728 = vpack.c.b16 %v5703, %v5702
      %v5729 = vpack.c.b16 %v5705, %v5704
      %v5730 = vpack.c.b16 %v5707, %v5706
      %v5731 = vpack.c.b16 %v5709, %v5708
      %v5732 = vpack.c.b16 %v5711, %v5710
      %v5733 = vpack.c.b16 %v5713, %v5712
      %v5734 = vpack.c.b16 %v5715, %v5714
      %v5735 = vpack.c.b16 %v5717, %v5716
      %v5736 = vpack.c.b16 %v5719, %v5718
      %v5737 = vpack.c.b16 %v5721, %v5720
      %v5740 = vunpack.c.l.b16 %v5656
      %v5741 = vunpack.c.l.b16 %v5657
      %v5742 = vpack.c.b16 %v5741, %v5740
      %v5745 = vsel %vm400, %v5722, 0
      %v5748 = vsel %vm400, %v5723, 0
      %v5751 = vsel %vm400, %v5724, 0
      %v5754 = vsel %vm400, %v5725, 0
      %v5757 = vsel %vm400, %v5726, 0
      %v5760 = vsel %vm400, %v5727, 0
      %v5763 = vsel %vm400, %v5728, 0
      %v5766 = vsel %vm400, %v5729, 0
      %v5769 = vsel %vm400, %v5730, 0
      %v5772 = vsel %vm400, %v5731, 0
      %v5775 = vsel %vm400, %v5732, 0
      %v5778 = vsel %vm400, %v5733, 0
      %v5781 = vsel %vm400, %v5734, 0
      %v5784 = vsel %vm400, %v5735, 0
      %v5787 = vsel %vm400, %v5736, 0
      %v5790 = vsel %vm400, %v5737, 0
      %5792 = vmatpush.bf16.msra.mxu0 0
      %5793 = vmatpush.bf16.msra.mxu0 0
      %5794 = vmatpush.bf16.msra.mxu0 0
      %5795 = vmatpush.bf16.msra.mxu0 0
      %5796 = vmatpush.bf16.msra.mxu0 0
      %5797 = vmatpush.bf16.msra.mxu0 0
      %5798 = vmatpush.bf16.msra.mxu0 0
      %5799 = vmatpush.bf16.msra.mxu0 %v5742
      %5800 = vmatmul.bf16.gmra.mxu0 %v5745
      %v5801 = vpop.f32.mrf.mxu0
      %v5802 = vadd.f32 0.0, %v5801
      %v5803 = vpop.f32.mrf.mxu0
      %v5804 = vadd.f32 0.0, %v5803
      %5805 = vmatmul.bf16.gmra.mxu0 %v5748
      %v5806 = vpop.f32.mrf.mxu0
      %v5807 = vadd.f32 0.0, %v5806
      %v5808 = vpop.f32.mrf.mxu0
      %v5809 = vadd.f32 0.0, %v5808
      %5810 = vmatmul.bf16.gmra.mxu0 %v5751
      %v5811 = vpop.f32.mrf.mxu0
      %v5812 = vadd.f32 0.0, %v5811
      %v5813 = vpop.f32.mrf.mxu0
      %v5814 = vadd.f32 0.0, %v5813
      %5815 = vmatmul.bf16.gmra.mxu0 %v5754
      %v5816 = vpop.f32.mrf.mxu0
      %v5817 = vadd.f32 0.0, %v5816
      %v5818 = vpop.f32.mrf.mxu0
      %v5819 = vadd.f32 0.0, %v5818
      %5820 = vmatmul.bf16.gmra.mxu0 %v5757
      %v5821 = vpop.f32.mrf.mxu0
      %v5822 = vadd.f32 0.0, %v5821
      %v5823 = vpop.f32.mrf.mxu0
      %v5824 = vadd.f32 0.0, %v5823
      %5825 = vmatmul.bf16.gmra.mxu0 %v5760
      %v5826 = vpop.f32.mrf.mxu0
      %v5827 = vadd.f32 0.0, %v5826
      %v5828 = vpop.f32.mrf.mxu0
      %v5829 = vadd.f32 0.0, %v5828
      %5830 = vmatmul.bf16.gmra.mxu0 %v5763
      %v5831 = vpop.f32.mrf.mxu0
      %v5832 = vadd.f32 0.0, %v5831
      %v5833 = vpop.f32.mrf.mxu0
      %v5834 = vadd.f32 0.0, %v5833
      %5835 = vmatmul.bf16.gmra.mxu0 %v5766
      %v5836 = vpop.f32.mrf.mxu0
      %v5837 = vadd.f32 0.0, %v5836
      %v5838 = vpop.f32.mrf.mxu0
      %v5839 = vadd.f32 0.0, %v5838
      %5840 = vmatmul.bf16.gmra.mxu0 %v5769
      %v5841 = vpop.f32.mrf.mxu0
      %v5842 = vadd.f32 0.0, %v5841
      %v5843 = vpop.f32.mrf.mxu0
      %v5844 = vadd.f32 0.0, %v5843
      %5845 = vmatmul.bf16.gmra.mxu0 %v5772
      %v5846 = vpop.f32.mrf.mxu0
      %v5847 = vadd.f32 0.0, %v5846
      %v5848 = vpop.f32.mrf.mxu0
      %v5849 = vadd.f32 0.0, %v5848
      %5850 = vmatmul.bf16.gmra.mxu0 %v5775
      %v5851 = vpop.f32.mrf.mxu0
      %v5852 = vadd.f32 0.0, %v5851
      %v5853 = vpop.f32.mrf.mxu0
      %v5854 = vadd.f32 0.0, %v5853
      %5855 = vmatmul.bf16.gmra.mxu0 %v5778
      %v5856 = vpop.f32.mrf.mxu0
      %v5857 = vadd.f32 0.0, %v5856
      %v5858 = vpop.f32.mrf.mxu0
      %v5859 = vadd.f32 0.0, %v5858
      %5860 = vmatmul.bf16.gmra.mxu0 %v5781
      %v5861 = vpop.f32.mrf.mxu0
      %v5862 = vadd.f32 0.0, %v5861
      %v5863 = vpop.f32.mrf.mxu0
      %v5864 = vadd.f32 0.0, %v5863
      %5865 = vmatmul.bf16.gmra.mxu0 %v5784
      %v5866 = vpop.f32.mrf.mxu0
      %v5867 = vadd.f32 0.0, %v5866
      %v5868 = vpop.f32.mrf.mxu0
      %v5869 = vadd.f32 0.0, %v5868
      %5870 = vmatmul.bf16.gmra.mxu0 %v5787
      %v5871 = vpop.f32.mrf.mxu0
      %v5872 = vadd.f32 0.0, %v5871
      %v5873 = vpop.f32.mrf.mxu0
      %v5874 = vadd.f32 0.0, %v5873
      %5875 = vmatmul.bf16.gmra.mxu0 %v5790
      %v5876 = vpop.f32.mrf.mxu0
      %v5877 = vadd.f32 0.0, %v5876
      %v5878 = vpop.f32.mrf.mxu0
      %v5879 = vadd.f32 0.0, %v5878
      %5880 = vdwg.mxu0
      %v5881 = vadd.f32 %v5557, %v5802
      %v5882 = vadd.f32 %v5558, %v5804
      %v5883 = vadd.f32 %v5559, %v5807
      %v5884 = vadd.f32 %v5560, %v5809
      %v5885 = vadd.f32 %v5561, %v5812
      %v5886 = vadd.f32 %v5562, %v5814
      %v5887 = vadd.f32 %v5563, %v5817
      %v5888 = vadd.f32 %v5564, %v5819
      %v5889 = vadd.f32 %v5565, %v5822
      %v5890 = vadd.f32 %v5566, %v5824
      %v5891 = vadd.f32 %v5567, %v5827
      %v5892 = vadd.f32 %v5568, %v5829
      %v5893 = vadd.f32 %v5569, %v5832
      %v5894 = vadd.f32 %v5570, %v5834
      %v5895 = vadd.f32 %v5571, %v5837
      %v5896 = vadd.f32 %v5572, %v5839
      %v5897 = vadd.f32 %v5573, %v5842
      %v5898 = vadd.f32 %v5574, %v5844
      %v5899 = vadd.f32 %v5575, %v5847
      %v5900 = vadd.f32 %v5576, %v5849
      %v5901 = vadd.f32 %v5577, %v5852
      %v5902 = vadd.f32 %v5578, %v5854
      %v5903 = vadd.f32 %v5579, %v5857
      %v5904 = vadd.f32 %v5580, %v5859
      %v5905 = vadd.f32 %v5581, %v5862
      %v5906 = vadd.f32 %v5582, %v5864
      %v5907 = vadd.f32 %v5583, %v5867
      %v5908 = vadd.f32 %v5584, %v5869
      %v5909 = vadd.f32 %v5585, %v5872
      %v5910 = vadd.f32 %v5586, %v5874
      %v5911 = vadd.f32 %v5587, %v5877
      %v5912 = vadd.f32 %v5588, %v5879
      %s5913 = scalar_lea.vmem %s3, 48
      %v5914 = vld [vmem:[%s5913] sm:$0xf]
      %v5915 = vld [vmem:[%s5913 + $0x4] sm:$0xf]
      %v5948 = vunpack.c.l.b16 %v5623
      %v5949 = vunpack.c.l.b16 %v5624
      %v5950 = vunpack.c.l.b16 %v5625
      %v5951 = vunpack.c.l.b16 %v5626
      %v5952 = vunpack.c.l.b16 %v5627
      %v5953 = vunpack.c.l.b16 %v5628
      %v5954 = vunpack.c.l.b16 %v5629
      %v5955 = vunpack.c.l.b16 %v5630
      %v5956 = vunpack.c.l.b16 %v5631
      %v5957 = vunpack.c.l.b16 %v5632
      %v5958 = vunpack.c.l.b16 %v5633
      %v5959 = vunpack.c.l.b16 %v5634
      %v5960 = vunpack.c.l.b16 %v5635
      %v5961 = vunpack.c.l.b16 %v5636
      %v5962 = vunpack.c.l.b16 %v5637
      %v5963 = vunpack.c.l.b16 %v5638
      %v5964 = vunpack.c.l.b16 %v5639
      %v5965 = vunpack.c.l.b16 %v5640
      %v5966 = vunpack.c.l.b16 %v5641
      %v5967 = vunpack.c.l.b16 %v5642
      %v5968 = vunpack.c.l.b16 %v5643
      %v5969 = vunpack.c.l.b16 %v5644
      %v5970 = vunpack.c.l.b16 %v5645
      %v5971 = vunpack.c.l.b16 %v5646
      %v5972 = vunpack.c.l.b16 %v5647
      %v5973 = vunpack.c.l.b16 %v5648
      %v5974 = vunpack.c.l.b16 %v5649
      %v5975 = vunpack.c.l.b16 %v5650
      %v5976 = vunpack.c.l.b16 %v5651
      %v5977 = vunpack.c.l.b16 %v5652
      %v5978 = vunpack.c.l.b16 %v5653
      %v5979 = vunpack.c.l.b16 %v5654
      %v5980 = vpack.c.b16 %v5949, %v5948
      %v5981 = vpack.c.b16 %v5951, %v5950
      %v5982 = vpack.c.b16 %v5953, %v5952
      %v5983 = vpack.c.b16 %v5955, %v5954
      %v5984 = vpack.c.b16 %v5957, %v5956
      %v5985 = vpack.c.b16 %v5959, %v5958
      %v5986 = vpack.c.b16 %v5961, %v5960
      %v5987 = vpack.c.b16 %v5963, %v5962
      %v5988 = vpack.c.b16 %v5965, %v5964
      %v5989 = vpack.c.b16 %v5967, %v5966
      %v5990 = vpack.c.b16 %v5969, %v5968
      %v5991 = vpack.c.b16 %v5971, %v5970
      %v5992 = vpack.c.b16 %v5973, %v5972
      %v5993 = vpack.c.b16 %v5975, %v5974
      %v5994 = vpack.c.b16 %v5977, %v5976
      %v5995 = vpack.c.b16 %v5979, %v5978
      %v5998 = vunpack.c.l.b16 %v5914
      %v5999 = vunpack.c.l.b16 %v5915
      %v6000 = vpack.c.b16 %v5999, %v5998
      %v6003 = vsel %vm400, %v5980, 0
      %v6006 = vsel %vm400, %v5981, 0
      %v6009 = vsel %vm400, %v5982, 0
      %v6012 = vsel %vm400, %v5983, 0
      %v6015 = vsel %vm400, %v5984, 0
      %v6018 = vsel %vm400, %v5985, 0
      %v6021 = vsel %vm400, %v5986, 0
      %v6024 = vsel %vm400, %v5987, 0
      %v6027 = vsel %vm400, %v5988, 0
      %v6030 = vsel %vm400, %v5989, 0
      %v6033 = vsel %vm400, %v5990, 0
      %v6036 = vsel %vm400, %v5991, 0
      %v6039 = vsel %vm400, %v5992, 0
      %v6042 = vsel %vm400, %v5993, 0
      %v6045 = vsel %vm400, %v5994, 0
      %v6048 = vsel %vm400, %v5995, 0
      %6050 = vmatpush.bf16.msra.mxu0 0
      %6051 = vmatpush.bf16.msra.mxu0 0
      %6052 = vmatpush.bf16.msra.mxu0 0
      %6053 = vmatpush.bf16.msra.mxu0 0
      %6054 = vmatpush.bf16.msra.mxu0 0
      %6055 = vmatpush.bf16.msra.mxu0 0
      %6056 = vmatpush.bf16.msra.mxu0 0
      %6057 = vmatpush.bf16.msra.mxu0 %v6000
      %6058 = vmatmul.bf16.gmra.mxu0 %v6003
      %v6059 = vpop.f32.mrf.mxu0
      %v6060 = vadd.f32 0.0, %v6059
      %v6061 = vpop.f32.mrf.mxu0
      %v6062 = vadd.f32 0.0, %v6061
      %6063 = vmatmul.bf16.gmra.mxu0 %v6006
      %v6064 = vpop.f32.mrf.mxu0
      %v6065 = vadd.f32 0.0, %v6064
      %v6066 = vpop.f32.mrf.mxu0
      %v6067 = vadd.f32 0.0, %v6066
      %6068 = vmatmul.bf16.gmra.mxu0 %v6009
      %v6069 = vpop.f32.mrf.mxu0
      %v6070 = vadd.f32 0.0, %v6069
      %v6071 = vpop.f32.mrf.mxu0
      %v6072 = vadd.f32 0.0, %v6071
      %6073 = vmatmul.bf16.gmra.mxu0 %v6012
      %v6074 = vpop.f32.mrf.mxu0
      %v6075 = vadd.f32 0.0, %v6074
      %v6076 = vpop.f32.mrf.mxu0
      %v6077 = vadd.f32 0.0, %v6076
      %6078 = vmatmul.bf16.gmra.mxu0 %v6015
      %v6079 = vpop.f32.mrf.mxu0
      %v6080 = vadd.f32 0.0, %v6079
      %v6081 = vpop.f32.mrf.mxu0
      %v6082 = vadd.f32 0.0, %v6081
      %6083 = vmatmul.bf16.gmra.mxu0 %v6018
      %v6084 = vpop.f32.mrf.mxu0
      %v6085 = vadd.f32 0.0, %v6084
      %v6086 = vpop.f32.mrf.mxu0
      %v6087 = vadd.f32 0.0, %v6086
      %6088 = vmatmul.bf16.gmra.mxu0 %v6021
      %v6089 = vpop.f32.mrf.mxu0
      %v6090 = vadd.f32 0.0, %v6089
      %v6091 = vpop.f32.mrf.mxu0
      %v6092 = vadd.f32 0.0, %v6091
      %6093 = vmatmul.bf16.gmra.mxu0 %v6024
      %v6094 = vpop.f32.mrf.mxu0
      %v6095 = vadd.f32 0.0, %v6094
      %v6096 = vpop.f32.mrf.mxu0
      %v6097 = vadd.f32 0.0, %v6096
      %6098 = vmatmul.bf16.gmra.mxu0 %v6027
      %v6099 = vpop.f32.mrf.mxu0
      %v6100 = vadd.f32 0.0, %v6099
      %v6101 = vpop.f32.mrf.mxu0
      %v6102 = vadd.f32 0.0, %v6101
      %6103 = vmatmul.bf16.gmra.mxu0 %v6030
      %v6104 = vpop.f32.mrf.mxu0
      %v6105 = vadd.f32 0.0, %v6104
      %v6106 = vpop.f32.mrf.mxu0
      %v6107 = vadd.f32 0.0, %v6106
      %6108 = vmatmul.bf16.gmra.mxu0 %v6033
      %v6109 = vpop.f32.mrf.mxu0
      %v6110 = vadd.f32 0.0, %v6109
      %v6111 = vpop.f32.mrf.mxu0
      %v6112 = vadd.f32 0.0, %v6111
      %6113 = vmatmul.bf16.gmra.mxu0 %v6036
      %v6114 = vpop.f32.mrf.mxu0
      %v6115 = vadd.f32 0.0, %v6114
      %v6116 = vpop.f32.mrf.mxu0
      %v6117 = vadd.f32 0.0, %v6116
      %6118 = vmatmul.bf16.gmra.mxu0 %v6039
      %v6119 = vpop.f32.mrf.mxu0
      %v6120 = vadd.f32 0.0, %v6119
      %v6121 = vpop.f32.mrf.mxu0
      %v6122 = vadd.f32 0.0, %v6121
      %6123 = vmatmul.bf16.gmra.mxu0 %v6042
      %v6124 = vpop.f32.mrf.mxu0
      %v6125 = vadd.f32 0.0, %v6124
      %v6126 = vpop.f32.mrf.mxu0
      %v6127 = vadd.f32 0.0, %v6126
      %6128 = vmatmul.bf16.gmra.mxu0 %v6045
      %v6129 = vpop.f32.mrf.mxu0
      %v6130 = vadd.f32 0.0, %v6129
      %v6131 = vpop.f32.mrf.mxu0
      %v6132 = vadd.f32 0.0, %v6131
      %6133 = vmatmul.bf16.gmra.mxu0 %v6048
      %v6134 = vpop.f32.mrf.mxu0
      %v6135 = vadd.f32 0.0, %v6134
      %v6136 = vpop.f32.mrf.mxu0
      %v6137 = vadd.f32 0.0, %v6136
      %6138 = vdwg.mxu0
      %v6139 = vadd.f32 %v5881, %v6060
      %v6140 = vadd.f32 %v5882, %v6062
      %v6141 = vadd.f32 %v5883, %v6065
      %v6142 = vadd.f32 %v5884, %v6067
      %v6143 = vadd.f32 %v5885, %v6070
      %v6144 = vadd.f32 %v5886, %v6072
      %v6145 = vadd.f32 %v5887, %v6075
      %v6146 = vadd.f32 %v5888, %v6077
      %v6147 = vadd.f32 %v5889, %v6080
      %v6148 = vadd.f32 %v5890, %v6082
      %v6149 = vadd.f32 %v5891, %v6085
      %v6150 = vadd.f32 %v5892, %v6087
      %v6151 = vadd.f32 %v5893, %v6090
      %v6152 = vadd.f32 %v5894, %v6092
      %v6153 = vadd.f32 %v5895, %v6095
      %v6154 = vadd.f32 %v5896, %v6097
      %v6155 = vadd.f32 %v5897, %v6100
      %v6156 = vadd.f32 %v5898, %v6102
      %v6157 = vadd.f32 %v5899, %v6105
      %v6158 = vadd.f32 %v5900, %v6107
      %v6159 = vadd.f32 %v5901, %v6110
      %v6160 = vadd.f32 %v5902, %v6112
      %v6161 = vadd.f32 %v5903, %v6115
      %v6162 = vadd.f32 %v5904, %v6117
      %v6163 = vadd.f32 %v5905, %v6120
      %v6164 = vadd.f32 %v5906, %v6122
      %v6165 = vadd.f32 %v5907, %v6125
      %v6166 = vadd.f32 %v5908, %v6127
      %v6167 = vadd.f32 %v5909, %v6130
      %v6168 = vadd.f32 %v5910, %v6132
      %v6169 = vadd.f32 %v5911, %v6135
      %v6170 = vadd.f32 %v5912, %v6137
      %v6171 = vld [vmem:[%s5589] sm:$0xf]
      %v6172 = vld [vmem:[%s5589 + $0x4] sm:$0xf]
      %v6173 = vld [vmem:[%s5589 + $0x8] sm:$0x1]
      %v6174 = vld [vmem:[%s5589 + $0xc] sm:$0xf]
      %v6175 = vld [vmem:[%s5589 + $0x10] sm:$0xf]
      %v6176 = vld [vmem:[%s5589 + $0x14] sm:$0x1]
      %v6177 = vld [vmem:[%s5589 + $0x18] sm:$0xf]
      %v6178 = vld [vmem:[%s5589 + $0x1c] sm:$0xf]
      %v6179 = vld [vmem:[%s5589 + $0x20] sm:$0x1]
      %v6180 = vld [vmem:[%s5589 + $0x24] sm:$0xf]
      %v6181 = vld [vmem:[%s5589 + $0x28] sm:$0xf]
      %v6182 = vld [vmem:[%s5589 + $0x2c] sm:$0x1]
      %v6183 = vld [vmem:[%s5589 + $0x30] sm:$0xf]
      %v6184 = vld [vmem:[%s5589 + $0x34] sm:$0xf]
      %v6185 = vld [vmem:[%s5589 + $0x38] sm:$0x1]
      %v6186 = vld [vmem:[%s5589 + $0x3c] sm:$0xf]
      %v6187 = vld [vmem:[%s5589 + $0x40] sm:$0xf]
      %v6188 = vld [vmem:[%s5589 + $0x44] sm:$0x1]
      %v6189 = vld [vmem:[%s5589 + $0x48] sm:$0xf]
      %v6190 = vld [vmem:[%s5589 + $0x4c] sm:$0xf]
      %v6191 = vld [vmem:[%s5589 + $0x50] sm:$0x1]
      %v6192 = vld [vmem:[%s5589 + $0x54] sm:$0xf]
      %v6193 = vld [vmem:[%s5589 + $0x58] sm:$0xf]
      %v6194 = vld [vmem:[%s5589 + $0x5c] sm:$0x1]
      %v6195 = vld [vmem:[%s5589 + $0x60] sm:$0xf]
      %v6196 = vld [vmem:[%s5589 + $0x64] sm:$0xf]
      %v6197 = vld [vmem:[%s5589 + $0x68] sm:$0x1]
      %v6198 = vld [vmem:[%s5589 + $0x6c] sm:$0xf]
      %v6199 = vld [vmem:[%s5589 + $0x70] sm:$0xf]
      %v6200 = vld [vmem:[%s5589 + $0x74] sm:$0x1]
      %v6201 = vld [vmem:[%s5589 + $0x78] sm:$0xf]
      %v6202 = vld [vmem:[%s5589 + $0x7c] sm:$0xf]
      %v6203 = vld [vmem:[%s5589 + $0x80] sm:$0x1]
      %v6204 = vld [vmem:[%s5589 + $0x84] sm:$0xf]
      %v6205 = vld [vmem:[%s5589 + $0x88] sm:$0xf]
      %v6206 = vld [vmem:[%s5589 + $0x8c] sm:$0x1]
      %v6207 = vld [vmem:[%s5589 + $0x90] sm:$0xf]
      %v6208 = vld [vmem:[%s5589 + $0x94] sm:$0xf]
      %v6209 = vld [vmem:[%s5589 + $0x98] sm:$0x1]
      %v6210 = vld [vmem:[%s5589 + $0x9c] sm:$0xf]
      %v6211 = vld [vmem:[%s5589 + $0xa0] sm:$0xf]
      %v6212 = vld [vmem:[%s5589 + $0xa4] sm:$0x1]
      %v6213 = vld [vmem:[%s5589 + $0xa8] sm:$0xf]
      %v6214 = vld [vmem:[%s5589 + $0xac] sm:$0xf]
      %v6215 = vld [vmem:[%s5589 + $0xb0] sm:$0x1]
      %v6216 = vld [vmem:[%s5589 + $0xb4] sm:$0xf]
      %v6217 = vld [vmem:[%s5589 + $0xb8] sm:$0xf]
      %v6218 = vld [vmem:[%s5589 + $0xbc] sm:$0x1]
      %v6220 = vshrl.u32 %v6171, 16
      %v6222 = vrot.slane %v6220, 4
      %v6223 = vshll.u32 %v6171, 16
      %v6225 = vrot.slane %v6223, 5
      %v6226 = vor.u32 %v6222, %v6225
      %v6227 = vrot.slane %v6226, 4
      %v6229 = vshll.u32 %v6172, 16
      %v6231 = vrot.slane %v6229, 5
      %v6232 = vsel %vm811, %v6227, %v6231
      %v6233 = vshrl.u32 %v6172, 16
      %v6235 = vrot.slane %v6233, 4
      %v6236 = vor.u32 %v6235, %v6231
      %v6237 = vrot.slane %v6236, 4
      %v6239 = vshll.u32 %v6173, 16
      %v6241 = vrot.slane %v6239, 5
      %v6242 = vsel %vm811, %v6237, %v6241
      %v6244 = vshrl.u32 %v6174, 16
      %v6246 = vrot.slane %v6244, 4
      %v6247 = vshll.u32 %v6174, 16
      %v6249 = vrot.slane %v6247, 5
      %v6250 = vor.u32 %v6246, %v6249
      %v6251 = vrot.slane %v6250, 4
      %v6253 = vshll.u32 %v6175, 16
      %v6255 = vrot.slane %v6253, 5
      %v6256 = vsel %vm811, %v6251, %v6255
      %v6257 = vshrl.u32 %v6175, 16
      %v6259 = vrot.slane %v6257, 4
      %v6260 = vor.u32 %v6259, %v6255
      %v6261 = vrot.slane %v6260, 4
      %v6263 = vshll.u32 %v6176, 16
      %v6265 = vrot.slane %v6263, 5
      %v6266 = vsel %vm811, %v6261, %v6265
      %v6268 = vshrl.u32 %v6177, 16
      %v6270 = vrot.slane %v6268, 4
      %v6271 = vshll.u32 %v6177, 16
      %v6273 = vrot.slane %v6271, 5
      %v6274 = vor.u32 %v6270, %v6273
      %v6275 = vrot.slane %v6274, 4
      %v6277 = vshll.u32 %v6178, 16
      %v6279 = vrot.slane %v6277, 5
      %v6280 = vsel %vm811, %v6275, %v6279
      %v6281 = vshrl.u32 %v6178, 16
      %v6283 = vrot.slane %v6281, 4
      %v6284 = vor.u32 %v6283, %v6279
      %v6285 = vrot.slane %v6284, 4
      %v6287 = vshll.u32 %v6179, 16
      %v6289 = vrot.slane %v6287, 5
      %v6290 = vsel %vm811, %v6285, %v6289
      %v6292 = vshrl.u32 %v6180, 16
      %v6294 = vrot.slane %v6292, 4
      %v6295 = vshll.u32 %v6180, 16
      %v6297 = vrot.slane %v6295, 5
      %v6298 = vor.u32 %v6294, %v6297
      %v6299 = vrot.slane %v6298, 4
      %v6301 = vshll.u32 %v6181, 16
      %v6303 = vrot.slane %v6301, 5
      %v6304 = vsel %vm811, %v6299, %v6303
      %v6305 = vshrl.u32 %v6181, 16
      %v6307 = vrot.slane %v6305, 4
      %v6308 = vor.u32 %v6307, %v6303
      %v6309 = vrot.slane %v6308, 4
      %v6311 = vshll.u32 %v6182, 16
      %v6313 = vrot.slane %v6311, 5
      %v6314 = vsel %vm811, %v6309, %v6313
      %v6316 = vshrl.u32 %v6183, 16
      %v6318 = vrot.slane %v6316, 4
      %v6319 = vshll.u32 %v6183, 16
      %v6321 = vrot.slane %v6319, 5
      %v6322 = vor.u32 %v6318, %v6321
      %v6323 = vrot.slane %v6322, 4
      %v6325 = vshll.u32 %v6184, 16
      %v6327 = vrot.slane %v6325, 5
      %v6328 = vsel %vm811, %v6323, %v6327
      %v6329 = vshrl.u32 %v6184, 16
      %v6331 = vrot.slane %v6329, 4
      %v6332 = vor.u32 %v6331, %v6327
      %v6333 = vrot.slane %v6332, 4
      %v6335 = vshll.u32 %v6185, 16
      %v6337 = vrot.slane %v6335, 5
      %v6338 = vsel %vm811, %v6333, %v6337
      %v6340 = vshrl.u32 %v6186, 16
      %v6342 = vrot.slane %v6340, 4
      %v6343 = vshll.u32 %v6186, 16
      %v6345 = vrot.slane %v6343, 5
      %v6346 = vor.u32 %v6342, %v6345
      %v6347 = vrot.slane %v6346, 4
      %v6349 = vshll.u32 %v6187, 16
      %v6351 = vrot.slane %v6349, 5
      %v6352 = vsel %vm811, %v6347, %v6351
      %v6353 = vshrl.u32 %v6187, 16
      %v6355 = vrot.slane %v6353, 4
      %v6356 = vor.u32 %v6355, %v6351
      %v6357 = vrot.slane %v6356, 4
      %v6359 = vshll.u32 %v6188, 16
      %v6361 = vrot.slane %v6359, 5
      %v6362 = vsel %vm811, %v6357, %v6361
      %v6364 = vshrl.u32 %v6189, 16
      %v6366 = vrot.slane %v6364, 4
      %v6367 = vshll.u32 %v6189, 16
      %v6369 = vrot.slane %v6367, 5
      %v6370 = vor.u32 %v6366, %v6369
      %v6371 = vrot.slane %v6370, 4
      %v6373 = vshll.u32 %v6190, 16
      %v6375 = vrot.slane %v6373, 5
      %v6376 = vsel %vm811, %v6371, %v6375
      %v6377 = vshrl.u32 %v6190, 16
      %v6379 = vrot.slane %v6377, 4
      %v6380 = vor.u32 %v6379, %v6375
      %v6381 = vrot.slane %v6380, 4
      %v6383 = vshll.u32 %v6191, 16
      %v6385 = vrot.slane %v6383, 5
      %v6386 = vsel %vm811, %v6381, %v6385
      %v6388 = vshrl.u32 %v6192, 16
      %v6390 = vrot.slane %v6388, 4
      %v6391 = vshll.u32 %v6192, 16
      %v6393 = vrot.slane %v6391, 5
      %v6394 = vor.u32 %v6390, %v6393
      %v6395 = vrot.slane %v6394, 4
      %v6397 = vshll.u32 %v6193, 16
      %v6399 = vrot.slane %v6397, 5
      %v6400 = vsel %vm811, %v6395, %v6399
      %v6401 = vshrl.u32 %v6193, 16
      %v6403 = vrot.slane %v6401, 4
      %v6404 = vor.u32 %v6403, %v6399
      %v6405 = vrot.slane %v6404, 4
      %v6407 = vshll.u32 %v6194, 16
      %v6409 = vrot.slane %v6407, 5
      %v6410 = vsel %vm811, %v6405, %v6409
      %v6412 = vshrl.u32 %v6195, 16
      %v6414 = vrot.slane %v6412, 4
      %v6415 = vshll.u32 %v6195, 16
      %v6417 = vrot.slane %v6415, 5
      %v6418 = vor.u32 %v6414, %v6417
      %v6419 = vrot.slane %v6418, 4
      %v6421 = vshll.u32 %v6196, 16
      %v6423 = vrot.slane %v6421, 5
      %v6424 = vsel %vm811, %v6419, %v6423
      %v6425 = vshrl.u32 %v6196, 16
      %v6427 = vrot.slane %v6425, 4
      %v6428 = vor.u32 %v6427, %v6423
      %v6429 = vrot.slane %v6428, 4
      %v6431 = vshll.u32 %v6197, 16
      %v6433 = vrot.slane %v6431, 5
      %v6434 = vsel %vm811, %v6429, %v6433
      %v6436 = vshrl.u32 %v6198, 16
      %v6438 = vrot.slane %v6436, 4
      %v6439 = vshll.u32 %v6198, 16
      %v6441 = vrot.slane %v6439, 5
      %v6442 = vor.u32 %v6438, %v6441
      %v6443 = vrot.slane %v6442, 4
      %v6445 = vshll.u32 %v6199, 16
      %v6447 = vrot.slane %v6445, 5
      %v6448 = vsel %vm811, %v6443, %v6447
      %v6449 = vshrl.u32 %v6199, 16
      %v6451 = vrot.slane %v6449, 4
      %v6452 = vor.u32 %v6451, %v6447
      %v6453 = vrot.slane %v6452, 4
      %v6455 = vshll.u32 %v6200, 16
      %v6457 = vrot.slane %v6455, 5
      %v6458 = vsel %vm811, %v6453, %v6457
      %v6460 = vshrl.u32 %v6201, 16
      %v6462 = vrot.slane %v6460, 4
      %v6463 = vshll.u32 %v6201, 16
      %v6465 = vrot.slane %v6463, 5
      %v6466 = vor.u32 %v6462, %v6465
      %v6467 = vrot.slane %v6466, 4
      %v6469 = vshll.u32 %v6202, 16
      %v6471 = vrot.slane %v6469, 5
      %v6472 = vsel %vm811, %v6467, %v6471
      %v6473 = vshrl.u32 %v6202, 16
      %v6475 = vrot.slane %v6473, 4
      %v6476 = vor.u32 %v6475, %v6471
      %v6477 = vrot.slane %v6476, 4
      %v6479 = vshll.u32 %v6203, 16
      %v6481 = vrot.slane %v6479, 5
      %v6482 = vsel %vm811, %v6477, %v6481
      %v6484 = vshrl.u32 %v6204, 16
      %v6486 = vrot.slane %v6484, 4
      %v6487 = vshll.u32 %v6204, 16
      %v6489 = vrot.slane %v6487, 5
      %v6490 = vor.u32 %v6486, %v6489
      %v6491 = vrot.slane %v6490, 4
      %v6493 = vshll.u32 %v6205, 16
      %v6495 = vrot.slane %v6493, 5
      %v6496 = vsel %vm811, %v6491, %v6495
      %v6497 = vshrl.u32 %v6205, 16
      %v6499 = vrot.slane %v6497, 4
      %v6500 = vor.u32 %v6499, %v6495
      %v6501 = vrot.slane %v6500, 4
      %v6503 = vshll.u32 %v6206, 16
      %v6505 = vrot.slane %v6503, 5
      %v6506 = vsel %vm811, %v6501, %v6505
      %v6508 = vshrl.u32 %v6207, 16
      %v6510 = vrot.slane %v6508, 4
      %v6511 = vshll.u32 %v6207, 16
      %v6513 = vrot.slane %v6511, 5
      %v6514 = vor.u32 %v6510, %v6513
      %v6515 = vrot.slane %v6514, 4
      %v6517 = vshll.u32 %v6208, 16
      %v6519 = vrot.slane %v6517, 5
      %v6520 = vsel %vm811, %v6515, %v6519
      %v6521 = vshrl.u32 %v6208, 16
      %v6523 = vrot.slane %v6521, 4
      %v6524 = vor.u32 %v6523, %v6519
      %v6525 = vrot.slane %v6524, 4
      %v6527 = vshll.u32 %v6209, 16
      %v6529 = vrot.slane %v6527, 5
      %v6530 = vsel %vm811, %v6525, %v6529
      %v6532 = vshrl.u32 %v6210, 16
      %v6534 = vrot.slane %v6532, 4
      %v6535 = vshll.u32 %v6210, 16
      %v6537 = vrot.slane %v6535, 5
      %v6538 = vor.u32 %v6534, %v6537
      %v6539 = vrot.slane %v6538, 4
      %v6541 = vshll.u32 %v6211, 16
      %v6543 = vrot.slane %v6541, 5
      %v6544 = vsel %vm811, %v6539, %v6543
      %v6545 = vshrl.u32 %v6211, 16
      %v6547 = vrot.slane %v6545, 4
      %v6548 = vor.u32 %v6547, %v6543
      %v6549 = vrot.slane %v6548, 4
      %v6551 = vshll.u32 %v6212, 16
      %v6553 = vrot.slane %v6551, 5
      %v6554 = vsel %vm811, %v6549, %v6553
      %v6556 = vshrl.u32 %v6213, 16
      %v6558 = vrot.slane %v6556, 4
      %v6559 = vshll.u32 %v6213, 16
      %v6561 = vrot.slane %v6559, 5
      %v6562 = vor.u32 %v6558, %v6561
      %v6563 = vrot.slane %v6562, 4
      %v6565 = vshll.u32 %v6214, 16
      %v6567 = vrot.slane %v6565, 5
      %v6568 = vsel %vm811, %v6563, %v6567
      %v6569 = vshrl.u32 %v6214, 16
      %v6571 = vrot.slane %v6569, 4
      %v6572 = vor.u32 %v6571, %v6567
      %v6573 = vrot.slane %v6572, 4
      %v6575 = vshll.u32 %v6215, 16
      %v6577 = vrot.slane %v6575, 5
      %v6578 = vsel %vm811, %v6573, %v6577
      %v6580 = vshrl.u32 %v6216, 16
      %v6582 = vrot.slane %v6580, 4
      %v6583 = vshll.u32 %v6216, 16
      %v6585 = vrot.slane %v6583, 5
      %v6586 = vor.u32 %v6582, %v6585
      %v6587 = vrot.slane %v6586, 4
      %v6589 = vshll.u32 %v6217, 16
      %v6591 = vrot.slane %v6589, 5
      %v6592 = vsel %vm811, %v6587, %v6591
      %v6593 = vshrl.u32 %v6217, 16
      %v6595 = vrot.slane %v6593, 4
      %v6596 = vor.u32 %v6595, %v6591
      %v6597 = vrot.slane %v6596, 4
      %v6599 = vshll.u32 %v6218, 16
      %v6601 = vrot.slane %v6599, 5
      %v6602 = vsel %vm811, %v6597, %v6601
      %v6603 = vld [vmem:[%s5622] sm:$0xf]
      %v6604 = vld [vmem:[%s5622 + $0x4] sm:$0xf]
      %v6605 = vld [vmem:[%s5622 + $0x8] sm:$0x1]
      %v6606 = vld [vmem:[%s5622 + $0xc] sm:$0xf]
      %v6607 = vld [vmem:[%s5622 + $0x10] sm:$0xf]
      %v6608 = vld [vmem:[%s5622 + $0x14] sm:$0x1]
      %v6609 = vld [vmem:[%s5622 + $0x18] sm:$0xf]
      %v6610 = vld [vmem:[%s5622 + $0x1c] sm:$0xf]
      %v6611 = vld [vmem:[%s5622 + $0x20] sm:$0x1]
      %v6612 = vld [vmem:[%s5622 + $0x24] sm:$0xf]
      %v6613 = vld [vmem:[%s5622 + $0x28] sm:$0xf]
      %v6614 = vld [vmem:[%s5622 + $0x2c] sm:$0x1]
      %v6615 = vld [vmem:[%s5622 + $0x30] sm:$0xf]
      %v6616 = vld [vmem:[%s5622 + $0x34] sm:$0xf]
      %v6617 = vld [vmem:[%s5622 + $0x38] sm:$0x1]
      %v6618 = vld [vmem:[%s5622 + $0x3c] sm:$0xf]
      %v6619 = vld [vmem:[%s5622 + $0x40] sm:$0xf]
      %v6620 = vld [vmem:[%s5622 + $0x44] sm:$0x1]
      %v6621 = vld [vmem:[%s5622 + $0x48] sm:$0xf]
      %v6622 = vld [vmem:[%s5622 + $0x4c] sm:$0xf]
      %v6623 = vld [vmem:[%s5622 + $0x50] sm:$0x1]
      %v6624 = vld [vmem:[%s5622 + $0x54] sm:$0xf]
      %v6625 = vld [vmem:[%s5622 + $0x58] sm:$0xf]
      %v6626 = vld [vmem:[%s5622 + $0x5c] sm:$0x1]
      %v6627 = vld [vmem:[%s5622 + $0x60] sm:$0xf]
      %v6628 = vld [vmem:[%s5622 + $0x64] sm:$0xf]
      %v6629 = vld [vmem:[%s5622 + $0x68] sm:$0x1]
      %v6630 = vld [vmem:[%s5622 + $0x6c] sm:$0xf]
      %v6631 = vld [vmem:[%s5622 + $0x70] sm:$0xf]
      %v6632 = vld [vmem:[%s5622 + $0x74] sm:$0x1]
      %v6633 = vld [vmem:[%s5622 + $0x78] sm:$0xf]
      %v6634 = vld [vmem:[%s5622 + $0x7c] sm:$0xf]
      %v6635 = vld [vmem:[%s5622 + $0x80] sm:$0x1]
      %v6636 = vld [vmem:[%s5622 + $0x84] sm:$0xf]
      %v6637 = vld [vmem:[%s5622 + $0x88] sm:$0xf]
      %v6638 = vld [vmem:[%s5622 + $0x8c] sm:$0x1]
      %v6639 = vld [vmem:[%s5622 + $0x90] sm:$0xf]
      %v6640 = vld [vmem:[%s5622 + $0x94] sm:$0xf]
      %v6641 = vld [vmem:[%s5622 + $0x98] sm:$0x1]
      %v6642 = vld [vmem:[%s5622 + $0x9c] sm:$0xf]
      %v6643 = vld [vmem:[%s5622 + $0xa0] sm:$0xf]
      %v6644 = vld [vmem:[%s5622 + $0xa4] sm:$0x1]
      %v6645 = vld [vmem:[%s5622 + $0xa8] sm:$0xf]
      %v6646 = vld [vmem:[%s5622 + $0xac] sm:$0xf]
      %v6647 = vld [vmem:[%s5622 + $0xb0] sm:$0x1]
      %v6648 = vld [vmem:[%s5622 + $0xb4] sm:$0xf]
      %v6649 = vld [vmem:[%s5622 + $0xb8] sm:$0xf]
      %v6650 = vld [vmem:[%s5622 + $0xbc] sm:$0x1]
      %v6652 = vshrl.u32 %v6603, 16
      %v6654 = vrot.slane %v6652, 4
      %v6655 = vshll.u32 %v6603, 16
      %v6657 = vrot.slane %v6655, 5
      %v6658 = vor.u32 %v6654, %v6657
      %v6659 = vrot.slane %v6658, 4
      %v6661 = vshll.u32 %v6604, 16
      %v6663 = vrot.slane %v6661, 5
      %v6664 = vsel %vm811, %v6659, %v6663
      %v6665 = vshrl.u32 %v6604, 16
      %v6667 = vrot.slane %v6665, 4
      %v6668 = vor.u32 %v6667, %v6663
      %v6669 = vrot.slane %v6668, 4
      %v6671 = vshll.u32 %v6605, 16
      %v6673 = vrot.slane %v6671, 5
      %v6674 = vsel %vm811, %v6669, %v6673
      %v6676 = vshrl.u32 %v6606, 16
      %v6678 = vrot.slane %v6676, 4
      %v6679 = vshll.u32 %v6606, 16
      %v6681 = vrot.slane %v6679, 5
      %v6682 = vor.u32 %v6678, %v6681
      %v6683 = vrot.slane %v6682, 4
      %v6685 = vshll.u32 %v6607, 16
      %v6687 = vrot.slane %v6685, 5
      %v6688 = vsel %vm811, %v6683, %v6687
      %v6689 = vshrl.u32 %v6607, 16
      %v6691 = vrot.slane %v6689, 4
      %v6692 = vor.u32 %v6691, %v6687
      %v6693 = vrot.slane %v6692, 4
      %v6695 = vshll.u32 %v6608, 16
      %v6697 = vrot.slane %v6695, 5
      %v6698 = vsel %vm811, %v6693, %v6697
      %v6700 = vshrl.u32 %v6609, 16
      %v6702 = vrot.slane %v6700, 4
      %v6703 = vshll.u32 %v6609, 16
      %v6705 = vrot.slane %v6703, 5
      %v6706 = vor.u32 %v6702, %v6705
      %v6707 = vrot.slane %v6706, 4
      %v6709 = vshll.u32 %v6610, 16
      %v6711 = vrot.slane %v6709, 5
      %v6712 = vsel %vm811, %v6707, %v6711
      %v6713 = vshrl.u32 %v6610, 16
      %v6715 = vrot.slane %v6713, 4
      %v6716 = vor.u32 %v6715, %v6711
      %v6717 = vrot.slane %v6716, 4
      %v6719 = vshll.u32 %v6611, 16
      %v6721 = vrot.slane %v6719, 5
      %v6722 = vsel %vm811, %v6717, %v6721
      %v6724 = vshrl.u32 %v6612, 16
      %v6726 = vrot.slane %v6724, 4
      %v6727 = vshll.u32 %v6612, 16
      %v6729 = vrot.slane %v6727, 5
      %v6730 = vor.u32 %v6726, %v6729
      %v6731 = vrot.slane %v6730, 4
      %v6733 = vshll.u32 %v6613, 16
      %v6735 = vrot.slane %v6733, 5
      %v6736 = vsel %vm811, %v6731, %v6735
      %v6737 = vshrl.u32 %v6613, 16
      %v6739 = vrot.slane %v6737, 4
      %v6740 = vor.u32 %v6739, %v6735
      %v6741 = vrot.slane %v6740, 4
      %v6743 = vshll.u32 %v6614, 16
      %v6745 = vrot.slane %v6743, 5
      %v6746 = vsel %vm811, %v6741, %v6745
      %v6748 = vshrl.u32 %v6615, 16
      %v6750 = vrot.slane %v6748, 4
      %v6751 = vshll.u32 %v6615, 16
      %v6753 = vrot.slane %v6751, 5
      %v6754 = vor.u32 %v6750, %v6753
      %v6755 = vrot.slane %v6754, 4
      %v6757 = vshll.u32 %v6616, 16
      %v6759 = vrot.slane %v6757, 5
      %v6760 = vsel %vm811, %v6755, %v6759
      %v6761 = vshrl.u32 %v6616, 16
      %v6763 = vrot.slane %v6761, 4
      %v6764 = vor.u32 %v6763, %v6759
      %v6765 = vrot.slane %v6764, 4
      %v6767 = vshll.u32 %v6617, 16
      %v6769 = vrot.slane %v6767, 5
      %v6770 = vsel %vm811, %v6765, %v6769
      %v6772 = vshrl.u32 %v6618, 16
      %v6774 = vrot.slane %v6772, 4
      %v6775 = vshll.u32 %v6618, 16
      %v6777 = vrot.slane %v6775, 5
      %v6778 = vor.u32 %v6774, %v6777
      %v6779 = vrot.slane %v6778, 4
      %v6781 = vshll.u32 %v6619, 16
      %v6783 = vrot.slane %v6781, 5
      %v6784 = vsel %vm811, %v6779, %v6783
      %v6785 = vshrl.u32 %v6619, 16
      %v6787 = vrot.slane %v6785, 4
      %v6788 = vor.u32 %v6787, %v6783
      %v6789 = vrot.slane %v6788, 4
      %v6791 = vshll.u32 %v6620, 16
      %v6793 = vrot.slane %v6791, 5
      %v6794 = vsel %vm811, %v6789, %v6793
      %v6796 = vshrl.u32 %v6621, 16
      %v6798 = vrot.slane %v6796, 4
      %v6799 = vshll.u32 %v6621, 16
      %v6801 = vrot.slane %v6799, 5
      %v6802 = vor.u32 %v6798, %v6801
      %v6803 = vrot.slane %v6802, 4
      %v6805 = vshll.u32 %v6622, 16
      %v6807 = vrot.slane %v6805, 5
      %v6808 = vsel %vm811, %v6803, %v6807
      %v6809 = vshrl.u32 %v6622, 16
      %v6811 = vrot.slane %v6809, 4
      %v6812 = vor.u32 %v6811, %v6807
      %v6813 = vrot.slane %v6812, 4
      %v6815 = vshll.u32 %v6623, 16
      %v6817 = vrot.slane %v6815, 5
      %v6818 = vsel %vm811, %v6813, %v6817
      %v6820 = vshrl.u32 %v6624, 16
      %v6822 = vrot.slane %v6820, 4
      %v6823 = vshll.u32 %v6624, 16
      %v6825 = vrot.slane %v6823, 5
      %v6826 = vor.u32 %v6822, %v6825
      %v6827 = vrot.slane %v6826, 4
      %v6829 = vshll.u32 %v6625, 16
      %v6831 = vrot.slane %v6829, 5
      %v6832 = vsel %vm811, %v6827, %v6831
      %v6833 = vshrl.u32 %v6625, 16
      %v6835 = vrot.slane %v6833, 4
      %v6836 = vor.u32 %v6835, %v6831
      %v6837 = vrot.slane %v6836, 4
      %v6839 = vshll.u32 %v6626, 16
      %v6841 = vrot.slane %v6839, 5
      %v6842 = vsel %vm811, %v6837, %v6841
      %v6844 = vshrl.u32 %v6627, 16
      %v6846 = vrot.slane %v6844, 4
      %v6847 = vshll.u32 %v6627, 16
      %v6849 = vrot.slane %v6847, 5
      %v6850 = vor.u32 %v6846, %v6849
      %v6851 = vrot.slane %v6850, 4
      %v6853 = vshll.u32 %v6628, 16
      %v6855 = vrot.slane %v6853, 5
      %v6856 = vsel %vm811, %v6851, %v6855
      %v6857 = vshrl.u32 %v6628, 16
      %v6859 = vrot.slane %v6857, 4
      %v6860 = vor.u32 %v6859, %v6855
      %v6861 = vrot.slane %v6860, 4
      %v6863 = vshll.u32 %v6629, 16
      %v6865 = vrot.slane %v6863, 5
      %v6866 = vsel %vm811, %v6861, %v6865
      %v6868 = vshrl.u32 %v6630, 16
      %v6870 = vrot.slane %v6868, 4
      %v6871 = vshll.u32 %v6630, 16
      %v6873 = vrot.slane %v6871, 5
      %v6874 = vor.u32 %v6870, %v6873
      %v6875 = vrot.slane %v6874, 4
      %v6877 = vshll.u32 %v6631, 16
      %v6879 = vrot.slane %v6877, 5
      %v6880 = vsel %vm811, %v6875, %v6879
      %v6881 = vshrl.u32 %v6631, 16
      %v6883 = vrot.slane %v6881, 4
      %v6884 = vor.u32 %v6883, %v6879
      %v6885 = vrot.slane %v6884, 4
      %v6887 = vshll.u32 %v6632, 16
      %v6889 = vrot.slane %v6887, 5
      %v6890 = vsel %vm811, %v6885, %v6889
      %v6892 = vshrl.u32 %v6633, 16
      %v6894 = vrot.slane %v6892, 4
      %v6895 = vshll.u32 %v6633, 16
      %v6897 = vrot.slane %v6895, 5
      %v6898 = vor.u32 %v6894, %v6897
      %v6899 = vrot.slane %v6898, 4
      %v6901 = vshll.u32 %v6634, 16
      %v6903 = vrot.slane %v6901, 5
      %v6904 = vsel %vm811, %v6899, %v6903
      %v6905 = vshrl.u32 %v6634, 16
      %v6907 = vrot.slane %v6905, 4
      %v6908 = vor.u32 %v6907, %v6903
      %v6909 = vrot.slane %v6908, 4
      %v6911 = vshll.u32 %v6635, 16
      %v6913 = vrot.slane %v6911, 5
      %v6914 = vsel %vm811, %v6909, %v6913
      %v6916 = vshrl.u32 %v6636, 16
      %v6918 = vrot.slane %v6916, 4
      %v6919 = vshll.u32 %v6636, 16
      %v6921 = vrot.slane %v6919, 5
      %v6922 = vor.u32 %v6918, %v6921
      %v6923 = vrot.slane %v6922, 4
      %v6925 = vshll.u32 %v6637, 16
      %v6927 = vrot.slane %v6925, 5
      %v6928 = vsel %vm811, %v6923, %v6927
      %v6929 = vshrl.u32 %v6637, 16
      %v6931 = vrot.slane %v6929, 4
      %v6932 = vor.u32 %v6931, %v6927
      %v6933 = vrot.slane %v6932, 4
      %v6935 = vshll.u32 %v6638, 16
      %v6937 = vrot.slane %v6935, 5
      %v6938 = vsel %vm811, %v6933, %v6937
      %v6940 = vshrl.u32 %v6639, 16
      %v6942 = vrot.slane %v6940, 4
      %v6943 = vshll.u32 %v6639, 16
      %v6945 = vrot.slane %v6943, 5
      %v6946 = vor.u32 %v6942, %v6945
      %v6947 = vrot.slane %v6946, 4
      %v6949 = vshll.u32 %v6640, 16
      %v6951 = vrot.slane %v6949, 5
      %v6952 = vsel %vm811, %v6947, %v6951
      %v6953 = vshrl.u32 %v6640, 16
      %v6955 = vrot.slane %v6953, 4
      %v6956 = vor.u32 %v6955, %v6951
      %v6957 = vrot.slane %v6956, 4
      %v6959 = vshll.u32 %v6641, 16
      %v6961 = vrot.slane %v6959, 5
      %v6962 = vsel %vm811, %v6957, %v6961
      %v6964 = vshrl.u32 %v6642, 16
      %v6966 = vrot.slane %v6964, 4
      %v6967 = vshll.u32 %v6642, 16
      %v6969 = vrot.slane %v6967, 5
      %v6970 = vor.u32 %v6966, %v6969
      %v6971 = vrot.slane %v6970, 4
      %v6973 = vshll.u32 %v6643, 16
      %v6975 = vrot.slane %v6973, 5
      %v6976 = vsel %vm811, %v6971, %v6975
      %v6977 = vshrl.u32 %v6643, 16
      %v6979 = vrot.slane %v6977, 4
      %v6980 = vor.u32 %v6979, %v6975
      %v6981 = vrot.slane %v6980, 4
      %v6983 = vshll.u32 %v6644, 16
      %v6985 = vrot.slane %v6983, 5
      %v6986 = vsel %vm811, %v6981, %v6985
      %v6988 = vshrl.u32 %v6645, 16
      %v6990 = vrot.slane %v6988, 4
      %v6991 = vshll.u32 %v6645, 16
      %v6993 = vrot.slane %v6991, 5
      %v6994 = vor.u32 %v6990, %v6993
      %v6995 = vrot.slane %v6994, 4
      %v6997 = vshll.u32 %v6646, 16
      %v6999 = vrot.slane %v6997, 5
      %v7000 = vsel %vm811, %v6995, %v6999
      %v7001 = vshrl.u32 %v6646, 16
      %v7003 = vrot.slane %v7001, 4
      %v7004 = vor.u32 %v7003, %v6999
      %v7005 = vrot.slane %v7004, 4
      %v7007 = vshll.u32 %v6647, 16
      %v7009 = vrot.slane %v7007, 5
      %v7010 = vsel %vm811, %v7005, %v7009
      %v7012 = vshrl.u32 %v6648, 16
      %v7014 = vrot.slane %v7012, 4
      %v7015 = vshll.u32 %v6648, 16
      %v7017 = vrot.slane %v7015, 5
      %v7018 = vor.u32 %v7014, %v7017
      %v7019 = vrot.slane %v7018, 4
      %v7021 = vshll.u32 %v6649, 16
      %v7023 = vrot.slane %v7021, 5
      %v7024 = vsel %vm811, %v7019, %v7023
      %v7025 = vshrl.u32 %v6649, 16
      %v7027 = vrot.slane %v7025, 4
      %v7028 = vor.u32 %v7027, %v7023
      %v7029 = vrot.slane %v7028, 4
      %v7031 = vshll.u32 %v6650, 16
      %v7033 = vrot.slane %v7031, 5
      %v7034 = vsel %vm811, %v7029, %v7033
      %s7035 = scalar_lea.vmem %s2, 56
      %v7036 = vld [vmem:[%s7035] sm:$0xf]
      %v7037 = vld [vmem:[%s7035 + $0x4] sm:$0xf]
      %v7038 = vunpack.c.l.b16 %v6232
      %v7039 = vunpack.c.l.b16 %v6242
      %v7040 = vunpack.c.l.b16 %v6256
      %v7041 = vunpack.c.l.b16 %v6266
      %v7042 = vunpack.c.l.b16 %v6280
      %v7043 = vunpack.c.l.b16 %v6290
      %v7044 = vunpack.c.l.b16 %v6304
      %v7045 = vunpack.c.l.b16 %v6314
      %v7046 = vunpack.c.l.b16 %v6328
      %v7047 = vunpack.c.l.b16 %v6338
      %v7048 = vunpack.c.l.b16 %v6352
      %v7049 = vunpack.c.l.b16 %v6362
      %v7050 = vunpack.c.l.b16 %v6376
      %v7051 = vunpack.c.l.b16 %v6386
      %v7052 = vunpack.c.l.b16 %v6400
      %v7053 = vunpack.c.l.b16 %v6410
      %v7054 = vunpack.c.l.b16 %v6424
      %v7055 = vunpack.c.l.b16 %v6434
      %v7056 = vunpack.c.l.b16 %v6448
      %v7057 = vunpack.c.l.b16 %v6458
      %v7058 = vunpack.c.l.b16 %v6472
      %v7059 = vunpack.c.l.b16 %v6482
      %v7060 = vunpack.c.l.b16 %v6496
      %v7061 = vunpack.c.l.b16 %v6506
      %v7062 = vunpack.c.l.b16 %v6520
      %v7063 = vunpack.c.l.b16 %v6530
      %v7064 = vunpack.c.l.b16 %v6544
      %v7065 = vunpack.c.l.b16 %v6554
      %v7066 = vunpack.c.l.b16 %v6568
      %v7067 = vunpack.c.l.b16 %v6578
      %v7068 = vunpack.c.l.b16 %v6592
      %v7069 = vunpack.c.l.b16 %v6602
      %v7070 = vpack.c.b16 %v7039, %v7038
      %v7071 = vpack.c.b16 %v7041, %v7040
      %v7072 = vpack.c.b16 %v7043, %v7042
      %v7073 = vpack.c.b16 %v7045, %v7044
      %v7074 = vpack.c.b16 %v7047, %v7046
      %v7075 = vpack.c.b16 %v7049, %v7048
      %v7076 = vpack.c.b16 %v7051, %v7050
      %v7077 = vpack.c.b16 %v7053, %v7052
      %v7078 = vpack.c.b16 %v7055, %v7054
      %v7079 = vpack.c.b16 %v7057, %v7056
      %v7080 = vpack.c.b16 %v7059, %v7058
      %v7081 = vpack.c.b16 %v7061, %v7060
      %v7082 = vpack.c.b16 %v7063, %v7062
      %v7083 = vpack.c.b16 %v7065, %v7064
      %v7084 = vpack.c.b16 %v7067, %v7066
      %v7085 = vpack.c.b16 %v7069, %v7068
      %v7088 = vunpack.c.l.b16 %v7036
      %v7089 = vunpack.c.l.b16 %v7037
      %v7090 = vpack.c.b16 %v7089, %v7088
      %v7093 = vsel %vm400, %v7070, 0
      %v7096 = vsel %vm400, %v7071, 0
      %v7099 = vsel %vm400, %v7072, 0
      %v7102 = vsel %vm400, %v7073, 0
      %v7105 = vsel %vm400, %v7074, 0
      %v7108 = vsel %vm400, %v7075, 0
      %v7111 = vsel %vm400, %v7076, 0
      %v7114 = vsel %vm400, %v7077, 0
      %v7117 = vsel %vm400, %v7078, 0
      %v7120 = vsel %vm400, %v7079, 0
      %v7123 = vsel %vm400, %v7080, 0
      %v7126 = vsel %vm400, %v7081, 0
      %v7129 = vsel %vm400, %v7082, 0
      %v7132 = vsel %vm400, %v7083, 0
      %v7135 = vsel %vm400, %v7084, 0
      %v7138 = vsel %vm400, %v7085, 0
      %7140 = vmatpush.bf16.msra.mxu0 0
      %7141 = vmatpush.bf16.msra.mxu0 0
      %7142 = vmatpush.bf16.msra.mxu0 0
      %7143 = vmatpush.bf16.msra.mxu0 0
      %7144 = vmatpush.bf16.msra.mxu0 0
      %7145 = vmatpush.bf16.msra.mxu0 0
      %7146 = vmatpush.bf16.msra.mxu0 0
      %7147 = vmatpush.bf16.msra.mxu0 %v7090
      %7148 = vmatmul.bf16.gmra.mxu0 %v7093
      %v7149 = vpop.f32.mrf.mxu0
      %v7150 = vadd.f32 0.0, %v7149
      %v7151 = vpop.f32.mrf.mxu0
      %v7152 = vadd.f32 0.0, %v7151
      %7153 = vmatmul.bf16.gmra.mxu0 %v7096
      %v7154 = vpop.f32.mrf.mxu0
      %v7155 = vadd.f32 0.0, %v7154
      %v7156 = vpop.f32.mrf.mxu0
      %v7157 = vadd.f32 0.0, %v7156
      %7158 = vmatmul.bf16.gmra.mxu0 %v7099
      %v7159 = vpop.f32.mrf.mxu0
      %v7160 = vadd.f32 0.0, %v7159
      %v7161 = vpop.f32.mrf.mxu0
      %v7162 = vadd.f32 0.0, %v7161
      %7163 = vmatmul.bf16.gmra.mxu0 %v7102
      %v7164 = vpop.f32.mrf.mxu0
      %v7165 = vadd.f32 0.0, %v7164
      %v7166 = vpop.f32.mrf.mxu0
      %v7167 = vadd.f32 0.0, %v7166
      %7168 = vmatmul.bf16.gmra.mxu0 %v7105
      %v7169 = vpop.f32.mrf.mxu0
      %v7170 = vadd.f32 0.0, %v7169
      %v7171 = vpop.f32.mrf.mxu0
      %v7172 = vadd.f32 0.0, %v7171
      %7173 = vmatmul.bf16.gmra.mxu0 %v7108
      %v7174 = vpop.f32.mrf.mxu0
      %v7175 = vadd.f32 0.0, %v7174
      %v7176 = vpop.f32.mrf.mxu0
      %v7177 = vadd.f32 0.0, %v7176
      %7178 = vmatmul.bf16.gmra.mxu0 %v7111
      %v7179 = vpop.f32.mrf.mxu0
      %v7180 = vadd.f32 0.0, %v7179
      %v7181 = vpop.f32.mrf.mxu0
      %v7182 = vadd.f32 0.0, %v7181
      %7183 = vmatmul.bf16.gmra.mxu0 %v7114
      %v7184 = vpop.f32.mrf.mxu0
      %v7185 = vadd.f32 0.0, %v7184
      %v7186 = vpop.f32.mrf.mxu0
      %v7187 = vadd.f32 0.0, %v7186
      %7188 = vmatmul.bf16.gmra.mxu0 %v7117
      %v7189 = vpop.f32.mrf.mxu0
      %v7190 = vadd.f32 0.0, %v7189
      %v7191 = vpop.f32.mrf.mxu0
      %v7192 = vadd.f32 0.0, %v7191
      %7193 = vmatmul.bf16.gmra.mxu0 %v7120
      %v7194 = vpop.f32.mrf.mxu0
      %v7195 = vadd.f32 0.0, %v7194
      %v7196 = vpop.f32.mrf.mxu0
      %v7197 = vadd.f32 0.0, %v7196
      %7198 = vmatmul.bf16.gmra.mxu0 %v7123
      %v7199 = vpop.f32.mrf.mxu0
      %v7200 = vadd.f32 0.0, %v7199
      %v7201 = vpop.f32.mrf.mxu0
      %v7202 = vadd.f32 0.0, %v7201
      %7203 = vmatmul.bf16.gmra.mxu0 %v7126
      %v7204 = vpop.f32.mrf.mxu0
      %v7205 = vadd.f32 0.0, %v7204
      %v7206 = vpop.f32.mrf.mxu0
      %v7207 = vadd.f32 0.0, %v7206
      %7208 = vmatmul.bf16.gmra.mxu0 %v7129
      %v7209 = vpop.f32.mrf.mxu0
      %v7210 = vadd.f32 0.0, %v7209
      %v7211 = vpop.f32.mrf.mxu0
      %v7212 = vadd.f32 0.0, %v7211
      %7213 = vmatmul.bf16.gmra.mxu0 %v7132
      %v7214 = vpop.f32.mrf.mxu0
      %v7215 = vadd.f32 0.0, %v7214
      %v7216 = vpop.f32.mrf.mxu0
      %v7217 = vadd.f32 0.0, %v7216
      %7218 = vmatmul.bf16.gmra.mxu0 %v7135
      %v7219 = vpop.f32.mrf.mxu0
      %v7220 = vadd.f32 0.0, %v7219
      %v7221 = vpop.f32.mrf.mxu0
      %v7222 = vadd.f32 0.0, %v7221
      %7223 = vmatmul.bf16.gmra.mxu0 %v7138
      %v7224 = vpop.f32.mrf.mxu0
      %v7225 = vadd.f32 0.0, %v7224
      %v7226 = vpop.f32.mrf.mxu0
      %v7227 = vadd.f32 0.0, %v7226
      %7228 = vdwg.mxu0
      %v7229 = vadd.f32 %v6139, %v7150
      %v7230 = vadd.f32 %v6140, %v7152
      %v7231 = vadd.f32 %v6141, %v7155
      %v7232 = vadd.f32 %v6142, %v7157
      %v7233 = vadd.f32 %v6143, %v7160
      %v7234 = vadd.f32 %v6144, %v7162
      %v7235 = vadd.f32 %v6145, %v7165
      %v7236 = vadd.f32 %v6146, %v7167
      %v7237 = vadd.f32 %v6147, %v7170
      %v7238 = vadd.f32 %v6148, %v7172
      %v7239 = vadd.f32 %v6149, %v7175
      %v7240 = vadd.f32 %v6150, %v7177
      %v7241 = vadd.f32 %v6151, %v7180
      %v7242 = vadd.f32 %v6152, %v7182
      %v7243 = vadd.f32 %v6153, %v7185
      %v7244 = vadd.f32 %v6154, %v7187
      %v7245 = vadd.f32 %v6155, %v7190
      %v7246 = vadd.f32 %v6156, %v7192
      %v7247 = vadd.f32 %v6157, %v7195
      %v7248 = vadd.f32 %v6158, %v7197
      %v7249 = vadd.f32 %v6159, %v7200
      %v7250 = vadd.f32 %v6160, %v7202
      %v7251 = vadd.f32 %v6161, %v7205
      %v7252 = vadd.f32 %v6162, %v7207
      %v7253 = vadd.f32 %v6163, %v7210
      %v7254 = vadd.f32 %v6164, %v7212
      %v7255 = vadd.f32 %v6165, %v7215
      %v7256 = vadd.f32 %v6166, %v7217
      %v7257 = vadd.f32 %v6167, %v7220
      %v7258 = vadd.f32 %v6168, %v7222
      %v7259 = vadd.f32 %v6169, %v7225
      %v7260 = vadd.f32 %v6170, %v7227
      %s7261 = scalar_lea.vmem %s3, 56
      %v7262 = vld [vmem:[%s7261] sm:$0xf]
      %v7263 = vld [vmem:[%s7261 + $0x4] sm:$0xf]
      %v7264 = vunpack.c.l.b16 %v6664
      %v7265 = vunpack.c.l.b16 %v6674
      %v7266 = vunpack.c.l.b16 %v6688
      %v7267 = vunpack.c.l.b16 %v6698
      %v7268 = vunpack.c.l.b16 %v6712
      %v7269 = vunpack.c.l.b16 %v6722
      %v7270 = vunpack.c.l.b16 %v6736
      %v7271 = vunpack.c.l.b16 %v6746
      %v7272 = vunpack.c.l.b16 %v6760
      %v7273 = vunpack.c.l.b16 %v6770
      %v7274 = vunpack.c.l.b16 %v6784
      %v7275 = vunpack.c.l.b16 %v6794
      %v7276 = vunpack.c.l.b16 %v6808
      %v7277 = vunpack.c.l.b16 %v6818
      %v7278 = vunpack.c.l.b16 %v6832
      %v7279 = vunpack.c.l.b16 %v6842
      %v7280 = vunpack.c.l.b16 %v6856
      %v7281 = vunpack.c.l.b16 %v6866
      %v7282 = vunpack.c.l.b16 %v6880
      %v7283 = vunpack.c.l.b16 %v6890
      %v7284 = vunpack.c.l.b16 %v6904
      %v7285 = vunpack.c.l.b16 %v6914
      %v7286 = vunpack.c.l.b16 %v6928
      %v7287 = vunpack.c.l.b16 %v6938
      %v7288 = vunpack.c.l.b16 %v6952
      %v7289 = vunpack.c.l.b16 %v6962
      %v7290 = vunpack.c.l.b16 %v6976
      %v7291 = vunpack.c.l.b16 %v6986
      %v7292 = vunpack.c.l.b16 %v7000
      %v7293 = vunpack.c.l.b16 %v7010
      %v7294 = vunpack.c.l.b16 %v7024
      %v7295 = vunpack.c.l.b16 %v7034
      %v7296 = vpack.c.b16 %v7265, %v7264
      %v7297 = vpack.c.b16 %v7267, %v7266
      %v7298 = vpack.c.b16 %v7269, %v7268
      %v7299 = vpack.c.b16 %v7271, %v7270
      %v7300 = vpack.c.b16 %v7273, %v7272
      %v7301 = vpack.c.b16 %v7275, %v7274
      %v7302 = vpack.c.b16 %v7277, %v7276
      %v7303 = vpack.c.b16 %v7279, %v7278
      %v7304 = vpack.c.b16 %v7281, %v7280
      %v7305 = vpack.c.b16 %v7283, %v7282
      %v7306 = vpack.c.b16 %v7285, %v7284
      %v7307 = vpack.c.b16 %v7287, %v7286
      %v7308 = vpack.c.b16 %v7289, %v7288
      %v7309 = vpack.c.b16 %v7291, %v7290
      %v7310 = vpack.c.b16 %v7293, %v7292
      %v7311 = vpack.c.b16 %v7295, %v7294
      %v7314 = vunpack.c.l.b16 %v7262
      %v7315 = vunpack.c.l.b16 %v7263
      %v7316 = vpack.c.b16 %v7315, %v7314
      %v7319 = vsel %vm400, %v7296, 0
      %v7322 = vsel %vm400, %v7297, 0
      %v7325 = vsel %vm400, %v7298, 0
      %v7328 = vsel %vm400, %v7299, 0
      %v7331 = vsel %vm400, %v7300, 0
      %v7334 = vsel %vm400, %v7301, 0
      %v7337 = vsel %vm400, %v7302, 0
      %v7340 = vsel %vm400, %v7303, 0
      %v7343 = vsel %vm400, %v7304, 0
      %v7346 = vsel %vm400, %v7305, 0
      %v7349 = vsel %vm400, %v7306, 0
      %v7352 = vsel %vm400, %v7307, 0
      %v7355 = vsel %vm400, %v7308, 0
      %v7358 = vsel %vm400, %v7309, 0
      %v7361 = vsel %vm400, %v7310, 0
      %v7364 = vsel %vm400, %v7311, 0
      %7366 = vmatpush.bf16.msra.mxu0 0
      %7367 = vmatpush.bf16.msra.mxu0 0
      %7368 = vmatpush.bf16.msra.mxu0 0
      %7369 = vmatpush.bf16.msra.mxu0 0
      %7370 = vmatpush.bf16.msra.mxu0 0
      %7371 = vmatpush.bf16.msra.mxu0 0
      %7372 = vmatpush.bf16.msra.mxu0 0
      %7373 = vmatpush.bf16.msra.mxu0 %v7316
      %7374 = vmatmul.bf16.gmra.mxu0 %v7319
      %v7375 = vpop.f32.mrf.mxu0
      %v7376 = vadd.f32 0.0, %v7375
      %v7377 = vpop.f32.mrf.mxu0
      %v7378 = vadd.f32 0.0, %v7377
      %7379 = vmatmul.bf16.gmra.mxu0 %v7322
      %v7380 = vpop.f32.mrf.mxu0
      %v7381 = vadd.f32 0.0, %v7380
      %v7382 = vpop.f32.mrf.mxu0
      %v7383 = vadd.f32 0.0, %v7382
      %7384 = vmatmul.bf16.gmra.mxu0 %v7325
      %v7385 = vpop.f32.mrf.mxu0
      %v7386 = vadd.f32 0.0, %v7385
      %v7387 = vpop.f32.mrf.mxu0
      %v7388 = vadd.f32 0.0, %v7387
      %7389 = vmatmul.bf16.gmra.mxu0 %v7328
      %v7390 = vpop.f32.mrf.mxu0
      %v7391 = vadd.f32 0.0, %v7390
      %v7392 = vpop.f32.mrf.mxu0
      %v7393 = vadd.f32 0.0, %v7392
      %7394 = vmatmul.bf16.gmra.mxu0 %v7331
      %v7395 = vpop.f32.mrf.mxu0
      %v7396 = vadd.f32 0.0, %v7395
      %v7397 = vpop.f32.mrf.mxu0
      %v7398 = vadd.f32 0.0, %v7397
      %7399 = vmatmul.bf16.gmra.mxu0 %v7334
      %v7400 = vpop.f32.mrf.mxu0
      %v7401 = vadd.f32 0.0, %v7400
      %v7402 = vpop.f32.mrf.mxu0
      %v7403 = vadd.f32 0.0, %v7402
      %7404 = vmatmul.bf16.gmra.mxu0 %v7337
      %v7405 = vpop.f32.mrf.mxu0
      %v7406 = vadd.f32 0.0, %v7405
      %v7407 = vpop.f32.mrf.mxu0
      %v7408 = vadd.f32 0.0, %v7407
      %7409 = vmatmul.bf16.gmra.mxu0 %v7340
      %v7410 = vpop.f32.mrf.mxu0
      %v7411 = vadd.f32 0.0, %v7410
      %v7412 = vpop.f32.mrf.mxu0
      %v7413 = vadd.f32 0.0, %v7412
      %7414 = vmatmul.bf16.gmra.mxu0 %v7343
      %v7415 = vpop.f32.mrf.mxu0
      %v7416 = vadd.f32 0.0, %v7415
      %v7417 = vpop.f32.mrf.mxu0
      %v7418 = vadd.f32 0.0, %v7417
      %7419 = vmatmul.bf16.gmra.mxu0 %v7346
      %v7420 = vpop.f32.mrf.mxu0
      %v7421 = vadd.f32 0.0, %v7420
      %v7422 = vpop.f32.mrf.mxu0
      %v7423 = vadd.f32 0.0, %v7422
      %7424 = vmatmul.bf16.gmra.mxu0 %v7349
      %v7425 = vpop.f32.mrf.mxu0
      %v7426 = vadd.f32 0.0, %v7425
      %v7427 = vpop.f32.mrf.mxu0
      %v7428 = vadd.f32 0.0, %v7427
      %7429 = vmatmul.bf16.gmra.mxu0 %v7352
      %v7430 = vpop.f32.mrf.mxu0
      %v7431 = vadd.f32 0.0, %v7430
      %v7432 = vpop.f32.mrf.mxu0
      %v7433 = vadd.f32 0.0, %v7432
      %7434 = vmatmul.bf16.gmra.mxu0 %v7355
      %v7435 = vpop.f32.mrf.mxu0
      %v7436 = vadd.f32 0.0, %v7435
      %v7437 = vpop.f32.mrf.mxu0
      %v7438 = vadd.f32 0.0, %v7437
      %7439 = vmatmul.bf16.gmra.mxu0 %v7358
      %v7440 = vpop.f32.mrf.mxu0
      %v7441 = vadd.f32 0.0, %v7440
      %v7442 = vpop.f32.mrf.mxu0
      %v7443 = vadd.f32 0.0, %v7442
      %7444 = vmatmul.bf16.gmra.mxu0 %v7361
      %v7445 = vpop.f32.mrf.mxu0
      %v7446 = vadd.f32 0.0, %v7445
      %v7447 = vpop.f32.mrf.mxu0
      %v7448 = vadd.f32 0.0, %v7447
      %7449 = vmatmul.bf16.gmra.mxu0 %v7364
      %v7450 = vpop.f32.mrf.mxu0
      %v7451 = vadd.f32 0.0, %v7450
      %v7452 = vpop.f32.mrf.mxu0
      %v7453 = vadd.f32 0.0, %v7452
      %7454 = vdwg.mxu0
      %v7455 = vadd.f32 %v7229, %v7376
      %v7456 = vadd.f32 %v7230, %v7378
      %v7457 = vadd.f32 %v7231, %v7381
      %v7458 = vadd.f32 %v7232, %v7383
      %v7459 = vadd.f32 %v7233, %v7386
      %v7460 = vadd.f32 %v7234, %v7388
      %v7461 = vadd.f32 %v7235, %v7391
      %v7462 = vadd.f32 %v7236, %v7393
      %v7463 = vadd.f32 %v7237, %v7396
      %v7464 = vadd.f32 %v7238, %v7398
      %v7465 = vadd.f32 %v7239, %v7401
      %v7466 = vadd.f32 %v7240, %v7403
      %v7467 = vadd.f32 %v7241, %v7406
      %v7468 = vadd.f32 %v7242, %v7408
      %v7469 = vadd.f32 %v7243, %v7411
      %v7470 = vadd.f32 %v7244, %v7413
      %v7471 = vadd.f32 %v7245, %v7416
      %v7472 = vadd.f32 %v7246, %v7418
      %v7473 = vadd.f32 %v7247, %v7421
      %v7474 = vadd.f32 %v7248, %v7423
      %v7475 = vadd.f32 %v7249, %v7426
      %v7476 = vadd.f32 %v7250, %v7428
      %v7477 = vadd.f32 %v7251, %v7431
      %v7478 = vadd.f32 %v7252, %v7433
      %v7479 = vadd.f32 %v7253, %v7436
      %v7480 = vadd.f32 %v7254, %v7438
      %v7481 = vadd.f32 %v7255, %v7441
      %v7482 = vadd.f32 %v7256, %v7443
      %v7483 = vadd.f32 %v7257, %v7446
      %v7484 = vadd.f32 %v7258, %v7448
      %v7485 = vadd.f32 %v7259, %v7451
      %v7486 = vadd.f32 %v7260, %v7453
      %v7487 = vld [vmem:[%s5589] sm:$0xe]
      %v7488 = vld [vmem:[%s5589 + $0xc] sm:$0xe]
      %v7489 = vld [vmem:[%s5589 + $0x18] sm:$0xe]
      %v7490 = vld [vmem:[%s5589 + $0x24] sm:$0xe]
      %v7491 = vld [vmem:[%s5589 + $0x30] sm:$0xe]
      %v7492 = vld [vmem:[%s5589 + $0x3c] sm:$0xe]
      %v7493 = vld [vmem:[%s5589 + $0x48] sm:$0xe]
      %v7494 = vld [vmem:[%s5589 + $0x54] sm:$0xe]
      %v7495 = vld [vmem:[%s5589 + $0x60] sm:$0xe]
      %v7496 = vld [vmem:[%s5589 + $0x6c] sm:$0xe]
      %v7497 = vld [vmem:[%s5589 + $0x78] sm:$0xe]
      %v7498 = vld [vmem:[%s5589 + $0x84] sm:$0xe]
      %v7499 = vld [vmem:[%s5589 + $0x90] sm:$0xe]
      %v7500 = vld [vmem:[%s5589 + $0x9c] sm:$0xe]
      %v7501 = vld [vmem:[%s5589 + $0xa8] sm:$0xe]
      %v7502 = vld [vmem:[%s5589 + $0xb4] sm:$0xe]
      %v7551 = vrot.slane %v7487, 5
      %v7552 = vrot.slane %v7551, 4
      %v7553 = vrot.slane %v6172, 5
      %v7554 = vsel %vm2146, %v7552, %v7553
      %v7555 = vrot.slane %v7553, 4
      %v7556 = vrot.slane %v6173, 5
      %v7557 = vsel %vm2146, %v7555, %v7556
      %v7558 = vrot.slane %v7488, 5
      %v7559 = vrot.slane %v7558, 4
      %v7560 = vrot.slane %v6175, 5
      %v7561 = vsel %vm2146, %v7559, %v7560
      %v7562 = vrot.slane %v7560, 4
      %v7563 = vrot.slane %v6176, 5
      %v7564 = vsel %vm2146, %v7562, %v7563
      %v7565 = vrot.slane %v7489, 5
      %v7566 = vrot.slane %v7565, 4
      %v7567 = vrot.slane %v6178, 5
      %v7568 = vsel %vm2146, %v7566, %v7567
      %v7569 = vrot.slane %v7567, 4
      %v7570 = vrot.slane %v6179, 5
      %v7571 = vsel %vm2146, %v7569, %v7570
      %v7572 = vrot.slane %v7490, 5
      %v7573 = vrot.slane %v7572, 4
      %v7574 = vrot.slane %v6181, 5
      %v7575 = vsel %vm2146, %v7573, %v7574
      %v7576 = vrot.slane %v7574, 4
      %v7577 = vrot.slane %v6182, 5
      %v7578 = vsel %vm2146, %v7576, %v7577
      %v7579 = vrot.slane %v7491, 5
      %v7580 = vrot.slane %v7579, 4
      %v7581 = vrot.slane %v6184, 5
      %v7582 = vsel %vm2146, %v7580, %v7581
      %v7583 = vrot.slane %v7581, 4
      %v7584 = vrot.slane %v6185, 5
      %v7585 = vsel %vm2146, %v7583, %v7584
      %v7586 = vrot.slane %v7492, 5
      %v7587 = vrot.slane %v7586, 4
      %v7588 = vrot.slane %v6187, 5
      %v7589 = vsel %vm2146, %v7587, %v7588
      %v7590 = vrot.slane %v7588, 4
      %v7591 = vrot.slane %v6188, 5
      %v7592 = vsel %vm2146, %v7590, %v7591
      %v7593 = vrot.slane %v7493, 5
      %v7594 = vrot.slane %v7593, 4
      %v7595 = vrot.slane %v6190, 5
      %v7596 = vsel %vm2146, %v7594, %v7595
      %v7597 = vrot.slane %v7595, 4
      %v7598 = vrot.slane %v6191, 5
      %v7599 = vsel %vm2146, %v7597, %v7598
      %v7600 = vrot.slane %v7494, 5
      %v7601 = vrot.slane %v7600, 4
      %v7602 = vrot.slane %v6193, 5
      %v7603 = vsel %vm2146, %v7601, %v7602
      %v7604 = vrot.slane %v7602, 4
      %v7605 = vrot.slane %v6194, 5
      %v7606 = vsel %vm2146, %v7604, %v7605
      %v7607 = vrot.slane %v7495, 5
      %v7608 = vrot.slane %v7607, 4
      %v7609 = vrot.slane %v6196, 5
      %v7610 = vsel %vm2146, %v7608, %v7609
      %v7611 = vrot.slane %v7609, 4
      %v7612 = vrot.slane %v6197, 5
      %v7613 = vsel %vm2146, %v7611, %v7612
      %v7614 = vrot.slane %v7496, 5
      %v7615 = vrot.slane %v7614, 4
      %v7616 = vrot.slane %v6199, 5
      %v7617 = vsel %vm2146, %v7615, %v7616
      %v7618 = vrot.slane %v7616, 4
      %v7619 = vrot.slane %v6200, 5
      %v7620 = vsel %vm2146, %v7618, %v7619
      %v7621 = vrot.slane %v7497, 5
      %v7622 = vrot.slane %v7621, 4
      %v7623 = vrot.slane %v6202, 5
      %v7624 = vsel %vm2146, %v7622, %v7623
      %v7625 = vrot.slane %v7623, 4
      %v7626 = vrot.slane %v6203, 5
      %v7627 = vsel %vm2146, %v7625, %v7626
      %v7628 = vrot.slane %v7498, 5
      %v7629 = vrot.slane %v7628, 4
      %v7630 = vrot.slane %v6205, 5
      %v7631 = vsel %vm2146, %v7629, %v7630
      %v7632 = vrot.slane %v7630, 4
      %v7633 = vrot.slane %v6206, 5
      %v7634 = vsel %vm2146, %v7632, %v7633
      %v7635 = vrot.slane %v7499, 5
      %v7636 = vrot.slane %v7635, 4
      %v7637 = vrot.slane %v6208, 5
      %v7638 = vsel %vm2146, %v7636, %v7637
      %v7639 = vrot.slane %v7637, 4
      %v7640 = vrot.slane %v6209, 5
      %v7641 = vsel %vm2146, %v7639, %v7640
      %v7642 = vrot.slane %v7500, 5
      %v7643 = vrot.slane %v7642, 4
      %v7644 = vrot.slane %v6211, 5
      %v7645 = vsel %vm2146, %v7643, %v7644
      %v7646 = vrot.slane %v7644, 4
      %v7647 = vrot.slane %v6212, 5
      %v7648 = vsel %vm2146, %v7646, %v7647
      %v7649 = vrot.slane %v7501, 5
      %v7650 = vrot.slane %v7649, 4
      %v7651 = vrot.slane %v6214, 5
      %v7652 = vsel %vm2146, %v7650, %v7651
      %v7653 = vrot.slane %v7651, 4
      %v7654 = vrot.slane %v6215, 5
      %v7655 = vsel %vm2146, %v7653, %v7654
      %v7656 = vrot.slane %v7502, 5
      %v7657 = vrot.slane %v7656, 4
      %v7658 = vrot.slane %v6217, 5
      %v7659 = vsel %vm2146, %v7657, %v7658
      %v7660 = vrot.slane %v7658, 4
      %v7661 = vrot.slane %v6218, 5
      %v7662 = vsel %vm2146, %v7660, %v7661
      %v7663 = vld [vmem:[%s5622] sm:$0xe]
      %v7664 = vld [vmem:[%s5622 + $0xc] sm:$0xe]
      %v7665 = vld [vmem:[%s5622 + $0x18] sm:$0xe]
      %v7666 = vld [vmem:[%s5622 + $0x24] sm:$0xe]
      %v7667 = vld [vmem:[%s5622 + $0x30] sm:$0xe]
      %v7668 = vld [vmem:[%s5622 + $0x3c] sm:$0xe]
      %v7669 = vld [vmem:[%s5622 + $0x48] sm:$0xe]
      %v7670 = vld [vmem:[%s5622 + $0x54] sm:$0xe]
      %v7671 = vld [vmem:[%s5622 + $0x60] sm:$0xe]
      %v7672 = vld [vmem:[%s5622 + $0x6c] sm:$0xe]
      %v7673 = vld [vmem:[%s5622 + $0x78] sm:$0xe]
      %v7674 = vld [vmem:[%s5622 + $0x84] sm:$0xe]
      %v7675 = vld [vmem:[%s5622 + $0x90] sm:$0xe]
      %v7676 = vld [vmem:[%s5622 + $0x9c] sm:$0xe]
      %v7677 = vld [vmem:[%s5622 + $0xa8] sm:$0xe]
      %v7678 = vld [vmem:[%s5622 + $0xb4] sm:$0xe]
      %v7727 = vrot.slane %v7663, 5
      %v7728 = vrot.slane %v7727, 4
      %v7729 = vrot.slane %v6604, 5
      %v7730 = vsel %vm2146, %v7728, %v7729
      %v7731 = vrot.slane %v7729, 4
      %v7732 = vrot.slane %v6605, 5
      %v7733 = vsel %vm2146, %v7731, %v7732
      %v7734 = vrot.slane %v7664, 5
      %v7735 = vrot.slane %v7734, 4
      %v7736 = vrot.slane %v6607, 5
      %v7737 = vsel %vm2146, %v7735, %v7736
      %v7738 = vrot.slane %v7736, 4
      %v7739 = vrot.slane %v6608, 5
      %v7740 = vsel %vm2146, %v7738, %v7739
      %v7741 = vrot.slane %v7665, 5
      %v7742 = vrot.slane %v7741, 4
      %v7743 = vrot.slane %v6610, 5
      %v7744 = vsel %vm2146, %v7742, %v7743
      %v7745 = vrot.slane %v7743, 4
      %v7746 = vrot.slane %v6611, 5
      %v7747 = vsel %vm2146, %v7745, %v7746
      %v7748 = vrot.slane %v7666, 5
      %v7749 = vrot.slane %v7748, 4
      %v7750 = vrot.slane %v6613, 5
      %v7751 = vsel %vm2146, %v7749, %v7750
      %v7752 = vrot.slane %v7750, 4
      %v7753 = vrot.slane %v6614, 5
      %v7754 = vsel %vm2146, %v7752, %v7753
      %v7755 = vrot.slane %v7667, 5
      %v7756 = vrot.slane %v7755, 4
      %v7757 = vrot.slane %v6616, 5
      %v7758 = vsel %vm2146, %v7756, %v7757
      %v7759 = vrot.slane %v7757, 4
      %v7760 = vrot.slane %v6617, 5
      %v7761 = vsel %vm2146, %v7759, %v7760
      %v7762 = vrot.slane %v7668, 5
      %v7763 = vrot.slane %v7762, 4
      %v7764 = vrot.slane %v6619, 5
      %v7765 = vsel %vm2146, %v7763, %v7764
      %v7766 = vrot.slane %v7764, 4
      %v7767 = vrot.slane %v6620, 5
      %v7768 = vsel %vm2146, %v7766, %v7767
      %v7769 = vrot.slane %v7669, 5
      %v7770 = vrot.slane %v7769, 4
      %v7771 = vrot.slane %v6622, 5
      %v7772 = vsel %vm2146, %v7770, %v7771
      %v7773 = vrot.slane %v7771, 4
      %v7774 = vrot.slane %v6623, 5
      %v7775 = vsel %vm2146, %v7773, %v7774
      %v7776 = vrot.slane %v7670, 5
      %v7777 = vrot.slane %v7776, 4
      %v7778 = vrot.slane %v6625, 5
      %v7779 = vsel %vm2146, %v7777, %v7778
      %v7780 = vrot.slane %v7778, 4
      %v7781 = vrot.slane %v6626, 5
      %v7782 = vsel %vm2146, %v7780, %v7781
      %v7783 = vrot.slane %v7671, 5
      %v7784 = vrot.slane %v7783, 4
      %v7785 = vrot.slane %v6628, 5
      %v7786 = vsel %vm2146, %v7784, %v7785
      %v7787 = vrot.slane %v7785, 4
      %v7788 = vrot.slane %v6629, 5
      %v7789 = vsel %vm2146, %v7787, %v7788
      %v7790 = vrot.slane %v7672, 5
      %v7791 = vrot.slane %v7790, 4
      %v7792 = vrot.slane %v6631, 5
      %v7793 = vsel %vm2146, %v7791, %v7792
      %v7794 = vrot.slane %v7792, 4
      %v7795 = vrot.slane %v6632, 5
      %v7796 = vsel %vm2146, %v7794, %v7795
      %v7797 = vrot.slane %v7673, 5
      %v7798 = vrot.slane %v7797, 4
      %v7799 = vrot.slane %v6634, 5
      %v7800 = vsel %vm2146, %v7798, %v7799
      %v7801 = vrot.slane %v7799, 4
      %v7802 = vrot.slane %v6635, 5
      %v7803 = vsel %vm2146, %v7801, %v7802
      %v7804 = vrot.slane %v7674, 5
      %v7805 = vrot.slane %v7804, 4
      %v7806 = vrot.slane %v6637, 5
      %v7807 = vsel %vm2146, %v7805, %v7806
      %v7808 = vrot.slane %v7806, 4
      %v7809 = vrot.slane %v6638, 5
      %v7810 = vsel %vm2146, %v7808, %v7809
      %v7811 = vrot.slane %v7675, 5
      %v7812 = vrot.slane %v7811, 4
      %v7813 = vrot.slane %v6640, 5
      %v7814 = vsel %vm2146, %v7812, %v7813
      %v7815 = vrot.slane %v7813, 4
      %v7816 = vrot.slane %v6641, 5
      %v7817 = vsel %vm2146, %v7815, %v7816
      %v7818 = vrot.slane %v7676, 5
      %v7819 = vrot.slane %v7818, 4
      %v7820 = vrot.slane %v6643, 5
      %v7821 = vsel %vm2146, %v7819, %v7820
      %v7822 = vrot.slane %v7820, 4
      %v7823 = vrot.slane %v6644, 5
      %v7824 = vsel %vm2146, %v7822, %v7823
      %v7825 = vrot.slane %v7677, 5
      %v7826 = vrot.slane %v7825, 4
      %v7827 = vrot.slane %v6646, 5
      %v7828 = vsel %vm2146, %v7826, %v7827
      %v7829 = vrot.slane %v7827, 4
      %v7830 = vrot.slane %v6647, 5
      %v7831 = vsel %vm2146, %v7829, %v7830
      %v7832 = vrot.slane %v7678, 5
      %v7833 = vrot.slane %v7832, 4
      %v7834 = vrot.slane %v6649, 5
      %v7835 = vsel %vm2146, %v7833, %v7834
      %v7836 = vrot.slane %v7834, 4
      %v7837 = vrot.slane %v6650, 5
      %v7838 = vsel %vm2146, %v7836, %v7837
      %s7839 = scalar_lea.vmem %s2, 64
      %v7840 = vld [vmem:[%s7839] sm:$0xf]
      %v7841 = vld [vmem:[%s7839 + $0x4] sm:$0xf]
      %v7842 = vunpack.c.l.b16 %v7554
      %v7843 = vunpack.c.l.b16 %v7557
      %v7844 = vunpack.c.l.b16 %v7561
      %v7845 = vunpack.c.l.b16 %v7564
      %v7846 = vunpack.c.l.b16 %v7568
      %v7847 = vunpack.c.l.b16 %v7571
      %v7848 = vunpack.c.l.b16 %v7575
      %v7849 = vunpack.c.l.b16 %v7578
      %v7850 = vunpack.c.l.b16 %v7582
      %v7851 = vunpack.c.l.b16 %v7585
      %v7852 = vunpack.c.l.b16 %v7589
      %v7853 = vunpack.c.l.b16 %v7592
      %v7854 = vunpack.c.l.b16 %v7596
      %v7855 = vunpack.c.l.b16 %v7599
      %v7856 = vunpack.c.l.b16 %v7603
      %v7857 = vunpack.c.l.b16 %v7606
      %v7858 = vunpack.c.l.b16 %v7610
      %v7859 = vunpack.c.l.b16 %v7613
      %v7860 = vunpack.c.l.b16 %v7617
      %v7861 = vunpack.c.l.b16 %v7620
      %v7862 = vunpack.c.l.b16 %v7624
      %v7863 = vunpack.c.l.b16 %v7627
      %v7864 = vunpack.c.l.b16 %v7631
      %v7865 = vunpack.c.l.b16 %v7634
      %v7866 = vunpack.c.l.b16 %v7638
      %v7867 = vunpack.c.l.b16 %v7641
      %v7868 = vunpack.c.l.b16 %v7645
      %v7869 = vunpack.c.l.b16 %v7648
      %v7870 = vunpack.c.l.b16 %v7652
      %v7871 = vunpack.c.l.b16 %v7655
      %v7872 = vunpack.c.l.b16 %v7659
      %v7873 = vunpack.c.l.b16 %v7662
      %v7874 = vpack.c.b16 %v7843, %v7842
      %v7875 = vpack.c.b16 %v7845, %v7844
      %v7876 = vpack.c.b16 %v7847, %v7846
      %v7877 = vpack.c.b16 %v7849, %v7848
      %v7878 = vpack.c.b16 %v7851, %v7850
      %v7879 = vpack.c.b16 %v7853, %v7852
      %v7880 = vpack.c.b16 %v7855, %v7854
      %v7881 = vpack.c.b16 %v7857, %v7856
      %v7882 = vpack.c.b16 %v7859, %v7858
      %v7883 = vpack.c.b16 %v7861, %v7860
      %v7884 = vpack.c.b16 %v7863, %v7862
      %v7885 = vpack.c.b16 %v7865, %v7864
      %v7886 = vpack.c.b16 %v7867, %v7866
      %v7887 = vpack.c.b16 %v7869, %v7868
      %v7888 = vpack.c.b16 %v7871, %v7870
      %v7889 = vpack.c.b16 %v7873, %v7872
      %v7892 = vunpack.c.l.b16 %v7840
      %v7893 = vunpack.c.l.b16 %v7841
      %v7894 = vpack.c.b16 %v7893, %v7892
      %v7897 = vsel %vm400, %v7874, 0
      %v7900 = vsel %vm400, %v7875, 0
      %v7903 = vsel %vm400, %v7876, 0
      %v7906 = vsel %vm400, %v7877, 0
      %v7909 = vsel %vm400, %v7878, 0
      %v7912 = vsel %vm400, %v7879, 0
      %v7915 = vsel %vm400, %v7880, 0
      %v7918 = vsel %vm400, %v7881, 0
      %v7921 = vsel %vm400, %v7882, 0
      %v7924 = vsel %vm400, %v7883, 0
      %v7927 = vsel %vm400, %v7884, 0
      %v7930 = vsel %vm400, %v7885, 0
      %v7933 = vsel %vm400, %v7886, 0
      %v7936 = vsel %vm400, %v7887, 0
      %v7939 = vsel %vm400, %v7888, 0
      %v7942 = vsel %vm400, %v7889, 0
      %7944 = vmatpush.bf16.msra.mxu0 0
      %7945 = vmatpush.bf16.msra.mxu0 0
      %7946 = vmatpush.bf16.msra.mxu0 0
      %7947 = vmatpush.bf16.msra.mxu0 0
      %7948 = vmatpush.bf16.msra.mxu0 0
      %7949 = vmatpush.bf16.msra.mxu0 0
      %7950 = vmatpush.bf16.msra.mxu0 0
      %7951 = vmatpush.bf16.msra.mxu0 %v7894
      %7952 = vmatmul.bf16.gmra.mxu0 %v7897
      %v7953 = vpop.f32.mrf.mxu0
      %v7954 = vadd.f32 0.0, %v7953
      %v7955 = vpop.f32.mrf.mxu0
      %v7956 = vadd.f32 0.0, %v7955
      %7957 = vmatmul.bf16.gmra.mxu0 %v7900
      %v7958 = vpop.f32.mrf.mxu0
      %v7959 = vadd.f32 0.0, %v7958
      %v7960 = vpop.f32.mrf.mxu0
      %v7961 = vadd.f32 0.0, %v7960
      %7962 = vmatmul.bf16.gmra.mxu0 %v7903
      %v7963 = vpop.f32.mrf.mxu0
      %v7964 = vadd.f32 0.0, %v7963
      %v7965 = vpop.f32.mrf.mxu0
      %v7966 = vadd.f32 0.0, %v7965
      %7967 = vmatmul.bf16.gmra.mxu0 %v7906
      %v7968 = vpop.f32.mrf.mxu0
      %v7969 = vadd.f32 0.0, %v7968
      %v7970 = vpop.f32.mrf.mxu0
      %v7971 = vadd.f32 0.0, %v7970
      %7972 = vmatmul.bf16.gmra.mxu0 %v7909
      %v7973 = vpop.f32.mrf.mxu0
      %v7974 = vadd.f32 0.0, %v7973
      %v7975 = vpop.f32.mrf.mxu0
      %v7976 = vadd.f32 0.0, %v7975
      %7977 = vmatmul.bf16.gmra.mxu0 %v7912
      %v7978 = vpop.f32.mrf.mxu0
      %v7979 = vadd.f32 0.0, %v7978
      %v7980 = vpop.f32.mrf.mxu0
      %v7981 = vadd.f32 0.0, %v7980
      %7982 = vmatmul.bf16.gmra.mxu0 %v7915
      %v7983 = vpop.f32.mrf.mxu0
      %v7984 = vadd.f32 0.0, %v7983
      %v7985 = vpop.f32.mrf.mxu0
      %v7986 = vadd.f32 0.0, %v7985
      %7987 = vmatmul.bf16.gmra.mxu0 %v7918
      %v7988 = vpop.f32.mrf.mxu0
      %v7989 = vadd.f32 0.0, %v7988
      %v7990 = vpop.f32.mrf.mxu0
      %v7991 = vadd.f32 0.0, %v7990
      %7992 = vmatmul.bf16.gmra.mxu0 %v7921
      %v7993 = vpop.f32.mrf.mxu0
      %v7994 = vadd.f32 0.0, %v7993
      %v7995 = vpop.f32.mrf.mxu0
      %v7996 = vadd.f32 0.0, %v7995
      %7997 = vmatmul.bf16.gmra.mxu0 %v7924
      %v7998 = vpop.f32.mrf.mxu0
      %v7999 = vadd.f32 0.0, %v7998
      %v8000 = vpop.f32.mrf.mxu0
      %v8001 = vadd.f32 0.0, %v8000
      %8002 = vmatmul.bf16.gmra.mxu0 %v7927
      %v8003 = vpop.f32.mrf.mxu0
      %v8004 = vadd.f32 0.0, %v8003
      %v8005 = vpop.f32.mrf.mxu0
      %v8006 = vadd.f32 0.0, %v8005
      %8007 = vmatmul.bf16.gmra.mxu0 %v7930
      %v8008 = vpop.f32.mrf.mxu0
      %v8009 = vadd.f32 0.0, %v8008
      %v8010 = vpop.f32.mrf.mxu0
      %v8011 = vadd.f32 0.0, %v8010
      %8012 = vmatmul.bf16.gmra.mxu0 %v7933
      %v8013 = vpop.f32.mrf.mxu0
      %v8014 = vadd.f32 0.0, %v8013
      %v8015 = vpop.f32.mrf.mxu0
      %v8016 = vadd.f32 0.0, %v8015
      %8017 = vmatmul.bf16.gmra.mxu0 %v7936
      %v8018 = vpop.f32.mrf.mxu0
      %v8019 = vadd.f32 0.0, %v8018
      %v8020 = vpop.f32.mrf.mxu0
      %v8021 = vadd.f32 0.0, %v8020
      %8022 = vmatmul.bf16.gmra.mxu0 %v7939
      %v8023 = vpop.f32.mrf.mxu0
      %v8024 = vadd.f32 0.0, %v8023
      %v8025 = vpop.f32.mrf.mxu0
      %v8026 = vadd.f32 0.0, %v8025
      %8027 = vmatmul.bf16.gmra.mxu0 %v7942
      %v8028 = vpop.f32.mrf.mxu0
      %v8029 = vadd.f32 0.0, %v8028
      %v8030 = vpop.f32.mrf.mxu0
      %v8031 = vadd.f32 0.0, %v8030
      %8032 = vdwg.mxu0
      %v8033 = vadd.f32 %v7455, %v7954
      %v8034 = vadd.f32 %v7456, %v7956
      %v8035 = vadd.f32 %v7457, %v7959
      %v8036 = vadd.f32 %v7458, %v7961
      %v8037 = vadd.f32 %v7459, %v7964
      %v8038 = vadd.f32 %v7460, %v7966
      %v8039 = vadd.f32 %v7461, %v7969
      %v8040 = vadd.f32 %v7462, %v7971
      %v8041 = vadd.f32 %v7463, %v7974
      %v8042 = vadd.f32 %v7464, %v7976
      %v8043 = vadd.f32 %v7465, %v7979
      %v8044 = vadd.f32 %v7466, %v7981
      %v8045 = vadd.f32 %v7467, %v7984
      %v8046 = vadd.f32 %v7468, %v7986
      %v8047 = vadd.f32 %v7469, %v7989
      %v8048 = vadd.f32 %v7470, %v7991
      %v8049 = vadd.f32 %v7471, %v7994
      %v8050 = vadd.f32 %v7472, %v7996
      %v8051 = vadd.f32 %v7473, %v7999
      %v8052 = vadd.f32 %v7474, %v8001
      %v8053 = vadd.f32 %v7475, %v8004
      %v8054 = vadd.f32 %v7476, %v8006
      %v8055 = vadd.f32 %v7477, %v8009
      %v8056 = vadd.f32 %v7478, %v8011
      %v8057 = vadd.f32 %v7479, %v8014
      %v8058 = vadd.f32 %v7480, %v8016
      %v8059 = vadd.f32 %v7481, %v8019
      %v8060 = vadd.f32 %v7482, %v8021
      %v8061 = vadd.f32 %v7483, %v8024
      %v8062 = vadd.f32 %v7484, %v8026
      %v8063 = vadd.f32 %v7485, %v8029
      %v8064 = vadd.f32 %v7486, %v8031
      %s8065 = scalar_lea.vmem %s3, 64
      %v8066 = vld [vmem:[%s8065] sm:$0xf]
      %v8067 = vld [vmem:[%s8065 + $0x4] sm:$0xf]
      %v8068 = vunpack.c.l.b16 %v7730
      %v8069 = vunpack.c.l.b16 %v7733
      %v8070 = vunpack.c.l.b16 %v7737
      %v8071 = vunpack.c.l.b16 %v7740
      %v8072 = vunpack.c.l.b16 %v7744
      %v8073 = vunpack.c.l.b16 %v7747
      %v8074 = vunpack.c.l.b16 %v7751
      %v8075 = vunpack.c.l.b16 %v7754
      %v8076 = vunpack.c.l.b16 %v7758
      %v8077 = vunpack.c.l.b16 %v7761
      %v8078 = vunpack.c.l.b16 %v7765
      %v8079 = vunpack.c.l.b16 %v7768
      %v8080 = vunpack.c.l.b16 %v7772
      %v8081 = vunpack.c.l.b16 %v7775
      %v8082 = vunpack.c.l.b16 %v7779
      %v8083 = vunpack.c.l.b16 %v7782
      %v8084 = vunpack.c.l.b16 %v7786
      %v8085 = vunpack.c.l.b16 %v7789
      %v8086 = vunpack.c.l.b16 %v7793
      %v8087 = vunpack.c.l.b16 %v7796
      %v8088 = vunpack.c.l.b16 %v7800
      %v8089 = vunpack.c.l.b16 %v7803
      %v8090 = vunpack.c.l.b16 %v7807
      %v8091 = vunpack.c.l.b16 %v7810
      %v8092 = vunpack.c.l.b16 %v7814
      %v8093 = vunpack.c.l.b16 %v7817
      %v8094 = vunpack.c.l.b16 %v7821
      %v8095 = vunpack.c.l.b16 %v7824
      %v8096 = vunpack.c.l.b16 %v7828
      %v8097 = vunpack.c.l.b16 %v7831
      %v8098 = vunpack.c.l.b16 %v7835
      %v8099 = vunpack.c.l.b16 %v7838
      %v8100 = vpack.c.b16 %v8069, %v8068
      %v8101 = vpack.c.b16 %v8071, %v8070
      %v8102 = vpack.c.b16 %v8073, %v8072
      %v8103 = vpack.c.b16 %v8075, %v8074
      %v8104 = vpack.c.b16 %v8077, %v8076
      %v8105 = vpack.c.b16 %v8079, %v8078
      %v8106 = vpack.c.b16 %v8081, %v8080
      %v8107 = vpack.c.b16 %v8083, %v8082
      %v8108 = vpack.c.b16 %v8085, %v8084
      %v8109 = vpack.c.b16 %v8087, %v8086
      %v8110 = vpack.c.b16 %v8089, %v8088
      %v8111 = vpack.c.b16 %v8091, %v8090
      %v8112 = vpack.c.b16 %v8093, %v8092
      %v8113 = vpack.c.b16 %v8095, %v8094
      %v8114 = vpack.c.b16 %v8097, %v8096
      %v8115 = vpack.c.b16 %v8099, %v8098
      %v8118 = vunpack.c.l.b16 %v8066
      %v8119 = vunpack.c.l.b16 %v8067
      %v8120 = vpack.c.b16 %v8119, %v8118
      %v8123 = vsel %vm400, %v8100, 0
      %v8126 = vsel %vm400, %v8101, 0
      %v8129 = vsel %vm400, %v8102, 0
      %v8132 = vsel %vm400, %v8103, 0
      %v8135 = vsel %vm400, %v8104, 0
      %v8138 = vsel %vm400, %v8105, 0
      %v8141 = vsel %vm400, %v8106, 0
      %v8144 = vsel %vm400, %v8107, 0
      %v8147 = vsel %vm400, %v8108, 0
      %v8150 = vsel %vm400, %v8109, 0
      %v8153 = vsel %vm400, %v8110, 0
      %v8156 = vsel %vm400, %v8111, 0
      %v8159 = vsel %vm400, %v8112, 0
      %v8162 = vsel %vm400, %v8113, 0
      %v8165 = vsel %vm400, %v8114, 0
      %v8168 = vsel %vm400, %v8115, 0
      %8170 = vmatpush.bf16.msra.mxu0 0
      %8171 = vmatpush.bf16.msra.mxu0 0
      %8172 = vmatpush.bf16.msra.mxu0 0
      %8173 = vmatpush.bf16.msra.mxu0 0
      %8174 = vmatpush.bf16.msra.mxu0 0
      %8175 = vmatpush.bf16.msra.mxu0 0
      %8176 = vmatpush.bf16.msra.mxu0 0
      %8177 = vmatpush.bf16.msra.mxu0 %v8120
      %8178 = vmatmul.bf16.gmra.mxu0 %v8123
      %v8179 = vpop.f32.mrf.mxu0
      %v8180 = vadd.f32 0.0, %v8179
      %v8181 = vpop.f32.mrf.mxu0
      %v8182 = vadd.f32 0.0, %v8181
      %8183 = vmatmul.bf16.gmra.mxu0 %v8126
      %v8184 = vpop.f32.mrf.mxu0
      %v8185 = vadd.f32 0.0, %v8184
      %v8186 = vpop.f32.mrf.mxu0
      %v8187 = vadd.f32 0.0, %v8186
      %8188 = vmatmul.bf16.gmra.mxu0 %v8129
      %v8189 = vpop.f32.mrf.mxu0
      %v8190 = vadd.f32 0.0, %v8189
      %v8191 = vpop.f32.mrf.mxu0
      %v8192 = vadd.f32 0.0, %v8191
      %8193 = vmatmul.bf16.gmra.mxu0 %v8132
      %v8194 = vpop.f32.mrf.mxu0
      %v8195 = vadd.f32 0.0, %v8194
      %v8196 = vpop.f32.mrf.mxu0
      %v8197 = vadd.f32 0.0, %v8196
      %8198 = vmatmul.bf16.gmra.mxu0 %v8135
      %v8199 = vpop.f32.mrf.mxu0
      %v8200 = vadd.f32 0.0, %v8199
      %v8201 = vpop.f32.mrf.mxu0
      %v8202 = vadd.f32 0.0, %v8201
      %8203 = vmatmul.bf16.gmra.mxu0 %v8138
      %v8204 = vpop.f32.mrf.mxu0
      %v8205 = vadd.f32 0.0, %v8204
      %v8206 = vpop.f32.mrf.mxu0
      %v8207 = vadd.f32 0.0, %v8206
      %8208 = vmatmul.bf16.gmra.mxu0 %v8141
      %v8209 = vpop.f32.mrf.mxu0
      %v8210 = vadd.f32 0.0, %v8209
      %v8211 = vpop.f32.mrf.mxu0
      %v8212 = vadd.f32 0.0, %v8211
      %8213 = vmatmul.bf16.gmra.mxu0 %v8144
      %v8214 = vpop.f32.mrf.mxu0
      %v8215 = vadd.f32 0.0, %v8214
      %v8216 = vpop.f32.mrf.mxu0
      %v8217 = vadd.f32 0.0, %v8216
      %8218 = vmatmul.bf16.gmra.mxu0 %v8147
      %v8219 = vpop.f32.mrf.mxu0
      %v8220 = vadd.f32 0.0, %v8219
      %v8221 = vpop.f32.mrf.mxu0
      %v8222 = vadd.f32 0.0, %v8221
      %8223 = vmatmul.bf16.gmra.mxu0 %v8150
      %v8224 = vpop.f32.mrf.mxu0
      %v8225 = vadd.f32 0.0, %v8224
      %v8226 = vpop.f32.mrf.mxu0
      %v8227 = vadd.f32 0.0, %v8226
      %8228 = vmatmul.bf16.gmra.mxu0 %v8153
      %v8229 = vpop.f32.mrf.mxu0
      %v8230 = vadd.f32 0.0, %v8229
      %v8231 = vpop.f32.mrf.mxu0
      %v8232 = vadd.f32 0.0, %v8231
      %8233 = vmatmul.bf16.gmra.mxu0 %v8156
      %v8234 = vpop.f32.mrf.mxu0
      %v8235 = vadd.f32 0.0, %v8234
      %v8236 = vpop.f32.mrf.mxu0
      %v8237 = vadd.f32 0.0, %v8236
      %8238 = vmatmul.bf16.gmra.mxu0 %v8159
      %v8239 = vpop.f32.mrf.mxu0
      %v8240 = vadd.f32 0.0, %v8239
      %v8241 = vpop.f32.mrf.mxu0
      %v8242 = vadd.f32 0.0, %v8241
      %8243 = vmatmul.bf16.gmra.mxu0 %v8162
      %v8244 = vpop.f32.mrf.mxu0
      %v8245 = vadd.f32 0.0, %v8244
      %v8246 = vpop.f32.mrf.mxu0
      %v8247 = vadd.f32 0.0, %v8246
      %8248 = vmatmul.bf16.gmra.mxu0 %v8165
      %v8249 = vpop.f32.mrf.mxu0
      %v8250 = vadd.f32 0.0, %v8249
      %v8251 = vpop.f32.mrf.mxu0
      %v8252 = vadd.f32 0.0, %v8251
      %8253 = vmatmul.bf16.gmra.mxu0 %v8168
      %v8254 = vpop.f32.mrf.mxu0
      %v8255 = vadd.f32 0.0, %v8254
      %v8256 = vpop.f32.mrf.mxu0
      %v8257 = vadd.f32 0.0, %v8256
      %8258 = vdwg.mxu0
      %v8259 = vadd.f32 %v8033, %v8180
      %v8260 = vadd.f32 %v8034, %v8182
      %v8261 = vadd.f32 %v8035, %v8185
      %v8262 = vadd.f32 %v8036, %v8187
      %v8263 = vadd.f32 %v8037, %v8190
      %v8264 = vadd.f32 %v8038, %v8192
      %v8265 = vadd.f32 %v8039, %v8195
      %v8266 = vadd.f32 %v8040, %v8197
      %v8267 = vadd.f32 %v8041, %v8200
      %v8268 = vadd.f32 %v8042, %v8202
      %v8269 = vadd.f32 %v8043, %v8205
      %v8270 = vadd.f32 %v8044, %v8207
      %v8271 = vadd.f32 %v8045, %v8210
      %v8272 = vadd.f32 %v8046, %v8212
      %v8273 = vadd.f32 %v8047, %v8215
      %v8274 = vadd.f32 %v8048, %v8217
      %v8275 = vadd.f32 %v8049, %v8220
      %v8276 = vadd.f32 %v8050, %v8222
      %v8277 = vadd.f32 %v8051, %v8225
      %v8278 = vadd.f32 %v8052, %v8227
      %v8279 = vadd.f32 %v8053, %v8230
      %v8280 = vadd.f32 %v8054, %v8232
      %v8281 = vadd.f32 %v8055, %v8235
      %v8282 = vadd.f32 %v8056, %v8237
      %v8283 = vadd.f32 %v8057, %v8240
      %v8284 = vadd.f32 %v8058, %v8242
      %v8285 = vadd.f32 %v8059, %v8245
      %v8286 = vadd.f32 %v8060, %v8247
      %v8287 = vadd.f32 %v8061, %v8250
      %v8288 = vadd.f32 %v8062, %v8252
      %v8289 = vadd.f32 %v8063, %v8255
      %v8290 = vadd.f32 %v8064, %v8257
      %v8291 = vld [vmem:[%s4] sm:$0x1]
      %v8293 = vperm.slane %v8291, 0
      %v8295 = vadd.f32 %v8259, %v8293
      %v8296 = vadd.f32 %v8260, %v8293
      %v8297 = vadd.f32 %v8261, %v8293
      %v8298 = vadd.f32 %v8262, %v8293
      %v8299 = vadd.f32 %v8263, %v8293
      %v8300 = vadd.f32 %v8264, %v8293
      %v8301 = vadd.f32 %v8265, %v8293
      %v8302 = vadd.f32 %v8266, %v8293
      %v8303 = vadd.f32 %v8267, %v8293
      %v8304 = vadd.f32 %v8268, %v8293
      %v8305 = vadd.f32 %v8269, %v8293
      %v8306 = vadd.f32 %v8270, %v8293
      %v8307 = vadd.f32 %v8271, %v8293
      %v8308 = vadd.f32 %v8272, %v8293
      %v8309 = vadd.f32 %v8273, %v8293
      %v8310 = vadd.f32 %v8274, %v8293
      %v8311 = vadd.f32 %v8275, %v8293
      %v8312 = vadd.f32 %v8276, %v8293
      %v8313 = vadd.f32 %v8277, %v8293
      %v8314 = vadd.f32 %v8278, %v8293
      %v8315 = vadd.f32 %v8279, %v8293
      %v8316 = vadd.f32 %v8280, %v8293
      %v8317 = vadd.f32 %v8281, %v8293
      %v8318 = vadd.f32 %v8282, %v8293
      %v8319 = vadd.f32 %v8283, %v8293
      %v8320 = vadd.f32 %v8284, %v8293
      %v8321 = vadd.f32 %v8285, %v8293
      %v8322 = vadd.f32 %v8286, %v8293
      %v8323 = vadd.f32 %v8287, %v8293
      %v8324 = vadd.f32 %v8288, %v8293
      %v8325 = vadd.f32 %v8289, %v8293
      %v8326 = vadd.f32 %v8290, %v8293
      %v8327 = vmax.f32 %v8295, 0.0
      %v8328 = vmax.f32 %v8296, 0.0
      %v8329 = vmax.f32 %v8297, 0.0
      %v8330 = vmax.f32 %v8298, 0.0
      %v8331 = vmax.f32 %v8299, 0.0
      %v8332 = vmax.f32 %v8300, 0.0
      %v8333 = vmax.f32 %v8301, 0.0
      %v8334 = vmax.f32 %v8302, 0.0
      %v8335 = vmax.f32 %v8303, 0.0
      %v8336 = vmax.f32 %v8304, 0.0
      %v8337 = vmax.f32 %v8305, 0.0
      %v8338 = vmax.f32 %v8306, 0.0
      %v8339 = vmax.f32 %v8307, 0.0
      %v8340 = vmax.f32 %v8308, 0.0
      %v8341 = vmax.f32 %v8309, 0.0
      %v8342 = vmax.f32 %v8310, 0.0
      %v8343 = vmax.f32 %v8311, 0.0
      %v8344 = vmax.f32 %v8312, 0.0
      %v8345 = vmax.f32 %v8313, 0.0
      %v8346 = vmax.f32 %v8314, 0.0
      %v8347 = vmax.f32 %v8315, 0.0
      %v8348 = vmax.f32 %v8316, 0.0
      %v8349 = vmax.f32 %v8317, 0.0
      %v8350 = vmax.f32 %v8318, 0.0
      %v8351 = vmax.f32 %v8319, 0.0
      %v8352 = vmax.f32 %v8320, 0.0
      %v8353 = vmax.f32 %v8321, 0.0
      %v8354 = vmax.f32 %v8322, 0.0
      %v8355 = vmax.f32 %v8323, 0.0
      %v8356 = vmax.f32 %v8324, 0.0
      %v8357 = vmax.f32 %v8325, 0.0
      %v8358 = vmax.f32 %v8326, 0.0
      %v8359 = vpack.c.bf16 %v8327, %v8327
      %v8360 = vpack.c.bf16 %v8328, %v8328
      %v8361 = vpack.c.bf16 %v8329, %v8329
      %v8362 = vpack.c.bf16 %v8330, %v8330
      %v8363 = vpack.c.bf16 %v8331, %v8331
      %v8364 = vpack.c.bf16 %v8332, %v8332
      %v8365 = vpack.c.bf16 %v8333, %v8333
      %v8366 = vpack.c.bf16 %v8334, %v8334
      %v8367 = vpack.c.bf16 %v8335, %v8335
      %v8368 = vpack.c.bf16 %v8336, %v8336
      %v8369 = vpack.c.bf16 %v8337, %v8337
      %v8370 = vpack.c.bf16 %v8338, %v8338
      %v8371 = vpack.c.bf16 %v8339, %v8339
      %v8372 = vpack.c.bf16 %v8340, %v8340
      %v8373 = vpack.c.bf16 %v8341, %v8341
      %v8374 = vpack.c.bf16 %v8342, %v8342
      %v8375 = vpack.c.bf16 %v8343, %v8343
      %v8376 = vpack.c.bf16 %v8344, %v8344
      %v8377 = vpack.c.bf16 %v8345, %v8345
      %v8378 = vpack.c.bf16 %v8346, %v8346
      %v8379 = vpack.c.bf16 %v8347, %v8347
      %v8380 = vpack.c.bf16 %v8348, %v8348
      %v8381 = vpack.c.bf16 %v8349, %v8349
      %v8382 = vpack.c.bf16 %v8350, %v8350
      %v8383 = vpack.c.bf16 %v8351, %v8351
      %v8384 = vpack.c.bf16 %v8352, %v8352
      %v8385 = vpack.c.bf16 %v8353, %v8353
      %v8386 = vpack.c.bf16 %v8354, %v8354
      %v8387 = vpack.c.bf16 %v8355, %v8355
      %v8388 = vpack.c.bf16 %v8356, %v8356
      %v8389 = vpack.c.bf16 %v8357, %v8357
      %v8390 = vpack.c.bf16 %v8358, %v8358
      %vm8391 = vcmask 519168
      %8392 = vst.msk [vmem:[%s244] sm:$0xf] %vm8391, %v8359
      %8393 = vst.msk [vmem:[%s244 + $0x4] sm:$0xf] %vm8391, %v8360
      %8394 = vst.msk [vmem:[%s244 + $0x8] sm:$0xf] %vm8391, %v8361
      %8395 = vst.msk [vmem:[%s244 + $0xc] sm:$0xf] %vm8391, %v8362
      %8396 = vst.msk [vmem:[%s244 + $0x10] sm:$0xf] %vm8391, %v8363
      %8397 = vst.msk [vmem:[%s244 + $0x14] sm:$0xf] %vm8391, %v8364
      %8398 = vst.msk [vmem:[%s244 + $0x18] sm:$0xf] %vm8391, %v8365
      %8399 = vst.msk [vmem:[%s244 + $0x1c] sm:$0xf] %vm8391, %v8366
      %8400 = vst.msk [vmem:[%s244 + $0x20] sm:$0xf] %vm8391, %v8367
      %8401 = vst.msk [vmem:[%s244 + $0x24] sm:$0xf] %vm8391, %v8368
      %8402 = vst.msk [vmem:[%s244 + $0x28] sm:$0xf] %vm8391, %v8369
      %8403 = vst.msk [vmem:[%s244 + $0x2c] sm:$0xf] %vm8391, %v8370
      %8404 = vst.msk [vmem:[%s244 + $0x30] sm:$0xf] %vm8391, %v8371
      %8405 = vst.msk [vmem:[%s244 + $0x34] sm:$0xf] %vm8391, %v8372
      %8406 = vst.msk [vmem:[%s244 + $0x38] sm:$0xf] %vm8391, %v8373
      %8407 = vst.msk [vmem:[%s244 + $0x3c] sm:$0xf] %vm8391, %v8374
      %8408 = vst.msk [vmem:[%s244 + $0x40] sm:$0xf] %vm8391, %v8375
      %8409 = vst.msk [vmem:[%s244 + $0x44] sm:$0xf] %vm8391, %v8376
      %8410 = vst.msk [vmem:[%s244 + $0x48] sm:$0xf] %vm8391, %v8377
      %8411 = vst.msk [vmem:[%s244 + $0x4c] sm:$0xf] %vm8391, %v8378
      %8412 = vst.msk [vmem:[%s244 + $0x50] sm:$0xf] %vm8391, %v8379
      %8413 = vst.msk [vmem:[%s244 + $0x54] sm:$0xf] %vm8391, %v8380
      %8414 = vst.msk [vmem:[%s244 + $0x58] sm:$0xf] %vm8391, %v8381
      %8415 = vst.msk [vmem:[%s244 + $0x5c] sm:$0xf] %vm8391, %v8382
      %8416 = vst.msk [vmem:[%s244 + $0x60] sm:$0xf] %vm8391, %v8383
      %8417 = vst.msk [vmem:[%s244 + $0x64] sm:$0xf] %vm8391, %v8384
      %8418 = vst.msk [vmem:[%s244 + $0x68] sm:$0xf] %vm8391, %v8385
      %8419 = vst.msk [vmem:[%s244 + $0x6c] sm:$0xf] %vm8391, %v8386
      %8420 = vst.msk [vmem:[%s244 + $0x70] sm:$0xf] %vm8391, %v8387
      %8421 = vst.msk [vmem:[%s244 + $0x74] sm:$0xf] %vm8391, %v8388
      %8422 = vst.msk [vmem:[%s244 + $0x78] sm:$0xf] %vm8391, %v8389
      %8423 = vst.msk [vmem:[%s244 + $0x7c] sm:$0xf] %vm8391, %v8390
      %p8424 = scmp.lt.s32.totalorder %s16, 1
      %s8425 = scalar_select %p8424, %s16, 1
      %s8426 = smul.addr %s8425, 32
      %s8427 = smul.addr %s8426, 4
      %s8428 = scalar_lea.vmem %s5, %s8427
      // Predicated region
      $region41: #{cup_forward.1} parent=39 // pred_check
        %p8429 = pneg %p149
      $region42: #{cup_forward.1} parent=39 // pred_check_branch
        %8431 = sbr.rel (%p8429) target = $region44
      $region43: #{cup_forward.1} parent=39 // pred_region
        _
      $region44: #{cup_forward.1} parent=39 // pred_fallthru
        _
    $region40: #{cup_forward.1} parent=5 // pred_fallthru
      _
    %p8432 = scmp.le.s32.totalorder 2, %s11
    // Predicated region
    $region45: #{cup_forward.1} parent=5 // pred_check
      %p8433 = pneg %p8432
    $region46: #{cup_forward.1} parent=5 // pred_check_branch
      %8435 = sbr.rel (%p8433) target = $region48
    $region47: #{cup_forward.1} parent=5 // pred_region
      %s8436 = ssub.s32 %s11, 2
      // Predicated region
      $region49: #{cup_forward.1} parent=47 // pred_check
        %p8437 = pneg %p155
      $region50: #{cup_forward.1} parent=47 // pred_check_branch
        %8439 = sbr.rel (%p8437) target = $region52
      $region51: #{cup_forward.1} parent=47 // pred_region
        %p8440 = scmp.lt.s32.totalorder %s17, 1
        %s8441 = scalar_select %p8440, %s17, 1
        %s8442 = smul.addr %s8441, 32
        %s8443 = smul.addr %s8442, 4
        %s8444 = scalar_lea.vmem %s5, %s8443
      $region52: #{cup_forward.1} parent=47 // pred_fallthru
        _
    $region48: #{cup_forward.1} parent=5 // pred_fallthru
      _
  $region6: #{cup_forward.1} parent=0 // loop_footer
    %s15 = sadd.s32 1, %s11
  $region7: #{cup_forward.1} parent=0 // loop_footer_branch
    %10 = sbr.rel target = $region3
  $region8: #{cup_forward.1} parent=0 // loop_exit
    _

</llo_original>
